<compile_context>
chip_gen: v7x
topology: tpu7x:2x2x1
jax: 0.10.0
libtpu: 0.0.40
codegen_flags: <defaults>
</compile_context>

<pallas_src>
import functools
import math

import jax
import jax.numpy as jnp
from jax.experimental import pallas as pl
from jax.experimental.pallas import tpu as pltpu

# ----------------------- small synthetic CLIP hyper-params -------------------
IMG_SIZE = 16
PATCH = 8
IN_CH = 3
V_WIDTH = 32
V_HEADS = 4
V_LAYERS = 2
EMBED_DIM = 32
T_WIDTH = 32
T_HEADS = 4
T_LAYERS = 2
VOCAB = 64
CONTEXT = 8          # tokens per caption / degradation chunk (input text has 2*CONTEXT)
MLP_RATIO = 4

# MXU inputs (weights + cast activations) run in bf16 with f32 accumulation;
# element-wise math stays f32.
MXU_DTYPE = jnp.bfloat16

BLOCK_KEYS = ("ln", "wqkv", "bqkv", "wo", "bo", "w1", "b1", "w2", "b2")


# ----------------------------- BlockSpec helpers ------------------------------
def _const_spec(a):
    """Full-array block with a constant block index -> DMA'd into VMEM once."""
    return pl.BlockSpec(a.shape, lambda *_, nd=a.ndim: (0,) * nd)


def _layer_specs(blocks):
    """Per-layer weight streaming: each weight kind carries a leading layer axis
    selected by grid axis 0, so layer l's weights are (double-buffered) in VMEM
    while the activation stays resident — the scheme that keeps this design
    inside v7x's 64 MiB VMEM at real ViT-B scale."""
    specs = []
    for k in BLOCK_KEYS:
        a = blocks[k]
        specs.append(pl.BlockSpec((None,) + a.shape[1:],
                                  lambda l, *_, nd=a.ndim - 1: (l,) + (0,) * nd))
    return specs


def _layer_args(blocks):
    return tuple(blocks[k] for k in BLOCK_KEYS)


def _block_diag_mask(n_slabs, s, causal=False):
    """Additive attention mask for n_slabs independent length-s sequences packed
    on the sublane axis (block-diagonal), optionally causal inside each slab.
    Built once in the wrapper and fed with a constant index_map so it is NOT
    re-materialized on the VPU every layer (JAX does not CSE broadcast_in_dim)."""
    n = n_slabs * s
    i = jnp.arange(n)
    ok = (i[:, None] // s) == (i[None, :] // s)
    if causal:
        ok = ok & ((i[None, :] % s) <= (i[:, None] % s))
    return jnp.where(ok, 0.0, -1e9).astype(jnp.float32)


# --------------------------- in-kernel building blocks ------------------------
def _layer_norm(x, gamma, beta):
    x = x.astype(jnp.float32)
    mean = jnp.mean(x, axis=-1, keepdims=True)
    var = jnp.mean(jnp.square(x - mean), axis=-1, keepdims=True)
    return (x - mean) * jax.lax.rsqrt(var + 1e-5) * gamma + beta


def _mha(x, wqkv, bqkv, wo, bo, mask, n_heads, tmp_ref):
    """Multi-head self-attention on a stacked (R, D) slab.  The block-diagonal
    `mask` keeps packed sequences independent, so every projection matmul runs
    once on the whole slab (sublane-dense)."""
    R, D = x.shape
    dh = D // n_heads
    scale = 1.0 / math.sqrt(dh)
    qkv = jnp.dot(x.astype(MXU_DTYPE), wqkv,
                  preferred_element_type=jnp.float32) + bqkv
    # Static unroll is fine at 4 heads / dh=8; at real head counts switch to a
    # batched ('hqd,hkd->hqk') dot_general to bound live ranges (vreg pressure).
    for h in range(n_heads):
        q = qkv[:, h * dh:(h + 1) * dh]
        k = qkv[:, D + h * dh:D + (h + 1) * dh]
        v = qkv[:, 2 * D + h * dh:2 * D + (h + 1) * dh]
        s = jax.lax.dot_general(q, k, (((1,), (1,)), ((), ())),
                                preferred_element_type=jnp.float32) * scale + mask
        s = s - jnp.max(s, axis=-1, keepdims=True)
        p = jnp.exp(s)
        p = p * pl.reciprocal(jnp.sum(p, axis=-1, keepdims=True), approx=True)
        o_h = jnp.dot(p, v, preferred_element_type=jnp.float32)
        # Head outputs land in static lane slices of a VMEM buffer ...
        tmp_ref[0:R, h * dh:(h + 1) * dh] = o_h
    # ... so the out-projection is ONE depth-D (R,D)@(D,D) matmul instead of
    # n_heads depth-dh matmuls accumulated on the VALU.
    o = tmp_ref[0:R, :]
    return jnp.dot(o.astype(MXU_DTYPE), wo, preferred_element_type=jnp.float32) + bo


def _block_body(x, w, mask, n_heads, tmp_ref):
    """One ResidualAttentionBlock on a stacked (R, D) slab (f32 element-wise
    math, bf16 MXU inputs with f32 accumulation)."""
    ln, wqkv, bqkv, wo, bo, w1, b1, w2, b2 = w
    xn = _layer_norm(x, ln[0:1, :], ln[1:2, :])
    x = x + _mha(xn, wqkv, bqkv, wo, bo, mask, n_heads, tmp_ref)
    hn = _layer_norm(x, ln[2:3, :], ln[3:4, :])
    h = jnp.dot(hn.astype(MXU_DTYPE), w1, preferred_element_type=jnp.float32) + b1
    # TODO(synk): PyTorch nn.GELU defaults to the exact erf form; tanh approximation used.
    h = jax.nn.gelu(h, approximate=True)
    return x + jnp.dot(h.astype(MXU_DTYPE), w2, preferred_element_type=jnp.float32) + b2


def _head(pooled, ln, proj, out_dtype):
    """ln -> projection (no bias) -> L2 normalize (F.normalize semantics)."""
    pooled = _layer_norm(pooled, ln[0:1, :], ln[1:2, :])
    y = jnp.dot(pooled.astype(MXU_DTYPE), proj, preferred_element_type=jnp.float32)
    ss = jnp.sum(y * y, axis=-1, keepdims=True)
    return (y * jax.lax.rsqrt(jnp.maximum(ss, 1e-24))).astype(out_dtype)


# ---------------------------------- kernels -----------------------------------
def _vision_tower_kernel(p_ref, add_ref, convw_ref, lnpre_ref, mask_ref, *rest,
                         B, S, n_heads):
    """Whole controlled-image path: stem (l==0), per-layer {main block on the
    stacked [x_visual ; x_control] slab, zero module on the control half,
    control add}, fused ln_post/proj/L2-normalize head (l==last)."""
    main_refs, zero_refs = rest[0:9], rest[9:18]
    lnpost_ref, proj_ref = rest[18], rest[19]
    o_ref, x_scr, tmp_scr = rest[20], rest[21], rest[22]
    R = B * S
    l = pl.program_id(0)

    @pl.when(l == 0)
    def _():
        # ViT stem: ONE (B*S, C*P*P)@(C*P*P, D) matmul — class-token rows are
        # zero rows of the patch slab and live entirely in the additive term —
        # then ln_pre.  visual_control is a deepcopy of clip.visual (identical
        # stem at init), so both towers start from the same stem output.
        x0 = jnp.dot(p_ref[...].astype(MXU_DTYPE), convw_ref[...],
                     preferred_element_type=jnp.float32) + add_ref[...]
        x0 = _layer_norm(x0, lnpre_ref[0:1, :], lnpre_ref[1:2, :])
        x_scr[0:R, :] = x0
        x_scr[R:2 * R, :] = x0

    mask = mask_ref[...]
    main_w = tuple(r[...] for r in main_refs)
    zero_w = tuple(r[...] for r in zero_refs)

    # Main resblock on the stacked [xv ; xc] slab: both towers share this
    # layer's weights (deepcopy), so weights cross HBM->VMEM once per layer and
    # every projection/MLP matmul runs at 2x sublane fill.
    y = _block_body(x_scr[...], main_w, mask, n_heads, tmp_scr)
    yv, yc = y[0:R, :], y[R:2 * R, :]
    # ControlTransformer zero module on the control tower output, then the
    # control add into the controlled clip.visual tower.  (The zero module is a
    # parameter-zeroed resblock -> identity at init, so hid == yc at init.)
    hid = _block_body(yc, zero_w, mask[0:R, 0:R], n_heads, tmp_scr)
    x_scr[0:R, :] = yv + hid
    x_scr[R:2 * R, :] = yc

    @pl.when(l == pl.num_programs(0) - 1)
    def _():
        # Fused head: pool each (tower, batch) class-token row, then
        # ln_post -> proj -> L2 normalize; rows [0:B]=image, [B:2B]=degradation.
        for t in range(2):
            for b in range(B):
                dst = t * B + b
                src = t * R + b * S
                tmp_scr[dst:dst + 1, :] = x_scr[src:src + 1, :]
        o_ref[...] = _head(tmp_scr[0:2 * B, :], lnpost_ref[...], proj_ref[...],
                           o_ref.dtype)


def _text_tower_kernel(idx_ref, x0_ref, mask_ref, *rest, B2, S, n_heads):
    """Whole text encoder: load embeddings (l==0), per-layer causal block on the
    stacked (B2*S, D) slab, fused EOT-pool/ln_final/proj/L2-normalize head."""
    blk_refs = rest[0:9]
    lnf_ref, proj_ref = rest[9], rest[10]
    o_ref, x_scr, tmp_scr = rest[11], rest[12], rest[13]
    l = pl.program_id(0)

    @pl.when(l == 0)
    def _():
        x_scr[...] = x0_ref[...]

    w = tuple(r[...] for r in blk_refs)
    x_scr[...] = _block_body(x_scr[...], w, mask_ref[...], n_heads, tmp_scr)

    @pl.when(l == pl.num_programs(0) - 1)
    def _():
        # Pool the argmax (EOT) token of each prompt (per-row indices scalar-
        # prefetched into SMEM), then fused ln_final -> text_projection -> L2
        # normalize.  ln_final is per-token, so pool-then-LN == LN-then-pool.
        for b in range(B2):
            tmp_scr[b:b + 1, :] = x_scr[pl.ds(b * S + idx_ref[b], 1), :]
        o_ref[...] = _head(tmp_scr[0:B2, :], lnf_ref[...], proj_ref[...],
                           o_ref.dtype)


# ---------------------------------- encoders -----------------------------------
def encode_image_controlled(params, image):
    """clip.visual + visual_control (ControlTransformer) fused into ONE
    pallas_call: layer grid axis, VMEM-resident activations, streamed weights."""
    vp = params["visual"]
    B, C, H, W = image.shape
    gh, gw = H // PATCH, W // PATCH
    n_patches = gh * gw
    S = n_patches + 1
    cpp = C * PATCH * PATCH

    # NCHW -> (B, n_patches, C*P*P) patch extraction (wrapper-side layout glue);
    # a zero row is inserted where each class token goes so the in-kernel stem
    # is a single sublane-dense matmul.
    p = image.reshape(B, C, gh, PATCH, gw, PATCH)
    p = p.transpose(0, 2, 4, 1, 3, 5).reshape(B, n_patches, cpp)
    p_aug = jnp.concatenate([jnp.zeros((B, 1, cpp), p.dtype), p], axis=1)
    p_aug = p_aug.reshape(B * S, cpp)
    # class-token embedding + positional embedding as one additive (B*S, D) term
    add = jnp.tile(jnp.concatenate([vp["cls"] + vp["pos"][0:1], vp["pos"][1:]],
                                   axis=0), (B, 1))
    mask = _block_diag_mask(2 * B, S)            # [xv ; xc] slabs, no causal

    m_args = _layer_args(vp["blocks"])
    z_args = _layer_args(params["zero_blocks"])
    in_specs = ([_const_spec(p_aug), _const_spec(add), _const_spec(vp["conv_w"]),
                 _const_spec(vp["ln_pre"]), _const_spec(mask)]
                + _layer_specs(vp["blocks"]) + _layer_specs(params["zero_blocks"])
                + [_const_spec(vp["ln_post"]), _const_spec(vp["proj"])])

    feats = pl.pallas_call(
        functools.partial(_vision_tower_kernel, B=B, S=S, n_heads=V_HEADS),
        out_shape=jax.ShapeDtypeStruct((2 * B, EMBED_DIM), jnp.float32),
        grid_spec=pltpu.PrefetchScalarGridSpec(
            num_scalar_prefetch=0,
            grid=(V_LAYERS,),
            in_specs=in_specs,
            out_specs=pl.BlockSpec((2 * B, EMBED_DIM), lambda *_: (0, 0)),
            scratch_shapes=[pltpu.VMEM((2 * B * S, V_WIDTH), jnp.float32),
                            pltpu.VMEM((2 * B * S, V_WIDTH), jnp.float32)]),
        # Layer axis carries the VMEM-resident activation -> "arbitrary".  At
        # real ViT-B scale set vmem_limit_bytes explicitly (v7x: 64 MiB total,
        # v5e: 16 MiB default scoped) — unnecessary at these toy shapes.
        compiler_params=pltpu.CompilerParams(dimension_semantics=("arbitrary",)),
    )(p_aug, add, vp["conv_w"], vp["ln_pre"], mask, *m_args, *z_args,
      vp["ln_post"], vp["proj"])
    return feats[:B], feats[B:]               # image_features, degra_features


def encode_text(params, tokens):
    """CLIP text encoder (caption + degradation prompts batched together) fused
    into ONE pallas_call with the same layer-grid / resident-activation scheme."""
    tp = params["text"]
    B2, S = tokens.shape
    x0 = (jnp.take(tp["token_embedding"], tokens, axis=0)
          + tp["pos_embed"][None, :S]).reshape(B2 * S, T_WIDTH).astype(jnp.float32)
    idx = jnp.argmax(tokens, axis=-1).astype(jnp.int32)     # EOT pooling indices
    mask = _block_diag_mask(B2, S, causal=True)

    t_args = _layer_args(tp["blocks"])
    in_specs = ([_const_spec(x0), _const_spec(mask)] + _layer_specs(tp["blocks"])
                + [_const_spec(tp["ln_final"]), _const_spec(tp["text_projection"])])

    return pl.pallas_call(
        functools.partial(_text_tower_kernel, B2=B2, S=S, n_heads=T_HEADS),
        out_shape=jax.ShapeDtypeStruct((B2, EMBED_DIM), jnp.float32),
        grid_spec=pltpu.PrefetchScalarGridSpec(
            num_scalar_prefetch=1,
            grid=(T_LAYERS,),
            in_specs=in_specs,
            out_specs=pl.BlockSpec((B2, EMBED_DIM), lambda *_: (0, 0)),
            scratch_shapes=[pltpu.VMEM((B2 * S, T_WIDTH), jnp.float32),
                            pltpu.VMEM((B2 * S, T_WIDTH), jnp.float32)]),
        compiler_params=pltpu.CompilerParams(dimension_semantics=("arbitrary",)),
    )(idx, x0, mask, *t_args, tp["ln_final"], tp["text_projection"])


def daclip_forward(params, image, text):
    caption, degradation = jnp.split(text, 2, axis=-1)       # text.chunk(2, dim=-1)
    image_features, degra_features = encode_image_controlled(params, image)
    # Caption + degradation share weights and length -> one batched encoder pass.
    tfeat = encode_text(params, jnp.concatenate([caption, degradation], axis=0))
    B = caption.shape[0]
    return {
        "image_features": image_features,
        "text_features": tfeat[:B],
        "image_degra_features": degra_features,
        "text_degra_features": tfeat[B:],
        "logit_scale": jnp.exp(params["logit_scale"]),
    }


# ------------------------------- parameter init ---------------------------------
def _ln_params(width):
    return jnp.concatenate([jnp.ones((1, width), jnp.float32),
                            jnp.zeros((1, width), jnp.float32)], axis=0)


def _init_blocks(key, width, n_heads, n_layers, zero_init=False):
    """Kernel-layout block params, stacked over layers: (L, in, out) matrices in
    bf16 for the MXU, biases (L, 1, N) f32, LN stacked as (L, 4, D) =
    [ln1_w, ln1_b, ln2_w, ln2_b]; out-proj stored dense (D, D)."""
    hid = MLP_RATIO * width
    shapes = {
        "ln": (n_layers, 4, width),
        "wqkv": (n_layers, width, 3 * width),
        "bqkv": (n_layers, 1, 3 * width),
        "wo": (n_layers, width, width),
        "bo": (n_layers, 1, width),
        "w1": (n_layers, width, hid),
        "b1": (n_layers, 1, hid),
        "w2": (n_layers, hid, width),
        "b2": (n_layers, 1, width),
    }
    mxu_keys = ("wqkv", "wo", "w1", "w2")
    if zero_init:
        # ControlTransformer zero modules: parameter-zeroed copies of the
        # resblocks (residual connections make each one the identity at init).
        return {k: jnp.zeros(shp, MXU_DTYPE if k in mxu_keys else jnp.float32)
                for k, shp in shapes.items()}
    ks = jax.random.split(key, len(shapes))
    s = 0.02
    out = {}
    for kk, (k, shp) in zip(ks, shapes.items()):
        if k == "ln":
            row = jnp.stack([jnp.ones(width), jnp.zeros(width),
                             jnp.ones(width), jnp.zeros(width)], axis=0)
            out[k] = jnp.tile(row[None], (n_layers, 1, 1)).astype(jnp.float32)
        elif k in mxu_keys:
            out[k] = (s * jax.random.normal(kk, shp, jnp.float32)).astype(MXU_DTYPE)
        else:
            out[k] = s * jax.random.normal(kk, shp, jnp.float32)
    return out


def _init_visual(key):
    k0, k1, k2, k3, k4 = jax.random.split(key, 5)
    n_tok = 1 + (IMG_SIZE // PATCH) ** 2
    s = 0.02
    return {
        # conv1 weight pre-reshaped to (C*P*P, width) so the stem is one matmul.
        "conv_w": (s * jax.random.normal(k0, (IN_CH * PATCH * PATCH, V_WIDTH),
                                         jnp.float32)).astype(MXU_DTYPE),
        "cls": s * jax.random.normal(k1, (1, V_WIDTH), jnp.float32),
        "pos": s * jax.random.normal(k2, (n_tok, V_WIDTH), jnp.float32),
        "ln_pre": _ln_params(V_WIDTH),
        "blocks": _init_blocks(k3, V_WIDTH, V_HEADS, V_LAYERS),
        "ln_post": _ln_params(V_WIDTH),
        "proj": (s * jax.random.normal(k4, (V_WIDTH, EMBED_DIM),
                                       jnp.float32)).astype(MXU_DTYPE),
    }


def _init_text(key):
    k0, k1, k2, k3 = jax.random.split(key, 4)
    s = 0.02
    return {
        "token_embedding": s * jax.random.normal(k0, (VOCAB, T_WIDTH), jnp.float32),
        "pos_embed": s * jax.random.normal(k1, (CONTEXT, T_WIDTH), jnp.float32),
        "blocks": _init_blocks(k2, T_WIDTH, T_HEADS, T_LAYERS),
        "ln_final": _ln_params(T_WIDTH),
        "text_projection": (s * jax.random.normal(k3, (T_WIDTH, EMBED_DIM),
                                                  jnp.float32)).astype(MXU_DTYPE),
    }


def init_params(key):
    kv, kz, kt = jax.random.split(key, 3)
    return {
        # visual_control = copy.deepcopy(clip.visual): identical weights at init;
        # the towers share the same immutable arrays (functionally a deepcopy).
        "visual": _init_visual(kv),
        # ControlTransformer zero modules: zero_module(deepcopy(resblock)).
        "zero_blocks": _init_blocks(kz, V_WIDTH, V_HEADS, V_LAYERS, zero_init=True),
        "text": _init_text(kt),
        "logit_scale": jnp.asarray(math.log(1.0 / 0.07), jnp.float32),
    }


# ------------------------------------ main ------------------------------------
if __name__ == "__main__":
    root = jax.random.PRNGKey(0)
    kp, ki, ktk = jax.random.split(root, 3)

    params = init_params(kp)
    image = jax.random.normal(ki, (2, IN_CH, IMG_SIZE, IMG_SIZE), jnp.float32)   # NCHW
    text = jax.random.randint(ktk, (2, 2 * CONTEXT), 0, VOCAB, dtype=jnp.int32)

    fwd = jax.jit(functools.partial(daclip_forward, params))
    out = fwd(image, text)
    out = jax.tree_util.tree_map(jax.block_until_ready, out)

    assert out["image_features"].shape == (2, EMBED_DIM)
    assert out["image_degra_features"].shape == (2, EMBED_DIM)
    assert out["text_features"].shape == (2, EMBED_DIM)
    assert out["text_degra_features"].shape == (2, EMBED_DIM)
    assert out["logit_scale"].shape == ()
    for k in ("image_features", "image_degra_features",
              "text_features", "text_degra_features"):
        assert bool(jnp.all(jnp.isfinite(out[k]))), k
        norms = jnp.linalg.norm(out[k], axis=-1)
        assert bool(jnp.all(jnp.abs(norms - 1.0) < 1e-2)), k   # L2-normalized
    print("KERNEL_OK")
</pallas_src>

<mosaic_0001>
module attributes {stable_mosaic.version = 11 : i64} {
  func.func @_vision_tower_kernel(%arg0: i32, %arg1: memref<10x192xf32, #tpu.memory_space<vmem>>, %arg2: memref<10x32xf32, #tpu.memory_space<vmem>>, %arg3: memref<192x32xbf16, #tpu.memory_space<vmem>>, %arg4: memref<2x32xf32, #tpu.memory_space<vmem>>, %arg5: memref<20x20xf32, #tpu.memory_space<vmem>>, %arg6: memref<1x4x32xf32, #tpu.memory_space<vmem>>, %arg7: memref<1x32x96xbf16, #tpu.memory_space<vmem>>, %arg8: memref<1x1x96xf32, #tpu.memory_space<vmem>>, %arg9: memref<1x32x32xbf16, #tpu.memory_space<vmem>>, %arg10: memref<1x1x32xf32, #tpu.memory_space<vmem>>, %arg11: memref<1x32x128xbf16, #tpu.memory_space<vmem>>, %arg12: memref<1x1x128xf32, #tpu.memory_space<vmem>>, %arg13: memref<1x128x32xbf16, #tpu.memory_space<vmem>>, %arg14: memref<1x1x32xf32, #tpu.memory_space<vmem>>, %arg15: memref<1x4x32xf32, #tpu.memory_space<vmem>>, %arg16: memref<1x32x96xbf16, #tpu.memory_space<vmem>>, %arg17: memref<1x1x96xf32, #tpu.memory_space<vmem>>, %arg18: memref<1x32x32xbf16, #tpu.memory_space<vmem>>, %arg19: memref<1x1x32xf32, #tpu.memory_space<vmem>>, %arg20: memref<1x32x128xbf16, #tpu.memory_space<vmem>>, %arg21: memref<1x1x128xf32, #tpu.memory_space<vmem>>, %arg22: memref<1x128x32xbf16, #tpu.memory_space<vmem>>, %arg23: memref<1x1x32xf32, #tpu.memory_space<vmem>>, %arg24: memref<2x32xf32, #tpu.memory_space<vmem>>, %arg25: memref<32x32xbf16, #tpu.memory_space<vmem>>, %arg26: memref<4x32xf32, #tpu.memory_space<vmem>>, %arg27: memref<20x32xf32, #tpu.memory_space<vmem>>, %arg28: memref<20x32xf32, #tpu.memory_space<vmem>>) attributes {dimension_semantics = [#tpu.dimension_semantics<arbitrary>], iteration_bounds = array<i64: 2>, scalar_prefetch = 0 : i64, scratch_operands = 2 : i64, tpu.core_type = #tpu.core_type<tc>, window_params = [{pipeline_mode = #tpu.pipeline_mode<synchronous>, transform_indices = @transform_0, window_bounds = array<i64: 10, 192>}, {pipeline_mode = #tpu.pipeline_mode<synchronous>, transform_indices = @transform_1, window_bounds = array<i64: 10, 32>}, {pipeline_mode = #tpu.pipeline_mode<synchronous>, transform_indices = @transform_2, window_bounds = array<i64: 192, 32>}, {pipeline_mode = #tpu.pipeline_mode<synchronous>, transform_indices = @transform_3, window_bounds = array<i64: 2, 32>}, {pipeline_mode = #tpu.pipeline_mode<synchronous>, transform_indices = @transform_4, window_bounds = array<i64: 20, 20>}, {transform_indices = @transform_5, window_bounds = array<i64: 1, 4, 32>}, {transform_indices = @transform_6, window_bounds = array<i64: 1, 32, 96>}, {transform_indices = @transform_7, window_bounds = array<i64: 1, 1, 96>}, {transform_indices = @transform_8, window_bounds = array<i64: 1, 32, 32>}, {transform_indices = @transform_9, window_bounds = array<i64: 1, 1, 32>}, {transform_indices = @transform_10, window_bounds = array<i64: 1, 32, 128>}, {transform_indices = @transform_11, window_bounds = array<i64: 1, 1, 128>}, {transform_indices = @transform_12, window_bounds = array<i64: 1, 128, 32>}, {transform_indices = @transform_13, window_bounds = array<i64: 1, 1, 32>}, {transform_indices = @transform_14, window_bounds = array<i64: 1, 4, 32>}, {transform_indices = @transform_15, window_bounds = array<i64: 1, 32, 96>}, {transform_indices = @transform_16, window_bounds = array<i64: 1, 1, 96>}, {transform_indices = @transform_17, window_bounds = array<i64: 1, 32, 32>}, {transform_indices = @transform_18, window_bounds = array<i64: 1, 1, 32>}, {transform_indices = @transform_19, window_bounds = array<i64: 1, 32, 128>}, {transform_indices = @transform_20, window_bounds = array<i64: 1, 1, 128>}, {transform_indices = @transform_21, window_bounds = array<i64: 1, 128, 32>}, {transform_indices = @transform_22, window_bounds = array<i64: 1, 1, 32>}, {pipeline_mode = #tpu.pipeline_mode<synchronous>, transform_indices = @transform_23, window_bounds = array<i64: 2, 32>}, {pipeline_mode = #tpu.pipeline_mode<synchronous>, transform_indices = @transform_24, window_bounds = array<i64: 32, 32>}, {pipeline_mode = #tpu.pipeline_mode<synchronous>, transform_indices = @transform_25, window_bounds = array<i64: 4, 32>}]} {
    %c0_i32 = arith.constant 0 : i32
    %0 = arith.cmpi eq, %arg0, %c0_i32 : i32
    %1 = arith.extui %0 : i1 to i32
    %c0_i32_0 = arith.constant 0 : i32
    %2 = arith.cmpi ne, %1, %c0_i32_0 : i32
    scf.if %2 {
      %c0_154 = arith.constant 0 : index
      %c0_155 = arith.constant 0 : index
      %362 = vector.load %arg1[%c0_154, %c0_155] : memref<10x192xf32, #tpu.memory_space<vmem>>, vector<10x192xf32>
      %363 = arith.truncf %362 : vector<10x192xf32> to vector<10x192xbf16>
      %c0_156 = arith.constant 0 : index
      %c0_157 = arith.constant 0 : index
      %364 = vector.load %arg3[%c0_156, %c0_157] : memref<192x32xbf16, #tpu.memory_space<vmem>>, vector<192x32xbf16>
      %cst_158 = arith.constant dense<0.000000e+00> : vector<10x32xf32>
      %365 = tpu.matmul %363, %364, %cst_158 {dimension_numbers = #tpu.dot_dimension_numbers<[1], [0], [0], [1], [0, 0, 1, 1], [], []>} : vector<10x192xbf16>, vector<192x32xbf16>, vector<10x32xf32> -> vector<10x32xf32>
      %c0_159 = arith.constant 0 : index
      %c0_160 = arith.constant 0 : index
      %366 = vector.load %arg2[%c0_159, %c0_160] : memref<10x32xf32, #tpu.memory_space<vmem>>, vector<10x32xf32>
      %367 = arith.addf %365, %366 : vector<10x32xf32>
      %c0_161 = arith.constant 0 : index
      %c0_162 = arith.constant 0 : index
      %368 = vector.load %arg4[%c0_161, %c0_162] : memref<2x32xf32, #tpu.memory_space<vmem>>, vector<1x32xf32>
      %c1 = arith.constant 1 : index
      %c0_163 = arith.constant 0 : index
      %369 = vector.load %arg4[%c1, %c0_163] : memref<2x32xf32, #tpu.memory_space<vmem>>, vector<1x32xf32>
      %cst_164 = arith.constant dense<0.000000e+00> : vector<10xf32>
      %370 = vector.multi_reduction <add>, %367, %cst_164 [1] : vector<10x32xf32> to vector<10xf32>
      %371 = vector.shape_cast %370 : vector<10xf32> to vector<10x1xf32>
      %cst_165 = arith.constant 3.200000e+01 : f32
      %372 = vector.broadcast %cst_165 : f32 to vector<10x1xf32>
      %373 = arith.divf %371, %372 : vector<10x1xf32>
      %374 = vector.broadcast %373 : vector<10x1xf32> to vector<10x32xf32>
      %375 = arith.subf %367, %374 : vector<10x32xf32>
      %376 = arith.mulf %375, %375 : vector<10x32xf32>
      %cst_166 = arith.constant dense<0.000000e+00> : vector<10xf32>
      %377 = vector.multi_reduction <add>, %376, %cst_166 [1] : vector<10x32xf32> to vector<10xf32>
      %378 = vector.shape_cast %377 : vector<10xf32> to vector<10x1xf32>
      %cst_167 = arith.constant 3.200000e+01 : f32
      %379 = vector.broadcast %cst_167 : f32 to vector<10x1xf32>
      %380 = arith.divf %378, %379 : vector<10x1xf32>
      %381 = vector.broadcast %373 : vector<10x1xf32> to vector<10x32xf32>
      %382 = arith.subf %367, %381 : vector<10x32xf32>
      %cst_168 = arith.constant 9.99999974E-6 : f32
      %383 = vector.broadcast %cst_168 : f32 to vector<10x1xf32>
      %384 = arith.addf %380, %383 : vector<10x1xf32>
      %385 = math.rsqrt %384 : vector<10x1xf32>
      %386 = vector.broadcast %385 : vector<10x1xf32> to vector<10x32xf32>
      %387 = arith.mulf %382, %386 : vector<10x32xf32>
      %388 = vector.broadcast %368 : vector<1x32xf32> to vector<10x32xf32>
      %389 = arith.mulf %387, %388 : vector<10x32xf32>
      %390 = vector.broadcast %369 : vector<1x32xf32> to vector<10x32xf32>
      %391 = arith.addf %389, %390 : vector<10x32xf32>
      %c0_169 = arith.constant 0 : index
      %c0_170 = arith.constant 0 : index
      %392 = vector.load %arg27[%c0_169, %c0_170] : memref<20x32xf32, #tpu.memory_space<vmem>>, vector<10x32xf32>
      tpu.vector_store %arg27[%c0_169, %c0_170], %391 {strides = array<i32>} : memref<20x32xf32, #tpu.memory_space<vmem>>, vector<10x32xf32>,
      %c10_171 = arith.constant 10 : index
      %c0_172 = arith.constant 0 : index
      %393 = vector.load %arg27[%c10_171, %c0_172] : memref<20x32xf32, #tpu.memory_space<vmem>>, vector<10x32xf32>
      tpu.vector_store %arg27[%c10_171, %c0_172], %391 {strides = array<i32>} : memref<20x32xf32, #tpu.memory_space<vmem>>, vector<10x32xf32>,
    } else {
    }
    %c0 = arith.constant 0 : index
    %c0_1 = arith.constant 0 : index
    %3 = vector.load %arg5[%c0, %c0_1] : memref<20x20xf32, #tpu.memory_space<vmem>>, vector<20x20xf32>
    %c0_2 = arith.constant 0 : index
    %c0_3 = arith.constant 0 : index
    %c0_4 = arith.constant 0 : index
    %4 = vector.load %arg6[%c0_2, %c0_3, %c0_4] : memref<1x4x32xf32, #tpu.memory_space<vmem>>, vector<1x4x32xf32>
    %5 = vector.shape_cast %4 : vector<1x4x32xf32> to vector<4x32xf32>
    %c0_5 = arith.constant 0 : index
    %c0_6 = arith.constant 0 : index
    %c0_7 = arith.constant 0 : index
    %6 = vector.load %arg7[%c0_5, %c0_6, %c0_7] : memref<1x32x96xbf16, #tpu.memory_space<vmem>>, vector<1x32x96xbf16>
    %7 = vector.shape_cast %6 : vector<1x32x96xbf16> to vector<32x96xbf16>
    %c0_8 = arith.constant 0 : index
    %c0_9 = arith.constant 0 : index
    %c0_10 = arith.constant 0 : index
    %8 = vector.load %arg8[%c0_8, %c0_9, %c0_10] : memref<1x1x96xf32, #tpu.memory_space<vmem>>, vector<1x1x96xf32>
    %9 = vector.shape_cast %8 : vector<1x1x96xf32> to vector<1x96xf32>
    %c0_11 = arith.constant 0 : index
    %c0_12 = arith.constant 0 : index
    %c0_13 = arith.constant 0 : index
    %10 = vector.load %arg9[%c0_11, %c0_12, %c0_13] : memref<1x32x32xbf16, #tpu.memory_space<vmem>>, vector<1x32x32xbf16>
    %11 = vector.shape_cast %10 : vector<1x32x32xbf16> to vector<32x32xbf16>
    %c0_14 = arith.constant 0 : index
    %c0_15 = arith.constant 0 : index
    %c0_16 = arith.constant 0 : index
    %12 = vector.load %arg10[%c0_14, %c0_15, %c0_16] : memref<1x1x32xf32, #tpu.memory_space<vmem>>, vector<1x1x32xf32>
    %13 = vector.shape_cast %12 : vector<1x1x32xf32> to vector<1x32xf32>
    %c0_17 = arith.constant 0 : index
    %c0_18 = arith.constant 0 : index
    %c0_19 = arith.constant 0 : index
    %14 = vector.load %arg11[%c0_17, %c0_18, %c0_19] : memref<1x32x128xbf16, #tpu.memory_space<vmem>>, vector<1x32x128xbf16>
    %15 = vector.shape_cast %14 : vector<1x32x128xbf16> to vector<32x128xbf16>
    %c0_20 = arith.constant 0 : index
    %c0_21 = arith.constant 0 : index
    %c0_22 = arith.constant 0 : index
    %16 = vector.load %arg12[%c0_20, %c0_21, %c0_22] : memref<1x1x128xf32, #tpu.memory_space<vmem>>, vector<1x1x128xf32>
    %17 = vector.shape_cast %16 : vector<1x1x128xf32> to vector<1x128xf32>
    %c0_23 = arith.constant 0 : index
    %c0_24 = arith.constant 0 : index
    %c0_25 = arith.constant 0 : index
    %18 = vector.load %arg13[%c0_23, %c0_24, %c0_25] : memref<1x128x32xbf16, #tpu.memory_space<vmem>>, vector<1x128x32xbf16>
    %19 = vector.shape_cast %18 : vector<1x128x32xbf16> to vector<128x32xbf16>
    %c0_26 = arith.constant 0 : index
    %c0_27 = arith.constant 0 : index
    %c0_28 = arith.constant 0 : index
    %20 = vector.load %arg14[%c0_26, %c0_27, %c0_28] : memref<1x1x32xf32, #tpu.memory_space<vmem>>, vector<1x1x32xf32>
    %21 = vector.shape_cast %20 : vector<1x1x32xf32> to vector<1x32xf32>
    %c0_29 = arith.constant 0 : index
    %c0_30 = arith.constant 0 : index
    %c0_31 = arith.constant 0 : index
    %22 = vector.load %arg15[%c0_29, %c0_30, %c0_31] : memref<1x4x32xf32, #tpu.memory_space<vmem>>, vector<1x4x32xf32>
    %23 = vector.shape_cast %22 : vector<1x4x32xf32> to vector<4x32xf32>
    %c0_32 = arith.constant 0 : index
    %c0_33 = arith.constant 0 : index
    %c0_34 = arith.constant 0 : index
    %24 = vector.load %arg16[%c0_32, %c0_33, %c0_34] : memref<1x32x96xbf16, #tpu.memory_space<vmem>>, vector<1x32x96xbf16>
    %25 = vector.shape_cast %24 : vector<1x32x96xbf16> to vector<32x96xbf16>
    %c0_35 = arith.constant 0 : index
    %c0_36 = arith.constant 0 : index
    %c0_37 = arith.constant 0 : index
    %26 = vector.load %arg17[%c0_35, %c0_36, %c0_37] : memref<1x1x96xf32, #tpu.memory_space<vmem>>, vector<1x1x96xf32>
    %27 = vector.shape_cast %26 : vector<1x1x96xf32> to vector<1x96xf32>
    %c0_38 = arith.constant 0 : index
    %c0_39 = arith.constant 0 : index
    %c0_40 = arith.constant 0 : index
    %28 = vector.load %arg18[%c0_38, %c0_39, %c0_40] : memref<1x32x32xbf16, #tpu.memory_space<vmem>>, vector<1x32x32xbf16>
    %29 = vector.shape_cast %28 : vector<1x32x32xbf16> to vector<32x32xbf16>
    %c0_41 = arith.constant 0 : index
    %c0_42 = arith.constant 0 : index
    %c0_43 = arith.constant 0 : index
    %30 = vector.load %arg19[%c0_41, %c0_42, %c0_43] : memref<1x1x32xf32, #tpu.memory_space<vmem>>, vector<1x1x32xf32>
    %31 = vector.shape_cast %30 : vector<1x1x32xf32> to vector<1x32xf32>
    %c0_44 = arith.constant 0 : index
    %c0_45 = arith.constant 0 : index
    %c0_46 = arith.constant 0 : index
    %32 = vector.load %arg20[%c0_44, %c0_45, %c0_46] : memref<1x32x128xbf16, #tpu.memory_space<vmem>>, vector<1x32x128xbf16>
    %33 = vector.shape_cast %32 : vector<1x32x128xbf16> to vector<32x128xbf16>
    %c0_47 = arith.constant 0 : index
    %c0_48 = arith.constant 0 : index
    %c0_49 = arith.constant 0 : index
    %34 = vector.load %arg21[%c0_47, %c0_48, %c0_49] : memref<1x1x128xf32, #tpu.memory_space<vmem>>, vector<1x1x128xf32>
    %35 = vector.shape_cast %34 : vector<1x1x128xf32> to vector<1x128xf32>
    %c0_50 = arith.constant 0 : index
    %c0_51 = arith.constant 0 : index
    %c0_52 = arith.constant 0 : index
    %36 = vector.load %arg22[%c0_50, %c0_51, %c0_52] : memref<1x128x32xbf16, #tpu.memory_space<vmem>>, vector<1x128x32xbf16>
    %37 = vector.shape_cast %36 : vector<1x128x32xbf16> to vector<128x32xbf16>
    %c0_53 = arith.constant 0 : index
    %c0_54 = arith.constant 0 : index
    %c0_55 = arith.constant 0 : index
    %38 = vector.load %arg23[%c0_53, %c0_54, %c0_55] : memref<1x1x32xf32, #tpu.memory_space<vmem>>, vector<1x1x32xf32>
    %39 = vector.shape_cast %38 : vector<1x1x32xf32> to vector<1x32xf32>
    %c0_56 = arith.constant 0 : index
    %c0_57 = arith.constant 0 : index
    %40 = vector.load %arg27[%c0_56, %c0_57] : memref<20x32xf32, #tpu.memory_space<vmem>>, vector<20x32xf32>
    %41 = vector.extract_strided_slice %5 {offsets = [0, 0], sizes = [1, 32], strides = [1, 1]} : vector<4x32xf32> to vector<1x32xf32>
    %42 = vector.extract_strided_slice %5 {offsets = [1, 0], sizes = [1, 32], strides = [1, 1]} : vector<4x32xf32> to vector<1x32xf32>
    %cst = arith.constant dense<0.000000e+00> : vector<20xf32>
    %43 = vector.multi_reduction <add>, %40, %cst [1] : vector<20x32xf32> to vector<20xf32>
    %44 = vector.shape_cast %43 : vector<20xf32> to vector<20x1xf32>
    %cst_58 = arith.constant 3.200000e+01 : f32
    %45 = vector.broadcast %cst_58 : f32 to vector<20x1xf32>
    %46 = arith.divf %44, %45 : vector<20x1xf32>
    %47 = vector.broadcast %46 : vector<20x1xf32> to vector<20x32xf32>
    %48 = arith.subf %40, %47 : vector<20x32xf32>
    %49 = arith.mulf %48, %48 : vector<20x32xf32>
    %cst_59 = arith.constant dense<0.000000e+00> : vector<20xf32>
    %50 = vector.multi_reduction <add>, %49, %cst_59 [1] : vector<20x32xf32> to vector<20xf32>
    %51 = vector.shape_cast %50 : vector<20xf32> to vector<20x1xf32>
    %cst_60 = arith.constant 3.200000e+01 : f32
    %52 = vector.broadcast %cst_60 : f32 to vector<20x1xf32>
    %53 = arith.divf %51, %52 : vector<20x1xf32>
    %54 = vector.broadcast %46 : vector<20x1xf32> to vector<20x32xf32>
    %55 = arith.subf %40, %54 : vector<20x32xf32>
    %cst_61 = arith.constant 9.99999974E-6 : f32
    %56 = vector.broadcast %cst_61 : f32 to vector<20x1xf32>
    %57 = arith.addf %53, %56 : vector<20x1xf32>
    %58 = math.rsqrt %57 : vector<20x1xf32>
    %59 = vector.broadcast %58 : vector<20x1xf32> to vector<20x32xf32>
    %60 = arith.mulf %55, %59 : vector<20x32xf32>
    %61 = vector.broadcast %41 : vector<1x32xf32> to vector<20x32xf32>
    %62 = arith.mulf %60, %61 : vector<20x32xf32>
    %63 = vector.broadcast %42 : vector<1x32xf32> to vector<20x32xf32>
    %64 = arith.addf %62, %63 : vector<20x32xf32>
    %65 = arith.truncf %64 : vector<20x32xf32> to vector<20x32xbf16>
    %cst_62 = arith.constant dense<0.000000e+00> : vector<20x96xf32>
    %66 = tpu.matmul %65, %7, %cst_62 {dimension_numbers = #tpu.dot_dimension_numbers<[1], [0], [0], [1], [0, 0, 1, 1], [], []>} : vector<20x32xbf16>, vector<32x96xbf16>, vector<20x96xf32> -> vector<20x96xf32>
    %67 = vector.broadcast %9 : vector<1x96xf32> to vector<20x96xf32>
    %68 = arith.addf %66, %67 : vector<20x96xf32>
    %69 = vector.extract_strided_slice %68 {offsets = [0, 0], sizes = [20, 8], strides = [1, 1]} : vector<20x96xf32> to vector<20x8xf32>
    %70 = vector.extract_strided_slice %68 {offsets = [0, 32], sizes = [20, 8], strides = [1, 1]} : vector<20x96xf32> to vector<20x8xf32>
    %71 = vector.extract_strided_slice %68 {offsets = [0, 64], sizes = [20, 8], strides = [1, 1]} : vector<20x96xf32> to vector<20x8xf32>
    %cst_63 = arith.constant dense<0.000000e+00> : vector<20x20xf32>
    %72 = tpu.matmul %69, %70, %cst_63 {dimension_numbers = #tpu.dot_dimension_numbers<[1], [1], [0], [0], [0, 0, 1, 0], [], []>} : vector<20x8xf32>, vector<20x8xf32>, vector<20x20xf32> -> vector<20x20xf32>
    %cst_64 = arith.constant 0.353553385 : f32
    %73 = vector.broadcast %cst_64 : f32 to vector<20x20xf32>
    %74 = arith.mulf %72, %73 : vector<20x20xf32>
    %75 = arith.addf %74, %3 : vector<20x20xf32>
    %cst_65 = arith.constant dense<0xFF800000> : vector<20xf32>
    %76 = vector.multi_reduction <maximumf>, %75, %cst_65 [1] : vector<20x20xf32> to vector<20xf32>
    %77 = vector.shape_cast %76 : vector<20xf32> to vector<20x1xf32>
    %78 = vector.broadcast %77 : vector<20x1xf32> to vector<20x20xf32>
    %79 = arith.subf %75, %78 : vector<20x20xf32>
    %80 = math.exp %79 : vector<20x20xf32>
    %cst_66 = arith.constant dense<0.000000e+00> : vector<20xf32>
    %81 = vector.multi_reduction <add>, %80, %cst_66 [1] : vector<20x20xf32> to vector<20xf32>
    %82 = vector.shape_cast %81 : vector<20xf32> to vector<20x1xf32>
    %83 = tpu.reciprocal %82 {approx = true} : vector<20x1xf32> -> vector<20x1xf32>
    %84 = vector.broadcast %83 : vector<20x1xf32> to vector<20x20xf32>
    %85 = arith.mulf %80, %84 : vector<20x20xf32>
    %cst_67 = arith.constant dense<0.000000e+00> : vector<20x8xf32>
    %86 = tpu.matmul %85, %71, %cst_67 {dimension_numbers = #tpu.dot_dimension_numbers<[1], [0], [0], [1], [0, 0, 1, 1], [], []>} : vector<20x20xf32>, vector<20x8xf32>, vector<20x8xf32> -> vector<20x8xf32>
    %c0_68 = arith.constant 0 : index
    %c0_69 = arith.constant 0 : index
    %87 = vector.load %arg28[%c0_68, %c0_69] : memref<20x32xf32, #tpu.memory_space<vmem>>, vector<20x8xf32>
    tpu.vector_store %arg28[%c0_68, %c0_69], %86 {strides = array<i32>} : memref<20x32xf32, #tpu.memory_space<vmem>>, vector<20x8xf32>,
    %88 = vector.extract_strided_slice %68 {offsets = [0, 8], sizes = [20, 8], strides = [1, 1]} : vector<20x96xf32> to vector<20x8xf32>
    %89 = vector.extract_strided_slice %68 {offsets = [0, 40], sizes = [20, 8], strides = [1, 1]} : vector<20x96xf32> to vector<20x8xf32>
    %90 = vector.extract_strided_slice %68 {offsets = [0, 72], sizes = [20, 8], strides = [1, 1]} : vector<20x96xf32> to vector<20x8xf32>
    %cst_70 = arith.constant dense<0.000000e+00> : vector<20x20xf32>
    %91 = tpu.matmul %88, %89, %cst_70 {dimension_numbers = #tpu.dot_dimension_numbers<[1], [1], [0], [0], [0, 0, 1, 0], [], []>} : vector<20x8xf32>, vector<20x8xf32>, vector<20x20xf32> -> vector<20x20xf32>
    %cst_71 = arith.constant 0.353553385 : f32
    %92 = vector.broadcast %cst_71 : f32 to vector<20x20xf32>
    %93 = arith.mulf %91, %92 : vector<20x20xf32>
    %94 = arith.addf %93, %3 : vector<20x20xf32>
    %cst_72 = arith.constant dense<0xFF800000> : vector<20xf32>
    %95 = vector.multi_reduction <maximumf>, %94, %cst_72 [1] : vector<20x20xf32> to vector<20xf32>
    %96 = vector.shape_cast %95 : vector<20xf32> to vector<20x1xf32>
    %97 = vector.broadcast %96 : vector<20x1xf32> to vector<20x20xf32>
    %98 = arith.subf %94, %97 : vector<20x20xf32>
    %99 = math.exp %98 : vector<20x20xf32>
    %cst_73 = arith.constant dense<0.000000e+00> : vector<20xf32>
    %100 = vector.multi_reduction <add>, %99, %cst_73 [1] : vector<20x20xf32> to vector<20xf32>
    %101 = vector.shape_cast %100 : vector<20xf32> to vector<20x1xf32>
    %102 = tpu.reciprocal %101 {approx = true} : vector<20x1xf32> -> vector<20x1xf32>
    %103 = vector.broadcast %102 : vector<20x1xf32> to vector<20x20xf32>
    %104 = arith.mulf %99, %103 : vector<20x20xf32>
    %cst_74 = arith.constant dense<0.000000e+00> : vector<20x8xf32>
    %105 = tpu.matmul %104, %90, %cst_74 {dimension_numbers = #tpu.dot_dimension_numbers<[1], [0], [0], [1], [0, 0, 1, 1], [], []>} : vector<20x20xf32>, vector<20x8xf32>, vector<20x8xf32> -> vector<20x8xf32>
    %c0_75 = arith.constant 0 : index
    %c8 = arith.constant 8 : index
    %106 = vector.load %arg28[%c0_75, %c8] : memref<20x32xf32, #tpu.memory_space<vmem>>, vector<20x8xf32>
    tpu.vector_store %arg28[%c0_75, %c8], %105 {strides = array<i32>} : memref<20x32xf32, #tpu.memory_space<vmem>>, vector<20x8xf32>,
    %107 = vector.extract_strided_slice %68 {offsets = [0, 16], sizes = [20, 8], strides = [1, 1]} : vector<20x96xf32> to vector<20x8xf32>
    %108 = vector.extract_strided_slice %68 {offsets = [0, 48], sizes = [20, 8], strides = [1, 1]} : vector<20x96xf32> to vector<20x8xf32>
    %109 = vector.extract_strided_slice %68 {offsets = [0, 80], sizes = [20, 8], strides = [1, 1]} : vector<20x96xf32> to vector<20x8xf32>
    %cst_76 = arith.constant dense<0.000000e+00> : vector<20x20xf32>
    %110 = tpu.matmul %107, %108, %cst_76 {dimension_numbers = #tpu.dot_dimension_numbers<[1], [1], [0], [0], [0, 0, 1, 0], [], []>} : vector<20x8xf32>, vector<20x8xf32>, vector<20x20xf32> -> vector<20x20xf32>
    %cst_77 = arith.constant 0.353553385 : f32
    %111 = vector.broadcast %cst_77 : f32 to vector<20x20xf32>
    %112 = arith.mulf %110, %111 : vector<20x20xf32>
    %113 = arith.addf %112, %3 : vector<20x20xf32>
    %cst_78 = arith.constant dense<0xFF800000> : vector<20xf32>
    %114 = vector.multi_reduction <maximumf>, %113, %cst_78 [1] : vector<20x20xf32> to vector<20xf32>
    %115 = vector.shape_cast %114 : vector<20xf32> to vector<20x1xf32>
    %116 = vector.broadcast %115 : vector<20x1xf32> to vector<20x20xf32>
    %117 = arith.subf %113, %116 : vector<20x20xf32>
    %118 = math.exp %117 : vector<20x20xf32>
    %cst_79 = arith.constant dense<0.000000e+00> : vector<20xf32>
    %119 = vector.multi_reduction <add>, %118, %cst_79 [1] : vector<20x20xf32> to vector<20xf32>
    %120 = vector.shape_cast %119 : vector<20xf32> to vector<20x1xf32>
    %121 = tpu.reciprocal %120 {approx = true} : vector<20x1xf32> -> vector<20x1xf32>
    %122 = vector.broadcast %121 : vector<20x1xf32> to vector<20x20xf32>
    %123 = arith.mulf %118, %122 : vector<20x20xf32>
    %cst_80 = arith.constant dense<0.000000e+00> : vector<20x8xf32>
    %124 = tpu.matmul %123, %109, %cst_80 {dimension_numbers = #tpu.dot_dimension_numbers<[1], [0], [0], [1], [0, 0, 1, 1], [], []>} : vector<20x20xf32>, vector<20x8xf32>, vector<20x8xf32> -> vector<20x8xf32>
    %c0_81 = arith.constant 0 : index
    %c16 = arith.constant 16 : index
    %125 = vector.load %arg28[%c0_81, %c16] : memref<20x32xf32, #tpu.memory_space<vmem>>, vector<20x8xf32>
    tpu.vector_store %arg28[%c0_81, %c16], %124 {strides = array<i32>} : memref<20x32xf32, #tpu.memory_space<vmem>>, vector<20x8xf32>,
    %126 = vector.extract_strided_slice %68 {offsets = [0, 24], sizes = [20, 8], strides = [1, 1]} : vector<20x96xf32> to vector<20x8xf32>
    %127 = vector.extract_strided_slice %68 {offsets = [0, 56], sizes = [20, 8], strides = [1, 1]} : vector<20x96xf32> to vector<20x8xf32>
    %128 = vector.extract_strided_slice %68 {offsets = [0, 88], sizes = [20, 8], strides = [1, 1]} : vector<20x96xf32> to vector<20x8xf32>
    %cst_82 = arith.constant dense<0.000000e+00> : vector<20x20xf32>
    %129 = tpu.matmul %126, %127, %cst_82 {dimension_numbers = #tpu.dot_dimension_numbers<[1], [1], [0], [0], [0, 0, 1, 0], [], []>} : vector<20x8xf32>, vector<20x8xf32>, vector<20x20xf32> -> vector<20x20xf32>
    %cst_83 = arith.constant 0.353553385 : f32
    %130 = vector.broadcast %cst_83 : f32 to vector<20x20xf32>
    %131 = arith.mulf %129, %130 : vector<20x20xf32>
    %132 = arith.addf %131, %3 : vector<20x20xf32>
    %cst_84 = arith.constant dense<0xFF800000> : vector<20xf32>
    %133 = vector.multi_reduction <maximumf>, %132, %cst_84 [1] : vector<20x20xf32> to vector<20xf32>
    %134 = vector.shape_cast %133 : vector<20xf32> to vector<20x1xf32>
    %135 = vector.broadcast %134 : vector<20x1xf32> to vector<20x20xf32>
    %136 = arith.subf %132, %135 : vector<20x20xf32>
    %137 = math.exp %136 : vector<20x20xf32>
    %cst_85 = arith.constant dense<0.000000e+00> : vector<20xf32>
    %138 = vector.multi_reduction <add>, %137, %cst_85 [1] : vector<20x20xf32> to vector<20xf32>
    %139 = vector.shape_cast %138 : vector<20xf32> to vector<20x1xf32>
    %140 = tpu.reciprocal %139 {approx = true} : vector<20x1xf32> -> vector<20x1xf32>
    %141 = vector.broadcast %140 : vector<20x1xf32> to vector<20x20xf32>
    %142 = arith.mulf %137, %141 : vector<20x20xf32>
    %cst_86 = arith.constant dense<0.000000e+00> : vector<20x8xf32>
    %143 = tpu.matmul %142, %128, %cst_86 {dimension_numbers = #tpu.dot_dimension_numbers<[1], [0], [0], [1], [0, 0, 1, 1], [], []>} : vector<20x20xf32>, vector<20x8xf32>, vector<20x8xf32> -> vector<20x8xf32>
    %c0_87 = arith.constant 0 : index
    %c24 = arith.constant 24 : index
    %144 = vector.load %arg28[%c0_87, %c24] : memref<20x32xf32, #tpu.memory_space<vmem>>, vector<20x8xf32>
    tpu.vector_store %arg28[%c0_87, %c24], %143 {strides = array<i32>} : memref<20x32xf32, #tpu.memory_space<vmem>>, vector<20x8xf32>,
    %c0_88 = arith.constant 0 : index
    %c0_89 = arith.constant 0 : index
    %145 = vector.load %arg28[%c0_88, %c0_89] : memref<20x32xf32, #tpu.memory_space<vmem>>, vector<20x32xf32>
    %146 = arith.truncf %145 : vector<20x32xf32> to vector<20x32xbf16>
    %cst_90 = arith.constant dense<0.000000e+00> : vector<20x32xf32>
    %147 = tpu.matmul %146, %11, %cst_90 {dimension_numbers = #tpu.dot_dimension_numbers<[1], [0], [0], [1], [0, 0, 1, 1], [], []>} : vector<20x32xbf16>, vector<32x32xbf16>, vector<20x32xf32> -> vector<20x32xf32>
    %148 = vector.broadcast %13 : vector<1x32xf32> to vector<20x32xf32>
    %149 = arith.addf %147, %148 : vector<20x32xf32>
    %150 = arith.addf %40, %149 : vector<20x32xf32>
    %151 = vector.extract_strided_slice %5 {offsets = [2, 0], sizes = [1, 32], strides = [1, 1]} : vector<4x32xf32> to vector<1x32xf32>
    %152 = vector.extract_strided_slice %5 {offsets = [3, 0], sizes = [1, 32], strides = [1, 1]} : vector<4x32xf32> to vector<1x32xf32>
    %cst_91 = arith.constant dense<0.000000e+00> : vector<20xf32>
    %153 = vector.multi_reduction <add>, %150, %cst_91 [1] : vector<20x32xf32> to vector<20xf32>
    %154 = vector.shape_cast %153 : vector<20xf32> to vector<20x1xf32>
    %cst_92 = arith.constant 3.200000e+01 : f32
    %155 = vector.broadcast %cst_92 : f32 to vector<20x1xf32>
    %156 = arith.divf %154, %155 : vector<20x1xf32>
    %157 = vector.broadcast %156 : vector<20x1xf32> to vector<20x32xf32>
    %158 = arith.subf %150, %157 : vector<20x32xf32>
    %159 = arith.mulf %158, %158 : vector<20x32xf32>
    %cst_93 = arith.constant dense<0.000000e+00> : vector<20xf32>
    %160 = vector.multi_reduction <add>, %159, %cst_93 [1] : vector<20x32xf32> to vector<20xf32>
    %161 = vector.shape_cast %160 : vector<20xf32> to vector<20x1xf32>
    %cst_94 = arith.constant 3.200000e+01 : f32
    %162 = vector.broadcast %cst_94 : f32 to vector<20x1xf32>
    %163 = arith.divf %161, %162 : vector<20x1xf32>
    %164 = vector.broadcast %156 : vector<20x1xf32> to vector<20x32xf32>
    %165 = arith.subf %150, %164 : vector<20x32xf32>
    %cst_95 = arith.constant 9.99999974E-6 : f32
    %166 = vector.broadcast %cst_95 : f32 to vector<20x1xf32>
    %167 = arith.addf %163, %166 : vector<20x1xf32>
    %168 = math.rsqrt %167 : vector<20x1xf32>
    %169 = vector.broadcast %168 : vector<20x1xf32> to vector<20x32xf32>
    %170 = arith.mulf %165, %169 : vector<20x32xf32>
    %171 = vector.broadcast %151 : vector<1x32xf32> to vector<20x32xf32>
    %172 = arith.mulf %170, %171 : vector<20x32xf32>
    %173 = vector.broadcast %152 : vector<1x32xf32> to vector<20x32xf32>
    %174 = arith.addf %172, %173 : vector<20x32xf32>
    %175 = arith.truncf %174 : vector<20x32xf32> to vector<20x32xbf16>
    %cst_96 = arith.constant dense<0.000000e+00> : vector<20x128xf32>
    %176 = tpu.matmul %175, %15, %cst_96 {dimension_numbers = #tpu.dot_dimension_numbers<[1], [0], [0], [1], [0, 0, 1, 1], [], []>} : vector<20x32xbf16>, vector<32x128xbf16>, vector<20x128xf32> -> vector<20x128xf32>
    %177 = vector.broadcast %17 : vector<1x128xf32> to vector<20x128xf32>
    %178 = arith.addf %176, %177 : vector<20x128xf32>
    %179 = arith.mulf %178, %178 : vector<20x128xf32>
    %180 = arith.mulf %178, %179 : vector<20x128xf32>
    %cst_97 = arith.constant 4.471500e-02 : f32
    %181 = vector.broadcast %cst_97 : f32 to vector<20x128xf32>
    %182 = arith.mulf %181, %180 : vector<20x128xf32>
    %183 = arith.addf %178, %182 : vector<20x128xf32>
    %cst_98 = arith.constant 0.797884583 : f32
    %184 = vector.broadcast %cst_98 : f32 to vector<20x128xf32>
    %185 = arith.mulf %184, %183 : vector<20x128xf32>
    %186 = math.tanh %185 : vector<20x128xf32>
    %cst_99 = arith.constant 1.000000e+00 : f32
    %187 = vector.broadcast %cst_99 : f32 to vector<20x128xf32>
    %188 = arith.addf %187, %186 : vector<20x128xf32>
    %cst_100 = arith.constant 5.000000e-01 : f32
    %189 = vector.broadcast %cst_100 : f32 to vector<20x128xf32>
    %190 = arith.mulf %189, %188 : vector<20x128xf32>
    %191 = arith.mulf %178, %190 : vector<20x128xf32>
    %192 = arith.truncf %191 : vector<20x128xf32> to vector<20x128xbf16>
    %cst_101 = arith.constant dense<0.000000e+00> : vector<20x32xf32>
    %193 = tpu.matmul %192, %19, %cst_101 {dimension_numbers = #tpu.dot_dimension_numbers<[1], [0], [0], [1], [0, 0, 1, 1], [], []>} : vector<20x128xbf16>, vector<128x32xbf16>, vector<20x32xf32> -> vector<20x32xf32>
    %194 = arith.addf %150, %193 : vector<20x32xf32>
    %195 = vector.broadcast %21 : vector<1x32xf32> to vector<20x32xf32>
    %196 = arith.addf %194, %195 : vector<20x32xf32>
    %197 = vector.extract_strided_slice %196 {offsets = [0, 0], sizes = [10, 32], strides = [1, 1]} : vector<20x32xf32> to vector<10x32xf32>
    %198 = vector.extract_strided_slice %196 {offsets = [10, 0], sizes = [10, 32], strides = [1, 1]} : vector<20x32xf32> to vector<10x32xf32>
    %199 = vector.extract_strided_slice %3 {offsets = [0, 0], sizes = [10, 10], strides = [1, 1]} : vector<20x20xf32> to vector<10x10xf32>
    %200 = vector.extract_strided_slice %23 {offsets = [0, 0], sizes = [1, 32], strides = [1, 1]} : vector<4x32xf32> to vector<1x32xf32>
    %201 = vector.extract_strided_slice %23 {offsets = [1, 0], sizes = [1, 32], strides = [1, 1]} : vector<4x32xf32> to vector<1x32xf32>
    %cst_102 = arith.constant dense<0.000000e+00> : vector<10xf32>
    %202 = vector.multi_reduction <add>, %198, %cst_102 [1] : vector<10x32xf32> to vector<10xf32>
    %203 = vector.shape_cast %202 : vector<10xf32> to vector<10x1xf32>
    %cst_103 = arith.constant 3.200000e+01 : f32
    %204 = vector.broadcast %cst_103 : f32 to vector<10x1xf32>
    %205 = arith.divf %203, %204 : vector<10x1xf32>
    %206 = vector.broadcast %205 : vector<10x1xf32> to vector<10x32xf32>
    %207 = arith.subf %198, %206 : vector<10x32xf32>
    %208 = arith.mulf %207, %207 : vector<10x32xf32>
    %cst_104 = arith.constant dense<0.000000e+00> : vector<10xf32>
    %209 = vector.multi_reduction <add>, %208, %cst_104 [1] : vector<10x32xf32> to vector<10xf32>
    %210 = vector.shape_cast %209 : vector<10xf32> to vector<10x1xf32>
    %cst_105 = arith.constant 3.200000e+01 : f32
    %211 = vector.broadcast %cst_105 : f32 to vector<10x1xf32>
    %212 = arith.divf %210, %211 : vector<10x1xf32>
    %213 = vector.broadcast %205 : vector<10x1xf32> to vector<10x32xf32>
    %214 = arith.subf %198, %213 : vector<10x32xf32>
    %cst_106 = arith.constant 9.99999974E-6 : f32
    %215 = vector.broadcast %cst_106 : f32 to vector<10x1xf32>
    %216 = arith.addf %212, %215 : vector<10x1xf32>
    %217 = math.rsqrt %216 : vector<10x1xf32>
    %218 = vector.broadcast %217 : vector<10x1xf32> to vector<10x32xf32>
    %219 = arith.mulf %214, %218 : vector<10x32xf32>
    %220 = vector.broadcast %200 : vector<1x32xf32> to vector<10x32xf32>
    %221 = arith.mulf %219, %220 : vector<10x32xf32>
    %222 = vector.broadcast %201 : vector<1x32xf32> to vector<10x32xf32>
    %223 = arith.addf %221, %222 : vector<10x32xf32>
    %224 = arith.truncf %223 : vector<10x32xf32> to vector<10x32xbf16>
    %cst_107 = arith.constant dense<0.000000e+00> : vector<10x96xf32>
    %225 = tpu.matmul %224, %25, %cst_107 {dimension_numbers = #tpu.dot_dimension_numbers<[1], [0], [0], [1], [0, 0, 1, 1], [], []>} : vector<10x32xbf16>, vector<32x96xbf16>, vector<10x96xf32> -> vector<10x96xf32>
    %226 = vector.broadcast %27 : vector<1x96xf32> to vector<10x96xf32>
    %227 = arith.addf %225, %226 : vector<10x96xf32>
    %228 = vector.extract_strided_slice %227 {offsets = [0, 0], sizes = [10, 8], strides = [1, 1]} : vector<10x96xf32> to vector<10x8xf32>
    %229 = vector.extract_strided_slice %227 {offsets = [0, 32], sizes = [10, 8], strides = [1, 1]} : vector<10x96xf32> to vector<10x8xf32>
    %230 = vector.extract_strided_slice %227 {offsets = [0, 64], sizes = [10, 8], strides = [1, 1]} : vector<10x96xf32> to vector<10x8xf32>
    %cst_108 = arith.constant dense<0.000000e+00> : vector<10x10xf32>
    %231 = tpu.matmul %228, %229, %cst_108 {dimension_numbers = #tpu.dot_dimension_numbers<[1], [1], [0], [0], [0, 0, 1, 0], [], []>} : vector<10x8xf32>, vector<10x8xf32>, vector<10x10xf32> -> vector<10x10xf32>
    %cst_109 = arith.constant 0.353553385 : f32
    %232 = vector.broadcast %cst_109 : f32 to vector<10x10xf32>
    %233 = arith.mulf %231, %232 : vector<10x10xf32>
    %234 = arith.addf %233, %199 : vector<10x10xf32>
    %cst_110 = arith.constant dense<0xFF800000> : vector<10xf32>
    %235 = vector.multi_reduction <maximumf>, %234, %cst_110 [1] : vector<10x10xf32> to vector<10xf32>
    %236 = vector.shape_cast %235 : vector<10xf32> to vector<10x1xf32>
    %237 = vector.broadcast %236 : vector<10x1xf32> to vector<10x10xf32>
    %238 = arith.subf %234, %237 : vector<10x10xf32>
    %239 = math.exp %238 : vector<10x10xf32>
    %cst_111 = arith.constant dense<0.000000e+00> : vector<10xf32>
    %240 = vector.multi_reduction <add>, %239, %cst_111 [1] : vector<10x10xf32> to vector<10xf32>
    %241 = vector.shape_cast %240 : vector<10xf32> to vector<10x1xf32>
    %242 = tpu.reciprocal %241 {approx = true} : vector<10x1xf32> -> vector<10x1xf32>
    %243 = vector.broadcast %242 : vector<10x1xf32> to vector<10x10xf32>
    %244 = arith.mulf %239, %243 : vector<10x10xf32>
    %cst_112 = arith.constant dense<0.000000e+00> : vector<10x8xf32>
    %245 = tpu.matmul %244, %230, %cst_112 {dimension_numbers = #tpu.dot_dimension_numbers<[1], [0], [0], [1], [0, 0, 1, 1], [], []>} : vector<10x10xf32>, vector<10x8xf32>, vector<10x8xf32> -> vector<10x8xf32>
    %c0_113 = arith.constant 0 : index
    %c0_114 = arith.constant 0 : index
    %246 = vector.load %arg28[%c0_113, %c0_114] : memref<20x32xf32, #tpu.memory_space<vmem>>, vector<10x8xf32>
    tpu.vector_store %arg28[%c0_113, %c0_114], %245 {strides = array<i32>} : memref<20x32xf32, #tpu.memory_space<vmem>>, vector<10x8xf32>,
    %247 = vector.extract_strided_slice %227 {offsets = [0, 8], sizes = [10, 8], strides = [1, 1]} : vector<10x96xf32> to vector<10x8xf32>
    %248 = vector.extract_strided_slice %227 {offsets = [0, 40], sizes = [10, 8], strides = [1, 1]} : vector<10x96xf32> to vector<10x8xf32>
    %249 = vector.extract_strided_slice %227 {offsets = [0, 72], sizes = [10, 8], strides = [1, 1]} : vector<10x96xf32> to vector<10x8xf32>
    %cst_115 = arith.constant dense<0.000000e+00> : vector<10x10xf32>
    %250 = tpu.matmul %247, %248, %cst_115 {dimension_numbers = #tpu.dot_dimension_numbers<[1], [1], [0], [0], [0, 0, 1, 0], [], []>} : vector<10x8xf32>, vector<10x8xf32>, vector<10x10xf32> -> vector<10x10xf32>
    %cst_116 = arith.constant 0.353553385 : f32
    %251 = vector.broadcast %cst_116 : f32 to vector<10x10xf32>
    %252 = arith.mulf %250, %251 : vector<10x10xf32>
    %253 = arith.addf %252, %199 : vector<10x10xf32>
    %cst_117 = arith.constant dense<0xFF800000> : vector<10xf32>
    %254 = vector.multi_reduction <maximumf>, %253, %cst_117 [1] : vector<10x10xf32> to vector<10xf32>
    %255 = vector.shape_cast %254 : vector<10xf32> to vector<10x1xf32>
    %256 = vector.broadcast %255 : vector<10x1xf32> to vector<10x10xf32>
    %257 = arith.subf %253, %256 : vector<10x10xf32>
    %258 = math.exp %257 : vector<10x10xf32>
    %cst_118 = arith.constant dense<0.000000e+00> : vector<10xf32>
    %259 = vector.multi_reduction <add>, %258, %cst_118 [1] : vector<10x10xf32> to vector<10xf32>
    %260 = vector.shape_cast %259 : vector<10xf32> to vector<10x1xf32>
    %261 = tpu.reciprocal %260 {approx = true} : vector<10x1xf32> -> vector<10x1xf32>
    %262 = vector.broadcast %261 : vector<10x1xf32> to vector<10x10xf32>
    %263 = arith.mulf %258, %262 : vector<10x10xf32>
    %cst_119 = arith.constant dense<0.000000e+00> : vector<10x8xf32>
    %264 = tpu.matmul %263, %249, %cst_119 {dimension_numbers = #tpu.dot_dimension_numbers<[1], [0], [0], [1], [0, 0, 1, 1], [], []>} : vector<10x10xf32>, vector<10x8xf32>, vector<10x8xf32> -> vector<10x8xf32>
    %c0_120 = arith.constant 0 : index
    %c8_121 = arith.constant 8 : index
    %265 = vector.load %arg28[%c0_120, %c8_121] : memref<20x32xf32, #tpu.memory_space<vmem>>, vector<10x8xf32>
    tpu.vector_store %arg28[%c0_120, %c8_121], %264 {strides = array<i32>} : memref<20x32xf32, #tpu.memory_space<vmem>>, vector<10x8xf32>,
    %266 = vector.extract_strided_slice %227 {offsets = [0, 16], sizes = [10, 8], strides = [1, 1]} : vector<10x96xf32> to vector<10x8xf32>
    %267 = vector.extract_strided_slice %227 {offsets = [0, 48], sizes = [10, 8], strides = [1, 1]} : vector<10x96xf32> to vector<10x8xf32>
    %268 = vector.extract_strided_slice %227 {offsets = [0, 80], sizes = [10, 8], strides = [1, 1]} : vector<10x96xf32> to vector<10x8xf32>
    %cst_122 = arith.constant dense<0.000000e+00> : vector<10x10xf32>
    %269 = tpu.matmul %266, %267, %cst_122 {dimension_numbers = #tpu.dot_dimension_numbers<[1], [1], [0], [0], [0, 0, 1, 0], [], []>} : vector<10x8xf32>, vector<10x8xf32>, vector<10x10xf32> -> vector<10x10xf32>
    %cst_123 = arith.constant 0.353553385 : f32
    %270 = vector.broadcast %cst_123 : f32 to vector<10x10xf32>
    %271 = arith.mulf %269, %270 : vector<10x10xf32>
    %272 = arith.addf %271, %199 : vector<10x10xf32>
    %cst_124 = arith.constant dense<0xFF800000> : vector<10xf32>
    %273 = vector.multi_reduction <maximumf>, %272, %cst_124 [1] : vector<10x10xf32> to vector<10xf32>
    %274 = vector.shape_cast %273 : vector<10xf32> to vector<10x1xf32>
    %275 = vector.broadcast %274 : vector<10x1xf32> to vector<10x10xf32>
    %276 = arith.subf %272, %275 : vector<10x10xf32>
    %277 = math.exp %276 : vector<10x10xf32>
    %cst_125 = arith.constant dense<0.000000e+00> : vector<10xf32>
    %278 = vector.multi_reduction <add>, %277, %cst_125 [1] : vector<10x10xf32> to vector<10xf32>
    %279 = vector.shape_cast %278 : vector<10xf32> to vector<10x1xf32>
    %280 = tpu.reciprocal %279 {approx = true} : vector<10x1xf32> -> vector<10x1xf32>
    %281 = vector.broadcast %280 : vector<10x1xf32> to vector<10x10xf32>
    %282 = arith.mulf %277, %281 : vector<10x10xf32>
    %cst_126 = arith.constant dense<0.000000e+00> : vector<10x8xf32>
    %283 = tpu.matmul %282, %268, %cst_126 {dimension_numbers = #tpu.dot_dimension_numbers<[1], [0], [0], [1], [0, 0, 1, 1], [], []>} : vector<10x10xf32>, vector<10x8xf32>, vector<10x8xf32> -> vector<10x8xf32>
    %c0_127 = arith.constant 0 : index
    %c16_128 = arith.constant 16 : index
    %284 = vector.load %arg28[%c0_127, %c16_128] : memref<20x32xf32, #tpu.memory_space<vmem>>, vector<10x8xf32>
    tpu.vector_store %arg28[%c0_127, %c16_128], %283 {strides = array<i32>} : memref<20x32xf32, #tpu.memory_space<vmem>>, vector<10x8xf32>,
    %285 = vector.extract_strided_slice %227 {offsets = [0, 24], sizes = [10, 8], strides = [1, 1]} : vector<10x96xf32> to vector<10x8xf32>
    %286 = vector.extract_strided_slice %227 {offsets = [0, 56], sizes = [10, 8], strides = [1, 1]} : vector<10x96xf32> to vector<10x8xf32>
    %287 = vector.extract_strided_slice %227 {offsets = [0, 88], sizes = [10, 8], strides = [1, 1]} : vector<10x96xf32> to vector<10x8xf32>
    %cst_129 = arith.constant dense<0.000000e+00> : vector<10x10xf32>
    %288 = tpu.matmul %285, %286, %cst_129 {dimension_numbers = #tpu.dot_dimension_numbers<[1], [1], [0], [0], [0, 0, 1, 0], [], []>} : vector<10x8xf32>, vector<10x8xf32>, vector<10x10xf32> -> vector<10x10xf32>
    %cst_130 = arith.constant 0.353553385 : f32
    %289 = vector.broadcast %cst_130 : f32 to vector<10x10xf32>
    %290 = arith.mulf %288, %289 : vector<10x10xf32>
    %291 = arith.addf %290, %199 : vector<10x10xf32>
    %cst_131 = arith.constant dense<0xFF800000> : vector<10xf32>
    %292 = vector.multi_reduction <maximumf>, %291, %cst_131 [1] : vector<10x10xf32> to vector<10xf32>
    %293 = vector.shape_cast %292 : vector<10xf32> to vector<10x1xf32>
    %294 = vector.broadcast %293 : vector<10x1xf32> to vector<10x10xf32>
    %295 = arith.subf %291, %294 : vector<10x10xf32>
    %296 = math.exp %295 : vector<10x10xf32>
    %cst_132 = arith.constant dense<0.000000e+00> : vector<10xf32>
    %297 = vector.multi_reduction <add>, %296, %cst_132 [1] : vector<10x10xf32> to vector<10xf32>
    %298 = vector.shape_cast %297 : vector<10xf32> to vector<10x1xf32>
    %299 = tpu.reciprocal %298 {approx = true} : vector<10x1xf32> -> vector<10x1xf32>
    %300 = vector.broadcast %299 : vector<10x1xf32> to vector<10x10xf32>
    %301 = arith.mulf %296, %300 : vector<10x10xf32>
    %cst_133 = arith.constant dense<0.000000e+00> : vector<10x8xf32>
    %302 = tpu.matmul %301, %287, %cst_133 {dimension_numbers = #tpu.dot_dimension_numbers<[1], [0], [0], [1], [0, 0, 1, 1], [], []>} : vector<10x10xf32>, vector<10x8xf32>, vector<10x8xf32> -> vector<10x8xf32>
    %c0_134 = arith.constant 0 : index
    %c24_135 = arith.constant 24 : index
    %303 = vector.load %arg28[%c0_134, %c24_135] : memref<20x32xf32, #tpu.memory_space<vmem>>, vector<10x8xf32>
    tpu.vector_store %arg28[%c0_134, %c24_135], %302 {strides = array<i32>} : memref<20x32xf32, #tpu.memory_space<vmem>>, vector<10x8xf32>,
    %c0_136 = arith.constant 0 : index
    %c0_137 = arith.constant 0 : index
    %304 = vector.load %arg28[%c0_136, %c0_137] : memref<20x32xf32, #tpu.memory_space<vmem>>, vector<10x32xf32>
    %305 = arith.truncf %304 : vector<10x32xf32> to vector<10x32xbf16>
    %cst_138 = arith.constant dense<0.000000e+00> : vector<10x32xf32>
    %306 = tpu.matmul %305, %29, %cst_138 {dimension_numbers = #tpu.dot_dimension_numbers<[1], [0], [0], [1], [0, 0, 1, 1], [], []>} : vector<10x32xbf16>, vector<32x32xbf16>, vector<10x32xf32> -> vector<10x32xf32>
    %307 = vector.broadcast %31 : vector<1x32xf32> to vector<10x32xf32>
    %308 = arith.addf %306, %307 : vector<10x32xf32>
    %309 = arith.addf %198, %308 : vector<10x32xf32>
    %310 = vector.extract_strided_slice %23 {offsets = [2, 0], sizes = [1, 32], strides = [1, 1]} : vector<4x32xf32> to vector<1x32xf32>
    %311 = vector.extract_strided_slice %23 {offsets = [3, 0], sizes = [1, 32], strides = [1, 1]} : vector<4x32xf32> to vector<1x32xf32>
    %cst_139 = arith.constant dense<0.000000e+00> : vector<10xf32>
    %312 = vector.multi_reduction <add>, %309, %cst_139 [1] : vector<10x32xf32> to vector<10xf32>
    %313 = vector.shape_cast %312 : vector<10xf32> to vector<10x1xf32>
    %cst_140 = arith.constant 3.200000e+01 : f32
    %314 = vector.broadcast %cst_140 : f32 to vector<10x1xf32>
    %315 = arith.divf %313, %314 : vector<10x1xf32>
    %316 = vector.broadcast %315 : vector<10x1xf32> to vector<10x32xf32>
    %317 = arith.subf %309, %316 : vector<10x32xf32>
    %318 = arith.mulf %317, %317 : vector<10x32xf32>
    %cst_141 = arith.constant dense<0.000000e+00> : vector<10xf32>
    %319 = vector.multi_reduction <add>, %318, %cst_141 [1] : vector<10x32xf32> to vector<10xf32>
    %320 = vector.shape_cast %319 : vector<10xf32> to vector<10x1xf32>
    %cst_142 = arith.constant 3.200000e+01 : f32
    %321 = vector.broadcast %cst_142 : f32 to vector<10x1xf32>
    %322 = arith.divf %320, %321 : vector<10x1xf32>
    %323 = vector.broadcast %315 : vector<10x1xf32> to vector<10x32xf32>
    %324 = arith.subf %309, %323 : vector<10x32xf32>
    %cst_143 = arith.constant 9.99999974E-6 : f32
    %325 = vector.broadcast %cst_143 : f32 to vector<10x1xf32>
    %326 = arith.addf %322, %325 : vector<10x1xf32>
    %327 = math.rsqrt %326 : vector<10x1xf32>
    %328 = vector.broadcast %327 : vector<10x1xf32> to vector<10x32xf32>
    %329 = arith.mulf %324, %328 : vector<10x32xf32>
    %330 = vector.broadcast %310 : vector<1x32xf32> to vector<10x32xf32>
    %331 = arith.mulf %329, %330 : vector<10x32xf32>
    %332 = vector.broadcast %311 : vector<1x32xf32> to vector<10x32xf32>
    %333 = arith.addf %331, %332 : vector<10x32xf32>
    %334 = arith.truncf %333 : vector<10x32xf32> to vector<10x32xbf16>
    %cst_144 = arith.constant dense<0.000000e+00> : vector<10x128xf32>
    %335 = tpu.matmul %334, %33, %cst_144 {dimension_numbers = #tpu.dot_dimension_numbers<[1], [0], [0], [1], [0, 0, 1, 1], [], []>} : vector<10x32xbf16>, vector<32x128xbf16>, vector<10x128xf32> -> vector<10x128xf32>
    %336 = vector.broadcast %35 : vector<1x128xf32> to vector<10x128xf32>
    %337 = arith.addf %335, %336 : vector<10x128xf32>
    %338 = arith.mulf %337, %337 : vector<10x128xf32>
    %339 = arith.mulf %337, %338 : vector<10x128xf32>
    %cst_145 = arith.constant 4.471500e-02 : f32
    %340 = vector.broadcast %cst_145 : f32 to vector<10x128xf32>
    %341 = arith.mulf %340, %339 : vector<10x128xf32>
    %342 = arith.addf %337, %341 : vector<10x128xf32>
    %cst_146 = arith.constant 0.797884583 : f32
    %343 = vector.broadcast %cst_146 : f32 to vector<10x128xf32>
    %344 = arith.mulf %343, %342 : vector<10x128xf32>
    %345 = math.tanh %344 : vector<10x128xf32>
    %cst_147 = arith.constant 1.000000e+00 : f32
    %346 = vector.broadcast %cst_147 : f32 to vector<10x128xf32>
    %347 = arith.addf %346, %345 : vector<10x128xf32>
    %cst_148 = arith.constant 5.000000e-01 : f32
    %348 = vector.broadcast %cst_148 : f32 to vector<10x128xf32>
    %349 = arith.mulf %348, %347 : vector<10x128xf32>
    %350 = arith.mulf %337, %349 : vector<10x128xf32>
    %351 = arith.truncf %350 : vector<10x128xf32> to vector<10x128xbf16>
    %cst_149 = arith.constant dense<0.000000e+00> : vector<10x32xf32>
    %352 = tpu.matmul %351, %37, %cst_149 {dimension_numbers = #tpu.dot_dimension_numbers<[1], [0], [0], [1], [0, 0, 1, 1], [], []>} : vector<10x128xbf16>, vector<128x32xbf16>, vector<10x32xf32> -> vector<10x32xf32>
    %353 = arith.addf %309, %352 : vector<10x32xf32>
    %354 = vector.broadcast %39 : vector<1x32xf32> to vector<10x32xf32>
    %355 = arith.addf %353, %354 : vector<10x32xf32>
    %356 = arith.addf %197, %355 : vector<10x32xf32>
    %c0_150 = arith.constant 0 : index
    %c0_151 = arith.constant 0 : index
    %357 = vector.load %arg27[%c0_150, %c0_151] : memref<20x32xf32, #tpu.memory_space<vmem>>, vector<10x32xf32>
    tpu.vector_store %arg27[%c0_150, %c0_151], %356 {strides = array<i32>} : memref<20x32xf32, #tpu.memory_space<vmem>>, vector<10x32xf32>,
    %c10 = arith.constant 10 : index
    %c0_152 = arith.constant 0 : index
    %358 = vector.load %arg27[%c10, %c0_152] : memref<20x32xf32, #tpu.memory_space<vmem>>, vector<10x32xf32>
    tpu.vector_store %arg27[%c10, %c0_152], %198 {strides = array<i32>} : memref<20x32xf32, #tpu.memory_space<vmem>>, vector<10x32xf32>,
    %c1_i32 = arith.constant 1 : i32
    %359 = arith.cmpi eq, %arg0, %c1_i32 : i32
    %360 = arith.extui %359 : i1 to i32
    %c0_i32_153 = arith.constant 0 : i32
    %361 = arith.cmpi ne, %360, %c0_i32_153 : i32
    scf.if %361 {
      %c0_154 = arith.constant 0 : index
      %c0_155 = arith.constant 0 : index
      %362 = vector.load %arg27[%c0_154, %c0_155] : memref<20x32xf32, #tpu.memory_space<vmem>>, vector<1x32xf32>
      %c0_156 = arith.constant 0 : index
      %c0_157 = arith.constant 0 : index
      %363 = vector.load %arg28[%c0_156, %c0_157] : memref<20x32xf32, #tpu.memory_space<vmem>>, vector<1x32xf32>
      tpu.vector_store %arg28[%c0_156, %c0_157], %362 {strides = array<i32>} : memref<20x32xf32, #tpu.memory_space<vmem>>, vector<1x32xf32>,
      %c5 = arith.constant 5 : index
      %c0_158 = arith.constant 0 : index
      %364 = vector.load %arg27[%c5, %c0_158] : memref<20x32xf32, #tpu.memory_space<vmem>>, vector<1x32xf32>
      %c1 = arith.constant 1 : index
      %c0_159 = arith.constant 0 : index
      %365 = vector.load %arg28[%c1, %c0_159] : memref<20x32xf32, #tpu.memory_space<vmem>>, vector<1x32xf32>
      tpu.vector_store %arg28[%c1, %c0_159], %364 {strides = array<i32>} : memref<20x32xf32, #tpu.memory_space<vmem>>, vector<1x32xf32>,
      %c10_160 = arith.constant 10 : index
      %c0_161 = arith.constant 0 : index
      %366 = vector.load %arg27[%c10_160, %c0_161] : memref<20x32xf32, #tpu.memory_space<vmem>>, vector<1x32xf32>
      %c2 = arith.constant 2 : index
      %c0_162 = arith.constant 0 : index
      %367 = vector.load %arg28[%c2, %c0_162] : memref<20x32xf32, #tpu.memory_space<vmem>>, vector<1x32xf32>
      tpu.vector_store %arg28[%c2, %c0_162], %366 {strides = array<i32>} : memref<20x32xf32, #tpu.memory_space<vmem>>, vector<1x32xf32>,
      %c15 = arith.constant 15 : index
      %c0_163 = arith.constant 0 : index
      %368 = vector.load %arg27[%c15, %c0_163] : memref<20x32xf32, #tpu.memory_space<vmem>>, vector<1x32xf32>
      %c3 = arith.constant 3 : index
      %c0_164 = arith.constant 0 : index
      %369 = vector.load %arg28[%c3, %c0_164] : memref<20x32xf32, #tpu.memory_space<vmem>>, vector<1x32xf32>
      tpu.vector_store %arg28[%c3, %c0_164], %368 {strides = array<i32>} : memref<20x32xf32, #tpu.memory_space<vmem>>, vector<1x32xf32>,
      %c0_165 = arith.constant 0 : index
      %c0_166 = arith.constant 0 : index
      %370 = vector.load %arg28[%c0_165, %c0_166] : memref<20x32xf32, #tpu.memory_space<vmem>>, vector<4x32xf32>
      %c0_167 = arith.constant 0 : index
      %c0_168 = arith.constant 0 : index
      %371 = vector.load %arg24[%c0_167, %c0_168] : memref<2x32xf32, #tpu.memory_space<vmem>>, vector<2x32xf32>
      %c0_169 = arith.constant 0 : index
      %c0_170 = arith.constant 0 : index
      %372 = vector.load %arg25[%c0_169, %c0_170] : memref<32x32xbf16, #tpu.memory_space<vmem>>, vector<32x32xbf16>
      %373 = vector.extract_strided_slice %371 {offsets = [0, 0], sizes = [1, 32], strides = [1, 1]} : vector<2x32xf32> to vector<1x32xf32>
      %374 = vector.extract_strided_slice %371 {offsets = [1, 0], sizes = [1, 32], strides = [1, 1]} : vector<2x32xf32> to vector<1x32xf32>
      %cst_171 = arith.constant dense<0.000000e+00> : vector<4xf32>
      %375 = vector.multi_reduction <add>, %370, %cst_171 [1] : vector<4x32xf32> to vector<4xf32>
      %376 = vector.shape_cast %375 : vector<4xf32> to vector<4x1xf32>
      %cst_172 = arith.constant 3.200000e+01 : f32
      %377 = vector.broadcast %cst_172 : f32 to vector<4x1xf32>
      %378 = arith.divf %376, %377 : vector<4x1xf32>
      %379 = vector.broadcast %378 : vector<4x1xf32> to vector<4x32xf32>
      %380 = arith.subf %370, %379 : vector<4x32xf32>
      %381 = arith.mulf %380, %380 : vector<4x32xf32>
      %cst_173 = arith.constant dense<0.000000e+00> : vector<4xf32>
      %382 = vector.multi_reduction <add>, %381, %cst_173 [1] : vector<4x32xf32> to vector<4xf32>
      %383 = vector.shape_cast %382 : vector<4xf32> to vector<4x1xf32>
      %cst_174 = arith.constant 3.200000e+01 : f32
      %384 = vector.broadcast %cst_174 : f32 to vector<4x1xf32>
      %385 = arith.divf %383, %384 : vector<4x1xf32>
      %386 = vector.broadcast %378 : vector<4x1xf32> to vector<4x32xf32>
      %387 = arith.subf %370, %386 : vector<4x32xf32>
      %cst_175 = arith.constant 9.99999974E-6 : f32
      %388 = vector.broadcast %cst_175 : f32 to vector<4x1xf32>
      %389 = arith.addf %385, %388 : vector<4x1xf32>
      %390 = math.rsqrt %389 : vector<4x1xf32>
      %391 = vector.broadcast %390 : vector<4x1xf32> to vector<4x32xf32>
      %392 = arith.mulf %387, %391 : vector<4x32xf32>
      %393 = vector.broadcast %373 : vector<1x32xf32> to vector<4x32xf32>
      %394 = arith.mulf %392, %393 : vector<4x32xf32>
      %395 = vector.broadcast %374 : vector<1x32xf32> to vector<4x32xf32>
      %396 = arith.addf %394, %395 : vector<4x32xf32>
      %397 = arith.truncf %396 : vector<4x32xf32> to vector<4x32xbf16>
      %cst_176 = arith.constant dense<0.000000e+00> : vector<4x32xf32>
      %398 = tpu.matmul %397, %372, %cst_176 {dimension_numbers = #tpu.dot_dimension_numbers<[1], [0], [0], [1], [0, 0, 1, 1], [], []>} : vector<4x32xbf16>, vector<32x32xbf16>, vector<4x32xf32> -> vector<4x32xf32>
      %399 = arith.mulf %398, %398 : vector<4x32xf32>
      %cst_177 = arith.constant dense<0.000000e+00> : vector<4xf32>
      %400 = vector.multi_reduction <add>, %399, %cst_177 [1] : vector<4x32xf32> to vector<4xf32>
      %401 = vector.shape_cast %400 : vector<4xf32> to vector<4x1xf32>
      %cst_178 = arith.constant 1.000000e-24 : f32
      %402 = vector.broadcast %cst_178 : f32 to vector<4x1xf32>
      %403 = arith.maximumf %401, %402 : vector<4x1xf32>
      %404 = math.rsqrt %403 : vector<4x1xf32>
      %405 = vector.broadcast %404 : vector<4x1xf32> to vector<4x32xf32>
      %406 = arith.mulf %398, %405 : vector<4x32xf32>
      %c0_179 = arith.constant 0 : index
      %c0_180 = arith.constant 0 : index
      %407 = vector.load %arg26[%c0_179, %c0_180] : memref<4x32xf32, #tpu.memory_space<vmem>>, vector<4x32xf32>
      tpu.vector_store %arg26[%c0_179, %c0_180], %406 {strides = array<i32>} : memref<4x32xf32, #tpu.memory_space<vmem>>, vector<4x32xf32>,
    } else {
    }
    return
  }
  func.func @transform_0(%arg0: i32) -> (i32, i32) {
    %c0_i32 = arith.constant 0 : i32
    %c0_i32_0 = arith.constant 0 : i32
    %c0_i32_1 = arith.constant 0 : i32
    return %c0_i32, %c0_i32_0 : i32, i32
  }
  func.func @transform_1(%arg0: i32) -> (i32, i32) {
    %c0_i32 = arith.constant 0 : i32
    %c0_i32_0 = arith.constant 0 : i32
    %c0_i32_1 = arith.constant 0 : i32
    return %c0_i32, %c0_i32_0 : i32, i32
  }
  func.func @transform_2(%arg0: i32) -> (i32, i32) {
    %c0_i32 = arith.constant 0 : i32
    %c0_i32_0 = arith.constant 0 : i32
    %c0_i32_1 = arith.constant 0 : i32
    return %c0_i32, %c0_i32_0 : i32, i32
  }
  func.func @transform_3(%arg0: i32) -> (i32, i32) {
    %c0_i32 = arith.constant 0 : i32
    %c0_i32_0 = arith.constant 0 : i32
    %c0_i32_1 = arith.constant 0 : i32
    return %c0_i32, %c0_i32_0 : i32, i32
  }
  func.func @transform_4(%arg0: i32) -> (i32, i32) {
    %c0_i32 = arith.constant 0 : i32
    %c0_i32_0 = arith.constant 0 : i32
    %c0_i32_1 = arith.constant 0 : i32
    return %c0_i32, %c0_i32_0 : i32, i32
  }
  func.func @transform_5(%arg0: i32) -> (i32, i32, i32) {
    %c0_i32 = arith.constant 0 : i32
    %c0_i32_0 = arith.constant 0 : i32
    %c0_i32_1 = arith.constant 0 : i32
    return %arg0, %c0_i32, %c0_i32_0 : i32, i32, i32
  }
  func.func @transform_6(%arg0: i32) -> (i32, i32, i32) {
    %c0_i32 = arith.constant 0 : i32
    %c0_i32_0 = arith.constant 0 : i32
    %c0_i32_1 = arith.constant 0 : i32
    return %arg0, %c0_i32, %c0_i32_0 : i32, i32, i32
  }
  func.func @transform_7(%arg0: i32) -> (i32, i32, i32) {
    %c0_i32 = arith.constant 0 : i32
    %c0_i32_0 = arith.constant 0 : i32
    %c0_i32_1 = arith.constant 0 : i32
    return %arg0, %c0_i32, %c0_i32_0 : i32, i32, i32
  }
  func.func @transform_8(%arg0: i32) -> (i32, i32, i32) {
    %c0_i32 = arith.constant 0 : i32
    %c0_i32_0 = arith.constant 0 : i32
    %c0_i32_1 = arith.constant 0 : i32
    return %arg0, %c0_i32, %c0_i32_0 : i32, i32, i32
  }
  func.func @transform_9(%arg0: i32) -> (i32, i32, i32) {
    %c0_i32 = arith.constant 0 : i32
    %c0_i32_0 = arith.constant 0 : i32
    %c0_i32_1 = arith.constant 0 : i32
    return %arg0, %c0_i32, %c0_i32_0 : i32, i32, i32
  }
  func.func @transform_10(%arg0: i32) -> (i32, i32, i32) {
    %c0_i32 = arith.constant 0 : i32
    %c0_i32_0 = arith.constant 0 : i32
    %c0_i32_1 = arith.constant 0 : i32
    return %arg0, %c0_i32, %c0_i32_0 : i32, i32, i32
  }
  func.func @transform_11(%arg0: i32) -> (i32, i32, i32) {
    %c0_i32 = arith.constant 0 : i32
    %c0_i32_0 = arith.constant 0 : i32
    %c0_i32_1 = arith.constant 0 : i32
    return %arg0, %c0_i32, %c0_i32_0 : i32, i32, i32
  }
  func.func @transform_12(%arg0: i32) -> (i32, i32, i32) {
    %c0_i32 = arith.constant 0 : i32
    %c0_i32_0 = arith.constant 0 : i32
    %c0_i32_1 = arith.constant 0 : i32
    return %arg0, %c0_i32, %c0_i32_0 : i32, i32, i32
  }
  func.func @transform_13(%arg0: i32) -> (i32, i32, i32) {
    %c0_i32 = arith.constant 0 : i32
    %c0_i32_0 = arith.constant 0 : i32
    %c0_i32_1 = arith.constant 0 : i32
    return %arg0, %c0_i32, %c0_i32_0 : i32, i32, i32
  }
  func.func @transform_14(%arg0: i32) -> (i32, i32, i32) {
    %c0_i32 = arith.constant 0 : i32
    %c0_i32_0 = arith.constant 0 : i32
    %c0_i32_1 = arith.constant 0 : i32
    return %arg0, %c0_i32, %c0_i32_0 : i32, i32, i32
  }
  func.func @transform_15(%arg0: i32) -> (i32, i32, i32) {
    %c0_i32 = arith.constant 0 : i32
    %c0_i32_0 = arith.constant 0 : i32
    %c0_i32_1 = arith.constant 0 : i32
    return %arg0, %c0_i32, %c0_i32_0 : i32, i32, i32
  }
  func.func @transform_16(%arg0: i32) -> (i32, i32, i32) {
    %c0_i32 = arith.constant 0 : i32
    %c0_i32_0 = arith.constant 0 : i32
    %c0_i32_1 = arith.constant 0 : i32
    return %arg0, %c0_i32, %c0_i32_0 : i32, i32, i32
  }
  func.func @transform_17(%arg0: i32) -> (i32, i32, i32) {
    %c0_i32 = arith.constant 0 : i32
    %c0_i32_0 = arith.constant 0 : i32
    %c0_i32_1 = arith.constant 0 : i32
    return %arg0, %c0_i32, %c0_i32_0 : i32, i32, i32
  }
  func.func @transform_18(%arg0: i32) -> (i32, i32, i32) {
    %c0_i32 = arith.constant 0 : i32
    %c0_i32_0 = arith.constant 0 : i32
    %c0_i32_1 = arith.constant 0 : i32
    return %arg0, %c0_i32, %c0_i32_0 : i32, i32, i32
  }
  func.func @transform_19(%arg0: i32) -> (i32, i32, i32) {
    %c0_i32 = arith.constant 0 : i32
    %c0_i32_0 = arith.constant 0 : i32
    %c0_i32_1 = arith.constant 0 : i32
    return %arg0, %c0_i32, %c0_i32_0 : i32, i32, i32
  }
  func.func @transform_20(%arg0: i32) -> (i32, i32, i32) {
    %c0_i32 = arith.constant 0 : i32
    %c0_i32_0 = arith.constant 0 : i32
    %c0_i32_1 = arith.constant 0 : i32
    return %arg0, %c0_i32, %c0_i32_0 : i32, i32, i32
  }
  func.func @transform_21(%arg0: i32) -> (i32, i32, i32) {
    %c0_i32 = arith.constant 0 : i32
    %c0_i32_0 = arith.constant 0 : i32
    %c0_i32_1 = arith.constant 0 : i32
    return %arg0, %c0_i32, %c0_i32_0 : i32, i32, i32
  }
  func.func @transform_22(%arg0: i32) -> (i32, i32, i32) {
    %c0_i32 = arith.constant 0 : i32
    %c0_i32_0 = arith.constant 0 : i32
    %c0_i32_1 = arith.constant 0 : i32
    return %arg0, %c0_i32, %c0_i32_0 : i32, i32, i32
  }
  func.func @transform_23(%arg0: i32) -> (i32, i32) {
    %c0_i32 = arith.constant 0 : i32
    %c0_i32_0 = arith.constant 0 : i32
    %c0_i32_1 = arith.constant 0 : i32
    return %c0_i32, %c0_i32_0 : i32, i32
  }
  func.func @transform_24(%arg0: i32) -> (i32, i32) {
    %c0_i32 = arith.constant 0 : i32
    %c0_i32_0 = arith.constant 0 : i32
    %c0_i32_1 = arith.constant 0 : i32
    return %c0_i32, %c0_i32_0 : i32, i32
  }
  func.func @transform_25(%arg0: i32) -> (i32, i32) {
    %c0_i32 = arith.constant 0 : i32
    %c0_i32_0 = arith.constant 0 : i32
    %c0_i32_1 = arith.constant 0 : i32
    return %c0_i32, %c0_i32_0 : i32, i32
  }
}

module attributes {stable_mosaic.version = 11 : i64} {
  func.func @_text_tower_kernel(%arg0: i32, %arg1: memref<4xi32, #tpu.memory_space<smem>>, %arg2: memref<32x32xf32, #tpu.memory_space<vmem>>, %arg3: memref<32x32xf32, #tpu.memory_space<vmem>>, %arg4: memref<1x4x32xf32, #tpu.memory_space<vmem>>, %arg5: memref<1x32x96xbf16, #tpu.memory_space<vmem>>, %arg6: memref<1x1x96xf32, #tpu.memory_space<vmem>>, %arg7: memref<1x32x32xbf16, #tpu.memory_space<vmem>>, %arg8: memref<1x1x32xf32, #tpu.memory_space<vmem>>, %arg9: memref<1x32x128xbf16, #tpu.memory_space<vmem>>, %arg10: memref<1x1x128xf32, #tpu.memory_space<vmem>>, %arg11: memref<1x128x32xbf16, #tpu.memory_space<vmem>>, %arg12: memref<1x1x32xf32, #tpu.memory_space<vmem>>, %arg13: memref<2x32xf32, #tpu.memory_space<vmem>>, %arg14: memref<32x32xbf16, #tpu.memory_space<vmem>>, %arg15: memref<4x32xf32, #tpu.memory_space<vmem>>, %arg16: memref<32x32xf32, #tpu.memory_space<vmem>>, %arg17: memref<32x32xf32, #tpu.memory_space<vmem>>) attributes {dimension_semantics = [#tpu.dimension_semantics<arbitrary>], iteration_bounds = array<i64: 2>, scalar_prefetch = 1 : i64, scratch_operands = 2 : i64, tpu.core_type = #tpu.core_type<tc>, window_params = [{pipeline_mode = #tpu.pipeline_mode<synchronous>, transform_indices = @transform_0, window_bounds = array<i64: 32, 32>}, {pipeline_mode = #tpu.pipeline_mode<synchronous>, transform_indices = @transform_1, window_bounds = array<i64: 32, 32>}, {transform_indices = @transform_2, window_bounds = array<i64: 1, 4, 32>}, {transform_indices = @transform_3, window_bounds = array<i64: 1, 32, 96>}, {transform_indices = @transform_4, window_bounds = array<i64: 1, 1, 96>}, {transform_indices = @transform_5, window_bounds = array<i64: 1, 32, 32>}, {transform_indices = @transform_6, window_bounds = array<i64: 1, 1, 32>}, {transform_indices = @transform_7, window_bounds = array<i64: 1, 32, 128>}, {transform_indices = @transform_8, window_bounds = array<i64: 1, 1, 128>}, {transform_indices = @transform_9, window_bounds = array<i64: 1, 128, 32>}, {transform_indices = @transform_10, window_bounds = array<i64: 1, 1, 32>}, {pipeline_mode = #tpu.pipeline_mode<synchronous>, transform_indices = @transform_11, window_bounds = array<i64: 2, 32>}, {pipeline_mode = #tpu.pipeline_mode<synchronous>, transform_indices = @transform_12, window_bounds = array<i64: 32, 32>}, {pipeline_mode = #tpu.pipeline_mode<synchronous>, transform_indices = @transform_13, window_bounds = array<i64: 4, 32>}]} {
    %c0_i32 = arith.constant 0 : i32
    %0 = arith.cmpi eq, %arg0, %c0_i32 : i32
    %1 = arith.extui %0 : i1 to i32
    %c0_i32_0 = arith.constant 0 : i32
    %2 = arith.cmpi ne, %1, %c0_i32_0 : i32
    scf.if %2 {
      %c0_78 = arith.constant 0 : index
      %c0_79 = arith.constant 0 : index
      %183 = vector.load %arg2[%c0_78, %c0_79] : memref<32x32xf32, #tpu.memory_space<vmem>>, vector<32x32xf32>
      %c0_80 = arith.constant 0 : index
      %c0_81 = arith.constant 0 : index
      %184 = vector.load %arg16[%c0_80, %c0_81] : memref<32x32xf32, #tpu.memory_space<vmem>>, vector<32x32xf32>
      tpu.vector_store %arg16[%c0_80, %c0_81], %183 {strides = array<i32>} : memref<32x32xf32, #tpu.memory_space<vmem>>, vector<32x32xf32>,
    } else {
    }
    %c0 = arith.constant 0 : index
    %c0_1 = arith.constant 0 : index
    %c0_2 = arith.constant 0 : index
    %3 = vector.load %arg4[%c0, %c0_1, %c0_2] : memref<1x4x32xf32, #tpu.memory_space<vmem>>, vector<1x4x32xf32>
    %4 = vector.shape_cast %3 : vector<1x4x32xf32> to vector<4x32xf32>
    %c0_3 = arith.constant 0 : index
    %c0_4 = arith.constant 0 : index
    %c0_5 = arith.constant 0 : index
    %5 = vector.load %arg5[%c0_3, %c0_4, %c0_5] : memref<1x32x96xbf16, #tpu.memory_space<vmem>>, vector<1x32x96xbf16>
    %6 = vector.shape_cast %5 : vector<1x32x96xbf16> to vector<32x96xbf16>
    %c0_6 = arith.constant 0 : index
    %c0_7 = arith.constant 0 : index
    %c0_8 = arith.constant 0 : index
    %7 = vector.load %arg6[%c0_6, %c0_7, %c0_8] : memref<1x1x96xf32, #tpu.memory_space<vmem>>, vector<1x1x96xf32>
    %8 = vector.shape_cast %7 : vector<1x1x96xf32> to vector<1x96xf32>
    %c0_9 = arith.constant 0 : index
    %c0_10 = arith.constant 0 : index
    %c0_11 = arith.constant 0 : index
    %9 = vector.load %arg7[%c0_9, %c0_10, %c0_11] : memref<1x32x32xbf16, #tpu.memory_space<vmem>>, vector<1x32x32xbf16>
    %10 = vector.shape_cast %9 : vector<1x32x32xbf16> to vector<32x32xbf16>
    %c0_12 = arith.constant 0 : index
    %c0_13 = arith.constant 0 : index
    %c0_14 = arith.constant 0 : index
    %11 = vector.load %arg8[%c0_12, %c0_13, %c0_14] : memref<1x1x32xf32, #tpu.memory_space<vmem>>, vector<1x1x32xf32>
    %12 = vector.shape_cast %11 : vector<1x1x32xf32> to vector<1x32xf32>
    %c0_15 = arith.constant 0 : index
    %c0_16 = arith.constant 0 : index
    %c0_17 = arith.constant 0 : index
    %13 = vector.load %arg9[%c0_15, %c0_16, %c0_17] : memref<1x32x128xbf16, #tpu.memory_space<vmem>>, vector<1x32x128xbf16>
    %14 = vector.shape_cast %13 : vector<1x32x128xbf16> to vector<32x128xbf16>
    %c0_18 = arith.constant 0 : index
    %c0_19 = arith.constant 0 : index
    %c0_20 = arith.constant 0 : index
    %15 = vector.load %arg10[%c0_18, %c0_19, %c0_20] : memref<1x1x128xf32, #tpu.memory_space<vmem>>, vector<1x1x128xf32>
    %16 = vector.shape_cast %15 : vector<1x1x128xf32> to vector<1x128xf32>
    %c0_21 = arith.constant 0 : index
    %c0_22 = arith.constant 0 : index
    %c0_23 = arith.constant 0 : index
    %17 = vector.load %arg11[%c0_21, %c0_22, %c0_23] : memref<1x128x32xbf16, #tpu.memory_space<vmem>>, vector<1x128x32xbf16>
    %18 = vector.shape_cast %17 : vector<1x128x32xbf16> to vector<128x32xbf16>
    %c0_24 = arith.constant 0 : index
    %c0_25 = arith.constant 0 : index
    %c0_26 = arith.constant 0 : index
    %19 = vector.load %arg12[%c0_24, %c0_25, %c0_26] : memref<1x1x32xf32, #tpu.memory_space<vmem>>, vector<1x1x32xf32>
    %20 = vector.shape_cast %19 : vector<1x1x32xf32> to vector<1x32xf32>
    %c0_27 = arith.constant 0 : index
    %c0_28 = arith.constant 0 : index
    %21 = vector.load %arg16[%c0_27, %c0_28] : memref<32x32xf32, #tpu.memory_space<vmem>>, vector<32x32xf32>
    %c0_29 = arith.constant 0 : index
    %c0_30 = arith.constant 0 : index
    %22 = vector.load %arg3[%c0_29, %c0_30] : memref<32x32xf32, #tpu.memory_space<vmem>>, vector<32x32xf32>
    %23 = vector.extract_strided_slice %4 {offsets = [0, 0], sizes = [1, 32], strides = [1, 1]} : vector<4x32xf32> to vector<1x32xf32>
    %24 = vector.extract_strided_slice %4 {offsets = [1, 0], sizes = [1, 32], strides = [1, 1]} : vector<4x32xf32> to vector<1x32xf32>
    %cst = arith.constant dense<0.000000e+00> : vector<32xf32>
    %25 = vector.multi_reduction <add>, %21, %cst [1] : vector<32x32xf32> to vector<32xf32>
    %26 = vector.shape_cast %25 : vector<32xf32> to vector<32x1xf32>
    %cst_31 = arith.constant 3.200000e+01 : f32
    %27 = vector.broadcast %cst_31 : f32 to vector<32x1xf32>
    %28 = arith.divf %26, %27 : vector<32x1xf32>
    %29 = vector.broadcast %28 : vector<32x1xf32> to vector<32x32xf32>
    %30 = arith.subf %21, %29 : vector<32x32xf32>
    %31 = arith.mulf %30, %30 : vector<32x32xf32>
    %cst_32 = arith.constant dense<0.000000e+00> : vector<32xf32>
    %32 = vector.multi_reduction <add>, %31, %cst_32 [1] : vector<32x32xf32> to vector<32xf32>
    %33 = vector.shape_cast %32 : vector<32xf32> to vector<32x1xf32>
    %cst_33 = arith.constant 3.200000e+01 : f32
    %34 = vector.broadcast %cst_33 : f32 to vector<32x1xf32>
    %35 = arith.divf %33, %34 : vector<32x1xf32>
    %36 = vector.broadcast %28 : vector<32x1xf32> to vector<32x32xf32>
    %37 = arith.subf %21, %36 : vector<32x32xf32>
    %cst_34 = arith.constant 9.99999974E-6 : f32
    %38 = vector.broadcast %cst_34 : f32 to vector<32x1xf32>
    %39 = arith.addf %35, %38 : vector<32x1xf32>
    %40 = math.rsqrt %39 : vector<32x1xf32>
    %41 = vector.broadcast %40 : vector<32x1xf32> to vector<32x32xf32>
    %42 = arith.mulf %37, %41 : vector<32x32xf32>
    %43 = vector.broadcast %23 : vector<1x32xf32> to vector<32x32xf32>
    %44 = arith.mulf %42, %43 : vector<32x32xf32>
    %45 = vector.broadcast %24 : vector<1x32xf32> to vector<32x32xf32>
    %46 = arith.addf %44, %45 : vector<32x32xf32>
    %47 = arith.truncf %46 : vector<32x32xf32> to vector<32x32xbf16>
    %cst_35 = arith.constant dense<0.000000e+00> : vector<32x96xf32>
    %48 = tpu.matmul %47, %6, %cst_35 {dimension_numbers = #tpu.dot_dimension_numbers<[1], [0], [0], [1], [0, 0, 1, 1], [], []>} : vector<32x32xbf16>, vector<32x96xbf16>, vector<32x96xf32> -> vector<32x96xf32>
    %49 = vector.broadcast %8 : vector<1x96xf32> to vector<32x96xf32>
    %50 = arith.addf %48, %49 : vector<32x96xf32>
    %51 = vector.extract_strided_slice %50 {offsets = [0, 0], sizes = [32, 8], strides = [1, 1]} : vector<32x96xf32> to vector<32x8xf32>
    %52 = vector.extract_strided_slice %50 {offsets = [0, 32], sizes = [32, 8], strides = [1, 1]} : vector<32x96xf32> to vector<32x8xf32>
    %53 = vector.extract_strided_slice %50 {offsets = [0, 64], sizes = [32, 8], strides = [1, 1]} : vector<32x96xf32> to vector<32x8xf32>
    %cst_36 = arith.constant dense<0.000000e+00> : vector<32x32xf32>
    %54 = tpu.matmul %51, %52, %cst_36 {dimension_numbers = #tpu.dot_dimension_numbers<[1], [1], [0], [0], [0, 0, 1, 0], [], []>} : vector<32x8xf32>, vector<32x8xf32>, vector<32x32xf32> -> vector<32x32xf32>
    %cst_37 = arith.constant 0.353553385 : f32
    %55 = vector.broadcast %cst_37 : f32 to vector<32x32xf32>
    %56 = arith.mulf %54, %55 : vector<32x32xf32>
    %57 = arith.addf %56, %22 : vector<32x32xf32>
    %cst_38 = arith.constant dense<0xFF800000> : vector<32xf32>
    %58 = vector.multi_reduction <maximumf>, %57, %cst_38 [1] : vector<32x32xf32> to vector<32xf32>
    %59 = vector.shape_cast %58 : vector<32xf32> to vector<32x1xf32>
    %60 = vector.broadcast %59 : vector<32x1xf32> to vector<32x32xf32>
    %61 = arith.subf %57, %60 : vector<32x32xf32>
    %62 = math.exp %61 : vector<32x32xf32>
    %cst_39 = arith.constant dense<0.000000e+00> : vector<32xf32>
    %63 = vector.multi_reduction <add>, %62, %cst_39 [1] : vector<32x32xf32> to vector<32xf32>
    %64 = vector.shape_cast %63 : vector<32xf32> to vector<32x1xf32>
    %65 = tpu.reciprocal %64 {approx = true} : vector<32x1xf32> -> vector<32x1xf32>
    %66 = vector.broadcast %65 : vector<32x1xf32> to vector<32x32xf32>
    %67 = arith.mulf %62, %66 : vector<32x32xf32>
    %cst_40 = arith.constant dense<0.000000e+00> : vector<32x8xf32>
    %68 = tpu.matmul %67, %53, %cst_40 {dimension_numbers = #tpu.dot_dimension_numbers<[1], [0], [0], [1], [0, 0, 1, 1], [], []>} : vector<32x32xf32>, vector<32x8xf32>, vector<32x8xf32> -> vector<32x8xf32>
    %c0_41 = arith.constant 0 : index
    %c0_42 = arith.constant 0 : index
    %69 = vector.load %arg17[%c0_41, %c0_42] : memref<32x32xf32, #tpu.memory_space<vmem>>, vector<32x8xf32>
    tpu.vector_store %arg17[%c0_41, %c0_42], %68 {strides = array<i32>} : memref<32x32xf32, #tpu.memory_space<vmem>>, vector<32x8xf32>,
    %70 = vector.extract_strided_slice %50 {offsets = [0, 8], sizes = [32, 8], strides = [1, 1]} : vector<32x96xf32> to vector<32x8xf32>
    %71 = vector.extract_strided_slice %50 {offsets = [0, 40], sizes = [32, 8], strides = [1, 1]} : vector<32x96xf32> to vector<32x8xf32>
    %72 = vector.extract_strided_slice %50 {offsets = [0, 72], sizes = [32, 8], strides = [1, 1]} : vector<32x96xf32> to vector<32x8xf32>
    %cst_43 = arith.constant dense<0.000000e+00> : vector<32x32xf32>
    %73 = tpu.matmul %70, %71, %cst_43 {dimension_numbers = #tpu.dot_dimension_numbers<[1], [1], [0], [0], [0, 0, 1, 0], [], []>} : vector<32x8xf32>, vector<32x8xf32>, vector<32x32xf32> -> vector<32x32xf32>
    %cst_44 = arith.constant 0.353553385 : f32
    %74 = vector.broadcast %cst_44 : f32 to vector<32x32xf32>
    %75 = arith.mulf %73, %74 : vector<32x32xf32>
    %76 = arith.addf %75, %22 : vector<32x32xf32>
    %cst_45 = arith.constant dense<0xFF800000> : vector<32xf32>
    %77 = vector.multi_reduction <maximumf>, %76, %cst_45 [1] : vector<32x32xf32> to vector<32xf32>
    %78 = vector.shape_cast %77 : vector<32xf32> to vector<32x1xf32>
    %79 = vector.broadcast %78 : vector<32x1xf32> to vector<32x32xf32>
    %80 = arith.subf %76, %79 : vector<32x32xf32>
    %81 = math.exp %80 : vector<32x32xf32>
    %cst_46 = arith.constant dense<0.000000e+00> : vector<32xf32>
    %82 = vector.multi_reduction <add>, %81, %cst_46 [1] : vector<32x32xf32> to vector<32xf32>
    %83 = vector.shape_cast %82 : vector<32xf32> to vector<32x1xf32>
    %84 = tpu.reciprocal %83 {approx = true} : vector<32x1xf32> -> vector<32x1xf32>
    %85 = vector.broadcast %84 : vector<32x1xf32> to vector<32x32xf32>
    %86 = arith.mulf %81, %85 : vector<32x32xf32>
    %cst_47 = arith.constant dense<0.000000e+00> : vector<32x8xf32>
    %87 = tpu.matmul %86, %72, %cst_47 {dimension_numbers = #tpu.dot_dimension_numbers<[1], [0], [0], [1], [0, 0, 1, 1], [], []>} : vector<32x32xf32>, vector<32x8xf32>, vector<32x8xf32> -> vector<32x8xf32>
    %c0_48 = arith.constant 0 : index
    %c8 = arith.constant 8 : index
    %88 = vector.load %arg17[%c0_48, %c8] : memref<32x32xf32, #tpu.memory_space<vmem>>, vector<32x8xf32>
    tpu.vector_store %arg17[%c0_48, %c8], %87 {strides = array<i32>} : memref<32x32xf32, #tpu.memory_space<vmem>>, vector<32x8xf32>,
    %89 = vector.extract_strided_slice %50 {offsets = [0, 16], sizes = [32, 8], strides = [1, 1]} : vector<32x96xf32> to vector<32x8xf32>
    %90 = vector.extract_strided_slice %50 {offsets = [0, 48], sizes = [32, 8], strides = [1, 1]} : vector<32x96xf32> to vector<32x8xf32>
    %91 = vector.extract_strided_slice %50 {offsets = [0, 80], sizes = [32, 8], strides = [1, 1]} : vector<32x96xf32> to vector<32x8xf32>
    %cst_49 = arith.constant dense<0.000000e+00> : vector<32x32xf32>
    %92 = tpu.matmul %89, %90, %cst_49 {dimension_numbers = #tpu.dot_dimension_numbers<[1], [1], [0], [0], [0, 0, 1, 0], [], []>} : vector<32x8xf32>, vector<32x8xf32>, vector<32x32xf32> -> vector<32x32xf32>
    %cst_50 = arith.constant 0.353553385 : f32
    %93 = vector.broadcast %cst_50 : f32 to vector<32x32xf32>
    %94 = arith.mulf %92, %93 : vector<32x32xf32>
    %95 = arith.addf %94, %22 : vector<32x32xf32>
    %cst_51 = arith.constant dense<0xFF800000> : vector<32xf32>
    %96 = vector.multi_reduction <maximumf>, %95, %cst_51 [1] : vector<32x32xf32> to vector<32xf32>
    %97 = vector.shape_cast %96 : vector<32xf32> to vector<32x1xf32>
    %98 = vector.broadcast %97 : vector<32x1xf32> to vector<32x32xf32>
    %99 = arith.subf %95, %98 : vector<32x32xf32>
    %100 = math.exp %99 : vector<32x32xf32>
    %cst_52 = arith.constant dense<0.000000e+00> : vector<32xf32>
    %101 = vector.multi_reduction <add>, %100, %cst_52 [1] : vector<32x32xf32> to vector<32xf32>
    %102 = vector.shape_cast %101 : vector<32xf32> to vector<32x1xf32>
    %103 = tpu.reciprocal %102 {approx = true} : vector<32x1xf32> -> vector<32x1xf32>
    %104 = vector.broadcast %103 : vector<32x1xf32> to vector<32x32xf32>
    %105 = arith.mulf %100, %104 : vector<32x32xf32>
    %cst_53 = arith.constant dense<0.000000e+00> : vector<32x8xf32>
    %106 = tpu.matmul %105, %91, %cst_53 {dimension_numbers = #tpu.dot_dimension_numbers<[1], [0], [0], [1], [0, 0, 1, 1], [], []>} : vector<32x32xf32>, vector<32x8xf32>, vector<32x8xf32> -> vector<32x8xf32>
    %c0_54 = arith.constant 0 : index
    %c16 = arith.constant 16 : index
    %107 = vector.load %arg17[%c0_54, %c16] : memref<32x32xf32, #tpu.memory_space<vmem>>, vector<32x8xf32>
    tpu.vector_store %arg17[%c0_54, %c16], %106 {strides = array<i32>} : memref<32x32xf32, #tpu.memory_space<vmem>>, vector<32x8xf32>,
    %108 = vector.extract_strided_slice %50 {offsets = [0, 24], sizes = [32, 8], strides = [1, 1]} : vector<32x96xf32> to vector<32x8xf32>
    %109 = vector.extract_strided_slice %50 {offsets = [0, 56], sizes = [32, 8], strides = [1, 1]} : vector<32x96xf32> to vector<32x8xf32>
    %110 = vector.extract_strided_slice %50 {offsets = [0, 88], sizes = [32, 8], strides = [1, 1]} : vector<32x96xf32> to vector<32x8xf32>
    %cst_55 = arith.constant dense<0.000000e+00> : vector<32x32xf32>
    %111 = tpu.matmul %108, %109, %cst_55 {dimension_numbers = #tpu.dot_dimension_numbers<[1], [1], [0], [0], [0, 0, 1, 0], [], []>} : vector<32x8xf32>, vector<32x8xf32>, vector<32x32xf32> -> vector<32x32xf32>
    %cst_56 = arith.constant 0.353553385 : f32
    %112 = vector.broadcast %cst_56 : f32 to vector<32x32xf32>
    %113 = arith.mulf %111, %112 : vector<32x32xf32>
    %114 = arith.addf %113, %22 : vector<32x32xf32>
    %cst_57 = arith.constant dense<0xFF800000> : vector<32xf32>
    %115 = vector.multi_reduction <maximumf>, %114, %cst_57 [1] : vector<32x32xf32> to vector<32xf32>
    %116 = vector.shape_cast %115 : vector<32xf32> to vector<32x1xf32>
    %117 = vector.broadcast %116 : vector<32x1xf32> to vector<32x32xf32>
    %118 = arith.subf %114, %117 : vector<32x32xf32>
    %119 = math.exp %118 : vector<32x32xf32>
    %cst_58 = arith.constant dense<0.000000e+00> : vector<32xf32>
    %120 = vector.multi_reduction <add>, %119, %cst_58 [1] : vector<32x32xf32> to vector<32xf32>
    %121 = vector.shape_cast %120 : vector<32xf32> to vector<32x1xf32>
    %122 = tpu.reciprocal %121 {approx = true} : vector<32x1xf32> -> vector<32x1xf32>
    %123 = vector.broadcast %122 : vector<32x1xf32> to vector<32x32xf32>
    %124 = arith.mulf %119, %123 : vector<32x32xf32>
    %cst_59 = arith.constant dense<0.000000e+00> : vector<32x8xf32>
    %125 = tpu.matmul %124, %110, %cst_59 {dimension_numbers = #tpu.dot_dimension_numbers<[1], [0], [0], [1], [0, 0, 1, 1], [], []>} : vector<32x32xf32>, vector<32x8xf32>, vector<32x8xf32> -> vector<32x8xf32>
    %c0_60 = arith.constant 0 : index
    %c24 = arith.constant 24 : index
    %126 = vector.load %arg17[%c0_60, %c24] : memref<32x32xf32, #tpu.memory_space<vmem>>, vector<32x8xf32>
    tpu.vector_store %arg17[%c0_60, %c24], %125 {strides = array<i32>} : memref<32x32xf32, #tpu.memory_space<vmem>>, vector<32x8xf32>,
    %c0_61 = arith.constant 0 : index
    %c0_62 = arith.constant 0 : index
    %127 = vector.load %arg17[%c0_61, %c0_62] : memref<32x32xf32, #tpu.memory_space<vmem>>, vector<32x32xf32>
    %128 = arith.truncf %127 : vector<32x32xf32> to vector<32x32xbf16>
    %cst_63 = arith.constant dense<0.000000e+00> : vector<32x32xf32>
    %129 = tpu.matmul %128, %10, %cst_63 {dimension_numbers = #tpu.dot_dimension_numbers<[1], [0], [0], [1], [0, 0, 1, 1], [], []>} : vector<32x32xbf16>, vector<32x32xbf16>, vector<32x32xf32> -> vector<32x32xf32>
    %130 = vector.broadcast %12 : vector<1x32xf32> to vector<32x32xf32>
    %131 = arith.addf %129, %130 : vector<32x32xf32>
    %132 = arith.addf %21, %131 : vector<32x32xf32>
    %133 = vector.extract_strided_slice %4 {offsets = [2, 0], sizes = [1, 32], strides = [1, 1]} : vector<4x32xf32> to vector<1x32xf32>
    %134 = vector.extract_strided_slice %4 {offsets = [3, 0], sizes = [1, 32], strides = [1, 1]} : vector<4x32xf32> to vector<1x32xf32>
    %cst_64 = arith.constant dense<0.000000e+00> : vector<32xf32>
    %135 = vector.multi_reduction <add>, %132, %cst_64 [1] : vector<32x32xf32> to vector<32xf32>
    %136 = vector.shape_cast %135 : vector<32xf32> to vector<32x1xf32>
    %cst_65 = arith.constant 3.200000e+01 : f32
    %137 = vector.broadcast %cst_65 : f32 to vector<32x1xf32>
    %138 = arith.divf %136, %137 : vector<32x1xf32>
    %139 = vector.broadcast %138 : vector<32x1xf32> to vector<32x32xf32>
    %140 = arith.subf %132, %139 : vector<32x32xf32>
    %141 = arith.mulf %140, %140 : vector<32x32xf32>
    %cst_66 = arith.constant dense<0.000000e+00> : vector<32xf32>
    %142 = vector.multi_reduction <add>, %141, %cst_66 [1] : vector<32x32xf32> to vector<32xf32>
    %143 = vector.shape_cast %142 : vector<32xf32> to vector<32x1xf32>
    %cst_67 = arith.constant 3.200000e+01 : f32
    %144 = vector.broadcast %cst_67 : f32 to vector<32x1xf32>
    %145 = arith.divf %143, %144 : vector<32x1xf32>
    %146 = vector.broadcast %138 : vector<32x1xf32> to vector<32x32xf32>
    %147 = arith.subf %132, %146 : vector<32x32xf32>
    %cst_68 = arith.constant 9.99999974E-6 : f32
    %148 = vector.broadcast %cst_68 : f32 to vector<32x1xf32>
    %149 = arith.addf %145, %148 : vector<32x1xf32>
    %150 = math.rsqrt %149 : vector<32x1xf32>
    %151 = vector.broadcast %150 : vector<32x1xf32> to vector<32x32xf32>
    %152 = arith.mulf %147, %151 : vector<32x32xf32>
    %153 = vector.broadcast %133 : vector<1x32xf32> to vector<32x32xf32>
    %154 = arith.mulf %152, %153 : vector<32x32xf32>
    %155 = vector.broadcast %134 : vector<1x32xf32> to vector<32x32xf32>
    %156 = arith.addf %154, %155 : vector<32x32xf32>
    %157 = arith.truncf %156 : vector<32x32xf32> to vector<32x32xbf16>
    %cst_69 = arith.constant dense<0.000000e+00> : vector<32x128xf32>
    %158 = tpu.matmul %157, %14, %cst_69 {dimension_numbers = #tpu.dot_dimension_numbers<[1], [0], [0], [1], [0, 0, 1, 1], [], []>} : vector<32x32xbf16>, vector<32x128xbf16>, vector<32x128xf32> -> vector<32x128xf32>
    %159 = vector.broadcast %16 : vector<1x128xf32> to vector<32x128xf32>
    %160 = arith.addf %158, %159 : vector<32x128xf32>
    %161 = arith.mulf %160, %160 : vector<32x128xf32>
    %162 = arith.mulf %160, %161 : vector<32x128xf32>
    %cst_70 = arith.constant 4.471500e-02 : f32
    %163 = vector.broadcast %cst_70 : f32 to vector<32x128xf32>
    %164 = arith.mulf %163, %162 : vector<32x128xf32>
    %165 = arith.addf %160, %164 : vector<32x128xf32>
    %cst_71 = arith.constant 0.797884583 : f32
    %166 = vector.broadcast %cst_71 : f32 to vector<32x128xf32>
    %167 = arith.mulf %166, %165 : vector<32x128xf32>
    %168 = math.tanh %167 : vector<32x128xf32>
    %cst_72 = arith.constant 1.000000e+00 : f32
    %169 = vector.broadcast %cst_72 : f32 to vector<32x128xf32>
    %170 = arith.addf %169, %168 : vector<32x128xf32>
    %cst_73 = arith.constant 5.000000e-01 : f32
    %171 = vector.broadcast %cst_73 : f32 to vector<32x128xf32>
    %172 = arith.mulf %171, %170 : vector<32x128xf32>
    %173 = arith.mulf %160, %172 : vector<32x128xf32>
    %174 = arith.truncf %173 : vector<32x128xf32> to vector<32x128xbf16>
    %cst_74 = arith.constant dense<0.000000e+00> : vector<32x32xf32>
    %175 = tpu.matmul %174, %18, %cst_74 {dimension_numbers = #tpu.dot_dimension_numbers<[1], [0], [0], [1], [0, 0, 1, 1], [], []>} : vector<32x128xbf16>, vector<128x32xbf16>, vector<32x32xf32> -> vector<32x32xf32>
    %176 = arith.addf %132, %175 : vector<32x32xf32>
    %177 = vector.broadcast %20 : vector<1x32xf32> to vector<32x32xf32>
    %178 = arith.addf %176, %177 : vector<32x32xf32>
    %c0_75 = arith.constant 0 : index
    %c0_76 = arith.constant 0 : index
    %179 = vector.load %arg16[%c0_75, %c0_76] : memref<32x32xf32, #tpu.memory_space<vmem>>, vector<32x32xf32>
    tpu.vector_store %arg16[%c0_75, %c0_76], %178 {strides = array<i32>} : memref<32x32xf32, #tpu.memory_space<vmem>>, vector<32x32xf32>,
    %c1_i32 = arith.constant 1 : i32
    %180 = arith.cmpi eq, %arg0, %c1_i32 : i32
    %181 = arith.extui %180 : i1 to i32
    %c0_i32_77 = arith.constant 0 : i32
    %182 = arith.cmpi ne, %181, %c0_i32_77 : i32
    scf.if %182 {
      %c0_78 = arith.constant 0 : index
      %183 = memref.load %arg1[%c0_78] : memref<4xi32, #tpu.memory_space<smem>>
      %c0_i32_79 = arith.constant 0 : i32
      %184 = arith.addi %c0_i32_79, %183 : i32
      %185 = arith.index_cast %184 : i32 to index
      %c0_80 = arith.constant 0 : index
      %186 = vector.load %arg16[%185, %c0_80] : memref<32x32xf32, #tpu.memory_space<vmem>>, vector<1x32xf32>
      %c0_81 = arith.constant 0 : index
      %c0_82 = arith.constant 0 : index
      %187 = vector.load %arg17[%c0_81, %c0_82] : memref<32x32xf32, #tpu.memory_space<vmem>>, vector<1x32xf32>
      tpu.vector_store %arg17[%c0_81, %c0_82], %186 {strides = array<i32>} : memref<32x32xf32, #tpu.memory_space<vmem>>, vector<1x32xf32>,
      %c1 = arith.constant 1 : index
      %188 = memref.load %arg1[%c1] : memref<4xi32, #tpu.memory_space<smem>>
      %c8_i32 = arith.constant 8 : i32
      %189 = arith.addi %c8_i32, %188 : i32
      %190 = arith.index_cast %189 : i32 to index
      %c0_83 = arith.constant 0 : index
      %191 = vector.load %arg16[%190, %c0_83] : memref<32x32xf32, #tpu.memory_space<vmem>>, vector<1x32xf32>
      %c1_84 = arith.constant 1 : index
      %c0_85 = arith.constant 0 : index
      %192 = vector.load %arg17[%c1_84, %c0_85] : memref<32x32xf32, #tpu.memory_space<vmem>>, vector<1x32xf32>
      tpu.vector_store %arg17[%c1_84, %c0_85], %191 {strides = array<i32>} : memref<32x32xf32, #tpu.memory_space<vmem>>, vector<1x32xf32>,
      %c2 = arith.constant 2 : index
      %193 = memref.load %arg1[%c2] : memref<4xi32, #tpu.memory_space<smem>>
      %c16_i32 = arith.constant 16 : i32
      %194 = arith.addi %c16_i32, %193 : i32
      %195 = arith.index_cast %194 : i32 to index
      %c0_86 = arith.constant 0 : index
      %196 = vector.load %arg16[%195, %c0_86] : memref<32x32xf32, #tpu.memory_space<vmem>>, vector<1x32xf32>
      %c2_87 = arith.constant 2 : index
      %c0_88 = arith.constant 0 : index
      %197 = vector.load %arg17[%c2_87, %c0_88] : memref<32x32xf32, #tpu.memory_space<vmem>>, vector<1x32xf32>
      tpu.vector_store %arg17[%c2_87, %c0_88], %196 {strides = array<i32>} : memref<32x32xf32, #tpu.memory_space<vmem>>, vector<1x32xf32>,
      %c3 = arith.constant 3 : index
      %198 = memref.load %arg1[%c3] : memref<4xi32, #tpu.memory_space<smem>>
      %c24_i32 = arith.constant 24 : i32
      %199 = arith.addi %c24_i32, %198 : i32
      %200 = arith.index_cast %199 : i32 to index
      %c0_89 = arith.constant 0 : index
      %201 = vector.load %arg16[%200, %c0_89] : memref<32x32xf32, #tpu.memory_space<vmem>>, vector<1x32xf32>
      %c3_90 = arith.constant 3 : index
      %c0_91 = arith.constant 0 : index
      %202 = vector.load %arg17[%c3_90, %c0_91] : memref<32x32xf32, #tpu.memory_space<vmem>>, vector<1x32xf32>
      tpu.vector_store %arg17[%c3_90, %c0_91], %201 {strides = array<i32>} : memref<32x32xf32, #tpu.memory_space<vmem>>, vector<1x32xf32>,
      %c0_92 = arith.constant 0 : index
      %c0_93 = arith.constant 0 : index
      %203 = vector.load %arg17[%c0_92, %c0_93] : memref<32x32xf32, #tpu.memory_space<vmem>>, vector<4x32xf32>
      %c0_94 = arith.constant 0 : index
      %c0_95 = arith.constant 0 : index
      %204 = vector.load %arg13[%c0_94, %c0_95] : memref<2x32xf32, #tpu.memory_space<vmem>>, vector<2x32xf32>
      %c0_96 = arith.constant 0 : index
      %c0_97 = arith.constant 0 : index
      %205 = vector.load %arg14[%c0_96, %c0_97] : memref<32x32xbf16, #tpu.memory_space<vmem>>, vector<32x32xbf16>
      %206 = vector.extract_strided_slice %204 {offsets = [0, 0], sizes = [1, 32], strides = [1, 1]} : vector<2x32xf32> to vector<1x32xf32>
      %207 = vector.extract_strided_slice %204 {offsets = [1, 0], sizes = [1, 32], strides = [1, 1]} : vector<2x32xf32> to vector<1x32xf32>
      %cst_98 = arith.constant dense<0.000000e+00> : vector<4xf32>
      %208 = vector.multi_reduction <add>, %203, %cst_98 [1] : vector<4x32xf32> to vector<4xf32>
      %209 = vector.shape_cast %208 : vector<4xf32> to vector<4x1xf32>
      %cst_99 = arith.constant 3.200000e+01 : f32
      %210 = vector.broadcast %cst_99 : f32 to vector<4x1xf32>
      %211 = arith.divf %209, %210 : vector<4x1xf32>
      %212 = vector.broadcast %211 : vector<4x1xf32> to vector<4x32xf32>
      %213 = arith.subf %203, %212 : vector<4x32xf32>
      %214 = arith.mulf %213, %213 : vector<4x32xf32>
      %cst_100 = arith.constant dense<0.000000e+00> : vector<4xf32>
      %215 = vector.multi_reduction <add>, %214, %cst_100 [1] : vector<4x32xf32> to vector<4xf32>
      %216 = vector.shape_cast %215 : vector<4xf32> to vector<4x1xf32>
      %cst_101 = arith.constant 3.200000e+01 : f32
      %217 = vector.broadcast %cst_101 : f32 to vector<4x1xf32>
      %218 = arith.divf %216, %217 : vector<4x1xf32>
      %219 = vector.broadcast %211 : vector<4x1xf32> to vector<4x32xf32>
      %220 = arith.subf %203, %219 : vector<4x32xf32>
      %cst_102 = arith.constant 9.99999974E-6 : f32
      %221 = vector.broadcast %cst_102 : f32 to vector<4x1xf32>
      %222 = arith.addf %218, %221 : vector<4x1xf32>
      %223 = math.rsqrt %222 : vector<4x1xf32>
      %224 = vector.broadcast %223 : vector<4x1xf32> to vector<4x32xf32>
      %225 = arith.mulf %220, %224 : vector<4x32xf32>
      %226 = vector.broadcast %206 : vector<1x32xf32> to vector<4x32xf32>
      %227 = arith.mulf %225, %226 : vector<4x32xf32>
      %228 = vector.broadcast %207 : vector<1x32xf32> to vector<4x32xf32>
      %229 = arith.addf %227, %228 : vector<4x32xf32>
      %230 = arith.truncf %229 : vector<4x32xf32> to vector<4x32xbf16>
      %cst_103 = arith.constant dense<0.000000e+00> : vector<4x32xf32>
      %231 = tpu.matmul %230, %205, %cst_103 {dimension_numbers = #tpu.dot_dimension_numbers<[1], [0], [0], [1], [0, 0, 1, 1], [], []>} : vector<4x32xbf16>, vector<32x32xbf16>, vector<4x32xf32> -> vector<4x32xf32>
      %232 = arith.mulf %231, %231 : vector<4x32xf32>
      %cst_104 = arith.constant dense<0.000000e+00> : vector<4xf32>
      %233 = vector.multi_reduction <add>, %232, %cst_104 [1] : vector<4x32xf32> to vector<4xf32>
      %234 = vector.shape_cast %233 : vector<4xf32> to vector<4x1xf32>
      %cst_105 = arith.constant 1.000000e-24 : f32
      %235 = vector.broadcast %cst_105 : f32 to vector<4x1xf32>
      %236 = arith.maximumf %234, %235 : vector<4x1xf32>
      %237 = math.rsqrt %236 : vector<4x1xf32>
      %238 = vector.broadcast %237 : vector<4x1xf32> to vector<4x32xf32>
      %239 = arith.mulf %231, %238 : vector<4x32xf32>
      %c0_106 = arith.constant 0 : index
      %c0_107 = arith.constant 0 : index
      %240 = vector.load %arg15[%c0_106, %c0_107] : memref<4x32xf32, #tpu.memory_space<vmem>>, vector<4x32xf32>
      tpu.vector_store %arg15[%c0_106, %c0_107], %239 {strides = array<i32>} : memref<4x32xf32, #tpu.memory_space<vmem>>, vector<4x32xf32>,
    } else {
    }
    return
  }
  func.func @transform_0(%arg0: i32, %arg1: memref<4xi32, #tpu.memory_space<smem>>) -> (i32, i32) {
    %c0_i32 = arith.constant 0 : i32
    %c0_i32_0 = arith.constant 0 : i32
    %c0_i32_1 = arith.constant 0 : i32
    return %c0_i32, %c0_i32_0 : i32, i32
  }
  func.func @transform_1(%arg0: i32, %arg1: memref<4xi32, #tpu.memory_space<smem>>) -> (i32, i32) {
    %c0_i32 = arith.constant 0 : i32
    %c0_i32_0 = arith.constant 0 : i32
    %c0_i32_1 = arith.constant 0 : i32
    return %c0_i32, %c0_i32_0 : i32, i32
  }
  func.func @transform_2(%arg0: i32, %arg1: memref<4xi32, #tpu.memory_space<smem>>) -> (i32, i32, i32) {
    %c0_i32 = arith.constant 0 : i32
    %c0_i32_0 = arith.constant 0 : i32
    %c0_i32_1 = arith.constant 0 : i32
    return %arg0, %c0_i32, %c0_i32_0 : i32, i32, i32
  }
  func.func @transform_3(%arg0: i32, %arg1: memref<4xi32, #tpu.memory_space<smem>>) -> (i32, i32, i32) {
    %c0_i32 = arith.constant 0 : i32
    %c0_i32_0 = arith.constant 0 : i32
    %c0_i32_1 = arith.constant 0 : i32
    return %arg0, %c0_i32, %c0_i32_0 : i32, i32, i32
  }
  func.func @transform_4(%arg0: i32, %arg1: memref<4xi32, #tpu.memory_space<smem>>) -> (i32, i32, i32) {
    %c0_i32 = arith.constant 0 : i32
    %c0_i32_0 = arith.constant 0 : i32
    %c0_i32_1 = arith.constant 0 : i32
    return %arg0, %c0_i32, %c0_i32_0 : i32, i32, i32
  }
  func.func @transform_5(%arg0: i32, %arg1: memref<4xi32, #tpu.memory_space<smem>>) -> (i32, i32, i32) {
    %c0_i32 = arith.constant 0 : i32
    %c0_i32_0 = arith.constant 0 : i32
    %c0_i32_1 = arith.constant 0 : i32
    return %arg0, %c0_i32, %c0_i32_0 : i32, i32, i32
  }
  func.func @transform_6(%arg0: i32, %arg1: memref<4xi32, #tpu.memory_space<smem>>) -> (i32, i32, i32) {
    %c0_i32 = arith.constant 0 : i32
    %c0_i32_0 = arith.constant 0 : i32
    %c0_i32_1 = arith.constant 0 : i32
    return %arg0, %c0_i32, %c0_i32_0 : i32, i32, i32
  }
  func.func @transform_7(%arg0: i32, %arg1: memref<4xi32, #tpu.memory_space<smem>>) -> (i32, i32, i32) {
    %c0_i32 = arith.constant 0 : i32
    %c0_i32_0 = arith.constant 0 : i32
    %c0_i32_1 = arith.constant 0 : i32
    return %arg0, %c0_i32, %c0_i32_0 : i32, i32, i32
  }
  func.func @transform_8(%arg0: i32, %arg1: memref<4xi32, #tpu.memory_space<smem>>) -> (i32, i32, i32) {
    %c0_i32 = arith.constant 0 : i32
    %c0_i32_0 = arith.constant 0 : i32
    %c0_i32_1 = arith.constant 0 : i32
    return %arg0, %c0_i32, %c0_i32_0 : i32, i32, i32
  }
  func.func @transform_9(%arg0: i32, %arg1: memref<4xi32, #tpu.memory_space<smem>>) -> (i32, i32, i32) {
    %c0_i32 = arith.constant 0 : i32
    %c0_i32_0 = arith.constant 0 : i32
    %c0_i32_1 = arith.constant 0 : i32
    return %arg0, %c0_i32, %c0_i32_0 : i32, i32, i32
  }
  func.func @transform_10(%arg0: i32, %arg1: memref<4xi32, #tpu.memory_space<smem>>) -> (i32, i32, i32) {
    %c0_i32 = arith.constant 0 : i32
    %c0_i32_0 = arith.constant 0 : i32
    %c0_i32_1 = arith.constant 0 : i32
    return %arg0, %c0_i32, %c0_i32_0 : i32, i32, i32
  }
  func.func @transform_11(%arg0: i32, %arg1: memref<4xi32, #tpu.memory_space<smem>>) -> (i32, i32) {
    %c0_i32 = arith.constant 0 : i32
    %c0_i32_0 = arith.constant 0 : i32
    %c0_i32_1 = arith.constant 0 : i32
    return %c0_i32, %c0_i32_0 : i32, i32
  }
  func.func @transform_12(%arg0: i32, %arg1: memref<4xi32, #tpu.memory_space<smem>>) -> (i32, i32) {
    %c0_i32 = arith.constant 0 : i32
    %c0_i32_0 = arith.constant 0 : i32
    %c0_i32_1 = arith.constant 0 : i32
    return %c0_i32, %c0_i32_0 : i32, i32
  }
  func.func @transform_13(%arg0: i32, %arg1: memref<4xi32, #tpu.memory_space<smem>>) -> (i32, i32) {
    %c0_i32 = arith.constant 0 : i32
    %c0_i32_0 = arith.constant 0 : i32
    %c0_i32_1 = arith.constant 0 : i32
    return %c0_i32, %c0_i32_0 : i32, i32
  }
}

</mosaic_0001>

<llo_original>
// kernel: tile.7
$region0: #{tile.7}
  %s0 = inlined_call_operand.vmem [shape: f32[2,5,32], index: 0, kind: input, shape index: {}]
  %s1 = inlined_call_operand.vmem [shape: f32[10,32], index: 1, kind: output, shape index: {}]
  %v2 = vld [vmem:[%s0] sm:$0x1f]
  %vm3 = vcmask 261120
  %4 = vst.msk [vmem:[%s1] sm:$0x1f] %vm3, %v2
  %s5 = scalar_lea.vmem %s0, 8
  %v6 = vld [vmem:[%s5] sm:$0x1f]
  %vm7 = vcmask 261120
  %s8 = scalar_lea.vmem %s1, 5
  %9 = vst.msk [vmem:[%s8] sm:$0x1f] %vm7, %v6

// kernel: daclip_forward.3
$region0: #{daclip_forward.3}
  #allocation0 [shape = 'u32[]', space=smem, size = 0x4, offset = 0x4, fixed_abs, tag = 'smem constant byte address 0x4 - core index']
  #allocation1 [shape = 'u32[144,128]{1,0:T(1,128)}', space=vmem, size = 0x12000, scoped, tag = 'internal scratch']
  #allocation2 [shape = 'f32[32,32]{1,0:T(8,128)}', space=vmem, size = 0x4000, scoped, tag = 'scratch operand']
  #allocation3 [shape = 'f32[32,32]{1,0:T(8,128)}', space=vmem, size = 0x4000, scoped, tag = 'scratch operand']
  #allocation4 [shape = 's32[1]{0}', space=sflag, size = 0x4, scoped, tag = 'scoped memory for daclip_forward.3']
  #allocation5 [shape = 'u8[512]{0}', space=smem, size = 0x200, scoped, tag = 'prefetched SMEM operand 0']
  %s0 = inlined_call_operand.vmem [shape: s32[4], index: 0, kind: input, shape index: {}]
  %s1 = inlined_call_operand.vmem [shape: f32[32,32], index: 1, kind: input, shape index: {}]
  %s2 = inlined_call_operand.vmem [shape: f32[32,32], index: 2, kind: input, shape index: {}]
  %s3 = inlined_call_operand.vmem [shape: f32[2,4,32], index: 3, kind: input, shape index: {}]
  %s4 = inlined_call_operand.vmem [shape: bf16[2,32,96], index: 4, kind: input, shape index: {}]
  %s5 = inlined_call_operand.vmem [shape: f32[2,1,96], index: 5, kind: input, shape index: {}]
  %s6 = inlined_call_operand.vmem [shape: bf16[2,32,32], index: 6, kind: input, shape index: {}]
  %s7 = inlined_call_operand.vmem [shape: f32[2,1,32], index: 7, kind: input, shape index: {}]
  %s8 = inlined_call_operand.vmem [shape: bf16[2,32,128], index: 8, kind: input, shape index: {}]
  %s9 = inlined_call_operand.vmem [shape: f32[2,1,128], index: 9, kind: input, shape index: {}]
  %s10 = inlined_call_operand.vmem [shape: bf16[2,128,32], index: 10, kind: input, shape index: {}]
  %s11 = inlined_call_operand.vmem [shape: f32[2,1,32], index: 11, kind: input, shape index: {}]
  %s12 = inlined_call_operand.vmem [shape: f32[2,32], index: 12, kind: input, shape index: {}]
  %s13 = inlined_call_operand.vmem [shape: bf16[32,32], index: 13, kind: input, shape index: {}]
  %s14 = inlined_call_operand.vmem [shape: f32[4,32], index: 14, kind: output, shape index: {}]
  %s15 = sld [smem:[#allocation0]]
  $region93: #{daclip_forward.3} parent=0
    _
  %s17 = ssub.s32 1, %s15
  %s18 = scalar_select 0, %s17, %s15
  %s19 = sshll.u32 %s0, 4
  %s20 = int_to_ptr.vmem [resolvable:$true] %s19
  %22 = dma.vmem_to_smem %s20, 16, [#allocation5], [#allocation4]
  %23 = dma.done [#allocation4], 16
  %24 = sfence
  loop: start=0, step=1, limit=4
  $region2: #{daclip_forward.3} parent=0 // loop_pre_header
    _
  $region3: #{daclip_forward.3} parent=0 // loop_header
    %s26 = sphi 0, %s30
    %p27 = scmp.ge.s32.totalorder %s26, 4
    %s34 = sphi 0, %s34
    %s36 = sphi 0, %s34
    %s37 = sphi 0, %s36
    %s51 = sphi 0, %s37
    %s55 = sphi 0, %s55
    %s57 = sphi 0, %s55
    %s58 = sphi 0, %s57
    %s72 = sphi 0, %s58
    %s78 = sphi 0, %s80
    %s81 = sphi 0, %s78
    %s82 = sphi 0, %s81
    %s98 = sphi 0, %s82
    %s104 = sphi 0, %s106
    %s107 = sphi 0, %s104
    %s108 = sphi 0, %s107
    %s124 = sphi 0, %s108
    %s130 = sphi 0, %s132
    %s133 = sphi 0, %s130
    %s134 = sphi 0, %s133
    %s150 = sphi 0, %s134
    %s156 = sphi 0, %s158
    %s159 = sphi 0, %s156
    %s160 = sphi 0, %s159
    %s176 = sphi 0, %s160
    %s182 = sphi 0, %s184
    %s185 = sphi 0, %s182
    %s186 = sphi 0, %s185
    %s202 = sphi 0, %s186
    %s208 = sphi 0, %s210
    %s211 = sphi 0, %s208
    %s212 = sphi 0, %s211
    %s228 = sphi 0, %s212
    %s234 = sphi 0, %s236
    %s237 = sphi 0, %s234
    %s238 = sphi 0, %s237
    %s254 = sphi 0, %s238
    %s260 = sphi 0, %s262
    %s263 = sphi 0, %s260
    %s264 = sphi 0, %s263
    %s280 = sphi 0, %s264
    %s286 = sphi 0, %s288
    %s289 = sphi 0, %s286
    %s290 = sphi 0, %s289
    %s306 = sphi 0, %s290
    %s310 = sphi 0, %s310
    %s312 = sphi 0, %s310
    %s313 = sphi 0, %s312
    %s327 = sphi 0, %s313
    %s331 = sphi 0, %s331
    %s333 = sphi 0, %s331
    %s334 = sphi 0, %s333
    %s348 = sphi 0, %s334
    %s352 = sphi 0, %s352
    %s354 = sphi 0, %s352
    %s355 = sphi 0, %s354
    %s369 = sphi 0, %s355
  $region4: #{daclip_forward.3} parent=0 // loop_header_branch
    %29 = sbr.rel (%p27) target = $region8
  $region5: #{daclip_forward.3} parent=0 // loop_body
    %s31 = ssub.s32 %s26, 1
    %s32 = ssub.s32 %s26, 2
    %s33 = sadd.s32 %s26, 1
    %s35 = sadd.s32 %s34, 1
    %p38 = scmp.eq.s32.totalorder %s26, 1
    %p39 = scmp.ne.s32.totalorder %s34, %s36
    %p40 = scmp.eq.s32.totalorder %s26, 0
    %p41 = por %p39, %p40
    %p42 = scmp.ne.s32.totalorder %s34, %s36
    %p43 = scmp.eq.s32.totalorder %s31, 1
    %p44 = por %p42, %p43
    %p45 = scmp.ne.s32.totalorder %s36, %s37
    %p46 = scmp.eq.s32.totalorder %s31, 0
    %p47 = por %p45, %p46
    %p48 = scmp.ne.s32.totalorder %s36, %s37
    %p49 = scmp.eq.s32.totalorder %s32, 1
    %p50 = por %p48, %p49
    %p52 = scmp.ne.s32.totalorder %s37, %s51
    %p53 = scmp.eq.s32.totalorder %s32, 0
    %p54 = por %p52, %p53
    %s56 = sadd.s32 %s55, 1
    %p59 = scmp.eq.s32.totalorder %s26, 1
    %p60 = scmp.ne.s32.totalorder %s55, %s57
    %p61 = scmp.eq.s32.totalorder %s26, 0
    %p62 = por %p60, %p61
    %p63 = scmp.ne.s32.totalorder %s55, %s57
    %p64 = scmp.eq.s32.totalorder %s31, 1
    %p65 = por %p63, %p64
    %p66 = scmp.ne.s32.totalorder %s57, %s58
    %p67 = scmp.eq.s32.totalorder %s31, 0
    %p68 = por %p66, %p67
    %p69 = scmp.ne.s32.totalorder %s57, %s58
    %p70 = scmp.eq.s32.totalorder %s32, 1
    %p71 = por %p69, %p70
    %p73 = scmp.ne.s32.totalorder %s58, %s72
    %p74 = scmp.eq.s32.totalorder %s32, 0
    %p75 = por %p73, %p74
    %s76 = ssub.s32 %s26, %s33
    %p77 = scmp.eq.s32.totalorder %s76, 0
    %s79 = sadd.s32 %s78, 1
    %s80 = scalar_select %p77, %s78, %s79
    %p83 = pneg %p77
    %p84 = scmp.eq.s32.totalorder %s26, 1
    %p85 = por %p83, %p84
    %p86 = scmp.ne.s32.totalorder %s78, %s81
    %p87 = scmp.eq.s32.totalorder %s26, 0
    %p88 = por %p86, %p87
    %p89 = scmp.ne.s32.totalorder %s78, %s81
    %p90 = scmp.eq.s32.totalorder %s31, 1
    %p91 = por %p89, %p90
    %p92 = scmp.ne.s32.totalorder %s81, %s82
    %p93 = scmp.eq.s32.totalorder %s31, 0
    %p94 = por %p92, %p93
    %p95 = scmp.ne.s32.totalorder %s81, %s82
    %p96 = scmp.eq.s32.totalorder %s32, 1
    %p97 = por %p95, %p96
    %p99 = scmp.ne.s32.totalorder %s82, %s98
    %p100 = scmp.eq.s32.totalorder %s32, 0
    %p101 = por %p99, %p100
    %s102 = ssub.s32 %s26, %s33
    %p103 = scmp.eq.s32.totalorder %s102, 0
    %s105 = sadd.s32 %s104, 1
    %s106 = scalar_select %p103, %s104, %s105
    %p109 = pneg %p103
    %p110 = scmp.eq.s32.totalorder %s26, 1
    %p111 = por %p109, %p110
    %p112 = scmp.ne.s32.totalorder %s104, %s107
    %p113 = scmp.eq.s32.totalorder %s26, 0
    %p114 = por %p112, %p113
    %p115 = scmp.ne.s32.totalorder %s104, %s107
    %p116 = scmp.eq.s32.totalorder %s31, 1
    %p117 = por %p115, %p116
    %p118 = scmp.ne.s32.totalorder %s107, %s108
    %p119 = scmp.eq.s32.totalorder %s31, 0
    %p120 = por %p118, %p119
    %p121 = scmp.ne.s32.totalorder %s107, %s108
    %p122 = scmp.eq.s32.totalorder %s32, 1
    %p123 = por %p121, %p122
    %p125 = scmp.ne.s32.totalorder %s108, %s124
    %p126 = scmp.eq.s32.totalorder %s32, 0
    %p127 = por %p125, %p126
    %s128 = ssub.s32 %s26, %s33
    %p129 = scmp.eq.s32.totalorder %s128, 0
    %s131 = sadd.s32 %s130, 1
    %s132 = scalar_select %p129, %s130, %s131
    %p135 = pneg %p129
    %p136 = scmp.eq.s32.totalorder %s26, 1
    %p137 = por %p135, %p136
    %p138 = scmp.ne.s32.totalorder %s130, %s133
    %p139 = scmp.eq.s32.totalorder %s26, 0
    %p140 = por %p138, %p139
    %p141 = scmp.ne.s32.totalorder %s130, %s133
    %p142 = scmp.eq.s32.totalorder %s31, 1
    %p143 = por %p141, %p142
    %p144 = scmp.ne.s32.totalorder %s133, %s134
    %p145 = scmp.eq.s32.totalorder %s31, 0
    %p146 = por %p144, %p145
    %p147 = scmp.ne.s32.totalorder %s133, %s134
    %p148 = scmp.eq.s32.totalorder %s32, 1
    %p149 = por %p147, %p148
    %p151 = scmp.ne.s32.totalorder %s134, %s150
    %p152 = scmp.eq.s32.totalorder %s32, 0
    %p153 = por %p151, %p152
    %s154 = ssub.s32 %s26, %s33
    %p155 = scmp.eq.s32.totalorder %s154, 0
    %s157 = sadd.s32 %s156, 1
    %s158 = scalar_select %p155, %s156, %s157
    %p161 = pneg %p155
    %p162 = scmp.eq.s32.totalorder %s26, 1
    %p163 = por %p161, %p162
    %p164 = scmp.ne.s32.totalorder %s156, %s159
    %p165 = scmp.eq.s32.totalorder %s26, 0
    %p166 = por %p164, %p165
    %p167 = scmp.ne.s32.totalorder %s156, %s159
    %p168 = scmp.eq.s32.totalorder %s31, 1
    %p169 = por %p167, %p168
    %p170 = scmp.ne.s32.totalorder %s159, %s160
    %p171 = scmp.eq.s32.totalorder %s31, 0
    %p172 = por %p170, %p171
    %p173 = scmp.ne.s32.totalorder %s159, %s160
    %p174 = scmp.eq.s32.totalorder %s32, 1
    %p175 = por %p173, %p174
    %p177 = scmp.ne.s32.totalorder %s160, %s176
    %p178 = scmp.eq.s32.totalorder %s32, 0
    %p179 = por %p177, %p178
    %s180 = ssub.s32 %s26, %s33
    %p181 = scmp.eq.s32.totalorder %s180, 0
    %s183 = sadd.s32 %s182, 1
    %s184 = scalar_select %p181, %s182, %s183
    %p187 = pneg %p181
    %p188 = scmp.eq.s32.totalorder %s26, 1
    %p189 = por %p187, %p188
    %p190 = scmp.ne.s32.totalorder %s182, %s185
    %p191 = scmp.eq.s32.totalorder %s26, 0
    %p192 = por %p190, %p191
    %p193 = scmp.ne.s32.totalorder %s182, %s185
    %p194 = scmp.eq.s32.totalorder %s31, 1
    %p195 = por %p193, %p194
    %p196 = scmp.ne.s32.totalorder %s185, %s186
    %p197 = scmp.eq.s32.totalorder %s31, 0
    %p198 = por %p196, %p197
    %p199 = scmp.ne.s32.totalorder %s185, %s186
    %p200 = scmp.eq.s32.totalorder %s32, 1
    %p201 = por %p199, %p200
    %p203 = scmp.ne.s32.totalorder %s186, %s202
    %p204 = scmp.eq.s32.totalorder %s32, 0
    %p205 = por %p203, %p204
    %s206 = ssub.s32 %s26, %s33
    %p207 = scmp.eq.s32.totalorder %s206, 0
    %s209 = sadd.s32 %s208, 1
    %s210 = scalar_select %p207, %s208, %s209
    %p213 = pneg %p207
    %p214 = scmp.eq.s32.totalorder %s26, 1
    %p215 = por %p213, %p214
    %p216 = scmp.ne.s32.totalorder %s208, %s211
    %p217 = scmp.eq.s32.totalorder %s26, 0
    %p218 = por %p216, %p217
    %p219 = scmp.ne.s32.totalorder %s208, %s211
    %p220 = scmp.eq.s32.totalorder %s31, 1
    %p221 = por %p219, %p220
    %p222 = scmp.ne.s32.totalorder %s211, %s212
    %p223 = scmp.eq.s32.totalorder %s31, 0
    %p224 = por %p222, %p223
    %p225 = scmp.ne.s32.totalorder %s211, %s212
    %p226 = scmp.eq.s32.totalorder %s32, 1
    %p227 = por %p225, %p226
    %p229 = scmp.ne.s32.totalorder %s212, %s228
    %p230 = scmp.eq.s32.totalorder %s32, 0
    %p231 = por %p229, %p230
    %s232 = ssub.s32 %s26, %s33
    %p233 = scmp.eq.s32.totalorder %s232, 0
    %s235 = sadd.s32 %s234, 1
    %s236 = scalar_select %p233, %s234, %s235
    %p239 = pneg %p233
    %p240 = scmp.eq.s32.totalorder %s26, 1
    %p241 = por %p239, %p240
    %p242 = scmp.ne.s32.totalorder %s234, %s237
    %p243 = scmp.eq.s32.totalorder %s26, 0
    %p244 = por %p242, %p243
    %p245 = scmp.ne.s32.totalorder %s234, %s237
    %p246 = scmp.eq.s32.totalorder %s31, 1
    %p247 = por %p245, %p246
    %p248 = scmp.ne.s32.totalorder %s237, %s238
    %p249 = scmp.eq.s32.totalorder %s31, 0
    %p250 = por %p248, %p249
    %p251 = scmp.ne.s32.totalorder %s237, %s238
    %p252 = scmp.eq.s32.totalorder %s32, 1
    %p253 = por %p251, %p252
    %p255 = scmp.ne.s32.totalorder %s238, %s254
    %p256 = scmp.eq.s32.totalorder %s32, 0
    %p257 = por %p255, %p256
    %s258 = ssub.s32 %s26, %s33
    %p259 = scmp.eq.s32.totalorder %s258, 0
    %s261 = sadd.s32 %s260, 1
    %s262 = scalar_select %p259, %s260, %s261
    %p265 = pneg %p259
    %p266 = scmp.eq.s32.totalorder %s26, 1
    %p267 = por %p265, %p266
    %p268 = scmp.ne.s32.totalorder %s260, %s263
    %p269 = scmp.eq.s32.totalorder %s26, 0
    %p270 = por %p268, %p269
    %p271 = scmp.ne.s32.totalorder %s260, %s263
    %p272 = scmp.eq.s32.totalorder %s31, 1
    %p273 = por %p271, %p272
    %p274 = scmp.ne.s32.totalorder %s263, %s264
    %p275 = scmp.eq.s32.totalorder %s31, 0
    %p276 = por %p274, %p275
    %p277 = scmp.ne.s32.totalorder %s263, %s264
    %p278 = scmp.eq.s32.totalorder %s32, 1
    %p279 = por %p277, %p278
    %p281 = scmp.ne.s32.totalorder %s264, %s280
    %p282 = scmp.eq.s32.totalorder %s32, 0
    %p283 = por %p281, %p282
    %s284 = ssub.s32 %s26, %s33
    %p285 = scmp.eq.s32.totalorder %s284, 0
    %s287 = sadd.s32 %s286, 1
    %s288 = scalar_select %p285, %s286, %s287
    %p291 = pneg %p285
    %p292 = scmp.eq.s32.totalorder %s26, 1
    %p293 = por %p291, %p292
    %p294 = scmp.ne.s32.totalorder %s286, %s289
    %p295 = scmp.eq.s32.totalorder %s26, 0
    %p296 = por %p294, %p295
    %p297 = scmp.ne.s32.totalorder %s286, %s289
    %p298 = scmp.eq.s32.totalorder %s31, 1
    %p299 = por %p297, %p298
    %p300 = scmp.ne.s32.totalorder %s289, %s290
    %p301 = scmp.eq.s32.totalorder %s31, 0
    %p302 = por %p300, %p301
    %p303 = scmp.ne.s32.totalorder %s289, %s290
    %p304 = scmp.eq.s32.totalorder %s32, 1
    %p305 = por %p303, %p304
    %p307 = scmp.ne.s32.totalorder %s290, %s306
    %p308 = scmp.eq.s32.totalorder %s32, 0
    %p309 = por %p307, %p308
    %s311 = sadd.s32 %s310, 1
    %p314 = scmp.eq.s32.totalorder %s26, 1
    %p315 = scmp.ne.s32.totalorder %s310, %s312
    %p316 = scmp.eq.s32.totalorder %s26, 0
    %p317 = por %p315, %p316
    %p318 = scmp.ne.s32.totalorder %s310, %s312
    %p319 = scmp.eq.s32.totalorder %s31, 1
    %p320 = por %p318, %p319
    %p321 = scmp.ne.s32.totalorder %s312, %s313
    %p322 = scmp.eq.s32.totalorder %s31, 0
    %p323 = por %p321, %p322
    %p324 = scmp.ne.s32.totalorder %s312, %s313
    %p325 = scmp.eq.s32.totalorder %s32, 1
    %p326 = por %p324, %p325
    %p328 = scmp.ne.s32.totalorder %s313, %s327
    %p329 = scmp.eq.s32.totalorder %s32, 0
    %p330 = por %p328, %p329
    %s332 = sadd.s32 %s331, 1
    %p335 = scmp.eq.s32.totalorder %s26, 1
    %p336 = scmp.ne.s32.totalorder %s331, %s333
    %p337 = scmp.eq.s32.totalorder %s26, 0
    %p338 = por %p336, %p337
    %p339 = scmp.ne.s32.totalorder %s331, %s333
    %p340 = scmp.eq.s32.totalorder %s31, 1
    %p341 = por %p339, %p340
    %p342 = scmp.ne.s32.totalorder %s333, %s334
    %p343 = scmp.eq.s32.totalorder %s31, 0
    %p344 = por %p342, %p343
    %p345 = scmp.ne.s32.totalorder %s333, %s334
    %p346 = scmp.eq.s32.totalorder %s32, 1
    %p347 = por %p345, %p346
    %p349 = scmp.ne.s32.totalorder %s334, %s348
    %p350 = scmp.eq.s32.totalorder %s32, 0
    %p351 = por %p349, %p350
    %s353 = sadd.s32 %s352, 1
    %p356 = scmp.eq.s32.totalorder %s26, 1
    %p357 = scmp.ne.s32.totalorder %s352, %s354
    %p358 = scmp.eq.s32.totalorder %s26, 0
    %p359 = por %p357, %p358
    %p360 = scmp.ne.s32.totalorder %s352, %s354
    %p361 = scmp.eq.s32.totalorder %s31, 1
    %p362 = por %p360, %p361
    %p363 = scmp.ne.s32.totalorder %s354, %s355
    %p364 = scmp.eq.s32.totalorder %s31, 0
    %p365 = por %p363, %p364
    %p366 = scmp.ne.s32.totalorder %s354, %s355
    %p367 = scmp.eq.s32.totalorder %s32, 1
    %p368 = por %p366, %p367
    %p370 = scmp.ne.s32.totalorder %s355, %s369
    %p371 = scmp.eq.s32.totalorder %s32, 0
    %p372 = por %p370, %p371
    %p373 = scmp.le.s32.totalorder 1, %s26
    %p374 = scmp.lt.s32.totalorder %s26, 3
    %p375 = pnand %p373, %p374
    %p376 = pneg %p375
    // Predicated region
    $region9: #{daclip_forward.3} parent=5 // pred_check
      _
    $region10: #{daclip_forward.3} parent=5 // pred_check_branch
      %378 = sbr.rel (%p375) target = $region12
    $region11: #{daclip_forward.3} parent=5 // pred_region
      %s379 = ssub.s32 %s26, 1
      // Predicated region
      $region13: #{daclip_forward.3} parent=11 // pred_check
        %p380 = pneg %p47
      $region14: #{daclip_forward.3} parent=11 // pred_check_branch
        %382 = sbr.rel (%p380) target = $region16
      $region15: #{daclip_forward.3} parent=11 // pred_region
        _
      $region16: #{daclip_forward.3} parent=11 // pred_fallthru
        _
      // Predicated region
      $region17: #{daclip_forward.3} parent=11 // pred_check
        %p383 = pneg %p68
      $region18: #{daclip_forward.3} parent=11 // pred_check_branch
        %385 = sbr.rel (%p383) target = $region20
      $region19: #{daclip_forward.3} parent=11 // pred_region
        _
      $region20: #{daclip_forward.3} parent=11 // pred_fallthru
        _
      // Predicated region
      $region21: #{daclip_forward.3} parent=11 // pred_check
        %p386 = pneg %p323
      $region22: #{daclip_forward.3} parent=11 // pred_check_branch
        %388 = sbr.rel (%p386) target = $region24
      $region23: #{daclip_forward.3} parent=11 // pred_region
        _
      $region24: #{daclip_forward.3} parent=11 // pred_fallthru
        _
      // Predicated region
      $region25: #{daclip_forward.3} parent=11 // pred_check
        %p389 = pneg %p344
      $region26: #{daclip_forward.3} parent=11 // pred_check_branch
        %391 = sbr.rel (%p389) target = $region28
      $region27: #{daclip_forward.3} parent=11 // pred_region
        _
      $region28: #{daclip_forward.3} parent=11 // pred_fallthru
        _
    $region12: #{daclip_forward.3} parent=5 // pred_fallthru
      _
    %p392 = scmp.lt.s32.totalorder %s26, 2
    // Predicated region
    $region29: #{daclip_forward.3} parent=5 // pred_check
      %p393 = pneg %p392
    $region30: #{daclip_forward.3} parent=5 // pred_check_branch
      %395 = sbr.rel (%p393) target = $region32
    $region31: #{daclip_forward.3} parent=5 // pred_region
      // Predicated region
      $region33: #{daclip_forward.3} parent=31 // pred_check
        %p396 = pneg %p88
      $region34: #{daclip_forward.3} parent=31 // pred_check_branch
        %398 = sbr.rel (%p396) target = $region36
      $region35: #{daclip_forward.3} parent=31 // pred_region
        %p399 = scmp.lt.s32.totalorder %s26, 1
        %s400 = scalar_select %p399, %s26, 1
        %s401 = smul.addr %s400, 4
        %s402 = scalar_lea.vmem %s3, %s401
      $region36: #{daclip_forward.3} parent=31 // pred_fallthru
        _
      // Predicated region
      $region37: #{daclip_forward.3} parent=31 // pred_check
        %p403 = pneg %p114
      $region38: #{daclip_forward.3} parent=31 // pred_check_branch
        %405 = sbr.rel (%p403) target = $region40
      $region39: #{daclip_forward.3} parent=31 // pred_region
        %p406 = scmp.lt.s32.totalorder %s26, 1
        %s407 = scalar_select %p406, %s26, 1
        %s408 = smul.addr %s407, 4
        %s409 = smul.addr %s408, 4
        %s410 = scalar_lea.vmem %s4, %s409
      $region40: #{daclip_forward.3} parent=31 // pred_fallthru
        _
      // Predicated region
      $region41: #{daclip_forward.3} parent=31 // pred_check
        %p411 = pneg %p140
      $region42: #{daclip_forward.3} parent=31 // pred_check_branch
        %413 = sbr.rel (%p411) target = $region44
      $region43: #{daclip_forward.3} parent=31 // pred_region
        %p414 = scmp.lt.s32.totalorder %s26, 1
        %s415 = scalar_select %p414, %s26, 1
        %s416 = scalar_lea.vmem %s5, %s415
      $region44: #{daclip_forward.3} parent=31 // pred_fallthru
        _
      // Predicated region
      $region45: #{daclip_forward.3} parent=31 // pred_check
        %p417 = pneg %p166
      $region46: #{daclip_forward.3} parent=31 // pred_check_branch
        %419 = sbr.rel (%p417) target = $region48
      $region47: #{daclip_forward.3} parent=31 // pred_region
        %p420 = scmp.lt.s32.totalorder %s26, 1
        %s421 = scalar_select %p420, %s26, 1
        %s422 = smul.addr %s421, 4
        %s423 = smul.addr %s422, 4
        %s424 = scalar_lea.vmem %s6, %s423
      $region48: #{daclip_forward.3} parent=31 // pred_fallthru
        _
      // Predicated region
      $region49: #{daclip_forward.3} parent=31 // pred_check
        %p425 = pneg %p192
      $region50: #{daclip_forward.3} parent=31 // pred_check_branch
        %427 = sbr.rel (%p425) target = $region52
      $region51: #{daclip_forward.3} parent=31 // pred_region
        %p428 = scmp.lt.s32.totalorder %s26, 1
        %s429 = scalar_select %p428, %s26, 1
        %s430 = scalar_lea.vmem %s7, %s429
      $region52: #{daclip_forward.3} parent=31 // pred_fallthru
        _
      // Predicated region
      $region53: #{daclip_forward.3} parent=31 // pred_check
        %p431 = pneg %p218
      $region54: #{daclip_forward.3} parent=31 // pred_check_branch
        %433 = sbr.rel (%p431) target = $region56
      $region55: #{daclip_forward.3} parent=31 // pred_region
        %p434 = scmp.lt.s32.totalorder %s26, 1
        %s435 = scalar_select %p434, %s26, 1
        %s436 = smul.addr %s435, 4
        %s437 = smul.addr %s436, 4
        %s438 = scalar_lea.vmem %s8, %s437
      $region56: #{daclip_forward.3} parent=31 // pred_fallthru
        _
      // Predicated region
      $region57: #{daclip_forward.3} parent=31 // pred_check
        %p439 = pneg %p244
      $region58: #{daclip_forward.3} parent=31 // pred_check_branch
        %441 = sbr.rel (%p439) target = $region60
      $region59: #{daclip_forward.3} parent=31 // pred_region
        %p442 = scmp.lt.s32.totalorder %s26, 1
        %s443 = scalar_select %p442, %s26, 1
        %s444 = scalar_lea.vmem %s9, %s443
      $region60: #{daclip_forward.3} parent=31 // pred_fallthru
        _
      // Predicated region
      $region61: #{daclip_forward.3} parent=31 // pred_check
        %p445 = pneg %p270
      $region62: #{daclip_forward.3} parent=31 // pred_check_branch
        %447 = sbr.rel (%p445) target = $region64
      $region63: #{daclip_forward.3} parent=31 // pred_region
        %p448 = scmp.lt.s32.totalorder %s26, 1
        %s449 = scalar_select %p448, %s26, 1
        %s450 = smul.addr %s449, 16
        %s451 = smul.addr %s450, 4
        %s452 = scalar_lea.vmem %s10, %s451
      $region64: #{daclip_forward.3} parent=31 // pred_fallthru
        _
      // Predicated region
      $region65: #{daclip_forward.3} parent=31 // pred_check
        %p453 = pneg %p296
      $region66: #{daclip_forward.3} parent=31 // pred_check_branch
        %455 = sbr.rel (%p453) target = $region68
      $region67: #{daclip_forward.3} parent=31 // pred_region
        %p456 = scmp.lt.s32.totalorder %s26, 1
        %s457 = scalar_select %p456, %s26, 1
        %s458 = scalar_lea.vmem %s11, %s457
      $region68: #{daclip_forward.3} parent=31 // pred_fallthru
        _
    $region32: #{daclip_forward.3} parent=5 // pred_fallthru
      _
    %p459 = scmp.le.s32.totalorder 1, %s26
    %p460 = scmp.lt.s32.totalorder %s26, 3
    %p461 = pnand %p459, %p460
    %p462 = pneg %p461
    // Predicated region
    $region69: #{daclip_forward.3} parent=5 // pred_check
      _
    $region70: #{daclip_forward.3} parent=5 // pred_check_branch
      %464 = sbr.rel (%p461) target = $region72
    $region71: #{daclip_forward.3} parent=5 // pred_region
      %s465 = ssub.s32 %s26, 1
      %p466 = pneg %p47
      %p467 = pneg %p44
      %p468 = pneg %p68
      %p469 = pneg %p65
      %p470 = scmp.lt.s32.totalorder %s31, 1
      %s471 = scalar_select %p470, %s31, 1
      %s472 = smul.addr %s471, 4
      %s473 = scalar_lea.vmem %s3, %s472
      %p474 = pneg %p94
      %p475 = pneg %p91
      %p476 = scmp.lt.s32.totalorder %s31, 1
      %s477 = scalar_select %p476, %s31, 1
      %s478 = smul.addr %s477, 4
      %s479 = smul.addr %s478, 4
      %s480 = scalar_lea.vmem %s4, %s479
      %p481 = pneg %p120
      %p482 = pneg %p117
      %p483 = scmp.lt.s32.totalorder %s31, 1
      %s484 = scalar_select %p483, %s31, 1
      %s485 = scalar_lea.vmem %s5, %s484
      %p486 = pneg %p146
      %p487 = pneg %p143
      %p488 = scmp.lt.s32.totalorder %s31, 1
      %s489 = scalar_select %p488, %s31, 1
      %s490 = smul.addr %s489, 4
      %s491 = smul.addr %s490, 4
      %s492 = scalar_lea.vmem %s6, %s491
      %p493 = pneg %p172
      %p494 = pneg %p169
      %p495 = scmp.lt.s32.totalorder %s31, 1
      %s496 = scalar_select %p495, %s31, 1
      %s497 = scalar_lea.vmem %s7, %s496
      %p498 = pneg %p198
      %p499 = pneg %p195
      %p500 = scmp.lt.s32.totalorder %s31, 1
      %s501 = scalar_select %p500, %s31, 1
      %s502 = smul.addr %s501, 4
      %s503 = smul.addr %s502, 4
      %s504 = scalar_lea.vmem %s8, %s503
      %p505 = pneg %p224
      %p506 = pneg %p221
      %p507 = scmp.lt.s32.totalorder %s31, 1
      %s508 = scalar_select %p507, %s31, 1
      %s509 = scalar_lea.vmem %s9, %s508
      %p510 = pneg %p250
      %p511 = pneg %p247
      %p512 = scmp.lt.s32.totalorder %s31, 1
      %s513 = scalar_select %p512, %s31, 1
      %s514 = smul.addr %s513, 16
      %s515 = smul.addr %s514, 4
      %s516 = scalar_lea.vmem %s10, %s515
      %p517 = pneg %p276
      %p518 = pneg %p273
      %p519 = scmp.lt.s32.totalorder %s31, 1
      %s520 = scalar_select %p519, %s31, 1
      %s521 = scalar_lea.vmem %s11, %s520
      %p522 = pneg %p302
      %p523 = pneg %p299
      %p524 = pneg %p323
      %p525 = pneg %p320
      %p526 = pneg %p344
      %p527 = pneg %p341
      %p528 = pneg %p365
      %p529 = pneg %p362
      %p530 = scmp.lt.s32.totalorder %s31, 1
      %s531 = scalar_select %p530, %s31, 1
      %s532 = smul.addr %s531, 4
      %s533 = scalar_lea.vmem %s3, %s532
      %p534 = scmp.lt.s32.totalorder %s31, 1
      %s535 = scalar_select %p534, %s31, 1
      %s536 = smul.addr %s535, 4
      %s537 = smul.addr %s536, 4
      %s538 = scalar_lea.vmem %s4, %s537
      %p539 = scmp.lt.s32.totalorder %s31, 1
      %s540 = scalar_select %p539, %s31, 1
      %s541 = scalar_lea.vmem %s5, %s540
      %p542 = scmp.lt.s32.totalorder %s31, 1
      %s543 = scalar_select %p542, %s31, 1
      %s544 = smul.addr %s543, 4
      %s545 = smul.addr %s544, 4
      %s546 = scalar_lea.vmem %s6, %s545
      %p547 = scmp.lt.s32.totalorder %s31, 1
      %s548 = scalar_select %p547, %s31, 1
      %s549 = scalar_lea.vmem %s7, %s548
      %p550 = scmp.lt.s32.totalorder %s31, 1
      %s551 = scalar_select %p550, %s31, 1
      %s552 = smul.addr %s551, 4
      %s553 = smul.addr %s552, 4
      %s554 = scalar_lea.vmem %s8, %s553
      %p555 = scmp.lt.s32.totalorder %s31, 1
      %s556 = scalar_select %p555, %s31, 1
      %s557 = scalar_lea.vmem %s9, %s556
      %p558 = scmp.lt.s32.totalorder %s31, 1
      %s559 = scalar_select %p558, %s31, 1
      %s560 = smul.addr %s559, 16
      %s561 = smul.addr %s560, 4
      %s562 = scalar_lea.vmem %s10, %s561
      %p563 = scmp.lt.s32.totalorder %s31, 1
      %s564 = scalar_select %p563, %s31, 1
      %s565 = scalar_lea.vmem %s11, %s564
      %p567 = scmp.eq.s32.totalorder %s31, 0
      // Predicated region
      $region73: #{daclip_forward.3} parent=71 // pred_check
        %p568 = pneg %p567
      $region74: #{daclip_forward.3} parent=71 // pred_check_branch
        %570 = sbr.rel (%p568) target = $region76
      $region75: #{daclip_forward.3} parent=71 // pred_region
        %v571 = vld [vmem:[%s1] sm:$0xff]
        %v572 = vld [vmem:[%s1 + $0x8] sm:$0xff]
        %v573 = vld [vmem:[%s1 + $0x10] sm:$0xff]
        %v574 = vld [vmem:[%s1 + $0x18] sm:$0xff]
        %vm575 = vcmask 261120
        %576 = vst.msk [vmem:[#allocation2] sm:$0xff] %vm575, %v571
        %577 = vst.msk [vmem:[#allocation2 + $0x8] sm:$0xff] %vm575, %v572
        %578 = vst.msk [vmem:[#allocation2 + $0x10] sm:$0xff] %vm575, %v573
        %579 = vst.msk [vmem:[#allocation2 + $0x18] sm:$0xff] %vm575, %v574
      $region76: #{daclip_forward.3} parent=71 // pred_fallthru
        _
      %v580 = vld [vmem:[%s533] sm:$0xf]
      %v581 = vld [vmem:[%s538] sm:$0xf]
      %v582 = vld [vmem:[%s538 + $0x4] sm:$0xf]
      %v583 = vld [vmem:[%s538 + $0x8] sm:$0xf]
      %v584 = vld [vmem:[%s538 + $0xc] sm:$0xf]
      %v585 = vld [vmem:[%s541] sm:$0x1]
      %v586 = vld [vmem:[%s546] sm:$0xf]
      %v587 = vld [vmem:[%s546 + $0x4] sm:$0xf]
      %v588 = vld [vmem:[%s546 + $0x8] sm:$0xf]
      %v589 = vld [vmem:[%s546 + $0xc] sm:$0xf]
      %v590 = vld [vmem:[%s549] sm:$0x1]
      %v591 = vld [vmem:[%s554] sm:$0xf]
      %v592 = vld [vmem:[%s554 + $0x4] sm:$0xf]
      %v593 = vld [vmem:[%s554 + $0x8] sm:$0xf]
      %v594 = vld [vmem:[%s554 + $0xc] sm:$0xf]
      %v595 = vld [vmem:[%s557] sm:$0x1]
      %v596 = vld [vmem:[%s562] sm:$0xf]
      %v597 = vld [vmem:[%s562 + $0x4] sm:$0xf]
      %v598 = vld [vmem:[%s562 + $0x8] sm:$0xf]
      %v599 = vld [vmem:[%s562 + $0xc] sm:$0xf]
      %v600 = vld [vmem:[%s562 + $0x10] sm:$0xf]
      %v601 = vld [vmem:[%s562 + $0x14] sm:$0xf]
      %v602 = vld [vmem:[%s562 + $0x18] sm:$0xf]
      %v603 = vld [vmem:[%s562 + $0x1c] sm:$0xf]
      %v604 = vld [vmem:[%s562 + $0x20] sm:$0xf]
      %v605 = vld [vmem:[%s562 + $0x24] sm:$0xf]
      %v606 = vld [vmem:[%s562 + $0x28] sm:$0xf]
      %v607 = vld [vmem:[%s562 + $0x2c] sm:$0xf]
      %v608 = vld [vmem:[%s562 + $0x30] sm:$0xf]
      %v609 = vld [vmem:[%s562 + $0x34] sm:$0xf]
      %v610 = vld [vmem:[%s562 + $0x38] sm:$0xf]
      %v611 = vld [vmem:[%s562 + $0x3c] sm:$0xf]
      %v612 = vld [vmem:[%s565] sm:$0x1]
      %v613 = vld [vmem:[#allocation2] sm:$0xff]
      %v614 = vld [vmem:[#allocation2 + $0x8] sm:$0xff]
      %v615 = vld [vmem:[#allocation2 + $0x10] sm:$0xff]
      %v616 = vld [vmem:[#allocation2 + $0x18] sm:$0xff]
      %v617 = vld [vmem:[%s2] sm:$0xff]
      %v618 = vld [vmem:[%s2 + $0x8] sm:$0xff]
      %v619 = vld [vmem:[%s2 + $0x10] sm:$0xff]
      %v620 = vld [vmem:[%s2 + $0x18] sm:$0xff]
      %vm621 = vcmask 261120
      %v622 = vsel %vm621, %v613, 0.0
      %623 = vadd.xlane.f32.xlu0 %v622
      %v624 = vpop.xlane.xlu0 %623
      %v625 = vsel %vm621, %v614, 0.0
      %626 = vadd.xlane.f32.xlu0 %v625
      %v627 = vpop.xlane.xlu0 %626
      %v628 = vsel %vm621, %v615, 0.0
      %629 = vadd.xlane.f32.xlu0 %v628
      %v630 = vpop.xlane.xlu0 %629
      %v631 = vsel %vm621, %v616, 0.0
      %632 = vadd.xlane.f32.xlu0 %v631
      %v633 = vpop.xlane.xlu0 %632
      %v634 = vrcp.pop 32.0
      %v635 = vmul.f32 %v624, %v634
      %v636 = vmul.f32 %v627, %v634
      %v637 = vmul.f32 %v630, %v634
      %v638 = vmul.f32 %v633, %v634
      %v639 = vsub.f32 %v613, %v635
      %v640 = vsub.f32 %v614, %v636
      %v641 = vsub.f32 %v615, %v637
      %v642 = vsub.f32 %v616, %v638
      %v643 = vmul.f32 %v639, %v639
      %v644 = vmul.f32 %v640, %v640
      %v645 = vmul.f32 %v641, %v641
      %v646 = vmul.f32 %v642, %v642
      %v647 = vsel %vm621, %v643, 0.0
      %648 = vadd.xlane.f32.xlu0 %v647
      %v649 = vpop.xlane.xlu0 %648
      %v650 = vsel %vm621, %v644, 0.0
      %651 = vadd.xlane.f32.xlu0 %v650
      %v652 = vpop.xlane.xlu0 %651
      %v653 = vsel %vm621, %v645, 0.0
      %654 = vadd.xlane.f32.xlu0 %v653
      %v655 = vpop.xlane.xlu0 %654
      %v656 = vsel %vm621, %v646, 0.0
      %657 = vadd.xlane.f32.xlu0 %v656
      %v658 = vpop.xlane.xlu0 %657
      %v659 = vmul.f32 %v649, %v634
      %v660 = vmul.f32 %v652, %v634
      %v661 = vmul.f32 %v655, %v634
      %v662 = vmul.f32 %v658, %v634
      %v663 = vadd.f32 %v659, 1e-05
      %v664 = vadd.f32 %v660, 1e-05
      %v665 = vadd.f32 %v661, 1e-05
      %v666 = vadd.f32 %v662, 1e-05
      %v667 = vrsqrt.pop %v663
      %v668 = vrsqrt.pop %v664
      %v669 = vrsqrt.pop %v665
      %v670 = vrsqrt.pop %v666
      %v671 = vmul.f32 %v639, %v667
      %v672 = vmul.f32 %v640, %v668
      %v673 = vmul.f32 %v641, %v669
      %v674 = vmul.f32 %v642, %v670
      %v675 = vlaneseq
      %v676 = vshrl.u32 %v675, 7
      %v677 = vsub.s32 0, %v676
      %v678 = vrot.slane %v580, %v677
      %v679 = vmul.f32 %v671, %v678
      %v680 = vmul.f32 %v672, %v678
      %v681 = vmul.f32 %v673, %v678
      %v682 = vmul.f32 %v674, %v678
      %v683 = vlaneseq
      %v684 = vshrl.u32 %v683, 7
      %v685 = vsub.s32 1, %v684
      %v686 = vrot.slane %v580, %v685
      %v687 = vadd.f32 %v679, %v686
      %v688 = vadd.f32 %v680, %v686
      %v689 = vadd.f32 %v681, %v686
      %v690 = vadd.f32 %v682, %v686
      %v691 = vpack.c.bf16 %v688, %v687
      %v692 = vpack.c.bf16 %v690, %v689
      %v694 = vlaneseq
      %v695 = vshrl.u32 %v694, 7
      %v696 = vsub.s32 0, %v695
      %v697 = vrot.slane %v585, %v696
      %v703 = vunpack.c.l.b16 %v581
      %v704 = vunpack.c.l.b16 %v582
      %v705 = vunpack.c.l.b16 %v583
      %v706 = vunpack.c.l.b16 %v584
      %v707 = vpack.c.b16 %v704, %v703
      %v708 = vpack.c.b16 %v706, %v705
      %v712 = vsel %vm621, %v691, 0
      %v715 = vsel %vm621, %v692, 0
      %717 = vmatprep.subr.bf16.mxu0 0
      %718 = vmatpush1.bf16.msra.mxu0 %v707
      %719 = vmatprep.subr.bf16.mxu0 0
      %720 = vmatpush1.bf16.msra.mxu0 %v708
      %721 = vmatprep.subr.bf16.mxu0 0
      %722 = vmatpush1.bf16.msra.mxu0 0
      %723 = vmatprep.subr.bf16.mxu0 0
      %724 = vmatpush1.bf16.msra.mxu0 0
      %725 = vmatprep.subr.bf16.mxu0 0
      %726 = vmatpush1.bf16.msra.mxu0 0
      %727 = vmatprep.subr.bf16.mxu0 0
      %728 = vmatpush1.bf16.msra.mxu0 0
      %729 = vmatprep.subr.bf16.mxu0 0
      %730 = vmatpush1.bf16.msra.mxu0 0
      %731 = vmatprep.subr.bf16.mxu0 0
      %732 = vmatpush1.bf16.msra.mxu0 0
      %733 = vmatprep.subr.bf16.mxu0 0
      %734 = vmatpush1.bf16.msra.mxu0 0
      %735 = vmatprep.subr.bf16.mxu0 0
      %736 = vmatpush1.bf16.msra.mxu0 0
      %737 = vmatprep.subr.bf16.mxu0 0
      %738 = vmatpush1.bf16.msra.mxu0 0
      %739 = vmatprep.subr.bf16.mxu0 0
      %740 = vmatpush1.bf16.msra.mxu0 0
      %741 = vmatprep.subr.bf16.mxu0 0
      %742 = vmatpush1.bf16.msra.mxu0 0
      %743 = vmatprep.subr.bf16.mxu0 0
      %744 = vmatpush1.bf16.msra.mxu0 0
      %745 = vmatprep.subr.bf16.mxu0 0
      %746 = vmatpush1.bf16.msra.mxu0 0
      %747 = vmatprep.subr.bf16.mxu0 0
      %748 = vmatpush1.bf16.msra.mxu0 0
      %749 = vmatprep.mubr.bf16.mxu0 0
      %750 = vmatmul.mubr.bf16.gmra.mrb[0].mxu0 %v712
      %v751 = vpop.f32.mrb[0].mxu0
      %v752 = vadd.f32 %v697, %v751
      %v753 = vpop.f32.mrb[0].mxu0
      %v754 = vpop.f32.mrb[0].mxu0
      %v755 = vadd.f32 %v697, %v754
      %v756 = vpop.f32.mrb[0].mxu0
      %757 = vmatprep.mubr.bf16.mxu0 0
      %758 = vmatmul.mubr.bf16.gmra.mrb[0].mxu0 %v715
      %v759 = vpop.f32.mrb[0].mxu0
      %v760 = vadd.f32 %v697, %v759
      %v761 = vpop.f32.mrb[0].mxu0
      %v762 = vpop.f32.mrb[0].mxu0
      %v763 = vadd.f32 %v697, %v762
      %v764 = vpop.f32.mrb[0].mxu0
      %765 = vdwg.mxu0
      %770 = vrot.lane.b32.xlu0 %v752, 96
      %v771 = vpop.permute.xlu0 %770
      %772 = vrot.lane.b32.xlu0 %v755, 96
      %v773 = vpop.permute.xlu0 %772
      %774 = vrot.lane.b32.xlu0 %v760, 96
      %v775 = vpop.permute.xlu0 %774
      %776 = vrot.lane.b32.xlu0 %v763, 96
      %v777 = vpop.permute.xlu0 %776
      %vm778 = vcmask 64512
      %v779 = vsel %vm778, %v752, 0
      %v781 = vsel %vm778, %v755, 0
      %v783 = vsel %vm778, %v760, 0
      %v785 = vsel %vm778, %v763, 0
      %v787 = vsel %vm778, %v771, 0
      %v789 = vsel %vm778, %v773, 0
      %v791 = vsel %vm778, %v775, 0
      %v793 = vsel %vm778, %v777, 0
      %795 = vmatprep.subr.mxu0 0.0
      %796 = vmatpush1.xpose.msra.mxu0 %v787
      %797 = vmatprep.subr.mxu0 0.0
      %798 = vmatpush1.xpose.msra.mxu0 %v789
      %799 = vmatprep.subr.mxu0 0.0
      %800 = vmatpush1.xpose.msra.mxu0 %v791
      %801 = vmatprep.subr.mxu0 0.0
      %802 = vmatpush1.xpose.msra.mxu0 %v793
      %803 = vmatprep.subr.mxu0 0.0
      %804 = vmatpush1.xpose.msra.mxu0 0.0
      %805 = vmatprep.subr.mxu0 0.0
      %806 = vmatpush1.xpose.msra.mxu0 0.0
      %807 = vmatprep.subr.mxu0 0.0
      %808 = vmatpush1.xpose.msra.mxu0 0.0
      %809 = vmatprep.subr.mxu0 0.0
      %810 = vmatpush1.xpose.msra.mxu0 0.0
      %811 = vmatprep.subr.mxu0 0.0
      %812 = vmatpush1.xpose.msra.mxu0 0.0
      %813 = vmatprep.subr.mxu0 0.0
      %814 = vmatpush1.xpose.msra.mxu0 0.0
      %815 = vmatprep.subr.mxu0 0.0
      %816 = vmatpush1.xpose.msra.mxu0 0.0
      %817 = vmatprep.subr.mxu0 0.0
      %818 = vmatpush1.xpose.msra.mxu0 0.0
      %819 = vmatprep.subr.mxu0 0.0
      %820 = vmatpush1.xpose.msra.mxu0 0.0
      %821 = vmatprep.subr.mxu0 0.0
      %822 = vmatpush1.xpose.msra.mxu0 0.0
      %823 = vmatprep.subr.mxu0 0.0
      %824 = vmatpush1.xpose.msra.mxu0 0.0
      %825 = vmatprep.subr.mxu0 0.0
      %826 = vmatpush1.xpose.msra.mxu0 0.0
      %827 = vmatprep.subr.mxu0 0.0
      %828 = vmatpush1.xpose.msra.mxu0 0.0
      %829 = vmatprep.subr.mxu0 0.0
      %830 = vmatpush1.xpose.msra.mxu0 0.0
      %831 = vmatprep.subr.mxu0 0.0
      %832 = vmatpush1.xpose.msra.mxu0 0.0
      %833 = vmatprep.subr.mxu0 0.0
      %834 = vmatpush1.xpose.msra.mxu0 0.0
      %835 = vmatprep.subr.mxu0 0.0
      %836 = vmatpush1.xpose.msra.mxu0 0.0
      %837 = vmatprep.subr.mxu0 0.0
      %838 = vmatpush1.xpose.msra.mxu0 0.0
      %839 = vmatprep.subr.mxu0 0.0
      %840 = vmatpush1.xpose.msra.mxu0 0.0
      %841 = vmatprep.subr.mxu0 0.0
      %842 = vmatpush1.xpose.msra.mxu0 0.0
      %843 = vmatprep.subr.mxu0 0.0
      %844 = vmatpush1.xpose.msra.mxu0 0.0
      %845 = vmatprep.subr.mxu0 0.0
      %846 = vmatpush1.xpose.msra.mxu0 0.0
      %847 = vmatprep.subr.mxu0 0.0
      %848 = vmatpush1.xpose.msra.mxu0 0.0
      %849 = vmatprep.subr.mxu0 0.0
      %850 = vmatpush1.xpose.msra.mxu0 0.0
      %851 = vmatprep.subr.mxu0 0.0
      %852 = vmatpush1.xpose.msra.mxu0 0.0
      %853 = vmatprep.subr.mxu0 0.0
      %854 = vmatpush1.xpose.msra.mxu0 0.0
      %855 = vmatprep.subr.mxu0 0.0
      %856 = vmatpush1.xpose.msra.mxu0 0.0
      %857 = vmatprep.subr.mxu0 0.0
      %858 = vmatpush1.xpose.msra.mxu0 0.0
      %859 = vmatprep.mubr.f32.mxu0 0.0
      %860 = vmatmul.mubr.f32.gmra.mrb[0].mxu0 %v779
      %v861 = vpop.f32.mrb[0].mxu0
      %v862 = vadd.f32 0.0, %v861
      %v863 = vpop.f32.mrb[0].mxu0
      %864 = vmatprep.mubr.f32.mxu0 0.0
      %865 = vmatmul.mubr.f32.gmra.mrb[0].mxu0 %v781
      %v866 = vpop.f32.mrb[0].mxu0
      %v867 = vadd.f32 0.0, %v866
      %v868 = vpop.f32.mrb[0].mxu0
      %869 = vmatprep.mubr.f32.mxu0 0.0
      %870 = vmatmul.mubr.f32.gmra.mrb[0].mxu0 %v783
      %v871 = vpop.f32.mrb[0].mxu0
      %v872 = vadd.f32 0.0, %v871
      %v873 = vpop.f32.mrb[0].mxu0
      %874 = vmatprep.mubr.f32.mxu0 0.0
      %875 = vmatmul.mubr.f32.gmra.mrb[0].mxu0 %v785
      %v876 = vpop.f32.mrb[0].mxu0
      %v877 = vadd.f32 0.0, %v876
      %v878 = vpop.f32.mrb[0].mxu0
      %879 = vdwg.mxu0
      %v880 = vmul.f32 %v862, 0.35355338
      %v881 = vmul.f32 %v867, 0.35355338
      %v882 = vmul.f32 %v872, 0.35355338
      %v883 = vmul.f32 %v877, 0.35355338
      %v884 = vadd.f32 %v880, %v617
      %v885 = vadd.f32 %v881, %v618
      %v886 = vadd.f32 %v882, %v619
      %v887 = vadd.f32 %v883, %v620
      %v888 = vsel %vm621, %v884, -inf
      %889 = vmax.xlane.f32.xlu0 %v888
      %v890 = vpop.xlane.xlu0 %889
      %v891 = vsel %vm621, %v885, -inf
      %892 = vmax.xlane.f32.xlu0 %v891
      %v893 = vpop.xlane.xlu0 %892
      %v894 = vsel %vm621, %v886, -inf
      %895 = vmax.xlane.f32.xlu0 %v894
      %v896 = vpop.xlane.xlu0 %895
      %v897 = vsel %vm621, %v887, -inf
      %898 = vmax.xlane.f32.xlu0 %v897
      %v899 = vpop.xlane.xlu0 %898
      %v900 = vsub.f32 %v884, %v890
      %v901 = vsub.f32 %v885, %v893
      %v902 = vsub.f32 %v886, %v896
      %v903 = vsub.f32 %v887, %v899
      %v904 = vmul.f32 %v900, 1.442695
      %v905 = vpow.pop %v904
      %v906 = vmul.f32 %v901, 1.442695
      %v907 = vpow.pop %v906
      %v908 = vmul.f32 %v902, 1.442695
      %v909 = vpow.pop %v908
      %v910 = vmul.f32 %v903, 1.442695
      %v911 = vpow.pop %v910
      %v912 = vsel %vm621, %v905, 0.0
      %913 = vadd.xlane.f32.xlu0 %v912
      %v914 = vpop.xlane.xlu0 %913
      %v915 = vsel %vm621, %v907, 0.0
      %916 = vadd.xlane.f32.xlu0 %v915
      %v917 = vpop.xlane.xlu0 %916
      %v918 = vsel %vm621, %v909, 0.0
      %919 = vadd.xlane.f32.xlu0 %v918
      %v920 = vpop.xlane.xlu0 %919
      %v921 = vsel %vm621, %v911, 0.0
      %922 = vadd.xlane.f32.xlu0 %v921
      %v923 = vpop.xlane.xlu0 %922
      %v924 = vrcp.pop %v914
      %v925 = vrcp.pop %v917
      %v926 = vrcp.pop %v920
      %v927 = vrcp.pop %v923
      %v928 = vmul.f32 %v905, %v924
      %v929 = vmul.f32 %v907, %v925
      %v930 = vmul.f32 %v909, %v926
      %v931 = vmul.f32 %v911, %v927
      %932 = vrot.lane.b32.xlu0 %v752, 64
      %v933 = vpop.permute.xlu0 %932
      %934 = vrot.lane.b32.xlu0 %v755, 64
      %v935 = vpop.permute.xlu0 %934
      %936 = vrot.lane.b32.xlu0 %v760, 64
      %v937 = vpop.permute.xlu0 %936
      %938 = vrot.lane.b32.xlu0 %v763, 64
      %v939 = vpop.permute.xlu0 %938
      %v945 = vsel %vm621, %v928, 0
      %v948 = vsel %vm621, %v929, 0
      %v951 = vsel %vm621, %v930, 0
      %v954 = vsel %vm621, %v931, 0
      %956 = vmatprep.subr.mxu0 0.0
      %957 = vmatpush1.msra.mxu0 %v933
      %958 = vmatprep.subr.mxu0 0.0
      %959 = vmatpush1.msra.mxu0 %v935
      %960 = vmatprep.subr.mxu0 0.0
      %961 = vmatpush1.msra.mxu0 %v937
      %962 = vmatprep.subr.mxu0 0.0
      %963 = vmatpush1.msra.mxu0 %v939
      %964 = vmatprep.subr.mxu0 0.0
      %965 = vmatpush1.msra.mxu0 0.0
      %966 = vmatprep.subr.mxu0 0.0
      %967 = vmatpush1.msra.mxu0 0.0
      %968 = vmatprep.subr.mxu0 0.0
      %969 = vmatpush1.msra.mxu0 0.0
      %970 = vmatprep.subr.mxu0 0.0
      %971 = vmatpush1.msra.mxu0 0.0
      %972 = vmatprep.subr.mxu0 0.0
      %973 = vmatpush1.msra.mxu0 0.0
      %974 = vmatprep.subr.mxu0 0.0
      %975 = vmatpush1.msra.mxu0 0.0
      %976 = vmatprep.subr.mxu0 0.0
      %977 = vmatpush1.msra.mxu0 0.0
      %978 = vmatprep.subr.mxu0 0.0
      %979 = vmatpush1.msra.mxu0 0.0
      %980 = vmatprep.subr.mxu0 0.0
      %981 = vmatpush1.msra.mxu0 0.0
      %982 = vmatprep.subr.mxu0 0.0
      %983 = vmatpush1.msra.mxu0 0.0
      %984 = vmatprep.subr.mxu0 0.0
      %985 = vmatpush1.msra.mxu0 0.0
      %986 = vmatprep.subr.mxu0 0.0
      %987 = vmatpush1.msra.mxu0 0.0
      %988 = vmatprep.subr.mxu0 0.0
      %989 = vmatpush1.msra.mxu0 0.0
      %990 = vmatprep.subr.mxu0 0.0
      %991 = vmatpush1.msra.mxu0 0.0
      %992 = vmatprep.subr.mxu0 0.0
      %993 = vmatpush1.msra.mxu0 0.0
      %994 = vmatprep.subr.mxu0 0.0
      %995 = vmatpush1.msra.mxu0 0.0
      %996 = vmatprep.subr.mxu0 0.0
      %997 = vmatpush1.msra.mxu0 0.0
      %998 = vmatprep.subr.mxu0 0.0
      %999 = vmatpush1.msra.mxu0 0.0
      %1000 = vmatprep.subr.mxu0 0.0
      %1001 = vmatpush1.msra.mxu0 0.0
      %1002 = vmatprep.subr.mxu0 0.0
      %1003 = vmatpush1.msra.mxu0 0.0
      %1004 = vmatprep.subr.mxu0 0.0
      %1005 = vmatpush1.msra.mxu0 0.0
      %1006 = vmatprep.subr.mxu0 0.0
      %1007 = vmatpush1.msra.mxu0 0.0
      %1008 = vmatprep.subr.mxu0 0.0
      %1009 = vmatpush1.msra.mxu0 0.0
      %1010 = vmatprep.subr.mxu0 0.0
      %1011 = vmatpush1.msra.mxu0 0.0
      %1012 = vmatprep.subr.mxu0 0.0
      %1013 = vmatpush1.msra.mxu0 0.0
      %1014 = vmatprep.subr.mxu0 0.0
      %1015 = vmatpush1.msra.mxu0 0.0
      %1016 = vmatprep.subr.mxu0 0.0
      %1017 = vmatpush1.msra.mxu0 0.0
      %1018 = vmatprep.subr.mxu0 0.0
      %1019 = vmatpush1.msra.mxu0 0.0
      %1020 = vmatprep.mubr.f32.mxu0 0.0
      %1021 = vmatmul.mubr.f32.gmra.mrb[0].mxu0 %v945
      %v1022 = vpop.f32.mrb[0].mxu0
      %v1023 = vadd.f32 0.0, %v1022
      %v1024 = vpop.f32.mrb[0].mxu0
      %1025 = vmatprep.mubr.f32.mxu0 0.0
      %1026 = vmatmul.mubr.f32.gmra.mrb[0].mxu0 %v948
      %v1027 = vpop.f32.mrb[0].mxu0
      %v1028 = vadd.f32 0.0, %v1027
      %v1029 = vpop.f32.mrb[0].mxu0
      %1030 = vmatprep.mubr.f32.mxu0 0.0
      %1031 = vmatmul.mubr.f32.gmra.mrb[0].mxu0 %v951
      %v1032 = vpop.f32.mrb[0].mxu0
      %v1033 = vadd.f32 0.0, %v1032
      %v1034 = vpop.f32.mrb[0].mxu0
      %1035 = vmatprep.mubr.f32.mxu0 0.0
      %1036 = vmatmul.mubr.f32.gmra.mrb[0].mxu0 %v954
      %v1037 = vpop.f32.mrb[0].mxu0
      %v1038 = vadd.f32 0.0, %v1037
      %v1039 = vpop.f32.mrb[0].mxu0
      %1040 = vdwg.mxu0
      %1041 = vst.msk [vmem:[#allocation3] sm:$0xff] %vm778, %v1023
      %1042 = vst.msk [vmem:[#allocation3 + $0x8] sm:$0xff] %vm778, %v1028
      %1043 = vst.msk [vmem:[#allocation3 + $0x10] sm:$0xff] %vm778, %v1033
      %1044 = vst.msk [vmem:[#allocation3 + $0x18] sm:$0xff] %vm778, %v1038
      %1045 = vrot.lane.b32.xlu0 %v752, 120
      %v1046 = vpop.permute.xlu0 %1045
      %1047 = vrot.lane.b32.xlu0 %v755, 120
      %v1048 = vpop.permute.xlu0 %1047
      %1049 = vrot.lane.b32.xlu0 %v760, 120
      %v1050 = vpop.permute.xlu0 %1049
      %1051 = vrot.lane.b32.xlu0 %v763, 120
      %v1052 = vpop.permute.xlu0 %1051
      %1053 = vrot.lane.b32.xlu0 %v752, 88
      %v1054 = vpop.permute.xlu0 %1053
      %1055 = vrot.lane.b32.xlu0 %v755, 88
      %v1056 = vpop.permute.xlu0 %1055
      %1057 = vrot.lane.b32.xlu0 %v760, 88
      %v1058 = vpop.permute.xlu0 %1057
      %1059 = vrot.lane.b32.xlu0 %v763, 88
      %v1060 = vpop.permute.xlu0 %1059
      %v1061 = vsel %vm778, %v1046, 0
      %v1063 = vsel %vm778, %v1048, 0
      %v1065 = vsel %vm778, %v1050, 0
      %v1067 = vsel %vm778, %v1052, 0
      %v1069 = vsel %vm778, %v1054, 0
      %v1071 = vsel %vm778, %v1056, 0
      %v1073 = vsel %vm778, %v1058, 0
      %v1075 = vsel %vm778, %v1060, 0
      %1077 = vmatprep.subr.mxu0 0.0
      %1078 = vmatpush1.xpose.msra.mxu0 %v1069
      %1079 = vmatprep.subr.mxu0 0.0
      %1080 = vmatpush1.xpose.msra.mxu0 %v1071
      %1081 = vmatprep.subr.mxu0 0.0
      %1082 = vmatpush1.xpose.msra.mxu0 %v1073
      %1083 = vmatprep.subr.mxu0 0.0
      %1084 = vmatpush1.xpose.msra.mxu0 %v1075
      %1085 = vmatprep.subr.mxu0 0.0
      %1086 = vmatpush1.xpose.msra.mxu0 0.0
      %1087 = vmatprep.subr.mxu0 0.0
      %1088 = vmatpush1.xpose.msra.mxu0 0.0
      %1089 = vmatprep.subr.mxu0 0.0
      %1090 = vmatpush1.xpose.msra.mxu0 0.0
      %1091 = vmatprep.subr.mxu0 0.0
      %1092 = vmatpush1.xpose.msra.mxu0 0.0
      %1093 = vmatprep.subr.mxu0 0.0
      %1094 = vmatpush1.xpose.msra.mxu0 0.0
      %1095 = vmatprep.subr.mxu0 0.0
      %1096 = vmatpush1.xpose.msra.mxu0 0.0
      %1097 = vmatprep.subr.mxu0 0.0
      %1098 = vmatpush1.xpose.msra.mxu0 0.0
      %1099 = vmatprep.subr.mxu0 0.0
      %1100 = vmatpush1.xpose.msra.mxu0 0.0
      %1101 = vmatprep.subr.mxu0 0.0
      %1102 = vmatpush1.xpose.msra.mxu0 0.0
      %1103 = vmatprep.subr.mxu0 0.0
      %1104 = vmatpush1.xpose.msra.mxu0 0.0
      %1105 = vmatprep.subr.mxu0 0.0
      %1106 = vmatpush1.xpose.msra.mxu0 0.0
      %1107 = vmatprep.subr.mxu0 0.0
      %1108 = vmatpush1.xpose.msra.mxu0 0.0
      %1109 = vmatprep.subr.mxu0 0.0
      %1110 = vmatpush1.xpose.msra.mxu0 0.0
      %1111 = vmatprep.subr.mxu0 0.0
      %1112 = vmatpush1.xpose.msra.mxu0 0.0
      %1113 = vmatprep.subr.mxu0 0.0
      %1114 = vmatpush1.xpose.msra.mxu0 0.0
      %1115 = vmatprep.subr.mxu0 0.0
      %1116 = vmatpush1.xpose.msra.mxu0 0.0
      %1117 = vmatprep.subr.mxu0 0.0
      %1118 = vmatpush1.xpose.msra.mxu0 0.0
      %1119 = vmatprep.subr.mxu0 0.0
      %1120 = vmatpush1.xpose.msra.mxu0 0.0
      %1121 = vmatprep.subr.mxu0 0.0
      %1122 = vmatpush1.xpose.msra.mxu0 0.0
      %1123 = vmatprep.subr.mxu0 0.0
      %1124 = vmatpush1.xpose.msra.mxu0 0.0
      %1125 = vmatprep.subr.mxu0 0.0
      %1126 = vmatpush1.xpose.msra.mxu0 0.0
      %1127 = vmatprep.subr.mxu0 0.0
      %1128 = vmatpush1.xpose.msra.mxu0 0.0
      %1129 = vmatprep.subr.mxu0 0.0
      %1130 = vmatpush1.xpose.msra.mxu0 0.0
      %1131 = vmatprep.subr.mxu0 0.0
      %1132 = vmatpush1.xpose.msra.mxu0 0.0
      %1133 = vmatprep.subr.mxu0 0.0
      %1134 = vmatpush1.xpose.msra.mxu0 0.0
      %1135 = vmatprep.subr.mxu0 0.0
      %1136 = vmatpush1.xpose.msra.mxu0 0.0
      %1137 = vmatprep.subr.mxu0 0.0
      %1138 = vmatpush1.xpose.msra.mxu0 0.0
      %1139 = vmatprep.subr.mxu0 0.0
      %1140 = vmatpush1.xpose.msra.mxu0 0.0
      %1141 = vmatprep.mubr.f32.mxu0 0.0
      %1142 = vmatmul.mubr.f32.gmra.mrb[0].mxu0 %v1061
      %v1143 = vpop.f32.mrb[0].mxu0
      %v1144 = vadd.f32 0.0, %v1143
      %v1145 = vpop.f32.mrb[0].mxu0
      %1146 = vmatprep.mubr.f32.mxu0 0.0
      %1147 = vmatmul.mubr.f32.gmra.mrb[0].mxu0 %v1063
      %v1148 = vpop.f32.mrb[0].mxu0
      %v1149 = vadd.f32 0.0, %v1148
      %v1150 = vpop.f32.mrb[0].mxu0
      %1151 = vmatprep.mubr.f32.mxu0 0.0
      %1152 = vmatmul.mubr.f32.gmra.mrb[0].mxu0 %v1065
      %v1153 = vpop.f32.mrb[0].mxu0
      %v1154 = vadd.f32 0.0, %v1153
      %v1155 = vpop.f32.mrb[0].mxu0
      %1156 = vmatprep.mubr.f32.mxu0 0.0
      %1157 = vmatmul.mubr.f32.gmra.mrb[0].mxu0 %v1067
      %v1158 = vpop.f32.mrb[0].mxu0
      %v1159 = vadd.f32 0.0, %v1158
      %v1160 = vpop.f32.mrb[0].mxu0
      %1161 = vdwg.mxu0
      %v1162 = vmul.f32 %v1144, 0.35355338
      %v1163 = vmul.f32 %v1149, 0.35355338
      %v1164 = vmul.f32 %v1154, 0.35355338
      %v1165 = vmul.f32 %v1159, 0.35355338
      %v1166 = vadd.f32 %v1162, %v617
      %v1167 = vadd.f32 %v1163, %v618
      %v1168 = vadd.f32 %v1164, %v619
      %v1169 = vadd.f32 %v1165, %v620
      %v1170 = vsel %vm621, %v1166, -inf
      %1171 = vmax.xlane.f32.xlu0 %v1170
      %v1172 = vpop.xlane.xlu0 %1171
      %v1173 = vsel %vm621, %v1167, -inf
      %1174 = vmax.xlane.f32.xlu0 %v1173
      %v1175 = vpop.xlane.xlu0 %1174
      %v1176 = vsel %vm621, %v1168, -inf
      %1177 = vmax.xlane.f32.xlu0 %v1176
      %v1178 = vpop.xlane.xlu0 %1177
      %v1179 = vsel %vm621, %v1169, -inf
      %1180 = vmax.xlane.f32.xlu0 %v1179
      %v1181 = vpop.xlane.xlu0 %1180
      %v1182 = vsub.f32 %v1166, %v1172
      %v1183 = vsub.f32 %v1167, %v1175
      %v1184 = vsub.f32 %v1168, %v1178
      %v1185 = vsub.f32 %v1169, %v1181
      %v1186 = vmul.f32 %v1182, 1.442695
      %v1187 = vpow.pop %v1186
      %v1188 = vmul.f32 %v1183, 1.442695
      %v1189 = vpow.pop %v1188
      %v1190 = vmul.f32 %v1184, 1.442695
      %v1191 = vpow.pop %v1190
      %v1192 = vmul.f32 %v1185, 1.442695
      %v1193 = vpow.pop %v1192
      %v1194 = vsel %vm621, %v1187, 0.0
      %1195 = vadd.xlane.f32.xlu0 %v1194
      %v1196 = vpop.xlane.xlu0 %1195
      %v1197 = vsel %vm621, %v1189, 0.0
      %1198 = vadd.xlane.f32.xlu0 %v1197
      %v1199 = vpop.xlane.xlu0 %1198
      %v1200 = vsel %vm621, %v1191, 0.0
      %1201 = vadd.xlane.f32.xlu0 %v1200
      %v1202 = vpop.xlane.xlu0 %1201
      %v1203 = vsel %vm621, %v1193, 0.0
      %1204 = vadd.xlane.f32.xlu0 %v1203
      %v1205 = vpop.xlane.xlu0 %1204
      %v1206 = vrcp.pop %v1196
      %v1207 = vrcp.pop %v1199
      %v1208 = vrcp.pop %v1202
      %v1209 = vrcp.pop %v1205
      %v1210 = vmul.f32 %v1187, %v1206
      %v1211 = vmul.f32 %v1189, %v1207
      %v1212 = vmul.f32 %v1191, %v1208
      %v1213 = vmul.f32 %v1193, %v1209
      %1214 = vrot.lane.b32.xlu0 %v752, 56
      %v1215 = vpop.permute.xlu0 %1214
      %1216 = vrot.lane.b32.xlu0 %v755, 56
      %v1217 = vpop.permute.xlu0 %1216
      %1218 = vrot.lane.b32.xlu0 %v760, 56
      %v1219 = vpop.permute.xlu0 %1218
      %1220 = vrot.lane.b32.xlu0 %v763, 56
      %v1221 = vpop.permute.xlu0 %1220
      %v1227 = vsel %vm621, %v1210, 0
      %v1230 = vsel %vm621, %v1211, 0
      %v1233 = vsel %vm621, %v1212, 0
      %v1236 = vsel %vm621, %v1213, 0
      %1238 = vmatprep.subr.mxu0 0.0
      %1239 = vmatpush1.msra.mxu0 %v1215
      %1240 = vmatprep.subr.mxu0 0.0
      %1241 = vmatpush1.msra.mxu0 %v1217
      %1242 = vmatprep.subr.mxu0 0.0
      %1243 = vmatpush1.msra.mxu0 %v1219
      %1244 = vmatprep.subr.mxu0 0.0
      %1245 = vmatpush1.msra.mxu0 %v1221
      %1246 = vmatprep.subr.mxu0 0.0
      %1247 = vmatpush1.msra.mxu0 0.0
      %1248 = vmatprep.subr.mxu0 0.0
      %1249 = vmatpush1.msra.mxu0 0.0
      %1250 = vmatprep.subr.mxu0 0.0
      %1251 = vmatpush1.msra.mxu0 0.0
      %1252 = vmatprep.subr.mxu0 0.0
      %1253 = vmatpush1.msra.mxu0 0.0
      %1254 = vmatprep.subr.mxu0 0.0
      %1255 = vmatpush1.msra.mxu0 0.0
      %1256 = vmatprep.subr.mxu0 0.0
      %1257 = vmatpush1.msra.mxu0 0.0
      %1258 = vmatprep.subr.mxu0 0.0
      %1259 = vmatpush1.msra.mxu0 0.0
      %1260 = vmatprep.subr.mxu0 0.0
      %1261 = vmatpush1.msra.mxu0 0.0
      %1262 = vmatprep.subr.mxu0 0.0
      %1263 = vmatpush1.msra.mxu0 0.0
      %1264 = vmatprep.subr.mxu0 0.0
      %1265 = vmatpush1.msra.mxu0 0.0
      %1266 = vmatprep.subr.mxu0 0.0
      %1267 = vmatpush1.msra.mxu0 0.0
      %1268 = vmatprep.subr.mxu0 0.0
      %1269 = vmatpush1.msra.mxu0 0.0
      %1270 = vmatprep.subr.mxu0 0.0
      %1271 = vmatpush1.msra.mxu0 0.0
      %1272 = vmatprep.subr.mxu0 0.0
      %1273 = vmatpush1.msra.mxu0 0.0
      %1274 = vmatprep.subr.mxu0 0.0
      %1275 = vmatpush1.msra.mxu0 0.0
      %1276 = vmatprep.subr.mxu0 0.0
      %1277 = vmatpush1.msra.mxu0 0.0
      %1278 = vmatprep.subr.mxu0 0.0
      %1279 = vmatpush1.msra.mxu0 0.0
      %1280 = vmatprep.subr.mxu0 0.0
      %1281 = vmatpush1.msra.mxu0 0.0
      %1282 = vmatprep.subr.mxu0 0.0
      %1283 = vmatpush1.msra.mxu0 0.0
      %1284 = vmatprep.subr.mxu0 0.0
      %1285 = vmatpush1.msra.mxu0 0.0
      %1286 = vmatprep.subr.mxu0 0.0
      %1287 = vmatpush1.msra.mxu0 0.0
      %1288 = vmatprep.subr.mxu0 0.0
      %1289 = vmatpush1.msra.mxu0 0.0
      %1290 = vmatprep.subr.mxu0 0.0
      %1291 = vmatpush1.msra.mxu0 0.0
      %1292 = vmatprep.subr.mxu0 0.0
      %1293 = vmatpush1.msra.mxu0 0.0
      %1294 = vmatprep.subr.mxu0 0.0
      %1295 = vmatpush1.msra.mxu0 0.0
      %1296 = vmatprep.subr.mxu0 0.0
      %1297 = vmatpush1.msra.mxu0 0.0
      %1298 = vmatprep.subr.mxu0 0.0
      %1299 = vmatpush1.msra.mxu0 0.0
      %1300 = vmatprep.subr.mxu0 0.0
      %1301 = vmatpush1.msra.mxu0 0.0
      %1302 = vmatprep.mubr.f32.mxu0 0.0
      %1303 = vmatmul.mubr.f32.gmra.mrb[0].mxu0 %v1227
      %v1304 = vpop.f32.mrb[0].mxu0
      %v1305 = vadd.f32 0.0, %v1304
      %v1306 = vpop.f32.mrb[0].mxu0
      %1307 = vmatprep.mubr.f32.mxu0 0.0
      %1308 = vmatmul.mubr.f32.gmra.mrb[0].mxu0 %v1230
      %v1309 = vpop.f32.mrb[0].mxu0
      %v1310 = vadd.f32 0.0, %v1309
      %v1311 = vpop.f32.mrb[0].mxu0
      %1312 = vmatprep.mubr.f32.mxu0 0.0
      %1313 = vmatmul.mubr.f32.gmra.mrb[0].mxu0 %v1233
      %v1314 = vpop.f32.mrb[0].mxu0
      %v1315 = vadd.f32 0.0, %v1314
      %v1316 = vpop.f32.mrb[0].mxu0
      %1317 = vmatprep.mubr.f32.mxu0 0.0
      %1318 = vmatmul.mubr.f32.gmra.mrb[0].mxu0 %v1236
      %v1319 = vpop.f32.mrb[0].mxu0
      %v1320 = vadd.f32 0.0, %v1319
      %v1321 = vpop.f32.mrb[0].mxu0
      %1322 = vdwg.mxu0
      %1327 = vrot.lane.b32.xlu0 %v1305, 8
      %v1328 = vpop.permute.xlu0 %1327
      %1329 = vrot.lane.b32.xlu0 %v1310, 8
      %v1330 = vpop.permute.xlu0 %1329
      %1331 = vrot.lane.b32.xlu0 %v1315, 8
      %v1332 = vpop.permute.xlu0 %1331
      %1333 = vrot.lane.b32.xlu0 %v1320, 8
      %v1334 = vpop.permute.xlu0 %1333
      %vm1339 = vcmask 130112
      %1340 = vst.msk [vmem:[#allocation3] sm:$0xff] %vm1339, %v1328
      %1341 = vst.msk [vmem:[#allocation3 + $0x8] sm:$0xff] %vm1339, %v1330
      %1342 = vst.msk [vmem:[#allocation3 + $0x10] sm:$0xff] %vm1339, %v1332
      %1343 = vst.msk [vmem:[#allocation3 + $0x18] sm:$0xff] %vm1339, %v1334
      %1344 = vrot.lane.b32.xlu0 %v752, 112
      %v1345 = vpop.permute.xlu0 %1344
      %1346 = vrot.lane.b32.xlu0 %v755, 112
      %v1347 = vpop.permute.xlu0 %1346
      %1348 = vrot.lane.b32.xlu0 %v760, 112
      %v1349 = vpop.permute.xlu0 %1348
      %1350 = vrot.lane.b32.xlu0 %v763, 112
      %v1351 = vpop.permute.xlu0 %1350
      %1352 = vrot.lane.b32.xlu0 %v752, 80
      %v1353 = vpop.permute.xlu0 %1352
      %1354 = vrot.lane.b32.xlu0 %v755, 80
      %v1355 = vpop.permute.xlu0 %1354
      %1356 = vrot.lane.b32.xlu0 %v760, 80
      %v1357 = vpop.permute.xlu0 %1356
      %1358 = vrot.lane.b32.xlu0 %v763, 80
      %v1359 = vpop.permute.xlu0 %1358
      %v1360 = vsel %vm778, %v1345, 0
      %v1362 = vsel %vm778, %v1347, 0
      %v1364 = vsel %vm778, %v1349, 0
      %v1366 = vsel %vm778, %v1351, 0
      %v1368 = vsel %vm778, %v1353, 0
      %v1370 = vsel %vm778, %v1355, 0
      %v1372 = vsel %vm778, %v1357, 0
      %v1374 = vsel %vm778, %v1359, 0
      %1376 = vmatprep.subr.mxu0 0.0
      %1377 = vmatpush1.xpose.msra.mxu0 %v1368
      %1378 = vmatprep.subr.mxu0 0.0
      %1379 = vmatpush1.xpose.msra.mxu0 %v1370
      %1380 = vmatprep.subr.mxu0 0.0
      %1381 = vmatpush1.xpose.msra.mxu0 %v1372
      %1382 = vmatprep.subr.mxu0 0.0
      %1383 = vmatpush1.xpose.msra.mxu0 %v1374
      %1384 = vmatprep.subr.mxu0 0.0
      %1385 = vmatpush1.xpose.msra.mxu0 0.0
      %1386 = vmatprep.subr.mxu0 0.0
      %1387 = vmatpush1.xpose.msra.mxu0 0.0
      %1388 = vmatprep.subr.mxu0 0.0
      %1389 = vmatpush1.xpose.msra.mxu0 0.0
      %1390 = vmatprep.subr.mxu0 0.0
      %1391 = vmatpush1.xpose.msra.mxu0 0.0
      %1392 = vmatprep.subr.mxu0 0.0
      %1393 = vmatpush1.xpose.msra.mxu0 0.0
      %1394 = vmatprep.subr.mxu0 0.0
      %1395 = vmatpush1.xpose.msra.mxu0 0.0
      %1396 = vmatprep.subr.mxu0 0.0
      %1397 = vmatpush1.xpose.msra.mxu0 0.0
      %1398 = vmatprep.subr.mxu0 0.0
      %1399 = vmatpush1.xpose.msra.mxu0 0.0
      %1400 = vmatprep.subr.mxu0 0.0
      %1401 = vmatpush1.xpose.msra.mxu0 0.0
      %1402 = vmatprep.subr.mxu0 0.0
      %1403 = vmatpush1.xpose.msra.mxu0 0.0
      %1404 = vmatprep.subr.mxu0 0.0
      %1405 = vmatpush1.xpose.msra.mxu0 0.0
      %1406 = vmatprep.subr.mxu0 0.0
      %1407 = vmatpush1.xpose.msra.mxu0 0.0
      %1408 = vmatprep.subr.mxu0 0.0
      %1409 = vmatpush1.xpose.msra.mxu0 0.0
      %1410 = vmatprep.subr.mxu0 0.0
      %1411 = vmatpush1.xpose.msra.mxu0 0.0
      %1412 = vmatprep.subr.mxu0 0.0
      %1413 = vmatpush1.xpose.msra.mxu0 0.0
      %1414 = vmatprep.subr.mxu0 0.0
      %1415 = vmatpush1.xpose.msra.mxu0 0.0
      %1416 = vmatprep.subr.mxu0 0.0
      %1417 = vmatpush1.xpose.msra.mxu0 0.0
      %1418 = vmatprep.subr.mxu0 0.0
      %1419 = vmatpush1.xpose.msra.mxu0 0.0
      %1420 = vmatprep.subr.mxu0 0.0
      %1421 = vmatpush1.xpose.msra.mxu0 0.0
      %1422 = vmatprep.subr.mxu0 0.0
      %1423 = vmatpush1.xpose.msra.mxu0 0.0
      %1424 = vmatprep.subr.mxu0 0.0
      %1425 = vmatpush1.xpose.msra.mxu0 0.0
      %1426 = vmatprep.subr.mxu0 0.0
      %1427 = vmatpush1.xpose.msra.mxu0 0.0
      %1428 = vmatprep.subr.mxu0 0.0
      %1429 = vmatpush1.xpose.msra.mxu0 0.0
      %1430 = vmatprep.subr.mxu0 0.0
      %1431 = vmatpush1.xpose.msra.mxu0 0.0
      %1432 = vmatprep.subr.mxu0 0.0
      %1433 = vmatpush1.xpose.msra.mxu0 0.0
      %1434 = vmatprep.subr.mxu0 0.0
      %1435 = vmatpush1.xpose.msra.mxu0 0.0
      %1436 = vmatprep.subr.mxu0 0.0
      %1437 = vmatpush1.xpose.msra.mxu0 0.0
      %1438 = vmatprep.subr.mxu0 0.0
      %1439 = vmatpush1.xpose.msra.mxu0 0.0
      %1440 = vmatprep.mubr.f32.mxu0 0.0
      %1441 = vmatmul.mubr.f32.gmra.mrb[0].mxu0 %v1360
      %v1442 = vpop.f32.mrb[0].mxu0
      %v1443 = vadd.f32 0.0, %v1442
      %v1444 = vpop.f32.mrb[0].mxu0
      %1445 = vmatprep.mubr.f32.mxu0 0.0
      %1446 = vmatmul.mubr.f32.gmra.mrb[0].mxu0 %v1362
      %v1447 = vpop.f32.mrb[0].mxu0
      %v1448 = vadd.f32 0.0, %v1447
      %v1449 = vpop.f32.mrb[0].mxu0
      %1450 = vmatprep.mubr.f32.mxu0 0.0
      %1451 = vmatmul.mubr.f32.gmra.mrb[0].mxu0 %v1364
      %v1452 = vpop.f32.mrb[0].mxu0
      %v1453 = vadd.f32 0.0, %v1452
      %v1454 = vpop.f32.mrb[0].mxu0
      %1455 = vmatprep.mubr.f32.mxu0 0.0
      %1456 = vmatmul.mubr.f32.gmra.mrb[0].mxu0 %v1366
      %v1457 = vpop.f32.mrb[0].mxu0
      %v1458 = vadd.f32 0.0, %v1457
      %v1459 = vpop.f32.mrb[0].mxu0
      %1460 = vdwg.mxu0
      %v1461 = vmul.f32 %v1443, 0.35355338
      %v1462 = vmul.f32 %v1448, 0.35355338
      %v1463 = vmul.f32 %v1453, 0.35355338
      %v1464 = vmul.f32 %v1458, 0.35355338
      %v1465 = vadd.f32 %v1461, %v617
      %v1466 = vadd.f32 %v1462, %v618
      %v1467 = vadd.f32 %v1463, %v619
      %v1468 = vadd.f32 %v1464, %v620
      %v1469 = vsel %vm621, %v1465, -inf
      %1470 = vmax.xlane.f32.xlu0 %v1469
      %v1471 = vpop.xlane.xlu0 %1470
      %v1472 = vsel %vm621, %v1466, -inf
      %1473 = vmax.xlane.f32.xlu0 %v1472
      %v1474 = vpop.xlane.xlu0 %1473
      %v1475 = vsel %vm621, %v1467, -inf
      %1476 = vmax.xlane.f32.xlu0 %v1475
      %v1477 = vpop.xlane.xlu0 %1476
      %v1478 = vsel %vm621, %v1468, -inf
      %1479 = vmax.xlane.f32.xlu0 %v1478
      %v1480 = vpop.xlane.xlu0 %1479
      %v1481 = vsub.f32 %v1465, %v1471
      %v1482 = vsub.f32 %v1466, %v1474
      %v1483 = vsub.f32 %v1467, %v1477
      %v1484 = vsub.f32 %v1468, %v1480
      %v1485 = vmul.f32 %v1481, 1.442695
      %v1486 = vpow.pop %v1485
      %v1487 = vmul.f32 %v1482, 1.442695
      %v1488 = vpow.pop %v1487
      %v1489 = vmul.f32 %v1483, 1.442695
      %v1490 = vpow.pop %v1489
      %v1491 = vmul.f32 %v1484, 1.442695
      %v1492 = vpow.pop %v1491
      %v1493 = vsel %vm621, %v1486, 0.0
      %1494 = vadd.xlane.f32.xlu0 %v1493
      %v1495 = vpop.xlane.xlu0 %1494
      %v1496 = vsel %vm621, %v1488, 0.0
      %1497 = vadd.xlane.f32.xlu0 %v1496
      %v1498 = vpop.xlane.xlu0 %1497
      %v1499 = vsel %vm621, %v1490, 0.0
      %1500 = vadd.xlane.f32.xlu0 %v1499
      %v1501 = vpop.xlane.xlu0 %1500
      %v1502 = vsel %vm621, %v1492, 0.0
      %1503 = vadd.xlane.f32.xlu0 %v1502
      %v1504 = vpop.xlane.xlu0 %1503
      %v1505 = vrcp.pop %v1495
      %v1506 = vrcp.pop %v1498
      %v1507 = vrcp.pop %v1501
      %v1508 = vrcp.pop %v1504
      %v1509 = vmul.f32 %v1486, %v1505
      %v1510 = vmul.f32 %v1488, %v1506
      %v1511 = vmul.f32 %v1490, %v1507
      %v1512 = vmul.f32 %v1492, %v1508
      %1513 = vrot.lane.b32.xlu0 %v752, 48
      %v1514 = vpop.permute.xlu0 %1513
      %1515 = vrot.lane.b32.xlu0 %v755, 48
      %v1516 = vpop.permute.xlu0 %1515
      %1517 = vrot.lane.b32.xlu0 %v760, 48
      %v1518 = vpop.permute.xlu0 %1517
      %1519 = vrot.lane.b32.xlu0 %v763, 48
      %v1520 = vpop.permute.xlu0 %1519
      %v1526 = vsel %vm621, %v1509, 0
      %v1529 = vsel %vm621, %v1510, 0
      %v1532 = vsel %vm621, %v1511, 0
      %v1535 = vsel %vm621, %v1512, 0
      %1537 = vmatprep.subr.mxu0 0.0
      %1538 = vmatpush1.msra.mxu0 %v1514
      %1539 = vmatprep.subr.mxu0 0.0
      %1540 = vmatpush1.msra.mxu0 %v1516
      %1541 = vmatprep.subr.mxu0 0.0
      %1542 = vmatpush1.msra.mxu0 %v1518
      %1543 = vmatprep.subr.mxu0 0.0
      %1544 = vmatpush1.msra.mxu0 %v1520
      %1545 = vmatprep.subr.mxu0 0.0
      %1546 = vmatpush1.msra.mxu0 0.0
      %1547 = vmatprep.subr.mxu0 0.0
      %1548 = vmatpush1.msra.mxu0 0.0
      %1549 = vmatprep.subr.mxu0 0.0
      %1550 = vmatpush1.msra.mxu0 0.0
      %1551 = vmatprep.subr.mxu0 0.0
      %1552 = vmatpush1.msra.mxu0 0.0
      %1553 = vmatprep.subr.mxu0 0.0
      %1554 = vmatpush1.msra.mxu0 0.0
      %1555 = vmatprep.subr.mxu0 0.0
      %1556 = vmatpush1.msra.mxu0 0.0
      %1557 = vmatprep.subr.mxu0 0.0
      %1558 = vmatpush1.msra.mxu0 0.0
      %1559 = vmatprep.subr.mxu0 0.0
      %1560 = vmatpush1.msra.mxu0 0.0
      %1561 = vmatprep.subr.mxu0 0.0
      %1562 = vmatpush1.msra.mxu0 0.0
      %1563 = vmatprep.subr.mxu0 0.0
      %1564 = vmatpush1.msra.mxu0 0.0
      %1565 = vmatprep.subr.mxu0 0.0
      %1566 = vmatpush1.msra.mxu0 0.0
      %1567 = vmatprep.subr.mxu0 0.0
      %1568 = vmatpush1.msra.mxu0 0.0
      %1569 = vmatprep.subr.mxu0 0.0
      %1570 = vmatpush1.msra.mxu0 0.0
      %1571 = vmatprep.subr.mxu0 0.0
      %1572 = vmatpush1.msra.mxu0 0.0
      %1573 = vmatprep.subr.mxu0 0.0
      %1574 = vmatpush1.msra.mxu0 0.0
      %1575 = vmatprep.subr.mxu0 0.0
      %1576 = vmatpush1.msra.mxu0 0.0
      %1577 = vmatprep.subr.mxu0 0.0
      %1578 = vmatpush1.msra.mxu0 0.0
      %1579 = vmatprep.subr.mxu0 0.0
      %1580 = vmatpush1.msra.mxu0 0.0
      %1581 = vmatprep.subr.mxu0 0.0
      %1582 = vmatpush1.msra.mxu0 0.0
      %1583 = vmatprep.subr.mxu0 0.0
      %1584 = vmatpush1.msra.mxu0 0.0
      %1585 = vmatprep.subr.mxu0 0.0
      %1586 = vmatpush1.msra.mxu0 0.0
      %1587 = vmatprep.subr.mxu0 0.0
      %1588 = vmatpush1.msra.mxu0 0.0
      %1589 = vmatprep.subr.mxu0 0.0
      %1590 = vmatpush1.msra.mxu0 0.0
      %1591 = vmatprep.subr.mxu0 0.0
      %1592 = vmatpush1.msra.mxu0 0.0
      %1593 = vmatprep.subr.mxu0 0.0
      %1594 = vmatpush1.msra.mxu0 0.0
      %1595 = vmatprep.subr.mxu0 0.0
      %1596 = vmatpush1.msra.mxu0 0.0
      %1597 = vmatprep.subr.mxu0 0.0
      %1598 = vmatpush1.msra.mxu0 0.0
      %1599 = vmatprep.subr.mxu0 0.0
      %1600 = vmatpush1.msra.mxu0 0.0
      %1601 = vmatprep.mubr.f32.mxu0 0.0
      %1602 = vmatmul.mubr.f32.gmra.mrb[0].mxu0 %v1526
      %v1603 = vpop.f32.mrb[0].mxu0
      %v1604 = vadd.f32 0.0, %v1603
      %v1605 = vpop.f32.mrb[0].mxu0
      %1606 = vmatprep.mubr.f32.mxu0 0.0
      %1607 = vmatmul.mubr.f32.gmra.mrb[0].mxu0 %v1529
      %v1608 = vpop.f32.mrb[0].mxu0
      %v1609 = vadd.f32 0.0, %v1608
      %v1610 = vpop.f32.mrb[0].mxu0
      %1611 = vmatprep.mubr.f32.mxu0 0.0
      %1612 = vmatmul.mubr.f32.gmra.mrb[0].mxu0 %v1532
      %v1613 = vpop.f32.mrb[0].mxu0
      %v1614 = vadd.f32 0.0, %v1613
      %v1615 = vpop.f32.mrb[0].mxu0
      %1616 = vmatprep.mubr.f32.mxu0 0.0
      %1617 = vmatmul.mubr.f32.gmra.mrb[0].mxu0 %v1535
      %v1618 = vpop.f32.mrb[0].mxu0
      %v1619 = vadd.f32 0.0, %v1618
      %v1620 = vpop.f32.mrb[0].mxu0
      %1621 = vdwg.mxu0
      %1626 = vrot.lane.b32.xlu0 %v1604, 16
      %v1627 = vpop.permute.xlu0 %1626
      %1628 = vrot.lane.b32.xlu0 %v1609, 16
      %v1629 = vpop.permute.xlu0 %1628
      %1630 = vrot.lane.b32.xlu0 %v1614, 16
      %v1631 = vpop.permute.xlu0 %1630
      %1632 = vrot.lane.b32.xlu0 %v1619, 16
      %v1633 = vpop.permute.xlu0 %1632
      %vm1638 = vcmask 195712
      %1639 = vst.msk [vmem:[#allocation3] sm:$0xff] %vm1638, %v1627
      %1640 = vst.msk [vmem:[#allocation3 + $0x8] sm:$0xff] %vm1638, %v1629
      %1641 = vst.msk [vmem:[#allocation3 + $0x10] sm:$0xff] %vm1638, %v1631
      %1642 = vst.msk [vmem:[#allocation3 + $0x18] sm:$0xff] %vm1638, %v1633
      %1643 = vrot.lane.b32.xlu0 %v752, 104
      %v1644 = vpop.permute.xlu0 %1643
      %1645 = vrot.lane.b32.xlu0 %v755, 104
      %v1646 = vpop.permute.xlu0 %1645
      %1647 = vrot.lane.b32.xlu0 %v760, 104
      %v1648 = vpop.permute.xlu0 %1647
      %1649 = vrot.lane.b32.xlu0 %v763, 104
      %v1650 = vpop.permute.xlu0 %1649
      %1651 = vrot.lane.b32.xlu0 %v752, 72
      %v1652 = vpop.permute.xlu0 %1651
      %1653 = vrot.lane.b32.xlu0 %v755, 72
      %v1654 = vpop.permute.xlu0 %1653
      %1655 = vrot.lane.b32.xlu0 %v760, 72
      %v1656 = vpop.permute.xlu0 %1655
      %1657 = vrot.lane.b32.xlu0 %v763, 72
      %v1658 = vpop.permute.xlu0 %1657
      %v1659 = vsel %vm778, %v1644, 0
      %v1661 = vsel %vm778, %v1646, 0
      %v1663 = vsel %vm778, %v1648, 0
      %v1665 = vsel %vm778, %v1650, 0
      %v1667 = vsel %vm778, %v1652, 0
      %v1669 = vsel %vm778, %v1654, 0
      %v1671 = vsel %vm778, %v1656, 0
      %v1673 = vsel %vm778, %v1658, 0
      %1675 = vmatprep.subr.mxu0 0.0
      %1676 = vmatpush1.xpose.msra.mxu0 %v1667
      %1677 = vmatprep.subr.mxu0 0.0
      %1678 = vmatpush1.xpose.msra.mxu0 %v1669
      %1679 = vmatprep.subr.mxu0 0.0
      %1680 = vmatpush1.xpose.msra.mxu0 %v1671
      %1681 = vmatprep.subr.mxu0 0.0
      %1682 = vmatpush1.xpose.msra.mxu0 %v1673
      %1683 = vmatprep.subr.mxu0 0.0
      %1684 = vmatpush1.xpose.msra.mxu0 0.0
      %1685 = vmatprep.subr.mxu0 0.0
      %1686 = vmatpush1.xpose.msra.mxu0 0.0
      %1687 = vmatprep.subr.mxu0 0.0
      %1688 = vmatpush1.xpose.msra.mxu0 0.0
      %1689 = vmatprep.subr.mxu0 0.0
      %1690 = vmatpush1.xpose.msra.mxu0 0.0
      %1691 = vmatprep.subr.mxu0 0.0
      %1692 = vmatpush1.xpose.msra.mxu0 0.0
      %1693 = vmatprep.subr.mxu0 0.0
      %1694 = vmatpush1.xpose.msra.mxu0 0.0
      %1695 = vmatprep.subr.mxu0 0.0
      %1696 = vmatpush1.xpose.msra.mxu0 0.0
      %1697 = vmatprep.subr.mxu0 0.0
      %1698 = vmatpush1.xpose.msra.mxu0 0.0
      %1699 = vmatprep.subr.mxu0 0.0
      %1700 = vmatpush1.xpose.msra.mxu0 0.0
      %1701 = vmatprep.subr.mxu0 0.0
      %1702 = vmatpush1.xpose.msra.mxu0 0.0
      %1703 = vmatprep.subr.mxu0 0.0
      %1704 = vmatpush1.xpose.msra.mxu0 0.0
      %1705 = vmatprep.subr.mxu0 0.0
      %1706 = vmatpush1.xpose.msra.mxu0 0.0
      %1707 = vmatprep.subr.mxu0 0.0
      %1708 = vmatpush1.xpose.msra.mxu0 0.0
      %1709 = vmatprep.subr.mxu0 0.0
      %1710 = vmatpush1.xpose.msra.mxu0 0.0
      %1711 = vmatprep.subr.mxu0 0.0
      %1712 = vmatpush1.xpose.msra.mxu0 0.0
      %1713 = vmatprep.subr.mxu0 0.0
      %1714 = vmatpush1.xpose.msra.mxu0 0.0
      %1715 = vmatprep.subr.mxu0 0.0
      %1716 = vmatpush1.xpose.msra.mxu0 0.0
      %1717 = vmatprep.subr.mxu0 0.0
      %1718 = vmatpush1.xpose.msra.mxu0 0.0
      %1719 = vmatprep.subr.mxu0 0.0
      %1720 = vmatpush1.xpose.msra.mxu0 0.0
      %1721 = vmatprep.subr.mxu0 0.0
      %1722 = vmatpush1.xpose.msra.mxu0 0.0
      %1723 = vmatprep.subr.mxu0 0.0
      %1724 = vmatpush1.xpose.msra.mxu0 0.0
      %1725 = vmatprep.subr.mxu0 0.0
      %1726 = vmatpush1.xpose.msra.mxu0 0.0
      %1727 = vmatprep.subr.mxu0 0.0
      %1728 = vmatpush1.xpose.msra.mxu0 0.0
      %1729 = vmatprep.subr.mxu0 0.0
      %1730 = vmatpush1.xpose.msra.mxu0 0.0
      %1731 = vmatprep.subr.mxu0 0.0
      %1732 = vmatpush1.xpose.msra.mxu0 0.0
      %1733 = vmatprep.subr.mxu0 0.0
      %1734 = vmatpush1.xpose.msra.mxu0 0.0
      %1735 = vmatprep.subr.mxu0 0.0
      %1736 = vmatpush1.xpose.msra.mxu0 0.0
      %1737 = vmatprep.subr.mxu0 0.0
      %1738 = vmatpush1.xpose.msra.mxu0 0.0
      %1739 = vmatprep.mubr.f32.mxu0 0.0
      %1740 = vmatmul.mubr.f32.gmra.mrb[0].mxu0 %v1659
      %v1741 = vpop.f32.mrb[0].mxu0
      %v1742 = vadd.f32 0.0, %v1741
      %v1743 = vpop.f32.mrb[0].mxu0
      %1744 = vmatprep.mubr.f32.mxu0 0.0
      %1745 = vmatmul.mubr.f32.gmra.mrb[0].mxu0 %v1661
      %v1746 = vpop.f32.mrb[0].mxu0
      %v1747 = vadd.f32 0.0, %v1746
      %v1748 = vpop.f32.mrb[0].mxu0
      %1749 = vmatprep.mubr.f32.mxu0 0.0
      %1750 = vmatmul.mubr.f32.gmra.mrb[0].mxu0 %v1663
      %v1751 = vpop.f32.mrb[0].mxu0
      %v1752 = vadd.f32 0.0, %v1751
      %v1753 = vpop.f32.mrb[0].mxu0
      %1754 = vmatprep.mubr.f32.mxu0 0.0
      %1755 = vmatmul.mubr.f32.gmra.mrb[0].mxu0 %v1665
      %v1756 = vpop.f32.mrb[0].mxu0
      %v1757 = vadd.f32 0.0, %v1756
      %v1758 = vpop.f32.mrb[0].mxu0
      %1759 = vdwg.mxu0
      %v1760 = vmul.f32 %v1742, 0.35355338
      %v1761 = vmul.f32 %v1747, 0.35355338
      %v1762 = vmul.f32 %v1752, 0.35355338
      %v1763 = vmul.f32 %v1757, 0.35355338
      %v1764 = vadd.f32 %v1760, %v617
      %v1765 = vadd.f32 %v1761, %v618
      %v1766 = vadd.f32 %v1762, %v619
      %v1767 = vadd.f32 %v1763, %v620
      %v1768 = vsel %vm621, %v1764, -inf
      %1769 = vmax.xlane.f32.xlu0 %v1768
      %v1770 = vpop.xlane.xlu0 %1769
      %v1771 = vsel %vm621, %v1765, -inf
      %1772 = vmax.xlane.f32.xlu0 %v1771
      %v1773 = vpop.xlane.xlu0 %1772
      %v1774 = vsel %vm621, %v1766, -inf
      %1775 = vmax.xlane.f32.xlu0 %v1774
      %v1776 = vpop.xlane.xlu0 %1775
      %v1777 = vsel %vm621, %v1767, -inf
      %1778 = vmax.xlane.f32.xlu0 %v1777
      %v1779 = vpop.xlane.xlu0 %1778
      %v1780 = vsub.f32 %v1764, %v1770
      %v1781 = vsub.f32 %v1765, %v1773
      %v1782 = vsub.f32 %v1766, %v1776
      %v1783 = vsub.f32 %v1767, %v1779
      %v1784 = vmul.f32 %v1780, 1.442695
      %v1785 = vpow.pop %v1784
      %v1786 = vmul.f32 %v1781, 1.442695
      %v1787 = vpow.pop %v1786
      %v1788 = vmul.f32 %v1782, 1.442695
      %v1789 = vpow.pop %v1788
      %v1790 = vmul.f32 %v1783, 1.442695
      %v1791 = vpow.pop %v1790
      %v1792 = vsel %vm621, %v1785, 0.0
      %1793 = vadd.xlane.f32.xlu0 %v1792
      %v1794 = vpop.xlane.xlu0 %1793
      %v1795 = vsel %vm621, %v1787, 0.0
      %1796 = vadd.xlane.f32.xlu0 %v1795
      %v1797 = vpop.xlane.xlu0 %1796
      %v1798 = vsel %vm621, %v1789, 0.0
      %1799 = vadd.xlane.f32.xlu0 %v1798
      %v1800 = vpop.xlane.xlu0 %1799
      %v1801 = vsel %vm621, %v1791, 0.0
      %1802 = vadd.xlane.f32.xlu0 %v1801
      %v1803 = vpop.xlane.xlu0 %1802
      %v1804 = vrcp.pop %v1794
      %v1805 = vrcp.pop %v1797
      %v1806 = vrcp.pop %v1800
      %v1807 = vrcp.pop %v1803
      %v1808 = vmul.f32 %v1785, %v1804
      %v1809 = vmul.f32 %v1787, %v1805
      %v1810 = vmul.f32 %v1789, %v1806
      %v1811 = vmul.f32 %v1791, %v1807
      %1812 = vrot.lane.b32.xlu0 %v752, 40
      %v1813 = vpop.permute.xlu0 %1812
      %1814 = vrot.lane.b32.xlu0 %v755, 40
      %v1815 = vpop.permute.xlu0 %1814
      %1816 = vrot.lane.b32.xlu0 %v760, 40
      %v1817 = vpop.permute.xlu0 %1816
      %1818 = vrot.lane.b32.xlu0 %v763, 40
      %v1819 = vpop.permute.xlu0 %1818
      %v1825 = vsel %vm621, %v1808, 0
      %v1828 = vsel %vm621, %v1809, 0
      %v1831 = vsel %vm621, %v1810, 0
      %v1834 = vsel %vm621, %v1811, 0
      %1836 = vmatprep.subr.mxu0 0.0
      %1837 = vmatpush1.msra.mxu0 %v1813
      %1838 = vmatprep.subr.mxu0 0.0
      %1839 = vmatpush1.msra.mxu0 %v1815
      %1840 = vmatprep.subr.mxu0 0.0
      %1841 = vmatpush1.msra.mxu0 %v1817
      %1842 = vmatprep.subr.mxu0 0.0
      %1843 = vmatpush1.msra.mxu0 %v1819
      %1844 = vmatprep.subr.mxu0 0.0
      %1845 = vmatpush1.msra.mxu0 0.0
      %1846 = vmatprep.subr.mxu0 0.0
      %1847 = vmatpush1.msra.mxu0 0.0
      %1848 = vmatprep.subr.mxu0 0.0
      %1849 = vmatpush1.msra.mxu0 0.0
      %1850 = vmatprep.subr.mxu0 0.0
      %1851 = vmatpush1.msra.mxu0 0.0
      %1852 = vmatprep.subr.mxu0 0.0
      %1853 = vmatpush1.msra.mxu0 0.0
      %1854 = vmatprep.subr.mxu0 0.0
      %1855 = vmatpush1.msra.mxu0 0.0
      %1856 = vmatprep.subr.mxu0 0.0
      %1857 = vmatpush1.msra.mxu0 0.0
      %1858 = vmatprep.subr.mxu0 0.0
      %1859 = vmatpush1.msra.mxu0 0.0
      %1860 = vmatprep.subr.mxu0 0.0
      %1861 = vmatpush1.msra.mxu0 0.0
      %1862 = vmatprep.subr.mxu0 0.0
      %1863 = vmatpush1.msra.mxu0 0.0
      %1864 = vmatprep.subr.mxu0 0.0
      %1865 = vmatpush1.msra.mxu0 0.0
      %1866 = vmatprep.subr.mxu0 0.0
      %1867 = vmatpush1.msra.mxu0 0.0
      %1868 = vmatprep.subr.mxu0 0.0
      %1869 = vmatpush1.msra.mxu0 0.0
      %1870 = vmatprep.subr.mxu0 0.0
      %1871 = vmatpush1.msra.mxu0 0.0
      %1872 = vmatprep.subr.mxu0 0.0
      %1873 = vmatpush1.msra.mxu0 0.0
      %1874 = vmatprep.subr.mxu0 0.0
      %1875 = vmatpush1.msra.mxu0 0.0
      %1876 = vmatprep.subr.mxu0 0.0
      %1877 = vmatpush1.msra.mxu0 0.0
      %1878 = vmatprep.subr.mxu0 0.0
      %1879 = vmatpush1.msra.mxu0 0.0
      %1880 = vmatprep.subr.mxu0 0.0
      %1881 = vmatpush1.msra.mxu0 0.0
      %1882 = vmatprep.subr.mxu0 0.0
      %1883 = vmatpush1.msra.mxu0 0.0
      %1884 = vmatprep.subr.mxu0 0.0
      %1885 = vmatpush1.msra.mxu0 0.0
      %1886 = vmatprep.subr.mxu0 0.0
      %1887 = vmatpush1.msra.mxu0 0.0
      %1888 = vmatprep.subr.mxu0 0.0
      %1889 = vmatpush1.msra.mxu0 0.0
      %1890 = vmatprep.subr.mxu0 0.0
      %1891 = vmatpush1.msra.mxu0 0.0
      %1892 = vmatprep.subr.mxu0 0.0
      %1893 = vmatpush1.msra.mxu0 0.0
      %1894 = vmatprep.subr.mxu0 0.0
      %1895 = vmatpush1.msra.mxu0 0.0
      %1896 = vmatprep.subr.mxu0 0.0
      %1897 = vmatpush1.msra.mxu0 0.0
      %1898 = vmatprep.subr.mxu0 0.0
      %1899 = vmatpush1.msra.mxu0 0.0
      %1900 = vmatprep.mubr.f32.mxu0 0.0
      %1901 = vmatmul.mubr.f32.gmra.mrb[0].mxu0 %v1825
      %v1902 = vpop.f32.mrb[0].mxu0
      %v1903 = vadd.f32 0.0, %v1902
      %v1904 = vpop.f32.mrb[0].mxu0
      %1905 = vmatprep.mubr.f32.mxu0 0.0
      %1906 = vmatmul.mubr.f32.gmra.mrb[0].mxu0 %v1828
      %v1907 = vpop.f32.mrb[0].mxu0
      %v1908 = vadd.f32 0.0, %v1907
      %v1909 = vpop.f32.mrb[0].mxu0
      %1910 = vmatprep.mubr.f32.mxu0 0.0
      %1911 = vmatmul.mubr.f32.gmra.mrb[0].mxu0 %v1831
      %v1912 = vpop.f32.mrb[0].mxu0
      %v1913 = vadd.f32 0.0, %v1912
      %v1914 = vpop.f32.mrb[0].mxu0
      %1915 = vmatprep.mubr.f32.mxu0 0.0
      %1916 = vmatmul.mubr.f32.gmra.mrb[0].mxu0 %v1834
      %v1917 = vpop.f32.mrb[0].mxu0
      %v1918 = vadd.f32 0.0, %v1917
      %v1919 = vpop.f32.mrb[0].mxu0
      %1920 = vdwg.mxu0
      %1925 = vrot.lane.b32.xlu0 %v1903, 24
      %v1926 = vpop.permute.xlu0 %1925
      %1927 = vrot.lane.b32.xlu0 %v1908, 24
      %v1928 = vpop.permute.xlu0 %1927
      %1929 = vrot.lane.b32.xlu0 %v1913, 24
      %v1930 = vpop.permute.xlu0 %1929
      %1931 = vrot.lane.b32.xlu0 %v1918, 24
      %v1932 = vpop.permute.xlu0 %1931
      %vm1937 = vcmask 261312
      %1938 = vst.msk [vmem:[#allocation3] sm:$0xff] %vm1937, %v1926
      %1939 = vst.msk [vmem:[#allocation3 + $0x8] sm:$0xff] %vm1937, %v1928
      %1940 = vst.msk [vmem:[#allocation3 + $0x10] sm:$0xff] %vm1937, %v1930
      %1941 = vst.msk [vmem:[#allocation3 + $0x18] sm:$0xff] %vm1937, %v1932
      %v1942 = vld [vmem:[#allocation3] sm:$0xff]
      %v1943 = vld [vmem:[#allocation3 + $0x8] sm:$0xff]
      %v1944 = vld [vmem:[#allocation3 + $0x10] sm:$0xff]
      %v1945 = vld [vmem:[#allocation3 + $0x18] sm:$0xff]
      %v1946 = vpack.c.bf16 %v1943, %v1942
      %v1947 = vpack.c.bf16 %v1945, %v1944
      %v1949 = vlaneseq
      %v1950 = vshrl.u32 %v1949, 7
      %v1951 = vsub.s32 0, %v1950
      %v1952 = vrot.slane %v590, %v1951
      %v1958 = vunpack.c.l.b16 %v586
      %v1959 = vunpack.c.l.b16 %v587
      %v1960 = vunpack.c.l.b16 %v588
      %v1961 = vunpack.c.l.b16 %v589
      %v1962 = vpack.c.b16 %v1959, %v1958
      %v1963 = vpack.c.b16 %v1961, %v1960
      %v1967 = vsel %vm621, %v1946, 0
      %v1970 = vsel %vm621, %v1947, 0
      %1972 = vmatprep.subr.bf16.mxu0 0
      %1973 = vmatpush1.bf16.msra.mxu0 %v1962
      %1974 = vmatprep.subr.bf16.mxu0 0
      %1975 = vmatpush1.bf16.msra.mxu0 %v1963
      %1976 = vmatprep.subr.bf16.mxu0 0
      %1977 = vmatpush1.bf16.msra.mxu0 0
      %1978 = vmatprep.subr.bf16.mxu0 0
      %1979 = vmatpush1.bf16.msra.mxu0 0
      %1980 = vmatprep.subr.bf16.mxu0 0
      %1981 = vmatpush1.bf16.msra.mxu0 0
      %1982 = vmatprep.subr.bf16.mxu0 0
      %1983 = vmatpush1.bf16.msra.mxu0 0
      %1984 = vmatprep.subr.bf16.mxu0 0
      %1985 = vmatpush1.bf16.msra.mxu0 0
      %1986 = vmatprep.subr.bf16.mxu0 0
      %1987 = vmatpush1.bf16.msra.mxu0 0
      %1988 = vmatprep.subr.bf16.mxu0 0
      %1989 = vmatpush1.bf16.msra.mxu0 0
      %1990 = vmatprep.subr.bf16.mxu0 0
      %1991 = vmatpush1.bf16.msra.mxu0 0
      %1992 = vmatprep.subr.bf16.mxu0 0
      %1993 = vmatpush1.bf16.msra.mxu0 0
      %1994 = vmatprep.subr.bf16.mxu0 0
      %1995 = vmatpush1.bf16.msra.mxu0 0
      %1996 = vmatprep.subr.bf16.mxu0 0
      %1997 = vmatpush1.bf16.msra.mxu0 0
      %1998 = vmatprep.subr.bf16.mxu0 0
      %1999 = vmatpush1.bf16.msra.mxu0 0
      %2000 = vmatprep.subr.bf16.mxu0 0
      %2001 = vmatpush1.bf16.msra.mxu0 0
      %2002 = vmatprep.subr.bf16.mxu0 0
      %2003 = vmatpush1.bf16.msra.mxu0 0
      %2004 = vmatprep.mubr.bf16.mxu0 0
      %2005 = vmatmul.mubr.bf16.gmra.mrb[0].mxu0 %v1967
      %v2006 = vpop.f32.mrb[0].mxu0
      %v2007 = vadd.f32 %v1952, %v2006
      %v2008 = vpop.f32.mrb[0].mxu0
      %v2009 = vpop.f32.mrb[0].mxu0
      %v2010 = vadd.f32 %v1952, %v2009
      %v2011 = vpop.f32.mrb[0].mxu0
      %2012 = vmatprep.mubr.bf16.mxu0 0
      %2013 = vmatmul.mubr.bf16.gmra.mrb[0].mxu0 %v1970
      %v2014 = vpop.f32.mrb[0].mxu0
      %v2015 = vadd.f32 %v1952, %v2014
      %v2016 = vpop.f32.mrb[0].mxu0
      %v2017 = vpop.f32.mrb[0].mxu0
      %v2018 = vadd.f32 %v1952, %v2017
      %v2019 = vpop.f32.mrb[0].mxu0
      %2020 = vdwg.mxu0
      %v2021 = vadd.f32 %v613, %v2007
      %v2022 = vadd.f32 %v614, %v2010
      %v2023 = vadd.f32 %v615, %v2015
      %v2024 = vadd.f32 %v616, %v2018
      %v2025 = vsel %vm621, %v2021, 0.0
      %2026 = vadd.xlane.f32.xlu0 %v2025
      %v2027 = vpop.xlane.xlu0 %2026
      %v2028 = vsel %vm621, %v2022, 0.0
      %2029 = vadd.xlane.f32.xlu0 %v2028
      %v2030 = vpop.xlane.xlu0 %2029
      %v2031 = vsel %vm621, %v2023, 0.0
      %2032 = vadd.xlane.f32.xlu0 %v2031
      %v2033 = vpop.xlane.xlu0 %2032
      %v2034 = vsel %vm621, %v2024, 0.0
      %2035 = vadd.xlane.f32.xlu0 %v2034
      %v2036 = vpop.xlane.xlu0 %2035
      %v2037 = vmul.f32 %v2027, %v634
      %v2038 = vmul.f32 %v2030, %v634
      %v2039 = vmul.f32 %v2033, %v634
      %v2040 = vmul.f32 %v2036, %v634
      %v2041 = vsub.f32 %v2021, %v2037
      %v2042 = vsub.f32 %v2022, %v2038
      %v2043 = vsub.f32 %v2023, %v2039
      %v2044 = vsub.f32 %v2024, %v2040
      %v2045 = vmul.f32 %v2041, %v2041
      %v2046 = vmul.f32 %v2042, %v2042
      %v2047 = vmul.f32 %v2043, %v2043
      %v2048 = vmul.f32 %v2044, %v2044
      %v2049 = vsel %vm621, %v2045, 0.0
      %2050 = vadd.xlane.f32.xlu0 %v2049
      %v2051 = vpop.xlane.xlu0 %2050
      %v2052 = vsel %vm621, %v2046, 0.0
      %2053 = vadd.xlane.f32.xlu0 %v2052
      %v2054 = vpop.xlane.xlu0 %2053
      %v2055 = vsel %vm621, %v2047, 0.0
      %2056 = vadd.xlane.f32.xlu0 %v2055
      %v2057 = vpop.xlane.xlu0 %2056
      %v2058 = vsel %vm621, %v2048, 0.0
      %2059 = vadd.xlane.f32.xlu0 %v2058
      %v2060 = vpop.xlane.xlu0 %2059
      %v2061 = vmul.f32 %v2051, %v634
      %v2062 = vmul.f32 %v2054, %v634
      %v2063 = vmul.f32 %v2057, %v634
      %v2064 = vmul.f32 %v2060, %v634
      %v2065 = vadd.f32 %v2061, 1e-05
      %v2066 = vadd.f32 %v2062, 1e-05
      %v2067 = vadd.f32 %v2063, 1e-05
      %v2068 = vadd.f32 %v2064, 1e-05
      %v2069 = vrsqrt.pop %v2065
      %v2070 = vrsqrt.pop %v2066
      %v2071 = vrsqrt.pop %v2067
      %v2072 = vrsqrt.pop %v2068
      %v2073 = vmul.f32 %v2041, %v2069
      %v2074 = vmul.f32 %v2042, %v2070
      %v2075 = vmul.f32 %v2043, %v2071
      %v2076 = vmul.f32 %v2044, %v2072
      %v2077 = vlaneseq
      %v2078 = vshrl.u32 %v2077, 7
      %v2079 = vsub.s32 2, %v2078
      %v2080 = vrot.slane %v580, %v2079
      %v2081 = vmul.f32 %v2073, %v2080
      %v2082 = vmul.f32 %v2074, %v2080
      %v2083 = vmul.f32 %v2075, %v2080
      %v2084 = vmul.f32 %v2076, %v2080
      %v2085 = vlaneseq
      %v2086 = vshrl.u32 %v2085, 7
      %v2087 = vsub.s32 3, %v2086
      %v2088 = vrot.slane %v580, %v2087
      %v2089 = vadd.f32 %v2081, %v2088
      %v2090 = vadd.f32 %v2082, %v2088
      %v2091 = vadd.f32 %v2083, %v2088
      %v2092 = vadd.f32 %v2084, %v2088
      %v2093 = vpack.c.bf16 %v2090, %v2089
      %v2094 = vpack.c.bf16 %v2092, %v2091
      %v2096 = vlaneseq
      %v2097 = vshrl.u32 %v2096, 7
      %v2098 = vsub.s32 0, %v2097
      %v2099 = vrot.slane %v595, %v2098
      %v2105 = vunpack.c.l.b16 %v591
      %v2106 = vunpack.c.l.b16 %v592
      %v2107 = vunpack.c.l.b16 %v593
      %v2108 = vunpack.c.l.b16 %v594
      %v2109 = vpack.c.b16 %v2106, %v2105
      %v2110 = vpack.c.b16 %v2108, %v2107
      %v2114 = vsel %vm621, %v2093, 0
      %v2117 = vsel %vm621, %v2094, 0
      %2119 = vmatprep.subr.bf16.mxu0 0
      %2120 = vmatpush1.bf16.msra.mxu0 %v2109
      %2121 = vmatprep.subr.bf16.mxu0 0
      %2122 = vmatpush1.bf16.msra.mxu0 %v2110
      %2123 = vmatprep.subr.bf16.mxu0 0
      %2124 = vmatpush1.bf16.msra.mxu0 0
      %2125 = vmatprep.subr.bf16.mxu0 0
      %2126 = vmatpush1.bf16.msra.mxu0 0
      %2127 = vmatprep.subr.bf16.mxu0 0
      %2128 = vmatpush1.bf16.msra.mxu0 0
      %2129 = vmatprep.subr.bf16.mxu0 0
      %2130 = vmatpush1.bf16.msra.mxu0 0
      %2131 = vmatprep.subr.bf16.mxu0 0
      %2132 = vmatpush1.bf16.msra.mxu0 0
      %2133 = vmatprep.subr.bf16.mxu0 0
      %2134 = vmatpush1.bf16.msra.mxu0 0
      %2135 = vmatprep.subr.bf16.mxu0 0
      %2136 = vmatpush1.bf16.msra.mxu0 0
      %2137 = vmatprep.subr.bf16.mxu0 0
      %2138 = vmatpush1.bf16.msra.mxu0 0
      %2139 = vmatprep.subr.bf16.mxu0 0
      %2140 = vmatpush1.bf16.msra.mxu0 0
      %2141 = vmatprep.subr.bf16.mxu0 0
      %2142 = vmatpush1.bf16.msra.mxu0 0
      %2143 = vmatprep.subr.bf16.mxu0 0
      %2144 = vmatpush1.bf16.msra.mxu0 0
      %2145 = vmatprep.subr.bf16.mxu0 0
      %2146 = vmatpush1.bf16.msra.mxu0 0
      %2147 = vmatprep.subr.bf16.mxu0 0
      %2148 = vmatpush1.bf16.msra.mxu0 0
      %2149 = vmatprep.subr.bf16.mxu0 0
      %2150 = vmatpush1.bf16.msra.mxu0 0
      %2151 = vmatprep.mubr.bf16.mxu0 0
      %2152 = vmatmul.mubr.bf16.gmra.mrb[0].mxu0 %v2114
      %v2153 = vpop.f32.mrb[0].mxu0
      %v2154 = vadd.f32 %v2099, %v2153
      %v2155 = vpop.f32.mrb[0].mxu0
      %v2156 = vpop.f32.mrb[0].mxu0
      %v2157 = vadd.f32 %v2099, %v2156
      %v2158 = vpop.f32.mrb[0].mxu0
      %2159 = vmatprep.mubr.bf16.mxu0 0
      %2160 = vmatmul.mubr.bf16.gmra.mrb[0].mxu0 %v2117
      %v2161 = vpop.f32.mrb[0].mxu0
      %v2162 = vadd.f32 %v2099, %v2161
      %v2163 = vpop.f32.mrb[0].mxu0
      %v2164 = vpop.f32.mrb[0].mxu0
      %v2165 = vadd.f32 %v2099, %v2164
      %v2166 = vpop.f32.mrb[0].mxu0
      %2167 = vdwg.mxu0
      %v2168 = vmul.f32 %v2154, %v2154
      %v2169 = vmul.f32 %v2157, %v2157
      %v2170 = vmul.f32 %v2162, %v2162
      %v2171 = vmul.f32 %v2165, %v2165
      %v2172 = vmul.f32 %v2154, %v2168
      %v2173 = vmul.f32 %v2157, %v2169
      %v2174 = vmul.f32 %v2162, %v2170
      %v2175 = vmul.f32 %v2165, %v2171
      %v2176 = vmul.f32 %v2172, 0.044715
      %v2177 = vmul.f32 %v2173, 0.044715
      %v2178 = vmul.f32 %v2174, 0.044715
      %v2179 = vmul.f32 %v2175, 0.044715
      %v2180 = vadd.f32 %v2154, %v2176
      %v2181 = vadd.f32 %v2157, %v2177
      %v2182 = vadd.f32 %v2162, %v2178
      %v2183 = vadd.f32 %v2165, %v2179
      %v2184 = vmul.f32 %v2180, 0.7978846
      %v2185 = vmul.f32 %v2181, 0.7978846
      %v2186 = vmul.f32 %v2182, 0.7978846
      %v2187 = vmul.f32 %v2183, 0.7978846
      %v2188 = vtanh.pop %v2184
      %v2189 = vtanh.pop %v2185
      %v2190 = vtanh.pop %v2186
      %v2191 = vtanh.pop %v2187
      %v2192 = vadd.f32 %v2188, 1.0
      %v2193 = vadd.f32 %v2189, 1.0
      %v2194 = vadd.f32 %v2190, 1.0
      %v2195 = vadd.f32 %v2191, 1.0
      %v2196 = vmul.f32 %v2192, 0.5
      %v2197 = vmul.f32 %v2193, 0.5
      %v2198 = vmul.f32 %v2194, 0.5
      %v2199 = vmul.f32 %v2195, 0.5
      %v2200 = vmul.f32 %v2154, %v2196
      %v2201 = vmul.f32 %v2157, %v2197
      %v2202 = vmul.f32 %v2162, %v2198
      %v2203 = vmul.f32 %v2165, %v2199
      %v2204 = vpack.c.bf16 %v2201, %v2200
      %v2205 = vpack.c.bf16 %v2203, %v2202
      %v2222 = vunpack.c.l.b16 %v596
      %v2223 = vunpack.c.l.b16 %v597
      %v2224 = vunpack.c.l.b16 %v598
      %v2225 = vunpack.c.l.b16 %v599
      %v2226 = vunpack.c.l.b16 %v600
      %v2227 = vunpack.c.l.b16 %v601
      %v2228 = vunpack.c.l.b16 %v602
      %v2229 = vunpack.c.l.b16 %v603
      %v2230 = vunpack.c.l.b16 %v604
      %v2231 = vunpack.c.l.b16 %v605
      %v2232 = vunpack.c.l.b16 %v606
      %v2233 = vunpack.c.l.b16 %v607
      %v2234 = vunpack.c.l.b16 %v608
      %v2235 = vunpack.c.l.b16 %v609
      %v2236 = vunpack.c.l.b16 %v610
      %v2237 = vunpack.c.l.b16 %v611
      %v2238 = vpack.c.b16 %v2223, %v2222
      %v2239 = vpack.c.b16 %v2225, %v2224
      %v2240 = vpack.c.b16 %v2227, %v2226
      %v2241 = vpack.c.b16 %v2229, %v2228
      %v2242 = vpack.c.b16 %v2231, %v2230
      %v2243 = vpack.c.b16 %v2233, %v2232
      %v2244 = vpack.c.b16 %v2235, %v2234
      %v2245 = vpack.c.b16 %v2237, %v2236
      %2254 = vmatprep.subr.bf16.mxu0 0
      %2255 = vmatpush1.bf16.msra.mxu0 %v2238
      %2256 = vmatprep.subr.bf16.mxu0 0
      %2257 = vmatpush1.bf16.msra.mxu0 %v2239
      %2258 = vmatprep.subr.bf16.mxu0 0
      %2259 = vmatpush1.bf16.msra.mxu0 %v2240
      %2260 = vmatprep.subr.bf16.mxu0 0
      %2261 = vmatpush1.bf16.msra.mxu0 %v2241
      %2262 = vmatprep.subr.bf16.mxu0 0
      %2263 = vmatpush1.bf16.msra.mxu0 %v2242
      %2264 = vmatprep.subr.bf16.mxu0 0
      %2265 = vmatpush1.bf16.msra.mxu0 %v2243
      %2266 = vmatprep.subr.bf16.mxu0 0
      %2267 = vmatpush1.bf16.msra.mxu0 %v2244
      %2268 = vmatprep.subr.bf16.mxu0 0
      %2269 = vmatpush1.bf16.msra.mxu0 %v2245
      %2270 = vmatprep.subr.bf16.mxu0 0
      %2271 = vmatpush1.bf16.msra.mxu0 0
      %2272 = vmatprep.subr.bf16.mxu0 0
      %2273 = vmatpush1.bf16.msra.mxu0 0
      %2274 = vmatprep.subr.bf16.mxu0 0
      %2275 = vmatpush1.bf16.msra.mxu0 0
      %2276 = vmatprep.subr.bf16.mxu0 0
      %2277 = vmatpush1.bf16.msra.mxu0 0
      %2278 = vmatprep.subr.bf16.mxu0 0
      %2279 = vmatpush1.bf16.msra.mxu0 0
      %2280 = vmatprep.subr.bf16.mxu0 0
      %2281 = vmatpush1.bf16.msra.mxu0 0
      %2282 = vmatprep.subr.bf16.mxu0 0
      %2283 = vmatpush1.bf16.msra.mxu0 0
      %2284 = vmatprep.subr.bf16.mxu0 0
      %2285 = vmatpush1.bf16.msra.mxu0 0
      %2286 = vmatprep.mubr.bf16.mxu0 0
      %2287 = vmatmul.mubr.bf16.gmra.mrb[0].mxu0 %v2204
      %v2288 = vpop.f32.mrb[0].mxu0
      %v2289 = vadd.f32 0.0, %v2288
      %v2290 = vpop.f32.mrb[0].mxu0
      %v2291 = vpop.f32.mrb[0].mxu0
      %v2292 = vadd.f32 0.0, %v2291
      %v2293 = vpop.f32.mrb[0].mxu0
      %2294 = vmatprep.mubr.bf16.mxu0 0
      %2295 = vmatmul.mubr.bf16.gmra.mrb[0].mxu0 %v2205
      %v2296 = vpop.f32.mrb[0].mxu0
      %v2297 = vadd.f32 0.0, %v2296
      %v2298 = vpop.f32.mrb[0].mxu0
      %v2299 = vpop.f32.mrb[0].mxu0
      %v2300 = vadd.f32 0.0, %v2299
      %v2301 = vpop.f32.mrb[0].mxu0
      %2302 = vdwg.mxu0
      %v2303 = vadd.f32 %v2021, %v2289
      %v2304 = vadd.f32 %v2022, %v2292
      %v2305 = vadd.f32 %v2023, %v2297
      %v2306 = vadd.f32 %v2024, %v2300
      %v2308 = vlaneseq
      %v2309 = vshrl.u32 %v2308, 7
      %v2310 = vsub.s32 0, %v2309
      %v2311 = vrot.slane %v612, %v2310
      %v2313 = vadd.f32 %v2303, %v2311
      %v2314 = vadd.f32 %v2304, %v2311
      %v2315 = vadd.f32 %v2305, %v2311
      %v2316 = vadd.f32 %v2306, %v2311
      %2317 = vst.msk [vmem:[#allocation2] sm:$0xff] %vm621, %v2313
      %2318 = vst.msk [vmem:[#allocation2 + $0x8] sm:$0xff] %vm621, %v2314
      %2319 = vst.msk [vmem:[#allocation2 + $0x10] sm:$0xff] %vm621, %v2315
      %2320 = vst.msk [vmem:[#allocation2 + $0x18] sm:$0xff] %vm621, %v2316
      %p2321 = scmp.eq.s32.totalorder %s31, 1
      // Predicated region
      $region77: #{daclip_forward.3} parent=71 // pred_check
        %p2322 = pneg %p2321
      $region78: #{daclip_forward.3} parent=71 // pred_check_branch
        %2324 = sbr.rel (%p2322) target = $region80
      $region79: #{daclip_forward.3} parent=71 // pred_region
        %s2325 = sld [smem:[#allocation5]]
        %s2326 = scalar_lea.vmem [#allocation2], %s2325
        %v2327 = vld [vmem:[%s2326] sm:$0x1]
        %vm2328 = vcmask 253952
        %2329 = vst.msk [vmem:[#allocation3] sm:$0x1] %vm2328, %v2327
        %s2330 = sld [smem:[#allocation5 + $0x1]]
        %s2331 = sadd.s32 %s2330, 8
        %s2332 = scalar_lea.vmem [#allocation2], %s2331
        %v2333 = vld [vmem:[%s2332] sm:$0x1]
        %2334 = vst.msk [vmem:[#allocation3 + $0x1] sm:$0x1] %vm2328, %v2333
        %s2335 = sld [smem:[#allocation5 + $0x2]]
        %s2336 = sadd.s32 %s2335, 16
        %s2337 = scalar_lea.vmem [#allocation2], %s2336
        %v2338 = vld [vmem:[%s2337] sm:$0x1]
        %2339 = vst.msk [vmem:[#allocation3 + $0x2] sm:$0x1] %vm2328, %v2338
        %s2340 = sld [smem:[#allocation5 + $0x3]]
        %s2341 = sadd.s32 %s2340, 24
        %s2342 = scalar_lea.vmem [#allocation2], %s2341
        %v2343 = vld [vmem:[%s2342] sm:$0x1]
        %2344 = vst.msk [vmem:[#allocation3 + $0x3] sm:$0x1] %vm2328, %v2343
        %v2345 = vld [vmem:[#allocation3] sm:$0xf]
        %v2346 = vld [vmem:[%s12] sm:$0x3]
        %v2347 = vld [vmem:[%s13] sm:$0xf]
        %v2348 = vld [vmem:[%s13 + $0x4] sm:$0xf]
        %v2349 = vld [vmem:[%s13 + $0x8] sm:$0xf]
        %v2350 = vld [vmem:[%s13 + $0xc] sm:$0xf]
        %vm2351 = vcmask 257024
        %v2352 = vsel %vm2351, %v2345, 0.0
        %2353 = vadd.xlane.f32.xlu0 %v2352
        %v2354 = vpop.xlane.xlu0 %2353
        %v2355 = vmul.f32 %v2354, %v634
        %v2356 = vsub.f32 %v2345, %v2355
        %v2357 = vmul.f32 %v2356, %v2356
        %v2358 = vsel %vm2351, %v2357, 0.0
        %2359 = vadd.xlane.f32.xlu0 %v2358
        %v2360 = vpop.xlane.xlu0 %2359
        %v2361 = vmul.f32 %v2360, %v634
        %v2362 = vadd.f32 %v2361, 1e-05
        %v2363 = vrsqrt.pop %v2362
        %v2364 = vmul.f32 %v2356, %v2363
        %v2365 = vlaneseq
        %v2366 = vshrl.u32 %v2365, 7
        %v2367 = vsub.s32 0, %v2366
        %v2368 = vrot.slane %v2346, %v2367
        %v2369 = vmul.f32 %v2364, %v2368
        %v2370 = vlaneseq
        %v2371 = vshrl.u32 %v2370, 7
        %v2372 = vsub.s32 1, %v2371
        %v2373 = vrot.slane %v2346, %v2372
        %v2374 = vadd.f32 %v2369, %v2373
        %v2375 = vpack.c.bf16 %v2374, %v2374
        %v2380 = vunpack.c.l.b16 %v2347
        %v2381 = vunpack.c.l.b16 %v2348
        %v2382 = vunpack.c.l.b16 %v2349
        %v2383 = vunpack.c.l.b16 %v2350
        %v2384 = vpack.c.b16 %v2381, %v2380
        %v2385 = vpack.c.b16 %v2383, %v2382
        %v2389 = vsel %vm621, %v2375, 0
        %2391 = vmatprep.subr.bf16.mxu0 0
        %2392 = vmatpush1.bf16.msra.mxu0 %v2384
        %2393 = vmatprep.subr.bf16.mxu0 0
        %2394 = vmatpush1.bf16.msra.mxu0 %v2385
        %2395 = vmatprep.subr.bf16.mxu0 0
        %2396 = vmatpush1.bf16.msra.mxu0 0
        %2397 = vmatprep.subr.bf16.mxu0 0
        %2398 = vmatpush1.bf16.msra.mxu0 0
        %2399 = vmatprep.subr.bf16.mxu0 0
        %2400 = vmatpush1.bf16.msra.mxu0 0
        %2401 = vmatprep.subr.bf16.mxu0 0
        %2402 = vmatpush1.bf16.msra.mxu0 0
        %2403 = vmatprep.subr.bf16.mxu0 0
        %2404 = vmatpush1.bf16.msra.mxu0 0
        %2405 = vmatprep.subr.bf16.mxu0 0
        %2406 = vmatpush1.bf16.msra.mxu0 0
        %2407 = vmatprep.subr.bf16.mxu0 0
        %2408 = vmatpush1.bf16.msra.mxu0 0
        %2409 = vmatprep.subr.bf16.mxu0 0
        %2410 = vmatpush1.bf16.msra.mxu0 0
        %2411 = vmatprep.subr.bf16.mxu0 0
        %2412 = vmatpush1.bf16.msra.mxu0 0
        %2413 = vmatprep.subr.bf16.mxu0 0
        %2414 = vmatpush1.bf16.msra.mxu0 0
        %2415 = vmatprep.subr.bf16.mxu0 0
        %2416 = vmatpush1.bf16.msra.mxu0 0
        %2417 = vmatprep.subr.bf16.mxu0 0
        %2418 = vmatpush1.bf16.msra.mxu0 0
        %2419 = vmatprep.subr.bf16.mxu0 0
        %2420 = vmatpush1.bf16.msra.mxu0 0
        %2421 = vmatprep.subr.bf16.mxu0 0
        %2422 = vmatpush1.bf16.msra.mxu0 0
        %2423 = vmatprep.mubr.bf16.mxu0 0
        %2424 = vmatmul.mubr.bf16.gmra.mrb[0].mxu0 %v2389
        %v2425 = vpop.f32.mrb[0].mxu0
        %v2426 = vadd.f32 0.0, %v2425
        %v2427 = vpop.f32.mrb[0].mxu0
        %v2428 = vpop.f32.mrb[0].mxu0
        %v2429 = vpop.f32.mrb[0].mxu0
        %2430 = vdwg.mxu0
        %v2431 = vmul.f32 %v2426, %v2426
        %v2432 = vsel %vm2351, %v2431, 0.0
        %2433 = vadd.xlane.f32.xlu0 %v2432
        %v2434 = vpop.xlane.xlu0 %2433
        %v2435 = vmax.f32 %v2434, 1e-24
        %v2436 = vrsqrt.pop %v2435
        %v2437 = vmul.f32 %v2426, %v2436
        %2438 = vst.msk [vmem:[%s14] sm:$0xf] %vm2351, %v2437
      $region80: #{daclip_forward.3} parent=71 // pred_fallthru
        _
      // Predicated region
      $region81: #{daclip_forward.3} parent=71 // pred_check
        %p2439 = pneg %p362
      $region82: #{daclip_forward.3} parent=71 // pred_check_branch
        %2441 = sbr.rel (%p2439) target = $region84
      $region83: #{daclip_forward.3} parent=71 // pred_region
        _
      $region84: #{daclip_forward.3} parent=71 // pred_fallthru
        _
      // Predicated region
      $region85: #{daclip_forward.3} parent=71 // pred_check
        %p2442 = pneg %p362
      $region86: #{daclip_forward.3} parent=71 // pred_check_branch
        %2444 = sbr.rel (%p2442) target = $region88
      $region87: #{daclip_forward.3} parent=71 // pred_region
        _
      $region88: #{daclip_forward.3} parent=71 // pred_fallthru
        _
    $region72: #{daclip_forward.3} parent=5 // pred_fallthru
      _
    %p2445 = scmp.le.s32.totalorder 2, %s26
    // Predicated region
    $region89: #{daclip_forward.3} parent=5 // pred_check
      %p2446 = pneg %p2445
    $region90: #{daclip_forward.3} parent=5 // pred_check_branch
      %2448 = sbr.rel (%p2446) target = $region92
    $region91: #{daclip_forward.3} parent=5 // pred_region
      %s2449 = ssub.s32 %s26, 2
    $region92: #{daclip_forward.3} parent=5 // pred_fallthru
      _
  $region6: #{daclip_forward.3} parent=0 // loop_footer
    %s30 = sadd.s32 1, %s26
  $region7: #{daclip_forward.3} parent=0 // loop_footer_branch
    %25 = sbr.rel target = $region3
  $region8: #{daclip_forward.3} parent=0 // loop_exit
    _

// kernel: daclip_forward.2
$region0: #{daclip_forward.2}
  #allocation0 [shape = 'u32[]', space=smem, size = 0x4, offset = 0x4, fixed_abs, tag = 'smem constant byte address 0x4 - core index']
  #allocation1 [shape = 'u32[144,128]{1,0:T(1,128)}', space=vmem, size = 0x12000, scoped, tag = 'internal scratch']
  #allocation2 [shape = 'f32[20,32]{1,0:T(8,128)}', space=vmem, size = 0x3000, scoped, tag = 'scratch operand']
  #allocation3 [shape = 'f32[20,32]{1,0:T(8,128)}', space=vmem, size = 0x3000, scoped, tag = 'scratch operand']
  %s0 = inlined_call_operand.vmem [shape: f32[10,192], index: 0, kind: input, shape index: {}]
  %s1 = inlined_call_operand.vmem [shape: f32[10,32], index: 1, kind: input, shape index: {}]
  %s2 = inlined_call_operand.vmem [shape: bf16[192,32], index: 2, kind: input, shape index: {}]
  %s3 = inlined_call_operand.vmem [shape: f32[2,32], index: 3, kind: input, shape index: {}, may-alias: {3,23}]
  %s4 = inlined_call_operand.vmem [shape: f32[20,20], index: 4, kind: input, shape index: {}]
  %s5 = inlined_call_operand.vmem [shape: f32[2,4,32], index: 5, kind: input, shape index: {}]
  %s6 = inlined_call_operand.vmem [shape: bf16[2,32,96], index: 6, kind: input, shape index: {}]
  %s7 = inlined_call_operand.vmem [shape: f32[2,1,96], index: 7, kind: input, shape index: {}]
  %s8 = inlined_call_operand.vmem [shape: bf16[2,32,32], index: 8, kind: input, shape index: {}]
  %s9 = inlined_call_operand.vmem [shape: f32[2,1,32], index: 9, kind: input, shape index: {}]
  %s10 = inlined_call_operand.vmem [shape: bf16[2,32,128], index: 10, kind: input, shape index: {}]
  %s11 = inlined_call_operand.vmem [shape: f32[2,1,128], index: 11, kind: input, shape index: {}]
  %s12 = inlined_call_operand.vmem [shape: bf16[2,128,32], index: 12, kind: input, shape index: {}]
  %s13 = inlined_call_operand.vmem [shape: f32[2,1,32], index: 13, kind: input, shape index: {}]
  %s14 = inlined_call_operand.vmem [shape: f32[2,4,32], index: 14, kind: input, shape index: {}]
  %s15 = inlined_call_operand.vmem [shape: bf16[2,32,96], index: 15, kind: input, shape index: {}]
  %s16 = inlined_call_operand.vmem [shape: f32[2,1,96], index: 16, kind: input, shape index: {}]
  %s17 = inlined_call_operand.vmem [shape: bf16[2,32,32], index: 17, kind: input, shape index: {}]
  %s18 = inlined_call_operand.vmem [shape: f32[2,1,32], index: 18, kind: input, shape index: {}, may-alias: {18,22}]
  %s19 = inlined_call_operand.vmem [shape: bf16[2,32,128], index: 19, kind: input, shape index: {}]
  %s20 = inlined_call_operand.vmem [shape: f32[2,1,128], index: 20, kind: input, shape index: {}]
  %s21 = inlined_call_operand.vmem [shape: bf16[2,128,32], index: 21, kind: input, shape index: {}]
  %s22 = inlined_call_operand.vmem [shape: f32[2,1,32], index: 22, kind: input, shape index: {}, may-alias: {18,22}]
  %s23 = inlined_call_operand.vmem [shape: f32[2,32], index: 23, kind: input, shape index: {}, may-alias: {3,23}]
  %s24 = inlined_call_operand.vmem [shape: bf16[32,32], index: 24, kind: input, shape index: {}]
  %s25 = inlined_call_operand.vmem [shape: f32[4,32], index: 25, kind: output, shape index: {}]
  %s26 = sld [smem:[#allocation0]]
  $region141: #{daclip_forward.2} parent=0
    _
  %s28 = ssub.s32 1, %s26
  %s29 = scalar_select 0, %s28, %s26
  loop: start=0, step=1, limit=4
  $region2: #{daclip_forward.2} parent=0 // loop_pre_header
    _
  $region3: #{daclip_forward.2} parent=0 // loop_header
    %s31 = sphi 0, %s35
    %p32 = scmp.ge.s32.totalorder %s31, 4
    %s39 = sphi 0, %s39
    %s41 = sphi 0, %s39
    %s42 = sphi 0, %s41
    %s56 = sphi 0, %s42
    %s60 = sphi 0, %s60
    %s62 = sphi 0, %s60
    %s63 = sphi 0, %s62
    %s77 = sphi 0, %s63
    %s81 = sphi 0, %s81
    %s83 = sphi 0, %s81
    %s84 = sphi 0, %s83
    %s98 = sphi 0, %s84
    %s102 = sphi 0, %s102
    %s104 = sphi 0, %s102
    %s105 = sphi 0, %s104
    %s119 = sphi 0, %s105
    %s123 = sphi 0, %s123
    %s125 = sphi 0, %s123
    %s126 = sphi 0, %s125
    %s140 = sphi 0, %s126
    %s146 = sphi 0, %s148
    %s149 = sphi 0, %s146
    %s150 = sphi 0, %s149
    %s166 = sphi 0, %s150
    %s172 = sphi 0, %s174
    %s175 = sphi 0, %s172
    %s176 = sphi 0, %s175
    %s192 = sphi 0, %s176
    %s198 = sphi 0, %s200
    %s201 = sphi 0, %s198
    %s202 = sphi 0, %s201
    %s218 = sphi 0, %s202
    %s224 = sphi 0, %s226
    %s227 = sphi 0, %s224
    %s228 = sphi 0, %s227
    %s244 = sphi 0, %s228
    %s250 = sphi 0, %s252
    %s253 = sphi 0, %s250
    %s254 = sphi 0, %s253
    %s270 = sphi 0, %s254
    %s276 = sphi 0, %s278
    %s279 = sphi 0, %s276
    %s280 = sphi 0, %s279
    %s296 = sphi 0, %s280
    %s302 = sphi 0, %s304
    %s305 = sphi 0, %s302
    %s306 = sphi 0, %s305
    %s322 = sphi 0, %s306
    %s328 = sphi 0, %s330
    %s331 = sphi 0, %s328
    %s332 = sphi 0, %s331
    %s348 = sphi 0, %s332
    %s354 = sphi 0, %s356
    %s357 = sphi 0, %s354
    %s358 = sphi 0, %s357
    %s374 = sphi 0, %s358
    %s380 = sphi 0, %s382
    %s383 = sphi 0, %s380
    %s384 = sphi 0, %s383
    %s400 = sphi 0, %s384
    %s406 = sphi 0, %s408
    %s409 = sphi 0, %s406
    %s410 = sphi 0, %s409
    %s426 = sphi 0, %s410
    %s432 = sphi 0, %s434
    %s435 = sphi 0, %s432
    %s436 = sphi 0, %s435
    %s452 = sphi 0, %s436
    %s458 = sphi 0, %s460
    %s461 = sphi 0, %s458
    %s462 = sphi 0, %s461
    %s478 = sphi 0, %s462
    %s484 = sphi 0, %s486
    %s487 = sphi 0, %s484
    %s488 = sphi 0, %s487
    %s504 = sphi 0, %s488
    %s510 = sphi 0, %s512
    %s513 = sphi 0, %s510
    %s514 = sphi 0, %s513
    %s530 = sphi 0, %s514
    %s536 = sphi 0, %s538
    %s539 = sphi 0, %s536
    %s540 = sphi 0, %s539
    %s556 = sphi 0, %s540
    %s562 = sphi 0, %s564
    %s565 = sphi 0, %s562
    %s566 = sphi 0, %s565
    %s582 = sphi 0, %s566
    %s588 = sphi 0, %s590
    %s591 = sphi 0, %s588
    %s592 = sphi 0, %s591
    %s608 = sphi 0, %s592
    %s612 = sphi 0, %s612
    %s614 = sphi 0, %s612
    %s615 = sphi 0, %s614
    %s629 = sphi 0, %s615
    %s633 = sphi 0, %s633
    %s635 = sphi 0, %s633
    %s636 = sphi 0, %s635
    %s650 = sphi 0, %s636
    %s654 = sphi 0, %s654
    %s656 = sphi 0, %s654
    %s657 = sphi 0, %s656
    %s671 = sphi 0, %s657
  $region4: #{daclip_forward.2} parent=0 // loop_header_branch
    %34 = sbr.rel (%p32) target = $region8
  $region5: #{daclip_forward.2} parent=0 // loop_body
    %s36 = ssub.s32 %s31, 1
    %s37 = ssub.s32 %s31, 2
    %s38 = sadd.s32 %s31, 1
    %s40 = sadd.s32 %s39, 1
    %p43 = scmp.eq.s32.totalorder %s31, 1
    %p44 = scmp.ne.s32.totalorder %s39, %s41
    %p45 = scmp.eq.s32.totalorder %s31, 0
    %p46 = por %p44, %p45
    %p47 = scmp.ne.s32.totalorder %s39, %s41
    %p48 = scmp.eq.s32.totalorder %s36, 1
    %p49 = por %p47, %p48
    %p50 = scmp.ne.s32.totalorder %s41, %s42
    %p51 = scmp.eq.s32.totalorder %s36, 0
    %p52 = por %p50, %p51
    %p53 = scmp.ne.s32.totalorder %s41, %s42
    %p54 = scmp.eq.s32.totalorder %s37, 1
    %p55 = por %p53, %p54
    %p57 = scmp.ne.s32.totalorder %s42, %s56
    %p58 = scmp.eq.s32.totalorder %s37, 0
    %p59 = por %p57, %p58
    %s61 = sadd.s32 %s60, 1
    %p64 = scmp.eq.s32.totalorder %s31, 1
    %p65 = scmp.ne.s32.totalorder %s60, %s62
    %p66 = scmp.eq.s32.totalorder %s31, 0
    %p67 = por %p65, %p66
    %p68 = scmp.ne.s32.totalorder %s60, %s62
    %p69 = scmp.eq.s32.totalorder %s36, 1
    %p70 = por %p68, %p69
    %p71 = scmp.ne.s32.totalorder %s62, %s63
    %p72 = scmp.eq.s32.totalorder %s36, 0
    %p73 = por %p71, %p72
    %p74 = scmp.ne.s32.totalorder %s62, %s63
    %p75 = scmp.eq.s32.totalorder %s37, 1
    %p76 = por %p74, %p75
    %p78 = scmp.ne.s32.totalorder %s63, %s77
    %p79 = scmp.eq.s32.totalorder %s37, 0
    %p80 = por %p78, %p79
    %s82 = sadd.s32 %s81, 1
    %p85 = scmp.eq.s32.totalorder %s31, 1
    %p86 = scmp.ne.s32.totalorder %s81, %s83
    %p87 = scmp.eq.s32.totalorder %s31, 0
    %p88 = por %p86, %p87
    %p89 = scmp.ne.s32.totalorder %s81, %s83
    %p90 = scmp.eq.s32.totalorder %s36, 1
    %p91 = por %p89, %p90
    %p92 = scmp.ne.s32.totalorder %s83, %s84
    %p93 = scmp.eq.s32.totalorder %s36, 0
    %p94 = por %p92, %p93
    %p95 = scmp.ne.s32.totalorder %s83, %s84
    %p96 = scmp.eq.s32.totalorder %s37, 1
    %p97 = por %p95, %p96
    %p99 = scmp.ne.s32.totalorder %s84, %s98
    %p100 = scmp.eq.s32.totalorder %s37, 0
    %p101 = por %p99, %p100
    %s103 = sadd.s32 %s102, 1
    %p106 = scmp.eq.s32.totalorder %s31, 1
    %p107 = scmp.ne.s32.totalorder %s102, %s104
    %p108 = scmp.eq.s32.totalorder %s31, 0
    %p109 = por %p107, %p108
    %p110 = scmp.ne.s32.totalorder %s102, %s104
    %p111 = scmp.eq.s32.totalorder %s36, 1
    %p112 = por %p110, %p111
    %p113 = scmp.ne.s32.totalorder %s104, %s105
    %p114 = scmp.eq.s32.totalorder %s36, 0
    %p115 = por %p113, %p114
    %p116 = scmp.ne.s32.totalorder %s104, %s105
    %p117 = scmp.eq.s32.totalorder %s37, 1
    %p118 = por %p116, %p117
    %p120 = scmp.ne.s32.totalorder %s105, %s119
    %p121 = scmp.eq.s32.totalorder %s37, 0
    %p122 = por %p120, %p121
    %s124 = sadd.s32 %s123, 1
    %p127 = scmp.eq.s32.totalorder %s31, 1
    %p128 = scmp.ne.s32.totalorder %s123, %s125
    %p129 = scmp.eq.s32.totalorder %s31, 0
    %p130 = por %p128, %p129
    %p131 = scmp.ne.s32.totalorder %s123, %s125
    %p132 = scmp.eq.s32.totalorder %s36, 1
    %p133 = por %p131, %p132
    %p134 = scmp.ne.s32.totalorder %s125, %s126
    %p135 = scmp.eq.s32.totalorder %s36, 0
    %p136 = por %p134, %p135
    %p137 = scmp.ne.s32.totalorder %s125, %s126
    %p138 = scmp.eq.s32.totalorder %s37, 1
    %p139 = por %p137, %p138
    %p141 = scmp.ne.s32.totalorder %s126, %s140
    %p142 = scmp.eq.s32.totalorder %s37, 0
    %p143 = por %p141, %p142
    %s144 = ssub.s32 %s31, %s38
    %p145 = scmp.eq.s32.totalorder %s144, 0
    %s147 = sadd.s32 %s146, 1
    %s148 = scalar_select %p145, %s146, %s147
    %p151 = pneg %p145
    %p152 = scmp.eq.s32.totalorder %s31, 1
    %p153 = por %p151, %p152
    %p154 = scmp.ne.s32.totalorder %s146, %s149
    %p155 = scmp.eq.s32.totalorder %s31, 0
    %p156 = por %p154, %p155
    %p157 = scmp.ne.s32.totalorder %s146, %s149
    %p158 = scmp.eq.s32.totalorder %s36, 1
    %p159 = por %p157, %p158
    %p160 = scmp.ne.s32.totalorder %s149, %s150
    %p161 = scmp.eq.s32.totalorder %s36, 0
    %p162 = por %p160, %p161
    %p163 = scmp.ne.s32.totalorder %s149, %s150
    %p164 = scmp.eq.s32.totalorder %s37, 1
    %p165 = por %p163, %p164
    %p167 = scmp.ne.s32.totalorder %s150, %s166
    %p168 = scmp.eq.s32.totalorder %s37, 0
    %p169 = por %p167, %p168
    %s170 = ssub.s32 %s31, %s38
    %p171 = scmp.eq.s32.totalorder %s170, 0
    %s173 = sadd.s32 %s172, 1
    %s174 = scalar_select %p171, %s172, %s173
    %p177 = pneg %p171
    %p178 = scmp.eq.s32.totalorder %s31, 1
    %p179 = por %p177, %p178
    %p180 = scmp.ne.s32.totalorder %s172, %s175
    %p181 = scmp.eq.s32.totalorder %s31, 0
    %p182 = por %p180, %p181
    %p183 = scmp.ne.s32.totalorder %s172, %s175
    %p184 = scmp.eq.s32.totalorder %s36, 1
    %p185 = por %p183, %p184
    %p186 = scmp.ne.s32.totalorder %s175, %s176
    %p187 = scmp.eq.s32.totalorder %s36, 0
    %p188 = por %p186, %p187
    %p189 = scmp.ne.s32.totalorder %s175, %s176
    %p190 = scmp.eq.s32.totalorder %s37, 1
    %p191 = por %p189, %p190
    %p193 = scmp.ne.s32.totalorder %s176, %s192
    %p194 = scmp.eq.s32.totalorder %s37, 0
    %p195 = por %p193, %p194
    %s196 = ssub.s32 %s31, %s38
    %p197 = scmp.eq.s32.totalorder %s196, 0
    %s199 = sadd.s32 %s198, 1
    %s200 = scalar_select %p197, %s198, %s199
    %p203 = pneg %p197
    %p204 = scmp.eq.s32.totalorder %s31, 1
    %p205 = por %p203, %p204
    %p206 = scmp.ne.s32.totalorder %s198, %s201
    %p207 = scmp.eq.s32.totalorder %s31, 0
    %p208 = por %p206, %p207
    %p209 = scmp.ne.s32.totalorder %s198, %s201
    %p210 = scmp.eq.s32.totalorder %s36, 1
    %p211 = por %p209, %p210
    %p212 = scmp.ne.s32.totalorder %s201, %s202
    %p213 = scmp.eq.s32.totalorder %s36, 0
    %p214 = por %p212, %p213
    %p215 = scmp.ne.s32.totalorder %s201, %s202
    %p216 = scmp.eq.s32.totalorder %s37, 1
    %p217 = por %p215, %p216
    %p219 = scmp.ne.s32.totalorder %s202, %s218
    %p220 = scmp.eq.s32.totalorder %s37, 0
    %p221 = por %p219, %p220
    %s222 = ssub.s32 %s31, %s38
    %p223 = scmp.eq.s32.totalorder %s222, 0
    %s225 = sadd.s32 %s224, 1
    %s226 = scalar_select %p223, %s224, %s225
    %p229 = pneg %p223
    %p230 = scmp.eq.s32.totalorder %s31, 1
    %p231 = por %p229, %p230
    %p232 = scmp.ne.s32.totalorder %s224, %s227
    %p233 = scmp.eq.s32.totalorder %s31, 0
    %p234 = por %p232, %p233
    %p235 = scmp.ne.s32.totalorder %s224, %s227
    %p236 = scmp.eq.s32.totalorder %s36, 1
    %p237 = por %p235, %p236
    %p238 = scmp.ne.s32.totalorder %s227, %s228
    %p239 = scmp.eq.s32.totalorder %s36, 0
    %p240 = por %p238, %p239
    %p241 = scmp.ne.s32.totalorder %s227, %s228
    %p242 = scmp.eq.s32.totalorder %s37, 1
    %p243 = por %p241, %p242
    %p245 = scmp.ne.s32.totalorder %s228, %s244
    %p246 = scmp.eq.s32.totalorder %s37, 0
    %p247 = por %p245, %p246
    %s248 = ssub.s32 %s31, %s38
    %p249 = scmp.eq.s32.totalorder %s248, 0
    %s251 = sadd.s32 %s250, 1
    %s252 = scalar_select %p249, %s250, %s251
    %p255 = pneg %p249
    %p256 = scmp.eq.s32.totalorder %s31, 1
    %p257 = por %p255, %p256
    %p258 = scmp.ne.s32.totalorder %s250, %s253
    %p259 = scmp.eq.s32.totalorder %s31, 0
    %p260 = por %p258, %p259
    %p261 = scmp.ne.s32.totalorder %s250, %s253
    %p262 = scmp.eq.s32.totalorder %s36, 1
    %p263 = por %p261, %p262
    %p264 = scmp.ne.s32.totalorder %s253, %s254
    %p265 = scmp.eq.s32.totalorder %s36, 0
    %p266 = por %p264, %p265
    %p267 = scmp.ne.s32.totalorder %s253, %s254
    %p268 = scmp.eq.s32.totalorder %s37, 1
    %p269 = por %p267, %p268
    %p271 = scmp.ne.s32.totalorder %s254, %s270
    %p272 = scmp.eq.s32.totalorder %s37, 0
    %p273 = por %p271, %p272
    %s274 = ssub.s32 %s31, %s38
    %p275 = scmp.eq.s32.totalorder %s274, 0
    %s277 = sadd.s32 %s276, 1
    %s278 = scalar_select %p275, %s276, %s277
    %p281 = pneg %p275
    %p282 = scmp.eq.s32.totalorder %s31, 1
    %p283 = por %p281, %p282
    %p284 = scmp.ne.s32.totalorder %s276, %s279
    %p285 = scmp.eq.s32.totalorder %s31, 0
    %p286 = por %p284, %p285
    %p287 = scmp.ne.s32.totalorder %s276, %s279
    %p288 = scmp.eq.s32.totalorder %s36, 1
    %p289 = por %p287, %p288
    %p290 = scmp.ne.s32.totalorder %s279, %s280
    %p291 = scmp.eq.s32.totalorder %s36, 0
    %p292 = por %p290, %p291
    %p293 = scmp.ne.s32.totalorder %s279, %s280
    %p294 = scmp.eq.s32.totalorder %s37, 1
    %p295 = por %p293, %p294
    %p297 = scmp.ne.s32.totalorder %s280, %s296
    %p298 = scmp.eq.s32.totalorder %s37, 0
    %p299 = por %p297, %p298
    %s300 = ssub.s32 %s31, %s38
    %p301 = scmp.eq.s32.totalorder %s300, 0
    %s303 = sadd.s32 %s302, 1
    %s304 = scalar_select %p301, %s302, %s303
    %p307 = pneg %p301
    %p308 = scmp.eq.s32.totalorder %s31, 1
    %p309 = por %p307, %p308
    %p310 = scmp.ne.s32.totalorder %s302, %s305
    %p311 = scmp.eq.s32.totalorder %s31, 0
    %p312 = por %p310, %p311
    %p313 = scmp.ne.s32.totalorder %s302, %s305
    %p314 = scmp.eq.s32.totalorder %s36, 1
    %p315 = por %p313, %p314
    %p316 = scmp.ne.s32.totalorder %s305, %s306
    %p317 = scmp.eq.s32.totalorder %s36, 0
    %p318 = por %p316, %p317
    %p319 = scmp.ne.s32.totalorder %s305, %s306
    %p320 = scmp.eq.s32.totalorder %s37, 1
    %p321 = por %p319, %p320
    %p323 = scmp.ne.s32.totalorder %s306, %s322
    %p324 = scmp.eq.s32.totalorder %s37, 0
    %p325 = por %p323, %p324
    %s326 = ssub.s32 %s31, %s38
    %p327 = scmp.eq.s32.totalorder %s326, 0
    %s329 = sadd.s32 %s328, 1
    %s330 = scalar_select %p327, %s328, %s329
    %p333 = pneg %p327
    %p334 = scmp.eq.s32.totalorder %s31, 1
    %p335 = por %p333, %p334
    %p336 = scmp.ne.s32.totalorder %s328, %s331
    %p337 = scmp.eq.s32.totalorder %s31, 0
    %p338 = por %p336, %p337
    %p339 = scmp.ne.s32.totalorder %s328, %s331
    %p340 = scmp.eq.s32.totalorder %s36, 1
    %p341 = por %p339, %p340
    %p342 = scmp.ne.s32.totalorder %s331, %s332
    %p343 = scmp.eq.s32.totalorder %s36, 0
    %p344 = por %p342, %p343
    %p345 = scmp.ne.s32.totalorder %s331, %s332
    %p346 = scmp.eq.s32.totalorder %s37, 1
    %p347 = por %p345, %p346
    %p349 = scmp.ne.s32.totalorder %s332, %s348
    %p350 = scmp.eq.s32.totalorder %s37, 0
    %p351 = por %p349, %p350
    %s352 = ssub.s32 %s31, %s38
    %p353 = scmp.eq.s32.totalorder %s352, 0
    %s355 = sadd.s32 %s354, 1
    %s356 = scalar_select %p353, %s354, %s355
    %p359 = pneg %p353
    %p360 = scmp.eq.s32.totalorder %s31, 1
    %p361 = por %p359, %p360
    %p362 = scmp.ne.s32.totalorder %s354, %s357
    %p363 = scmp.eq.s32.totalorder %s31, 0
    %p364 = por %p362, %p363
    %p365 = scmp.ne.s32.totalorder %s354, %s357
    %p366 = scmp.eq.s32.totalorder %s36, 1
    %p367 = por %p365, %p366
    %p368 = scmp.ne.s32.totalorder %s357, %s358
    %p369 = scmp.eq.s32.totalorder %s36, 0
    %p370 = por %p368, %p369
    %p371 = scmp.ne.s32.totalorder %s357, %s358
    %p372 = scmp.eq.s32.totalorder %s37, 1
    %p373 = por %p371, %p372
    %p375 = scmp.ne.s32.totalorder %s358, %s374
    %p376 = scmp.eq.s32.totalorder %s37, 0
    %p377 = por %p375, %p376
    %s378 = ssub.s32 %s31, %s38
    %p379 = scmp.eq.s32.totalorder %s378, 0
    %s381 = sadd.s32 %s380, 1
    %s382 = scalar_select %p379, %s380, %s381
    %p385 = pneg %p379
    %p386 = scmp.eq.s32.totalorder %s31, 1
    %p387 = por %p385, %p386
    %p388 = scmp.ne.s32.totalorder %s380, %s383
    %p389 = scmp.eq.s32.totalorder %s31, 0
    %p390 = por %p388, %p389
    %p391 = scmp.ne.s32.totalorder %s380, %s383
    %p392 = scmp.eq.s32.totalorder %s36, 1
    %p393 = por %p391, %p392
    %p394 = scmp.ne.s32.totalorder %s383, %s384
    %p395 = scmp.eq.s32.totalorder %s36, 0
    %p396 = por %p394, %p395
    %p397 = scmp.ne.s32.totalorder %s383, %s384
    %p398 = scmp.eq.s32.totalorder %s37, 1
    %p399 = por %p397, %p398
    %p401 = scmp.ne.s32.totalorder %s384, %s400
    %p402 = scmp.eq.s32.totalorder %s37, 0
    %p403 = por %p401, %p402
    %s404 = ssub.s32 %s31, %s38
    %p405 = scmp.eq.s32.totalorder %s404, 0
    %s407 = sadd.s32 %s406, 1
    %s408 = scalar_select %p405, %s406, %s407
    %p411 = pneg %p405
    %p412 = scmp.eq.s32.totalorder %s31, 1
    %p413 = por %p411, %p412
    %p414 = scmp.ne.s32.totalorder %s406, %s409
    %p415 = scmp.eq.s32.totalorder %s31, 0
    %p416 = por %p414, %p415
    %p417 = scmp.ne.s32.totalorder %s406, %s409
    %p418 = scmp.eq.s32.totalorder %s36, 1
    %p419 = por %p417, %p418
    %p420 = scmp.ne.s32.totalorder %s409, %s410
    %p421 = scmp.eq.s32.totalorder %s36, 0
    %p422 = por %p420, %p421
    %p423 = scmp.ne.s32.totalorder %s409, %s410
    %p424 = scmp.eq.s32.totalorder %s37, 1
    %p425 = por %p423, %p424
    %p427 = scmp.ne.s32.totalorder %s410, %s426
    %p428 = scmp.eq.s32.totalorder %s37, 0
    %p429 = por %p427, %p428
    %s430 = ssub.s32 %s31, %s38
    %p431 = scmp.eq.s32.totalorder %s430, 0
    %s433 = sadd.s32 %s432, 1
    %s434 = scalar_select %p431, %s432, %s433
    %p437 = pneg %p431
    %p438 = scmp.eq.s32.totalorder %s31, 1
    %p439 = por %p437, %p438
    %p440 = scmp.ne.s32.totalorder %s432, %s435
    %p441 = scmp.eq.s32.totalorder %s31, 0
    %p442 = por %p440, %p441
    %p443 = scmp.ne.s32.totalorder %s432, %s435
    %p444 = scmp.eq.s32.totalorder %s36, 1
    %p445 = por %p443, %p444
    %p446 = scmp.ne.s32.totalorder %s435, %s436
    %p447 = scmp.eq.s32.totalorder %s36, 0
    %p448 = por %p446, %p447
    %p449 = scmp.ne.s32.totalorder %s435, %s436
    %p450 = scmp.eq.s32.totalorder %s37, 1
    %p451 = por %p449, %p450
    %p453 = scmp.ne.s32.totalorder %s436, %s452
    %p454 = scmp.eq.s32.totalorder %s37, 0
    %p455 = por %p453, %p454
    %s456 = ssub.s32 %s31, %s38
    %p457 = scmp.eq.s32.totalorder %s456, 0
    %s459 = sadd.s32 %s458, 1
    %s460 = scalar_select %p457, %s458, %s459
    %p463 = pneg %p457
    %p464 = scmp.eq.s32.totalorder %s31, 1
    %p465 = por %p463, %p464
    %p466 = scmp.ne.s32.totalorder %s458, %s461
    %p467 = scmp.eq.s32.totalorder %s31, 0
    %p468 = por %p466, %p467
    %p469 = scmp.ne.s32.totalorder %s458, %s461
    %p470 = scmp.eq.s32.totalorder %s36, 1
    %p471 = por %p469, %p470
    %p472 = scmp.ne.s32.totalorder %s461, %s462
    %p473 = scmp.eq.s32.totalorder %s36, 0
    %p474 = por %p472, %p473
    %p475 = scmp.ne.s32.totalorder %s461, %s462
    %p476 = scmp.eq.s32.totalorder %s37, 1
    %p477 = por %p475, %p476
    %p479 = scmp.ne.s32.totalorder %s462, %s478
    %p480 = scmp.eq.s32.totalorder %s37, 0
    %p481 = por %p479, %p480
    %s482 = ssub.s32 %s31, %s38
    %p483 = scmp.eq.s32.totalorder %s482, 0
    %s485 = sadd.s32 %s484, 1
    %s486 = scalar_select %p483, %s484, %s485
    %p489 = pneg %p483
    %p490 = scmp.eq.s32.totalorder %s31, 1
    %p491 = por %p489, %p490
    %p492 = scmp.ne.s32.totalorder %s484, %s487
    %p493 = scmp.eq.s32.totalorder %s31, 0
    %p494 = por %p492, %p493
    %p495 = scmp.ne.s32.totalorder %s484, %s487
    %p496 = scmp.eq.s32.totalorder %s36, 1
    %p497 = por %p495, %p496
    %p498 = scmp.ne.s32.totalorder %s487, %s488
    %p499 = scmp.eq.s32.totalorder %s36, 0
    %p500 = por %p498, %p499
    %p501 = scmp.ne.s32.totalorder %s487, %s488
    %p502 = scmp.eq.s32.totalorder %s37, 1
    %p503 = por %p501, %p502
    %p505 = scmp.ne.s32.totalorder %s488, %s504
    %p506 = scmp.eq.s32.totalorder %s37, 0
    %p507 = por %p505, %p506
    %s508 = ssub.s32 %s31, %s38
    %p509 = scmp.eq.s32.totalorder %s508, 0
    %s511 = sadd.s32 %s510, 1
    %s512 = scalar_select %p509, %s510, %s511
    %p515 = pneg %p509
    %p516 = scmp.eq.s32.totalorder %s31, 1
    %p517 = por %p515, %p516
    %p518 = scmp.ne.s32.totalorder %s510, %s513
    %p519 = scmp.eq.s32.totalorder %s31, 0
    %p520 = por %p518, %p519
    %p521 = scmp.ne.s32.totalorder %s510, %s513
    %p522 = scmp.eq.s32.totalorder %s36, 1
    %p523 = por %p521, %p522
    %p524 = scmp.ne.s32.totalorder %s513, %s514
    %p525 = scmp.eq.s32.totalorder %s36, 0
    %p526 = por %p524, %p525
    %p527 = scmp.ne.s32.totalorder %s513, %s514
    %p528 = scmp.eq.s32.totalorder %s37, 1
    %p529 = por %p527, %p528
    %p531 = scmp.ne.s32.totalorder %s514, %s530
    %p532 = scmp.eq.s32.totalorder %s37, 0
    %p533 = por %p531, %p532
    %s534 = ssub.s32 %s31, %s38
    %p535 = scmp.eq.s32.totalorder %s534, 0
    %s537 = sadd.s32 %s536, 1
    %s538 = scalar_select %p535, %s536, %s537
    %p541 = pneg %p535
    %p542 = scmp.eq.s32.totalorder %s31, 1
    %p543 = por %p541, %p542
    %p544 = scmp.ne.s32.totalorder %s536, %s539
    %p545 = scmp.eq.s32.totalorder %s31, 0
    %p546 = por %p544, %p545
    %p547 = scmp.ne.s32.totalorder %s536, %s539
    %p548 = scmp.eq.s32.totalorder %s36, 1
    %p549 = por %p547, %p548
    %p550 = scmp.ne.s32.totalorder %s539, %s540
    %p551 = scmp.eq.s32.totalorder %s36, 0
    %p552 = por %p550, %p551
    %p553 = scmp.ne.s32.totalorder %s539, %s540
    %p554 = scmp.eq.s32.totalorder %s37, 1
    %p555 = por %p553, %p554
    %p557 = scmp.ne.s32.totalorder %s540, %s556
    %p558 = scmp.eq.s32.totalorder %s37, 0
    %p559 = por %p557, %p558
    %s560 = ssub.s32 %s31, %s38
    %p561 = scmp.eq.s32.totalorder %s560, 0
    %s563 = sadd.s32 %s562, 1
    %s564 = scalar_select %p561, %s562, %s563
    %p567 = pneg %p561
    %p568 = scmp.eq.s32.totalorder %s31, 1
    %p569 = por %p567, %p568
    %p570 = scmp.ne.s32.totalorder %s562, %s565
    %p571 = scmp.eq.s32.totalorder %s31, 0
    %p572 = por %p570, %p571
    %p573 = scmp.ne.s32.totalorder %s562, %s565
    %p574 = scmp.eq.s32.totalorder %s36, 1
    %p575 = por %p573, %p574
    %p576 = scmp.ne.s32.totalorder %s565, %s566
    %p577 = scmp.eq.s32.totalorder %s36, 0
    %p578 = por %p576, %p577
    %p579 = scmp.ne.s32.totalorder %s565, %s566
    %p580 = scmp.eq.s32.totalorder %s37, 1
    %p581 = por %p579, %p580
    %p583 = scmp.ne.s32.totalorder %s566, %s582
    %p584 = scmp.eq.s32.totalorder %s37, 0
    %p585 = por %p583, %p584
    %s586 = ssub.s32 %s31, %s38
    %p587 = scmp.eq.s32.totalorder %s586, 0
    %s589 = sadd.s32 %s588, 1
    %s590 = scalar_select %p587, %s588, %s589
    %p593 = pneg %p587
    %p594 = scmp.eq.s32.totalorder %s31, 1
    %p595 = por %p593, %p594
    %p596 = scmp.ne.s32.totalorder %s588, %s591
    %p597 = scmp.eq.s32.totalorder %s31, 0
    %p598 = por %p596, %p597
    %p599 = scmp.ne.s32.totalorder %s588, %s591
    %p600 = scmp.eq.s32.totalorder %s36, 1
    %p601 = por %p599, %p600
    %p602 = scmp.ne.s32.totalorder %s591, %s592
    %p603 = scmp.eq.s32.totalorder %s36, 0
    %p604 = por %p602, %p603
    %p605 = scmp.ne.s32.totalorder %s591, %s592
    %p606 = scmp.eq.s32.totalorder %s37, 1
    %p607 = por %p605, %p606
    %p609 = scmp.ne.s32.totalorder %s592, %s608
    %p610 = scmp.eq.s32.totalorder %s37, 0
    %p611 = por %p609, %p610
    %s613 = sadd.s32 %s612, 1
    %p616 = scmp.eq.s32.totalorder %s31, 1
    %p617 = scmp.ne.s32.totalorder %s612, %s614
    %p618 = scmp.eq.s32.totalorder %s31, 0
    %p619 = por %p617, %p618
    %p620 = scmp.ne.s32.totalorder %s612, %s614
    %p621 = scmp.eq.s32.totalorder %s36, 1
    %p622 = por %p620, %p621
    %p623 = scmp.ne.s32.totalorder %s614, %s615
    %p624 = scmp.eq.s32.totalorder %s36, 0
    %p625 = por %p623, %p624
    %p626 = scmp.ne.s32.totalorder %s614, %s615
    %p627 = scmp.eq.s32.totalorder %s37, 1
    %p628 = por %p626, %p627
    %p630 = scmp.ne.s32.totalorder %s615, %s629
    %p631 = scmp.eq.s32.totalorder %s37, 0
    %p632 = por %p630, %p631
    %s634 = sadd.s32 %s633, 1
    %p637 = scmp.eq.s32.totalorder %s31, 1
    %p638 = scmp.ne.s32.totalorder %s633, %s635
    %p639 = scmp.eq.s32.totalorder %s31, 0
    %p640 = por %p638, %p639
    %p641 = scmp.ne.s32.totalorder %s633, %s635
    %p642 = scmp.eq.s32.totalorder %s36, 1
    %p643 = por %p641, %p642
    %p644 = scmp.ne.s32.totalorder %s635, %s636
    %p645 = scmp.eq.s32.totalorder %s36, 0
    %p646 = por %p644, %p645
    %p647 = scmp.ne.s32.totalorder %s635, %s636
    %p648 = scmp.eq.s32.totalorder %s37, 1
    %p649 = por %p647, %p648
    %p651 = scmp.ne.s32.totalorder %s636, %s650
    %p652 = scmp.eq.s32.totalorder %s37, 0
    %p653 = por %p651, %p652
    %s655 = sadd.s32 %s654, 1
    %p658 = scmp.eq.s32.totalorder %s31, 1
    %p659 = scmp.ne.s32.totalorder %s654, %s656
    %p660 = scmp.eq.s32.totalorder %s31, 0
    %p661 = por %p659, %p660
    %p662 = scmp.ne.s32.totalorder %s654, %s656
    %p663 = scmp.eq.s32.totalorder %s36, 1
    %p664 = por %p662, %p663
    %p665 = scmp.ne.s32.totalorder %s656, %s657
    %p666 = scmp.eq.s32.totalorder %s36, 0
    %p667 = por %p665, %p666
    %p668 = scmp.ne.s32.totalorder %s656, %s657
    %p669 = scmp.eq.s32.totalorder %s37, 1
    %p670 = por %p668, %p669
    %p672 = scmp.ne.s32.totalorder %s657, %s671
    %p673 = scmp.eq.s32.totalorder %s37, 0
    %p674 = por %p672, %p673
    %p675 = scmp.le.s32.totalorder 1, %s31
    %p676 = scmp.lt.s32.totalorder %s31, 3
    %p677 = pnand %p675, %p676
    %p678 = pneg %p677
    // Predicated region
    $region9: #{daclip_forward.2} parent=5 // pred_check
      _
    $region10: #{daclip_forward.2} parent=5 // pred_check_branch
      %680 = sbr.rel (%p677) target = $region12
    $region11: #{daclip_forward.2} parent=5 // pred_region
      %s681 = ssub.s32 %s31, 1
      // Predicated region
      $region13: #{daclip_forward.2} parent=11 // pred_check
        %p682 = pneg %p52
      $region14: #{daclip_forward.2} parent=11 // pred_check_branch
        %684 = sbr.rel (%p682) target = $region16
      $region15: #{daclip_forward.2} parent=11 // pred_region
        _
      $region16: #{daclip_forward.2} parent=11 // pred_fallthru
        _
      // Predicated region
      $region17: #{daclip_forward.2} parent=11 // pred_check
        %p685 = pneg %p73
      $region18: #{daclip_forward.2} parent=11 // pred_check_branch
        %687 = sbr.rel (%p685) target = $region20
      $region19: #{daclip_forward.2} parent=11 // pred_region
        _
      $region20: #{daclip_forward.2} parent=11 // pred_fallthru
        _
      // Predicated region
      $region21: #{daclip_forward.2} parent=11 // pred_check
        %p688 = pneg %p94
      $region22: #{daclip_forward.2} parent=11 // pred_check_branch
        %690 = sbr.rel (%p688) target = $region24
      $region23: #{daclip_forward.2} parent=11 // pred_region
        _
      $region24: #{daclip_forward.2} parent=11 // pred_fallthru
        _
      // Predicated region
      $region25: #{daclip_forward.2} parent=11 // pred_check
        %p691 = pneg %p115
      $region26: #{daclip_forward.2} parent=11 // pred_check_branch
        %693 = sbr.rel (%p691) target = $region28
      $region27: #{daclip_forward.2} parent=11 // pred_region
        _
      $region28: #{daclip_forward.2} parent=11 // pred_fallthru
        _
      // Predicated region
      $region29: #{daclip_forward.2} parent=11 // pred_check
        %p694 = pneg %p136
      $region30: #{daclip_forward.2} parent=11 // pred_check_branch
        %696 = sbr.rel (%p694) target = $region32
      $region31: #{daclip_forward.2} parent=11 // pred_region
        _
      $region32: #{daclip_forward.2} parent=11 // pred_fallthru
        _
      // Predicated region
      $region33: #{daclip_forward.2} parent=11 // pred_check
        %p697 = pneg %p625
      $region34: #{daclip_forward.2} parent=11 // pred_check_branch
        %699 = sbr.rel (%p697) target = $region36
      $region35: #{daclip_forward.2} parent=11 // pred_region
        _
      $region36: #{daclip_forward.2} parent=11 // pred_fallthru
        _
      // Predicated region
      $region37: #{daclip_forward.2} parent=11 // pred_check
        %p700 = pneg %p646
      $region38: #{daclip_forward.2} parent=11 // pred_check_branch
        %702 = sbr.rel (%p700) target = $region40
      $region39: #{daclip_forward.2} parent=11 // pred_region
        _
      $region40: #{daclip_forward.2} parent=11 // pred_fallthru
        _
    $region12: #{daclip_forward.2} parent=5 // pred_fallthru
      _
    %p703 = scmp.lt.s32.totalorder %s31, 2
    // Predicated region
    $region41: #{daclip_forward.2} parent=5 // pred_check
      %p704 = pneg %p703
    $region42: #{daclip_forward.2} parent=5 // pred_check_branch
      %706 = sbr.rel (%p704) target = $region44
    $region43: #{daclip_forward.2} parent=5 // pred_region
      // Predicated region
      $region45: #{daclip_forward.2} parent=43 // pred_check
        %p707 = pneg %p156
      $region46: #{daclip_forward.2} parent=43 // pred_check_branch
        %709 = sbr.rel (%p707) target = $region48
      $region47: #{daclip_forward.2} parent=43 // pred_region
        %p710 = scmp.lt.s32.totalorder %s31, 1
        %s711 = scalar_select %p710, %s31, 1
        %s712 = smul.addr %s711, 4
        %s713 = scalar_lea.vmem %s5, %s712
      $region48: #{daclip_forward.2} parent=43 // pred_fallthru
        _
      // Predicated region
      $region49: #{daclip_forward.2} parent=43 // pred_check
        %p714 = pneg %p182
      $region50: #{daclip_forward.2} parent=43 // pred_check_branch
        %716 = sbr.rel (%p714) target = $region52
      $region51: #{daclip_forward.2} parent=43 // pred_region
        %p717 = scmp.lt.s32.totalorder %s31, 1
        %s718 = scalar_select %p717, %s31, 1
        %s719 = smul.addr %s718, 4
        %s720 = smul.addr %s719, 4
        %s721 = scalar_lea.vmem %s6, %s720
      $region52: #{daclip_forward.2} parent=43 // pred_fallthru
        _
      // Predicated region
      $region53: #{daclip_forward.2} parent=43 // pred_check
        %p722 = pneg %p208
      $region54: #{daclip_forward.2} parent=43 // pred_check_branch
        %724 = sbr.rel (%p722) target = $region56
      $region55: #{daclip_forward.2} parent=43 // pred_region
        %p725 = scmp.lt.s32.totalorder %s31, 1
        %s726 = scalar_select %p725, %s31, 1
        %s727 = scalar_lea.vmem %s7, %s726
      $region56: #{daclip_forward.2} parent=43 // pred_fallthru
        _
      // Predicated region
      $region57: #{daclip_forward.2} parent=43 // pred_check
        %p728 = pneg %p234
      $region58: #{daclip_forward.2} parent=43 // pred_check_branch
        %730 = sbr.rel (%p728) target = $region60
      $region59: #{daclip_forward.2} parent=43 // pred_region
        %p731 = scmp.lt.s32.totalorder %s31, 1
        %s732 = scalar_select %p731, %s31, 1
        %s733 = smul.addr %s732, 4
        %s734 = smul.addr %s733, 4
        %s735 = scalar_lea.vmem %s8, %s734
      $region60: #{daclip_forward.2} parent=43 // pred_fallthru
        _
      // Predicated region
      $region61: #{daclip_forward.2} parent=43 // pred_check
        %p736 = pneg %p260
      $region62: #{daclip_forward.2} parent=43 // pred_check_branch
        %738 = sbr.rel (%p736) target = $region64
      $region63: #{daclip_forward.2} parent=43 // pred_region
        %p739 = scmp.lt.s32.totalorder %s31, 1
        %s740 = scalar_select %p739, %s31, 1
        %s741 = scalar_lea.vmem %s9, %s740
      $region64: #{daclip_forward.2} parent=43 // pred_fallthru
        _
      // Predicated region
      $region65: #{daclip_forward.2} parent=43 // pred_check
        %p742 = pneg %p286
      $region66: #{daclip_forward.2} parent=43 // pred_check_branch
        %744 = sbr.rel (%p742) target = $region68
      $region67: #{daclip_forward.2} parent=43 // pred_region
        %p745 = scmp.lt.s32.totalorder %s31, 1
        %s746 = scalar_select %p745, %s31, 1
        %s747 = smul.addr %s746, 4
        %s748 = smul.addr %s747, 4
        %s749 = scalar_lea.vmem %s10, %s748
      $region68: #{daclip_forward.2} parent=43 // pred_fallthru
        _
      // Predicated region
      $region69: #{daclip_forward.2} parent=43 // pred_check
        %p750 = pneg %p312
      $region70: #{daclip_forward.2} parent=43 // pred_check_branch
        %752 = sbr.rel (%p750) target = $region72
      $region71: #{daclip_forward.2} parent=43 // pred_region
        %p753 = scmp.lt.s32.totalorder %s31, 1
        %s754 = scalar_select %p753, %s31, 1
        %s755 = scalar_lea.vmem %s11, %s754
      $region72: #{daclip_forward.2} parent=43 // pred_fallthru
        _
      // Predicated region
      $region73: #{daclip_forward.2} parent=43 // pred_check
        %p756 = pneg %p338
      $region74: #{daclip_forward.2} parent=43 // pred_check_branch
        %758 = sbr.rel (%p756) target = $region76
      $region75: #{daclip_forward.2} parent=43 // pred_region
        %p759 = scmp.lt.s32.totalorder %s31, 1
        %s760 = scalar_select %p759, %s31, 1
        %s761 = smul.addr %s760, 16
        %s762 = smul.addr %s761, 4
        %s763 = scalar_lea.vmem %s12, %s762
      $region76: #{daclip_forward.2} parent=43 // pred_fallthru
        _
      // Predicated region
      $region77: #{daclip_forward.2} parent=43 // pred_check
        %p764 = pneg %p364
      $region78: #{daclip_forward.2} parent=43 // pred_check_branch
        %766 = sbr.rel (%p764) target = $region80
      $region79: #{daclip_forward.2} parent=43 // pred_region
        %p767 = scmp.lt.s32.totalorder %s31, 1
        %s768 = scalar_select %p767, %s31, 1
        %s769 = scalar_lea.vmem %s13, %s768
      $region80: #{daclip_forward.2} parent=43 // pred_fallthru
        _
      // Predicated region
      $region81: #{daclip_forward.2} parent=43 // pred_check
        %p770 = pneg %p390
      $region82: #{daclip_forward.2} parent=43 // pred_check_branch
        %772 = sbr.rel (%p770) target = $region84
      $region83: #{daclip_forward.2} parent=43 // pred_region
        %p773 = scmp.lt.s32.totalorder %s31, 1
        %s774 = scalar_select %p773, %s31, 1
        %s775 = smul.addr %s774, 4
        %s776 = scalar_lea.vmem %s14, %s775
      $region84: #{daclip_forward.2} parent=43 // pred_fallthru
        _
      // Predicated region
      $region85: #{daclip_forward.2} parent=43 // pred_check
        %p777 = pneg %p416
      $region86: #{daclip_forward.2} parent=43 // pred_check_branch
        %779 = sbr.rel (%p777) target = $region88
      $region87: #{daclip_forward.2} parent=43 // pred_region
        %p780 = scmp.lt.s32.totalorder %s31, 1
        %s781 = scalar_select %p780, %s31, 1
        %s782 = smul.addr %s781, 4
        %s783 = smul.addr %s782, 4
        %s784 = scalar_lea.vmem %s15, %s783
      $region88: #{daclip_forward.2} parent=43 // pred_fallthru
        _
      // Predicated region
      $region89: #{daclip_forward.2} parent=43 // pred_check
        %p785 = pneg %p442
      $region90: #{daclip_forward.2} parent=43 // pred_check_branch
        %787 = sbr.rel (%p785) target = $region92
      $region91: #{daclip_forward.2} parent=43 // pred_region
        %p788 = scmp.lt.s32.totalorder %s31, 1
        %s789 = scalar_select %p788, %s31, 1
        %s790 = scalar_lea.vmem %s16, %s789
      $region92: #{daclip_forward.2} parent=43 // pred_fallthru
        _
      // Predicated region
      $region93: #{daclip_forward.2} parent=43 // pred_check
        %p791 = pneg %p468
      $region94: #{daclip_forward.2} parent=43 // pred_check_branch
        %793 = sbr.rel (%p791) target = $region96
      $region95: #{daclip_forward.2} parent=43 // pred_region
        %p794 = scmp.lt.s32.totalorder %s31, 1
        %s795 = scalar_select %p794, %s31, 1
        %s796 = smul.addr %s795, 4
        %s797 = smul.addr %s796, 4
        %s798 = scalar_lea.vmem %s17, %s797
      $region96: #{daclip_forward.2} parent=43 // pred_fallthru
        _
      // Predicated region
      $region97: #{daclip_forward.2} parent=43 // pred_check
        %p799 = pneg %p494
      $region98: #{daclip_forward.2} parent=43 // pred_check_branch
        %801 = sbr.rel (%p799) target = $region100
      $region99: #{daclip_forward.2} parent=43 // pred_region
        %p802 = scmp.lt.s32.totalorder %s31, 1
        %s803 = scalar_select %p802, %s31, 1
        %s804 = scalar_lea.vmem %s18, %s803
      $region100: #{daclip_forward.2} parent=43 // pred_fallthru
        _
      // Predicated region
      $region101: #{daclip_forward.2} parent=43 // pred_check
        %p805 = pneg %p520
      $region102: #{daclip_forward.2} parent=43 // pred_check_branch
        %807 = sbr.rel (%p805) target = $region104
      $region103: #{daclip_forward.2} parent=43 // pred_region
        %p808 = scmp.lt.s32.totalorder %s31, 1
        %s809 = scalar_select %p808, %s31, 1
        %s810 = smul.addr %s809, 4
        %s811 = smul.addr %s810, 4
        %s812 = scalar_lea.vmem %s19, %s811
      $region104: #{daclip_forward.2} parent=43 // pred_fallthru
        _
      // Predicated region
      $region105: #{daclip_forward.2} parent=43 // pred_check
        %p813 = pneg %p546
      $region106: #{daclip_forward.2} parent=43 // pred_check_branch
        %815 = sbr.rel (%p813) target = $region108
      $region107: #{daclip_forward.2} parent=43 // pred_region
        %p816 = scmp.lt.s32.totalorder %s31, 1
        %s817 = scalar_select %p816, %s31, 1
        %s818 = scalar_lea.vmem %s20, %s817
      $region108: #{daclip_forward.2} parent=43 // pred_fallthru
        _
      // Predicated region
      $region109: #{daclip_forward.2} parent=43 // pred_check
        %p819 = pneg %p572
      $region110: #{daclip_forward.2} parent=43 // pred_check_branch
        %821 = sbr.rel (%p819) target = $region112
      $region111: #{daclip_forward.2} parent=43 // pred_region
        %p822 = scmp.lt.s32.totalorder %s31, 1
        %s823 = scalar_select %p822, %s31, 1
        %s824 = smul.addr %s823, 16
        %s825 = smul.addr %s824, 4
        %s826 = scalar_lea.vmem %s21, %s825
      $region112: #{daclip_forward.2} parent=43 // pred_fallthru
        _
      // Predicated region
      $region113: #{daclip_forward.2} parent=43 // pred_check
        %p827 = pneg %p598
      $region114: #{daclip_forward.2} parent=43 // pred_check_branch
        %829 = sbr.rel (%p827) target = $region116
      $region115: #{daclip_forward.2} parent=43 // pred_region
        %p830 = scmp.lt.s32.totalorder %s31, 1
        %s831 = scalar_select %p830, %s31, 1
        %s832 = scalar_lea.vmem %s22, %s831
      $region116: #{daclip_forward.2} parent=43 // pred_fallthru
        _
    $region44: #{daclip_forward.2} parent=5 // pred_fallthru
      _
    %p833 = scmp.le.s32.totalorder 1, %s31
    %p834 = scmp.lt.s32.totalorder %s31, 3
    %p835 = pnand %p833, %p834
    %p836 = pneg %p835
    // Predicated region
    $region117: #{daclip_forward.2} parent=5 // pred_check
      _
    $region118: #{daclip_forward.2} parent=5 // pred_check_branch
      %838 = sbr.rel (%p835) target = $region120
    $region119: #{daclip_forward.2} parent=5 // pred_region
      %s839 = ssub.s32 %s31, 1
      %p840 = pneg %p52
      %p841 = pneg %p49
      %p842 = pneg %p73
      %p843 = pneg %p70
      %p844 = pneg %p94
      %p845 = pneg %p91
      %p846 = pneg %p115
      %p847 = pneg %p112
      %p848 = pneg %p136
      %p849 = pneg %p133
      %p850 = scmp.lt.s32.totalorder %s36, 1
      %s851 = scalar_select %p850, %s36, 1
      %s852 = smul.addr %s851, 4
      %s853 = scalar_lea.vmem %s5, %s852
      %p854 = pneg %p162
      %p855 = pneg %p159
      %p856 = scmp.lt.s32.totalorder %s36, 1
      %s857 = scalar_select %p856, %s36, 1
      %s858 = smul.addr %s857, 4
      %s859 = smul.addr %s858, 4
      %s860 = scalar_lea.vmem %s6, %s859
      %p861 = pneg %p188
      %p862 = pneg %p185
      %p863 = scmp.lt.s32.totalorder %s36, 1
      %s864 = scalar_select %p863, %s36, 1
      %s865 = scalar_lea.vmem %s7, %s864
      %p866 = pneg %p214
      %p867 = pneg %p211
      %p868 = scmp.lt.s32.totalorder %s36, 1
      %s869 = scalar_select %p868, %s36, 1
      %s870 = smul.addr %s869, 4
      %s871 = smul.addr %s870, 4
      %s872 = scalar_lea.vmem %s8, %s871
      %p873 = pneg %p240
      %p874 = pneg %p237
      %p875 = scmp.lt.s32.totalorder %s36, 1
      %s876 = scalar_select %p875, %s36, 1
      %s877 = scalar_lea.vmem %s9, %s876
      %p878 = pneg %p266
      %p879 = pneg %p263
      %p880 = scmp.lt.s32.totalorder %s36, 1
      %s881 = scalar_select %p880, %s36, 1
      %s882 = smul.addr %s881, 4
      %s883 = smul.addr %s882, 4
      %s884 = scalar_lea.vmem %s10, %s883
      %p885 = pneg %p292
      %p886 = pneg %p289
      %p887 = scmp.lt.s32.totalorder %s36, 1
      %s888 = scalar_select %p887, %s36, 1
      %s889 = scalar_lea.vmem %s11, %s888
      %p890 = pneg %p318
      %p891 = pneg %p315
      %p892 = scmp.lt.s32.totalorder %s36, 1
      %s893 = scalar_select %p892, %s36, 1
      %s894 = smul.addr %s893, 16
      %s895 = smul.addr %s894, 4
      %s896 = scalar_lea.vmem %s12, %s895
      %p897 = pneg %p344
      %p898 = pneg %p341
      %p899 = scmp.lt.s32.totalorder %s36, 1
      %s900 = scalar_select %p899, %s36, 1
      %s901 = scalar_lea.vmem %s13, %s900
      %p902 = pneg %p370
      %p903 = pneg %p367
      %p904 = scmp.lt.s32.totalorder %s36, 1
      %s905 = scalar_select %p904, %s36, 1
      %s906 = smul.addr %s905, 4
      %s907 = scalar_lea.vmem %s14, %s906
      %p908 = pneg %p396
      %p909 = pneg %p393
      %p910 = scmp.lt.s32.totalorder %s36, 1
      %s911 = scalar_select %p910, %s36, 1
      %s912 = smul.addr %s911, 4
      %s913 = smul.addr %s912, 4
      %s914 = scalar_lea.vmem %s15, %s913
      %p915 = pneg %p422
      %p916 = pneg %p419
      %p917 = scmp.lt.s32.totalorder %s36, 1
      %s918 = scalar_select %p917, %s36, 1
      %s919 = scalar_lea.vmem %s16, %s918
      %p920 = pneg %p448
      %p921 = pneg %p445
      %p922 = scmp.lt.s32.totalorder %s36, 1
      %s923 = scalar_select %p922, %s36, 1
      %s924 = smul.addr %s923, 4
      %s925 = smul.addr %s924, 4
      %s926 = scalar_lea.vmem %s17, %s925
      %p927 = pneg %p474
      %p928 = pneg %p471
      %p929 = scmp.lt.s32.totalorder %s36, 1
      %s930 = scalar_select %p929, %s36, 1
      %s931 = scalar_lea.vmem %s18, %s930
      %p932 = pneg %p500
      %p933 = pneg %p497
      %p934 = scmp.lt.s32.totalorder %s36, 1
      %s935 = scalar_select %p934, %s36, 1
      %s936 = smul.addr %s935, 4
      %s937 = smul.addr %s936, 4
      %s938 = scalar_lea.vmem %s19, %s937
      %p939 = pneg %p526
      %p940 = pneg %p523
      %p941 = scmp.lt.s32.totalorder %s36, 1
      %s942 = scalar_select %p941, %s36, 1
      %s943 = scalar_lea.vmem %s20, %s942
      %p944 = pneg %p552
      %p945 = pneg %p549
      %p946 = scmp.lt.s32.totalorder %s36, 1
      %s947 = scalar_select %p946, %s36, 1
      %s948 = smul.addr %s947, 16
      %s949 = smul.addr %s948, 4
      %s950 = scalar_lea.vmem %s21, %s949
      %p951 = pneg %p578
      %p952 = pneg %p575
      %p953 = scmp.lt.s32.totalorder %s36, 1
      %s954 = scalar_select %p953, %s36, 1
      %s955 = scalar_lea.vmem %s22, %s954
      %p956 = pneg %p604
      %p957 = pneg %p601
      %p958 = pneg %p625
      %p959 = pneg %p622
      %p960 = pneg %p646
      %p961 = pneg %p643
      %p962 = pneg %p667
      %p963 = pneg %p664
      %p964 = scmp.lt.s32.totalorder %s36, 1
      %s965 = scalar_select %p964, %s36, 1
      %s966 = smul.addr %s965, 4
      %s967 = scalar_lea.vmem %s5, %s966
      %p968 = scmp.lt.s32.totalorder %s36, 1
      %s969 = scalar_select %p968, %s36, 1
      %s970 = smul.addr %s969, 4
      %s971 = smul.addr %s970, 4
      %s972 = scalar_lea.vmem %s6, %s971
      %p973 = scmp.lt.s32.totalorder %s36, 1
      %s974 = scalar_select %p973, %s36, 1
      %s975 = scalar_lea.vmem %s7, %s974
      %p976 = scmp.lt.s32.totalorder %s36, 1
      %s977 = scalar_select %p976, %s36, 1
      %s978 = smul.addr %s977, 4
      %s979 = smul.addr %s978, 4
      %s980 = scalar_lea.vmem %s8, %s979
      %p981 = scmp.lt.s32.totalorder %s36, 1
      %s982 = scalar_select %p981, %s36, 1
      %s983 = scalar_lea.vmem %s9, %s982
      %p984 = scmp.lt.s32.totalorder %s36, 1
      %s985 = scalar_select %p984, %s36, 1
      %s986 = smul.addr %s985, 4
      %s987 = smul.addr %s986, 4
      %s988 = scalar_lea.vmem %s10, %s987
      %p989 = scmp.lt.s32.totalorder %s36, 1
      %s990 = scalar_select %p989, %s36, 1
      %s991 = scalar_lea.vmem %s11, %s990
      %p992 = scmp.lt.s32.totalorder %s36, 1
      %s993 = scalar_select %p992, %s36, 1
      %s994 = smul.addr %s993, 16
      %s995 = smul.addr %s994, 4
      %s996 = scalar_lea.vmem %s12, %s995
      %p997 = scmp.lt.s32.totalorder %s36, 1
      %s998 = scalar_select %p997, %s36, 1
      %s999 = scalar_lea.vmem %s13, %s998
      %p1000 = scmp.lt.s32.totalorder %s36, 1
      %s1001 = scalar_select %p1000, %s36, 1
      %s1002 = smul.addr %s1001, 4
      %s1003 = scalar_lea.vmem %s14, %s1002
      %p1004 = scmp.lt.s32.totalorder %s36, 1
      %s1005 = scalar_select %p1004, %s36, 1
      %s1006 = smul.addr %s1005, 4
      %s1007 = smul.addr %s1006, 4
      %s1008 = scalar_lea.vmem %s15, %s1007
      %p1009 = scmp.lt.s32.totalorder %s36, 1
      %s1010 = scalar_select %p1009, %s36, 1
      %s1011 = scalar_lea.vmem %s16, %s1010
      %p1012 = scmp.lt.s32.totalorder %s36, 1
      %s1013 = scalar_select %p1012, %s36, 1
      %s1014 = smul.addr %s1013, 4
      %s1015 = smul.addr %s1014, 4
      %s1016 = scalar_lea.vmem %s17, %s1015
      %p1017 = scmp.lt.s32.totalorder %s36, 1
      %s1018 = scalar_select %p1017, %s36, 1
      %s1019 = scalar_lea.vmem %s18, %s1018
      %p1020 = scmp.lt.s32.totalorder %s36, 1
      %s1021 = scalar_select %p1020, %s36, 1
      %s1022 = smul.addr %s1021, 4
      %s1023 = smul.addr %s1022, 4
      %s1024 = scalar_lea.vmem %s19, %s1023
      %p1025 = scmp.lt.s32.totalorder %s36, 1
      %s1026 = scalar_select %p1025, %s36, 1
      %s1027 = scalar_lea.vmem %s20, %s1026
      %p1028 = scmp.lt.s32.totalorder %s36, 1
      %s1029 = scalar_select %p1028, %s36, 1
      %s1030 = smul.addr %s1029, 16
      %s1031 = smul.addr %s1030, 4
      %s1032 = scalar_lea.vmem %s21, %s1031
      %p1033 = scmp.lt.s32.totalorder %s36, 1
      %s1034 = scalar_select %p1033, %s36, 1
      %s1035 = scalar_lea.vmem %s22, %s1034
      %p1037 = scmp.eq.s32.totalorder %s36, 0
      // Predicated region
      $region121: #{daclip_forward.2} parent=119 // pred_check
        %p1038 = pneg %p1037
      $region122: #{daclip_forward.2} parent=119 // pred_check_branch
        %1040 = sbr.rel (%p1038) target = $region124
      $region123: #{daclip_forward.2} parent=119 // pred_region
        %v1041 = vld [vmem:[%s0] sm:$0xff]
        %v1042 = vld [vmem:[%s0 + $0x8] sm:$0xff]
        %v1043 = vld [vmem:[%s0 + $0x10] sm:$0x3]
        %v1044 = vld [vmem:[%s0 + $0x18] sm:$0x3]
        %v1045 = vpack.c.bf16 %v1043, %v1041
        %v1046 = vpack.c.bf16 %v1044, %v1042
        %v1047 = vld [vmem:[%s2] sm:$0xf]
        %v1048 = vld [vmem:[%s2 + $0x4] sm:$0xf]
        %v1049 = vld [vmem:[%s2 + $0x8] sm:$0xf]
        %v1050 = vld [vmem:[%s2 + $0xc] sm:$0xf]
        %v1051 = vld [vmem:[%s2 + $0x10] sm:$0xf]
        %v1052 = vld [vmem:[%s2 + $0x14] sm:$0xf]
        %v1053 = vld [vmem:[%s2 + $0x18] sm:$0xf]
        %v1054 = vld [vmem:[%s2 + $0x1c] sm:$0xf]
        %v1055 = vld [vmem:[%s2 + $0x20] sm:$0xf]
        %v1056 = vld [vmem:[%s2 + $0x24] sm:$0xf]
        %v1057 = vld [vmem:[%s2 + $0x28] sm:$0xf]
        %v1058 = vld [vmem:[%s2 + $0x2c] sm:$0xf]
        %v1059 = vld [vmem:[%s2 + $0x30] sm:$0xf]
        %v1060 = vld [vmem:[%s2 + $0x34] sm:$0xf]
        %v1061 = vld [vmem:[%s2 + $0x38] sm:$0xf]
        %v1062 = vld [vmem:[%s2 + $0x3c] sm:$0xf]
        %v1063 = vld [vmem:[%s2 + $0x40] sm:$0xf]
        %v1064 = vld [vmem:[%s2 + $0x44] sm:$0xf]
        %v1065 = vld [vmem:[%s2 + $0x48] sm:$0xf]
        %v1066 = vld [vmem:[%s2 + $0x4c] sm:$0xf]
        %v1067 = vld [vmem:[%s2 + $0x50] sm:$0xf]
        %v1068 = vld [vmem:[%s2 + $0x54] sm:$0xf]
        %v1069 = vld [vmem:[%s2 + $0x58] sm:$0xf]
        %v1070 = vld [vmem:[%s2 + $0x5c] sm:$0xf]
        %v1071 = vld [vmem:[%s1] sm:$0xff]
        %v1072 = vld [vmem:[%s1 + $0x8] sm:$0x3]
        %v1097 = vunpack.c.l.b16 %v1047
        %v1098 = vunpack.c.l.b16 %v1048
        %v1099 = vunpack.c.l.b16 %v1049
        %v1100 = vunpack.c.l.b16 %v1050
        %v1101 = vunpack.c.l.b16 %v1051
        %v1102 = vunpack.c.l.b16 %v1052
        %v1103 = vunpack.c.l.b16 %v1053
        %v1104 = vunpack.c.l.b16 %v1054
        %v1105 = vunpack.c.l.b16 %v1055
        %v1106 = vunpack.c.l.b16 %v1056
        %v1107 = vunpack.c.l.b16 %v1057
        %v1108 = vunpack.c.l.b16 %v1058
        %v1109 = vunpack.c.l.b16 %v1059
        %v1110 = vunpack.c.l.b16 %v1060
        %v1111 = vunpack.c.l.b16 %v1061
        %v1112 = vunpack.c.l.b16 %v1062
        %v1113 = vunpack.c.l.b16 %v1063
        %v1114 = vunpack.c.l.b16 %v1064
        %v1115 = vunpack.c.l.b16 %v1065
        %v1116 = vunpack.c.l.b16 %v1066
        %v1117 = vunpack.c.l.b16 %v1067
        %v1118 = vunpack.c.l.b16 %v1068
        %v1119 = vunpack.c.l.b16 %v1069
        %v1120 = vunpack.c.l.b16 %v1070
        %v1121 = vpack.c.b16 %v1098, %v1097
        %v1122 = vpack.c.b16 %v1100, %v1099
        %v1123 = vpack.c.b16 %v1102, %v1101
        %v1124 = vpack.c.b16 %v1104, %v1103
        %v1125 = vpack.c.b16 %v1106, %v1105
        %v1126 = vpack.c.b16 %v1108, %v1107
        %v1127 = vpack.c.b16 %v1110, %v1109
        %v1128 = vpack.c.b16 %v1112, %v1111
        %v1129 = vpack.c.b16 %v1114, %v1113
        %v1130 = vpack.c.b16 %v1116, %v1115
        %v1131 = vpack.c.b16 %v1118, %v1117
        %v1132 = vpack.c.b16 %v1120, %v1119
        %vm1145 = vcmask 523264
        %v1147 = vsel %vm1145, %v1046, 0
        %1149 = vmatprep.subr.bf16.mxu0 0
        %1150 = vmatpush1.bf16.msra.mxu0 %v1121
        %1151 = vmatprep.subr.bf16.mxu0 0
        %1152 = vmatpush1.bf16.msra.mxu0 %v1122
        %1153 = vmatprep.subr.bf16.mxu0 0
        %1154 = vmatpush1.bf16.msra.mxu0 %v1123
        %1155 = vmatprep.subr.bf16.mxu0 0
        %1156 = vmatpush1.bf16.msra.mxu0 %v1124
        %1157 = vmatprep.subr.bf16.mxu0 0
        %1158 = vmatpush1.bf16.msra.mxu0 %v1125
        %1159 = vmatprep.subr.bf16.mxu0 0
        %1160 = vmatpush1.bf16.msra.mxu0 %v1126
        %1161 = vmatprep.subr.bf16.mxu0 0
        %1162 = vmatpush1.bf16.msra.mxu0 %v1127
        %1163 = vmatprep.subr.bf16.mxu0 0
        %1164 = vmatpush1.bf16.msra.mxu0 %v1128
        %1165 = vmatprep.subr.bf16.mxu0 0
        %1166 = vmatpush1.bf16.msra.mxu0 %v1129
        %1167 = vmatprep.subr.bf16.mxu0 0
        %1168 = vmatpush1.bf16.msra.mxu0 %v1130
        %1169 = vmatprep.subr.bf16.mxu0 0
        %1170 = vmatpush1.bf16.msra.mxu0 %v1131
        %1171 = vmatprep.subr.bf16.mxu0 0
        %1172 = vmatpush1.bf16.msra.mxu0 %v1132
        %1173 = vmatprep.subr.bf16.mxu0 0
        %1174 = vmatpush1.bf16.msra.mxu0 0
        %1175 = vmatprep.subr.bf16.mxu0 0
        %1176 = vmatpush1.bf16.msra.mxu0 0
        %1177 = vmatprep.subr.bf16.mxu0 0
        %1178 = vmatpush1.bf16.msra.mxu0 0
        %1179 = vmatprep.subr.bf16.mxu0 0
        %1180 = vmatpush1.bf16.msra.mxu0 0
        %1181 = vmatprep.mubr.bf16.mxu0 %v1147
        %1182 = vmatmul.mubr.bf16.gmra.mrb[0].mxu0 %v1045
        %v1183 = vpop.f32.mrb[0].mxu0
        %v1184 = vadd.f32 %v1071, %v1183
        %v1185 = vpop.f32.mrb[0].mxu0
        %v1186 = vpop.f32.mrb[0].mxu0
        %v1187 = vadd.f32 %v1072, %v1186
        %v1188 = vpop.f32.mrb[0].mxu0
        %1189 = vdwg.mxu0
        %v1190 = vld [vmem:[%s3] sm:$0x1]
        %v1191 = vld [vmem:[%s3 + $0x1] sm:$0x1]
        %vm1192 = vcmask 261120
        %v1193 = vsel %vm1192, %v1184, 0.0
        %1194 = vadd.xlane.f32.xlu0 %v1193
        %v1195 = vpop.xlane.xlu0 %1194
        %vm1196 = vcmask 254976
        %v1197 = vsel %vm1196, %v1187, 0.0
        %1198 = vadd.xlane.f32.xlu0 %v1197
        %v1199 = vpop.xlane.xlu0 %1198
        %v1200 = vrcp.pop 32.0
        %v1201 = vmul.f32 %v1195, %v1200
        %v1202 = vmul.f32 %v1199, %v1200
        %v1203 = vsub.f32 %v1184, %v1201
        %v1204 = vsub.f32 %v1187, %v1202
        %v1205 = vmul.f32 %v1203, %v1203
        %v1206 = vmul.f32 %v1204, %v1204
        %v1207 = vsel %vm1192, %v1205, 0.0
        %1208 = vadd.xlane.f32.xlu0 %v1207
        %v1209 = vpop.xlane.xlu0 %1208
        %v1210 = vsel %vm1196, %v1206, 0.0
        %1211 = vadd.xlane.f32.xlu0 %v1210
        %v1212 = vpop.xlane.xlu0 %1211
        %v1213 = vmul.f32 %v1209, %v1200
        %v1214 = vmul.f32 %v1212, %v1200
        %v1215 = vadd.f32 %v1213, 1e-05
        %v1216 = vadd.f32 %v1214, 1e-05
        %v1217 = vrsqrt.pop %v1215
        %v1218 = vrsqrt.pop %v1216
        %v1219 = vmul.f32 %v1203, %v1217
        %v1220 = vmul.f32 %v1204, %v1218
        %v1221 = vlaneseq
        %v1222 = vshrl.u32 %v1221, 7
        %v1223 = vsub.s32 0, %v1222
        %v1224 = vrot.slane %v1190, %v1223
        %v1225 = vmul.f32 %v1219, %v1224
        %v1226 = vmul.f32 %v1220, %v1224
        %v1227 = vlaneseq
        %v1228 = vshrl.u32 %v1227, 7
        %v1229 = vsub.s32 0, %v1228
        %v1230 = vrot.slane %v1191, %v1229
        %v1231 = vadd.f32 %v1225, %v1230
        %v1232 = vadd.f32 %v1226, %v1230
        %1233 = vst.msk [vmem:[#allocation2] sm:$0xff] %vm1192, %v1231
        %1234 = vst.msk [vmem:[#allocation2 + $0x8] sm:$0x3] %vm1196, %v1232
        %1235 = vst.msk [vmem:[#allocation2 + $0xa] sm:$0xff] %vm1192, %v1231
        %1236 = vst.msk [vmem:[#allocation2 + $0x12] sm:$0x3] %vm1196, %v1232
      $region124: #{daclip_forward.2} parent=119 // pred_fallthru
        _
      %v1237 = vld [vmem:[%s4] sm:$0xff]
      %v1238 = vld [vmem:[%s4 + $0x8] sm:$0xff]
      %v1239 = vld [vmem:[%s4 + $0x10] sm:$0xf]
      %v1240 = vld [vmem:[%s967] sm:$0xf]
      %v1241 = vld [vmem:[%s972] sm:$0xf]
      %v1242 = vld [vmem:[%s972 + $0x4] sm:$0xf]
      %v1243 = vld [vmem:[%s972 + $0x8] sm:$0xf]
      %v1244 = vld [vmem:[%s972 + $0xc] sm:$0xf]
      %v1245 = vld [vmem:[%s975] sm:$0x1]
      %v1246 = vld [vmem:[%s980] sm:$0xf]
      %v1247 = vld [vmem:[%s980 + $0x4] sm:$0xf]
      %v1248 = vld [vmem:[%s980 + $0x8] sm:$0xf]
      %v1249 = vld [vmem:[%s980 + $0xc] sm:$0xf]
      %v1250 = vld [vmem:[%s983] sm:$0x1]
      %v1251 = vld [vmem:[%s988] sm:$0xf]
      %v1252 = vld [vmem:[%s988 + $0x4] sm:$0xf]
      %v1253 = vld [vmem:[%s988 + $0x8] sm:$0xf]
      %v1254 = vld [vmem:[%s988 + $0xc] sm:$0xf]
      %v1255 = vld [vmem:[%s991] sm:$0x1]
      %v1256 = vld [vmem:[%s996] sm:$0xf]
      %v1257 = vld [vmem:[%s996 + $0x4] sm:$0xf]
      %v1258 = vld [vmem:[%s996 + $0x8] sm:$0xf]
      %v1259 = vld [vmem:[%s996 + $0xc] sm:$0xf]
      %v1260 = vld [vmem:[%s996 + $0x10] sm:$0xf]
      %v1261 = vld [vmem:[%s996 + $0x14] sm:$0xf]
      %v1262 = vld [vmem:[%s996 + $0x18] sm:$0xf]
      %v1263 = vld [vmem:[%s996 + $0x1c] sm:$0xf]
      %v1264 = vld [vmem:[%s996 + $0x20] sm:$0xf]
      %v1265 = vld [vmem:[%s996 + $0x24] sm:$0xf]
      %v1266 = vld [vmem:[%s996 + $0x28] sm:$0xf]
      %v1267 = vld [vmem:[%s996 + $0x2c] sm:$0xf]
      %v1268 = vld [vmem:[%s996 + $0x30] sm:$0xf]
      %v1269 = vld [vmem:[%s996 + $0x34] sm:$0xf]
      %v1270 = vld [vmem:[%s996 + $0x38] sm:$0xf]
      %v1271 = vld [vmem:[%s996 + $0x3c] sm:$0xf]
      %v1272 = vld [vmem:[%s999] sm:$0x1]
      %v1273 = vld [vmem:[%s1003] sm:$0xf]
      %v1274 = vld [vmem:[%s1008] sm:$0xf]
      %v1275 = vld [vmem:[%s1008 + $0x4] sm:$0xf]
      %v1276 = vld [vmem:[%s1008 + $0x8] sm:$0xf]
      %v1277 = vld [vmem:[%s1008 + $0xc] sm:$0xf]
      %v1278 = vld [vmem:[%s1011] sm:$0x1]
      %v1279 = vld [vmem:[%s1016] sm:$0xf]
      %v1280 = vld [vmem:[%s1016 + $0x4] sm:$0xf]
      %v1281 = vld [vmem:[%s1016 + $0x8] sm:$0xf]
      %v1282 = vld [vmem:[%s1016 + $0xc] sm:$0xf]
      %v1283 = vld [vmem:[%s1019] sm:$0x1]
      %v1284 = vld [vmem:[%s1024] sm:$0xf]
      %v1285 = vld [vmem:[%s1024 + $0x4] sm:$0xf]
      %v1286 = vld [vmem:[%s1024 + $0x8] sm:$0xf]
      %v1287 = vld [vmem:[%s1024 + $0xc] sm:$0xf]
      %v1288 = vld [vmem:[%s1027] sm:$0x1]
      %v1289 = vld [vmem:[%s1032] sm:$0xf]
      %v1290 = vld [vmem:[%s1032 + $0x4] sm:$0xf]
      %v1291 = vld [vmem:[%s1032 + $0x8] sm:$0xf]
      %v1292 = vld [vmem:[%s1032 + $0xc] sm:$0xf]
      %v1293 = vld [vmem:[%s1032 + $0x10] sm:$0xf]
      %v1294 = vld [vmem:[%s1032 + $0x14] sm:$0xf]
      %v1295 = vld [vmem:[%s1032 + $0x18] sm:$0xf]
      %v1296 = vld [vmem:[%s1032 + $0x1c] sm:$0xf]
      %v1297 = vld [vmem:[%s1032 + $0x20] sm:$0xf]
      %v1298 = vld [vmem:[%s1032 + $0x24] sm:$0xf]
      %v1299 = vld [vmem:[%s1032 + $0x28] sm:$0xf]
      %v1300 = vld [vmem:[%s1032 + $0x2c] sm:$0xf]
      %v1301 = vld [vmem:[%s1032 + $0x30] sm:$0xf]
      %v1302 = vld [vmem:[%s1032 + $0x34] sm:$0xf]
      %v1303 = vld [vmem:[%s1032 + $0x38] sm:$0xf]
      %v1304 = vld [vmem:[%s1032 + $0x3c] sm:$0xf]
      %v1305 = vld [vmem:[%s1035] sm:$0x1]
      %v1306 = vld [vmem:[#allocation2] sm:$0xff]
      %v1307 = vld [vmem:[#allocation2 + $0x8] sm:$0xff]
      %v1308 = vld [vmem:[#allocation2 + $0x10] sm:$0xf]
      %vm1309 = vcmask 261120
      %v1310 = vsel %vm1309, %v1306, 0.0
      %1311 = vadd.xlane.f32.xlu0 %v1310
      %v1312 = vpop.xlane.xlu0 %1311
      %v1313 = vsel %vm1309, %v1307, 0.0
      %1314 = vadd.xlane.f32.xlu0 %v1313
      %v1315 = vpop.xlane.xlu0 %1314
      %vm1316 = vcmask 257024
      %v1317 = vsel %vm1316, %v1308, 0.0
      %1318 = vadd.xlane.f32.xlu0 %v1317
      %v1319 = vpop.xlane.xlu0 %1318
      %v1320 = vrcp.pop 32.0
      %v1321 = vmul.f32 %v1312, %v1320
      %v1322 = vmul.f32 %v1315, %v1320
      %v1323 = vmul.f32 %v1319, %v1320
      %v1324 = vsub.f32 %v1306, %v1321
      %v1325 = vsub.f32 %v1307, %v1322
      %v1326 = vsub.f32 %v1308, %v1323
      %v1327 = vmul.f32 %v1324, %v1324
      %v1328 = vmul.f32 %v1325, %v1325
      %v1329 = vmul.f32 %v1326, %v1326
      %v1330 = vsel %vm1309, %v1327, 0.0
      %1331 = vadd.xlane.f32.xlu0 %v1330
      %v1332 = vpop.xlane.xlu0 %1331
      %v1333 = vsel %vm1309, %v1328, 0.0
      %1334 = vadd.xlane.f32.xlu0 %v1333
      %v1335 = vpop.xlane.xlu0 %1334
      %v1336 = vsel %vm1316, %v1329, 0.0
      %1337 = vadd.xlane.f32.xlu0 %v1336
      %v1338 = vpop.xlane.xlu0 %1337
      %v1339 = vmul.f32 %v1332, %v1320
      %v1340 = vmul.f32 %v1335, %v1320
      %v1341 = vmul.f32 %v1338, %v1320
      %v1342 = vadd.f32 %v1339, 1e-05
      %v1343 = vadd.f32 %v1340, 1e-05
      %v1344 = vadd.f32 %v1341, 1e-05
      %v1345 = vrsqrt.pop %v1342
      %v1346 = vrsqrt.pop %v1343
      %v1347 = vrsqrt.pop %v1344
      %v1348 = vmul.f32 %v1324, %v1345
      %v1349 = vmul.f32 %v1325, %v1346
      %v1350 = vmul.f32 %v1326, %v1347
      %v1351 = vlaneseq
      %v1352 = vshrl.u32 %v1351, 7
      %v1353 = vsub.s32 0, %v1352
      %v1354 = vrot.slane %v1240, %v1353
      %v1355 = vmul.f32 %v1348, %v1354
      %v1356 = vmul.f32 %v1349, %v1354
      %v1357 = vmul.f32 %v1350, %v1354
      %v1358 = vlaneseq
      %v1359 = vshrl.u32 %v1358, 7
      %v1360 = vsub.s32 1, %v1359
      %v1361 = vrot.slane %v1240, %v1360
      %v1362 = vadd.f32 %v1355, %v1361
      %v1363 = vadd.f32 %v1356, %v1361
      %v1364 = vadd.f32 %v1357, %v1361
      %v1365 = vpack.c.bf16 %v1363, %v1362
      %v1366 = vpack.c.bf16 %v1364, %v1364
      %v1368 = vlaneseq
      %v1369 = vshrl.u32 %v1368, 7
      %v1370 = vsub.s32 0, %v1369
      %v1371 = vrot.slane %v1245, %v1370
      %v1377 = vunpack.c.l.b16 %v1241
      %v1378 = vunpack.c.l.b16 %v1242
      %v1379 = vunpack.c.l.b16 %v1243
      %v1380 = vunpack.c.l.b16 %v1244
      %v1381 = vpack.c.b16 %v1378, %v1377
      %v1382 = vpack.c.b16 %v1380, %v1379
      %v1386 = vsel %vm1309, %v1365, 0
      %v1389 = vsel %vm1309, %v1366, 0
      %1391 = vmatprep.subr.bf16.mxu0 0
      %1392 = vmatpush1.bf16.msra.mxu0 %v1381
      %1393 = vmatprep.subr.bf16.mxu0 0
      %1394 = vmatpush1.bf16.msra.mxu0 %v1382
      %1395 = vmatprep.subr.bf16.mxu0 0
      %1396 = vmatpush1.bf16.msra.mxu0 0
      %1397 = vmatprep.subr.bf16.mxu0 0
      %1398 = vmatpush1.bf16.msra.mxu0 0
      %1399 = vmatprep.subr.bf16.mxu0 0
      %1400 = vmatpush1.bf16.msra.mxu0 0
      %1401 = vmatprep.subr.bf16.mxu0 0
      %1402 = vmatpush1.bf16.msra.mxu0 0
      %1403 = vmatprep.subr.bf16.mxu0 0
      %1404 = vmatpush1.bf16.msra.mxu0 0
      %1405 = vmatprep.subr.bf16.mxu0 0
      %1406 = vmatpush1.bf16.msra.mxu0 0
      %1407 = vmatprep.subr.bf16.mxu0 0
      %1408 = vmatpush1.bf16.msra.mxu0 0
      %1409 = vmatprep.subr.bf16.mxu0 0
      %1410 = vmatpush1.bf16.msra.mxu0 0
      %1411 = vmatprep.subr.bf16.mxu0 0
      %1412 = vmatpush1.bf16.msra.mxu0 0
      %1413 = vmatprep.subr.bf16.mxu0 0
      %1414 = vmatpush1.bf16.msra.mxu0 0
      %1415 = vmatprep.subr.bf16.mxu0 0
      %1416 = vmatpush1.bf16.msra.mxu0 0
      %1417 = vmatprep.subr.bf16.mxu0 0
      %1418 = vmatpush1.bf16.msra.mxu0 0
      %1419 = vmatprep.subr.bf16.mxu0 0
      %1420 = vmatpush1.bf16.msra.mxu0 0
      %1421 = vmatprep.subr.bf16.mxu0 0
      %1422 = vmatpush1.bf16.msra.mxu0 0
      %1423 = vmatprep.mubr.bf16.mxu0 0
      %1424 = vmatmul.mubr.bf16.gmra.mrb[0].mxu0 %v1386
      %v1425 = vpop.f32.mrb[0].mxu0
      %v1426 = vadd.f32 %v1371, %v1425
      %v1427 = vpop.f32.mrb[0].mxu0
      %v1428 = vpop.f32.mrb[0].mxu0
      %v1429 = vadd.f32 %v1371, %v1428
      %v1430 = vpop.f32.mrb[0].mxu0
      %1431 = vmatprep.mubr.bf16.mxu0 0
      %1432 = vmatmul.mubr.bf16.gmra.mrb[0].mxu0 %v1389
      %v1433 = vpop.f32.mrb[0].mxu0
      %v1434 = vadd.f32 %v1371, %v1433
      %v1435 = vpop.f32.mrb[0].mxu0
      %v1436 = vpop.f32.mrb[0].mxu0
      %v1437 = vpop.f32.mrb[0].mxu0
      %1438 = vdwg.mxu0
      %1442 = vrot.lane.b32.xlu0 %v1426, 96
      %v1443 = vpop.permute.xlu0 %1442
      %1444 = vrot.lane.b32.xlu0 %v1429, 96
      %v1445 = vpop.permute.xlu0 %1444
      %1446 = vrot.lane.b32.xlu0 %v1434, 96
      %v1447 = vpop.permute.xlu0 %1446
      %vm1448 = vcmask 64512
      %v1449 = vsel %vm1448, %v1426, 0
      %v1451 = vsel %vm1448, %v1429, 0
      %v1453 = vsel %vm1448, %v1434, 0
      %v1455 = vsel %vm1448, %v1443, 0
      %v1457 = vsel %vm1448, %v1445, 0
      %v1459 = vsel %vm1448, %v1447, 0
      %1461 = vmatprep.subr.mxu0 0.0
      %1462 = vmatpush1.xpose.msra.mxu0 %v1455
      %1463 = vmatprep.subr.mxu0 0.0
      %1464 = vmatpush1.xpose.msra.mxu0 %v1457
      %1465 = vmatprep.subr.mxu0 0.0
      %1466 = vmatpush1.xpose.msra.mxu0 %v1459
      %1467 = vmatprep.subr.mxu0 0.0
      %1468 = vmatpush1.xpose.msra.mxu0 0.0
      %1469 = vmatprep.subr.mxu0 0.0
      %1470 = vmatpush1.xpose.msra.mxu0 0.0
      %1471 = vmatprep.subr.mxu0 0.0
      %1472 = vmatpush1.xpose.msra.mxu0 0.0
      %1473 = vmatprep.subr.mxu0 0.0
      %1474 = vmatpush1.xpose.msra.mxu0 0.0
      %1475 = vmatprep.subr.mxu0 0.0
      %1476 = vmatpush1.xpose.msra.mxu0 0.0
      %1477 = vmatprep.subr.mxu0 0.0
      %1478 = vmatpush1.xpose.msra.mxu0 0.0
      %1479 = vmatprep.subr.mxu0 0.0
      %1480 = vmatpush1.xpose.msra.mxu0 0.0
      %1481 = vmatprep.subr.mxu0 0.0
      %1482 = vmatpush1.xpose.msra.mxu0 0.0
      %1483 = vmatprep.subr.mxu0 0.0
      %1484 = vmatpush1.xpose.msra.mxu0 0.0
      %1485 = vmatprep.subr.mxu0 0.0
      %1486 = vmatpush1.xpose.msra.mxu0 0.0
      %1487 = vmatprep.subr.mxu0 0.0
      %1488 = vmatpush1.xpose.msra.mxu0 0.0
      %1489 = vmatprep.subr.mxu0 0.0
      %1490 = vmatpush1.xpose.msra.mxu0 0.0
      %1491 = vmatprep.subr.mxu0 0.0
      %1492 = vmatpush1.xpose.msra.mxu0 0.0
      %1493 = vmatprep.subr.mxu0 0.0
      %1494 = vmatpush1.xpose.msra.mxu0 0.0
      %1495 = vmatprep.subr.mxu0 0.0
      %1496 = vmatpush1.xpose.msra.mxu0 0.0
      %1497 = vmatprep.subr.mxu0 0.0
      %1498 = vmatpush1.xpose.msra.mxu0 0.0
      %1499 = vmatprep.subr.mxu0 0.0
      %1500 = vmatpush1.xpose.msra.mxu0 0.0
      %1501 = vmatprep.subr.mxu0 0.0
      %1502 = vmatpush1.xpose.msra.mxu0 0.0
      %1503 = vmatprep.subr.mxu0 0.0
      %1504 = vmatpush1.xpose.msra.mxu0 0.0
      %1505 = vmatprep.subr.mxu0 0.0
      %1506 = vmatpush1.xpose.msra.mxu0 0.0
      %1507 = vmatprep.subr.mxu0 0.0
      %1508 = vmatpush1.xpose.msra.mxu0 0.0
      %1509 = vmatprep.subr.mxu0 0.0
      %1510 = vmatpush1.xpose.msra.mxu0 0.0
      %1511 = vmatprep.subr.mxu0 0.0
      %1512 = vmatpush1.xpose.msra.mxu0 0.0
      %1513 = vmatprep.subr.mxu0 0.0
      %1514 = vmatpush1.xpose.msra.mxu0 0.0
      %1515 = vmatprep.subr.mxu0 0.0
      %1516 = vmatpush1.xpose.msra.mxu0 0.0
      %1517 = vmatprep.subr.mxu0 0.0
      %1518 = vmatpush1.xpose.msra.mxu0 0.0
      %1519 = vmatprep.subr.mxu0 0.0
      %1520 = vmatpush1.xpose.msra.mxu0 0.0
      %1521 = vmatprep.subr.mxu0 0.0
      %1522 = vmatpush1.xpose.msra.mxu0 0.0
      %1523 = vmatprep.subr.mxu0 0.0
      %1524 = vmatpush1.xpose.msra.mxu0 0.0
      %1525 = vmatprep.mubr.f32.mxu0 0.0
      %1526 = vmatmul.mubr.f32.gmra.mrb[0].mxu0 %v1449
      %v1527 = vpop.f32.mrb[0].mxu0
      %v1528 = vadd.f32 0.0, %v1527
      %v1529 = vpop.f32.mrb[0].mxu0
      %1530 = vmatprep.mubr.f32.mxu0 0.0
      %1531 = vmatmul.mubr.f32.gmra.mrb[0].mxu0 %v1451
      %v1532 = vpop.f32.mrb[0].mxu0
      %v1533 = vadd.f32 0.0, %v1532
      %v1534 = vpop.f32.mrb[0].mxu0
      %1535 = vmatprep.mubr.f32.mxu0 0.0
      %1536 = vmatmul.mubr.f32.gmra.mrb[0].mxu0 %v1453
      %v1537 = vpop.f32.mrb[0].mxu0
      %v1538 = vadd.f32 0.0, %v1537
      %v1539 = vpop.f32.mrb[0].mxu0
      %1540 = vdwg.mxu0
      %v1541 = vmul.f32 %v1528, 0.35355338
      %v1542 = vmul.f32 %v1533, 0.35355338
      %v1543 = vmul.f32 %v1538, 0.35355338
      %v1544 = vadd.f32 %v1541, %v1237
      %v1545 = vadd.f32 %v1542, %v1238
      %v1546 = vadd.f32 %v1543, %v1239
      %vm1547 = vcmask 162816
      %v1548 = vsel %vm1547, %v1544, -inf
      %1549 = vmax.xlane.f32.xlu0 %v1548
      %v1550 = vpop.xlane.xlu0 %1549
      %v1551 = vsel %vm1547, %v1545, -inf
      %1552 = vmax.xlane.f32.xlu0 %v1551
      %v1553 = vpop.xlane.xlu0 %1552
      %vm1554 = vcmask 158720
      %v1555 = vsel %vm1554, %v1546, -inf
      %1556 = vmax.xlane.f32.xlu0 %v1555
      %v1557 = vpop.xlane.xlu0 %1556
      %v1558 = vsub.f32 %v1544, %v1550
      %v1559 = vsub.f32 %v1545, %v1553
      %v1560 = vsub.f32 %v1546, %v1557
      %v1561 = vmul.f32 %v1558, 1.442695
      %v1562 = vpow.pop %v1561
      %v1563 = vmul.f32 %v1559, 1.442695
      %v1564 = vpow.pop %v1563
      %v1565 = vmul.f32 %v1560, 1.442695
      %v1566 = vpow.pop %v1565
      %v1567 = vsel %vm1547, %v1562, 0.0
      %1568 = vadd.xlane.f32.xlu0 %v1567
      %v1569 = vpop.xlane.xlu0 %1568
      %v1570 = vsel %vm1547, %v1564, 0.0
      %1571 = vadd.xlane.f32.xlu0 %v1570
      %v1572 = vpop.xlane.xlu0 %1571
      %v1573 = vsel %vm1554, %v1566, 0.0
      %1574 = vadd.xlane.f32.xlu0 %v1573
      %v1575 = vpop.xlane.xlu0 %1574
      %v1576 = vrcp.pop %v1569
      %v1577 = vrcp.pop %v1572
      %v1578 = vrcp.pop %v1575
      %v1579 = vmul.f32 %v1562, %v1576
      %v1580 = vmul.f32 %v1564, %v1577
      %v1581 = vmul.f32 %v1566, %v1578
      %1582 = vrot.lane.b32.xlu0 %v1426, 64
      %v1583 = vpop.permute.xlu0 %1582
      %1584 = vrot.lane.b32.xlu0 %v1429, 64
      %v1585 = vpop.permute.xlu0 %1584
      %1586 = vrot.lane.b32.xlu0 %v1434, 64
      %v1587 = vpop.permute.xlu0 %1586
      %v1591 = vsel %vm1547, %v1579, 0
      %v1594 = vsel %vm1547, %v1580, 0
      %v1597 = vsel %vm1547, %v1581, 0
      %vm1599 = vcmask 1043456
      %v1600 = vsel %vm1599, %v1587, 0
      %1602 = vmatprep.subr.mxu0 0.0
      %1603 = vmatpush1.msra.mxu0 %v1583
      %1604 = vmatprep.subr.mxu0 0.0
      %1605 = vmatpush1.msra.mxu0 %v1585
      %1606 = vmatprep.subr.mxu0 0.0
      %1607 = vmatpush1.msra.mxu0 %v1600
      %1608 = vmatprep.subr.mxu0 0.0
      %1609 = vmatpush1.msra.mxu0 0.0
      %1610 = vmatprep.subr.mxu0 0.0
      %1611 = vmatpush1.msra.mxu0 0.0
      %1612 = vmatprep.subr.mxu0 0.0
      %1613 = vmatpush1.msra.mxu0 0.0
      %1614 = vmatprep.subr.mxu0 0.0
      %1615 = vmatpush1.msra.mxu0 0.0
      %1616 = vmatprep.subr.mxu0 0.0
      %1617 = vmatpush1.msra.mxu0 0.0
      %1618 = vmatprep.subr.mxu0 0.0
      %1619 = vmatpush1.msra.mxu0 0.0
      %1620 = vmatprep.subr.mxu0 0.0
      %1621 = vmatpush1.msra.mxu0 0.0
      %1622 = vmatprep.subr.mxu0 0.0
      %1623 = vmatpush1.msra.mxu0 0.0
      %1624 = vmatprep.subr.mxu0 0.0
      %1625 = vmatpush1.msra.mxu0 0.0
      %1626 = vmatprep.subr.mxu0 0.0
      %1627 = vmatpush1.msra.mxu0 0.0
      %1628 = vmatprep.subr.mxu0 0.0
      %1629 = vmatpush1.msra.mxu0 0.0
      %1630 = vmatprep.subr.mxu0 0.0
      %1631 = vmatpush1.msra.mxu0 0.0
      %1632 = vmatprep.subr.mxu0 0.0
      %1633 = vmatpush1.msra.mxu0 0.0
      %1634 = vmatprep.subr.mxu0 0.0
      %1635 = vmatpush1.msra.mxu0 0.0
      %1636 = vmatprep.subr.mxu0 0.0
      %1637 = vmatpush1.msra.mxu0 0.0
      %1638 = vmatprep.subr.mxu0 0.0
      %1639 = vmatpush1.msra.mxu0 0.0
      %1640 = vmatprep.subr.mxu0 0.0
      %1641 = vmatpush1.msra.mxu0 0.0
      %1642 = vmatprep.subr.mxu0 0.0
      %1643 = vmatpush1.msra.mxu0 0.0
      %1644 = vmatprep.subr.mxu0 0.0
      %1645 = vmatpush1.msra.mxu0 0.0
      %1646 = vmatprep.subr.mxu0 0.0
      %1647 = vmatpush1.msra.mxu0 0.0
      %1648 = vmatprep.subr.mxu0 0.0
      %1649 = vmatpush1.msra.mxu0 0.0
      %1650 = vmatprep.subr.mxu0 0.0
      %1651 = vmatpush1.msra.mxu0 0.0
      %1652 = vmatprep.subr.mxu0 0.0
      %1653 = vmatpush1.msra.mxu0 0.0
      %1654 = vmatprep.subr.mxu0 0.0
      %1655 = vmatpush1.msra.mxu0 0.0
      %1656 = vmatprep.subr.mxu0 0.0
      %1657 = vmatpush1.msra.mxu0 0.0
      %1658 = vmatprep.subr.mxu0 0.0
      %1659 = vmatpush1.msra.mxu0 0.0
      %1660 = vmatprep.subr.mxu0 0.0
      %1661 = vmatpush1.msra.mxu0 0.0
      %1662 = vmatprep.subr.mxu0 0.0
      %1663 = vmatpush1.msra.mxu0 0.0
      %1664 = vmatprep.subr.mxu0 0.0
      %1665 = vmatpush1.msra.mxu0 0.0
      %1666 = vmatprep.mubr.f32.mxu0 0.0
      %1667 = vmatmul.mubr.f32.gmra.mrb[0].mxu0 %v1591
      %v1668 = vpop.f32.mrb[0].mxu0
      %v1669 = vadd.f32 0.0, %v1668
      %v1670 = vpop.f32.mrb[0].mxu0
      %1671 = vmatprep.mubr.f32.mxu0 0.0
      %1672 = vmatmul.mubr.f32.gmra.mrb[0].mxu0 %v1594
      %v1673 = vpop.f32.mrb[0].mxu0
      %v1674 = vadd.f32 0.0, %v1673
      %v1675 = vpop.f32.mrb[0].mxu0
      %1676 = vmatprep.mubr.f32.mxu0 0.0
      %1677 = vmatmul.mubr.f32.gmra.mrb[0].mxu0 %v1597
      %v1678 = vpop.f32.mrb[0].mxu0
      %v1679 = vadd.f32 0.0, %v1678
      %v1680 = vpop.f32.mrb[0].mxu0
      %1681 = vdwg.mxu0
      %1682 = vst.msk [vmem:[#allocation3] sm:$0xff] %vm1448, %v1669
      %1683 = vst.msk [vmem:[#allocation3 + $0x8] sm:$0xff] %vm1448, %v1674
      %vm1684 = vcmask 60416
      %1685 = vst.msk [vmem:[#allocation3 + $0x10] sm:$0xf] %vm1684, %v1679
      %1686 = vrot.lane.b32.xlu0 %v1426, 120
      %v1687 = vpop.permute.xlu0 %1686
      %1688 = vrot.lane.b32.xlu0 %v1429, 120
      %v1689 = vpop.permute.xlu0 %1688
      %1690 = vrot.lane.b32.xlu0 %v1434, 120
      %v1691 = vpop.permute.xlu0 %1690
      %1692 = vrot.lane.b32.xlu0 %v1426, 88
      %v1693 = vpop.permute.xlu0 %1692
      %1694 = vrot.lane.b32.xlu0 %v1429, 88
      %v1695 = vpop.permute.xlu0 %1694
      %1696 = vrot.lane.b32.xlu0 %v1434, 88
      %v1697 = vpop.permute.xlu0 %1696
      %v1698 = vsel %vm1448, %v1687, 0
      %v1700 = vsel %vm1448, %v1689, 0
      %v1702 = vsel %vm1448, %v1691, 0
      %v1704 = vsel %vm1448, %v1693, 0
      %v1706 = vsel %vm1448, %v1695, 0
      %v1708 = vsel %vm1448, %v1697, 0
      %1710 = vmatprep.subr.mxu0 0.0
      %1711 = vmatpush1.xpose.msra.mxu0 %v1704
      %1712 = vmatprep.subr.mxu0 0.0
      %1713 = vmatpush1.xpose.msra.mxu0 %v1706
      %1714 = vmatprep.subr.mxu0 0.0
      %1715 = vmatpush1.xpose.msra.mxu0 %v1708
      %1716 = vmatprep.subr.mxu0 0.0
      %1717 = vmatpush1.xpose.msra.mxu0 0.0
      %1718 = vmatprep.subr.mxu0 0.0
      %1719 = vmatpush1.xpose.msra.mxu0 0.0
      %1720 = vmatprep.subr.mxu0 0.0
      %1721 = vmatpush1.xpose.msra.mxu0 0.0
      %1722 = vmatprep.subr.mxu0 0.0
      %1723 = vmatpush1.xpose.msra.mxu0 0.0
      %1724 = vmatprep.subr.mxu0 0.0
      %1725 = vmatpush1.xpose.msra.mxu0 0.0
      %1726 = vmatprep.subr.mxu0 0.0
      %1727 = vmatpush1.xpose.msra.mxu0 0.0
      %1728 = vmatprep.subr.mxu0 0.0
      %1729 = vmatpush1.xpose.msra.mxu0 0.0
      %1730 = vmatprep.subr.mxu0 0.0
      %1731 = vmatpush1.xpose.msra.mxu0 0.0
      %1732 = vmatprep.subr.mxu0 0.0
      %1733 = vmatpush1.xpose.msra.mxu0 0.0
      %1734 = vmatprep.subr.mxu0 0.0
      %1735 = vmatpush1.xpose.msra.mxu0 0.0
      %1736 = vmatprep.subr.mxu0 0.0
      %1737 = vmatpush1.xpose.msra.mxu0 0.0
      %1738 = vmatprep.subr.mxu0 0.0
      %1739 = vmatpush1.xpose.msra.mxu0 0.0
      %1740 = vmatprep.subr.mxu0 0.0
      %1741 = vmatpush1.xpose.msra.mxu0 0.0
      %1742 = vmatprep.subr.mxu0 0.0
      %1743 = vmatpush1.xpose.msra.mxu0 0.0
      %1744 = vmatprep.subr.mxu0 0.0
      %1745 = vmatpush1.xpose.msra.mxu0 0.0
      %1746 = vmatprep.subr.mxu0 0.0
      %1747 = vmatpush1.xpose.msra.mxu0 0.0
      %1748 = vmatprep.subr.mxu0 0.0
      %1749 = vmatpush1.xpose.msra.mxu0 0.0
      %1750 = vmatprep.subr.mxu0 0.0
      %1751 = vmatpush1.xpose.msra.mxu0 0.0
      %1752 = vmatprep.subr.mxu0 0.0
      %1753 = vmatpush1.xpose.msra.mxu0 0.0
      %1754 = vmatprep.subr.mxu0 0.0
      %1755 = vmatpush1.xpose.msra.mxu0 0.0
      %1756 = vmatprep.subr.mxu0 0.0
      %1757 = vmatpush1.xpose.msra.mxu0 0.0
      %1758 = vmatprep.subr.mxu0 0.0
      %1759 = vmatpush1.xpose.msra.mxu0 0.0
      %1760 = vmatprep.subr.mxu0 0.0
      %1761 = vmatpush1.xpose.msra.mxu0 0.0
      %1762 = vmatprep.subr.mxu0 0.0
      %1763 = vmatpush1.xpose.msra.mxu0 0.0
      %1764 = vmatprep.subr.mxu0 0.0
      %1765 = vmatpush1.xpose.msra.mxu0 0.0
      %1766 = vmatprep.subr.mxu0 0.0
      %1767 = vmatpush1.xpose.msra.mxu0 0.0
      %1768 = vmatprep.subr.mxu0 0.0
      %1769 = vmatpush1.xpose.msra.mxu0 0.0
      %1770 = vmatprep.subr.mxu0 0.0
      %1771 = vmatpush1.xpose.msra.mxu0 0.0
      %1772 = vmatprep.subr.mxu0 0.0
      %1773 = vmatpush1.xpose.msra.mxu0 0.0
      %1774 = vmatprep.mubr.f32.mxu0 0.0
      %1775 = vmatmul.mubr.f32.gmra.mrb[0].mxu0 %v1698
      %v1776 = vpop.f32.mrb[0].mxu0
      %v1777 = vadd.f32 0.0, %v1776
      %v1778 = vpop.f32.mrb[0].mxu0
      %1779 = vmatprep.mubr.f32.mxu0 0.0
      %1780 = vmatmul.mubr.f32.gmra.mrb[0].mxu0 %v1700
      %v1781 = vpop.f32.mrb[0].mxu0
      %v1782 = vadd.f32 0.0, %v1781
      %v1783 = vpop.f32.mrb[0].mxu0
      %1784 = vmatprep.mubr.f32.mxu0 0.0
      %1785 = vmatmul.mubr.f32.gmra.mrb[0].mxu0 %v1702
      %v1786 = vpop.f32.mrb[0].mxu0
      %v1787 = vadd.f32 0.0, %v1786
      %v1788 = vpop.f32.mrb[0].mxu0
      %1789 = vdwg.mxu0
      %v1790 = vmul.f32 %v1777, 0.35355338
      %v1791 = vmul.f32 %v1782, 0.35355338
      %v1792 = vmul.f32 %v1787, 0.35355338
      %v1793 = vadd.f32 %v1790, %v1237
      %v1794 = vadd.f32 %v1791, %v1238
      %v1795 = vadd.f32 %v1792, %v1239
      %v1796 = vsel %vm1547, %v1793, -inf
      %1797 = vmax.xlane.f32.xlu0 %v1796
      %v1798 = vpop.xlane.xlu0 %1797
      %v1799 = vsel %vm1547, %v1794, -inf
      %1800 = vmax.xlane.f32.xlu0 %v1799
      %v1801 = vpop.xlane.xlu0 %1800
      %v1802 = vsel %vm1554, %v1795, -inf
      %1803 = vmax.xlane.f32.xlu0 %v1802
      %v1804 = vpop.xlane.xlu0 %1803
      %v1805 = vsub.f32 %v1793, %v1798
      %v1806 = vsub.f32 %v1794, %v1801
      %v1807 = vsub.f32 %v1795, %v1804
      %v1808 = vmul.f32 %v1805, 1.442695
      %v1809 = vpow.pop %v1808
      %v1810 = vmul.f32 %v1806, 1.442695
      %v1811 = vpow.pop %v1810
      %v1812 = vmul.f32 %v1807, 1.442695
      %v1813 = vpow.pop %v1812
      %v1814 = vsel %vm1547, %v1809, 0.0
      %1815 = vadd.xlane.f32.xlu0 %v1814
      %v1816 = vpop.xlane.xlu0 %1815
      %v1817 = vsel %vm1547, %v1811, 0.0
      %1818 = vadd.xlane.f32.xlu0 %v1817
      %v1819 = vpop.xlane.xlu0 %1818
      %v1820 = vsel %vm1554, %v1813, 0.0
      %1821 = vadd.xlane.f32.xlu0 %v1820
      %v1822 = vpop.xlane.xlu0 %1821
      %v1823 = vrcp.pop %v1816
      %v1824 = vrcp.pop %v1819
      %v1825 = vrcp.pop %v1822
      %v1826 = vmul.f32 %v1809, %v1823
      %v1827 = vmul.f32 %v1811, %v1824
      %v1828 = vmul.f32 %v1813, %v1825
      %1829 = vrot.lane.b32.xlu0 %v1426, 56
      %v1830 = vpop.permute.xlu0 %1829
      %1831 = vrot.lane.b32.xlu0 %v1429, 56
      %v1832 = vpop.permute.xlu0 %1831
      %1833 = vrot.lane.b32.xlu0 %v1434, 56
      %v1834 = vpop.permute.xlu0 %1833
      %v1838 = vsel %vm1547, %v1826, 0
      %v1841 = vsel %vm1547, %v1827, 0
      %v1844 = vsel %vm1547, %v1828, 0
      %v1846 = vsel %vm1599, %v1834, 0
      %1848 = vmatprep.subr.mxu0 0.0
      %1849 = vmatpush1.msra.mxu0 %v1830
      %1850 = vmatprep.subr.mxu0 0.0
      %1851 = vmatpush1.msra.mxu0 %v1832
      %1852 = vmatprep.subr.mxu0 0.0
      %1853 = vmatpush1.msra.mxu0 %v1846
      %1854 = vmatprep.subr.mxu0 0.0
      %1855 = vmatpush1.msra.mxu0 0.0
      %1856 = vmatprep.subr.mxu0 0.0
      %1857 = vmatpush1.msra.mxu0 0.0
      %1858 = vmatprep.subr.mxu0 0.0
      %1859 = vmatpush1.msra.mxu0 0.0
      %1860 = vmatprep.subr.mxu0 0.0
      %1861 = vmatpush1.msra.mxu0 0.0
      %1862 = vmatprep.subr.mxu0 0.0
      %1863 = vmatpush1.msra.mxu0 0.0
      %1864 = vmatprep.subr.mxu0 0.0
      %1865 = vmatpush1.msra.mxu0 0.0
      %1866 = vmatprep.subr.mxu0 0.0
      %1867 = vmatpush1.msra.mxu0 0.0
      %1868 = vmatprep.subr.mxu0 0.0
      %1869 = vmatpush1.msra.mxu0 0.0
      %1870 = vmatprep.subr.mxu0 0.0
      %1871 = vmatpush1.msra.mxu0 0.0
      %1872 = vmatprep.subr.mxu0 0.0
      %1873 = vmatpush1.msra.mxu0 0.0
      %1874 = vmatprep.subr.mxu0 0.0
      %1875 = vmatpush1.msra.mxu0 0.0
      %1876 = vmatprep.subr.mxu0 0.0
      %1877 = vmatpush1.msra.mxu0 0.0
      %1878 = vmatprep.subr.mxu0 0.0
      %1879 = vmatpush1.msra.mxu0 0.0
      %1880 = vmatprep.subr.mxu0 0.0
      %1881 = vmatpush1.msra.mxu0 0.0
      %1882 = vmatprep.subr.mxu0 0.0
      %1883 = vmatpush1.msra.mxu0 0.0
      %1884 = vmatprep.subr.mxu0 0.0
      %1885 = vmatpush1.msra.mxu0 0.0
      %1886 = vmatprep.subr.mxu0 0.0
      %1887 = vmatpush1.msra.mxu0 0.0
      %1888 = vmatprep.subr.mxu0 0.0
      %1889 = vmatpush1.msra.mxu0 0.0
      %1890 = vmatprep.subr.mxu0 0.0
      %1891 = vmatpush1.msra.mxu0 0.0
      %1892 = vmatprep.subr.mxu0 0.0
      %1893 = vmatpush1.msra.mxu0 0.0
      %1894 = vmatprep.subr.mxu0 0.0
      %1895 = vmatpush1.msra.mxu0 0.0
      %1896 = vmatprep.subr.mxu0 0.0
      %1897 = vmatpush1.msra.mxu0 0.0
      %1898 = vmatprep.subr.mxu0 0.0
      %1899 = vmatpush1.msra.mxu0 0.0
      %1900 = vmatprep.subr.mxu0 0.0
      %1901 = vmatpush1.msra.mxu0 0.0
      %1902 = vmatprep.subr.mxu0 0.0
      %1903 = vmatpush1.msra.mxu0 0.0
      %1904 = vmatprep.subr.mxu0 0.0
      %1905 = vmatpush1.msra.mxu0 0.0
      %1906 = vmatprep.subr.mxu0 0.0
      %1907 = vmatpush1.msra.mxu0 0.0
      %1908 = vmatprep.subr.mxu0 0.0
      %1909 = vmatpush1.msra.mxu0 0.0
      %1910 = vmatprep.subr.mxu0 0.0
      %1911 = vmatpush1.msra.mxu0 0.0
      %1912 = vmatprep.mubr.f32.mxu0 0.0
      %1913 = vmatmul.mubr.f32.gmra.mrb[0].mxu0 %v1838
      %v1914 = vpop.f32.mrb[0].mxu0
      %v1915 = vadd.f32 0.0, %v1914
      %v1916 = vpop.f32.mrb[0].mxu0
      %1917 = vmatprep.mubr.f32.mxu0 0.0
      %1918 = vmatmul.mubr.f32.gmra.mrb[0].mxu0 %v1841
      %v1919 = vpop.f32.mrb[0].mxu0
      %v1920 = vadd.f32 0.0, %v1919
      %v1921 = vpop.f32.mrb[0].mxu0
      %1922 = vmatprep.mubr.f32.mxu0 0.0
      %1923 = vmatmul.mubr.f32.gmra.mrb[0].mxu0 %v1844
      %v1924 = vpop.f32.mrb[0].mxu0
      %v1925 = vadd.f32 0.0, %v1924
      %v1926 = vpop.f32.mrb[0].mxu0
      %1927 = vdwg.mxu0
      %1931 = vrot.lane.b32.xlu0 %v1915, 8
      %v1932 = vpop.permute.xlu0 %1931
      %1933 = vrot.lane.b32.xlu0 %v1920, 8
      %v1934 = vpop.permute.xlu0 %1933
      %1935 = vrot.lane.b32.xlu0 %v1925, 8
      %v1936 = vpop.permute.xlu0 %1935
      %vm1940 = vcmask 130112
      %1941 = vst.msk [vmem:[#allocation3] sm:$0xff] %vm1940, %v1932
      %1942 = vst.msk [vmem:[#allocation3 + $0x8] sm:$0xff] %vm1940, %v1934
      %vm1943 = vcmask 126016
      %1944 = vst.msk [vmem:[#allocation3 + $0x10] sm:$0xf] %vm1943, %v1936
      %1945 = vrot.lane.b32.xlu0 %v1426, 112
      %v1946 = vpop.permute.xlu0 %1945
      %1947 = vrot.lane.b32.xlu0 %v1429, 112
      %v1948 = vpop.permute.xlu0 %1947
      %1949 = vrot.lane.b32.xlu0 %v1434, 112
      %v1950 = vpop.permute.xlu0 %1949
      %1951 = vrot.lane.b32.xlu0 %v1426, 80
      %v1952 = vpop.permute.xlu0 %1951
      %1953 = vrot.lane.b32.xlu0 %v1429, 80
      %v1954 = vpop.permute.xlu0 %1953
      %1955 = vrot.lane.b32.xlu0 %v1434, 80
      %v1956 = vpop.permute.xlu0 %1955
      %v1957 = vsel %vm1448, %v1946, 0
      %v1959 = vsel %vm1448, %v1948, 0
      %v1961 = vsel %vm1448, %v1950, 0
      %v1963 = vsel %vm1448, %v1952, 0
      %v1965 = vsel %vm1448, %v1954, 0
      %v1967 = vsel %vm1448, %v1956, 0
      %1969 = vmatprep.subr.mxu0 0.0
      %1970 = vmatpush1.xpose.msra.mxu0 %v1963
      %1971 = vmatprep.subr.mxu0 0.0
      %1972 = vmatpush1.xpose.msra.mxu0 %v1965
      %1973 = vmatprep.subr.mxu0 0.0
      %1974 = vmatpush1.xpose.msra.mxu0 %v1967
      %1975 = vmatprep.subr.mxu0 0.0
      %1976 = vmatpush1.xpose.msra.mxu0 0.0
      %1977 = vmatprep.subr.mxu0 0.0
      %1978 = vmatpush1.xpose.msra.mxu0 0.0
      %1979 = vmatprep.subr.mxu0 0.0
      %1980 = vmatpush1.xpose.msra.mxu0 0.0
      %1981 = vmatprep.subr.mxu0 0.0
      %1982 = vmatpush1.xpose.msra.mxu0 0.0
      %1983 = vmatprep.subr.mxu0 0.0
      %1984 = vmatpush1.xpose.msra.mxu0 0.0
      %1985 = vmatprep.subr.mxu0 0.0
      %1986 = vmatpush1.xpose.msra.mxu0 0.0
      %1987 = vmatprep.subr.mxu0 0.0
      %1988 = vmatpush1.xpose.msra.mxu0 0.0
      %1989 = vmatprep.subr.mxu0 0.0
      %1990 = vmatpush1.xpose.msra.mxu0 0.0
      %1991 = vmatprep.subr.mxu0 0.0
      %1992 = vmatpush1.xpose.msra.mxu0 0.0
      %1993 = vmatprep.subr.mxu0 0.0
      %1994 = vmatpush1.xpose.msra.mxu0 0.0
      %1995 = vmatprep.subr.mxu0 0.0
      %1996 = vmatpush1.xpose.msra.mxu0 0.0
      %1997 = vmatprep.subr.mxu0 0.0
      %1998 = vmatpush1.xpose.msra.mxu0 0.0
      %1999 = vmatprep.subr.mxu0 0.0
      %2000 = vmatpush1.xpose.msra.mxu0 0.0
      %2001 = vmatprep.subr.mxu0 0.0
      %2002 = vmatpush1.xpose.msra.mxu0 0.0
      %2003 = vmatprep.subr.mxu0 0.0
      %2004 = vmatpush1.xpose.msra.mxu0 0.0
      %2005 = vmatprep.subr.mxu0 0.0
      %2006 = vmatpush1.xpose.msra.mxu0 0.0
      %2007 = vmatprep.subr.mxu0 0.0
      %2008 = vmatpush1.xpose.msra.mxu0 0.0
      %2009 = vmatprep.subr.mxu0 0.0
      %2010 = vmatpush1.xpose.msra.mxu0 0.0
      %2011 = vmatprep.subr.mxu0 0.0
      %2012 = vmatpush1.xpose.msra.mxu0 0.0
      %2013 = vmatprep.subr.mxu0 0.0
      %2014 = vmatpush1.xpose.msra.mxu0 0.0
      %2015 = vmatprep.subr.mxu0 0.0
      %2016 = vmatpush1.xpose.msra.mxu0 0.0
      %2017 = vmatprep.subr.mxu0 0.0
      %2018 = vmatpush1.xpose.msra.mxu0 0.0
      %2019 = vmatprep.subr.mxu0 0.0
      %2020 = vmatpush1.xpose.msra.mxu0 0.0
      %2021 = vmatprep.subr.mxu0 0.0
      %2022 = vmatpush1.xpose.msra.mxu0 0.0
      %2023 = vmatprep.subr.mxu0 0.0
      %2024 = vmatpush1.xpose.msra.mxu0 0.0
      %2025 = vmatprep.subr.mxu0 0.0
      %2026 = vmatpush1.xpose.msra.mxu0 0.0
      %2027 = vmatprep.subr.mxu0 0.0
      %2028 = vmatpush1.xpose.msra.mxu0 0.0
      %2029 = vmatprep.subr.mxu0 0.0
      %2030 = vmatpush1.xpose.msra.mxu0 0.0
      %2031 = vmatprep.subr.mxu0 0.0
      %2032 = vmatpush1.xpose.msra.mxu0 0.0
      %2033 = vmatprep.mubr.f32.mxu0 0.0
      %2034 = vmatmul.mubr.f32.gmra.mrb[0].mxu0 %v1957
      %v2035 = vpop.f32.mrb[0].mxu0
      %v2036 = vadd.f32 0.0, %v2035
      %v2037 = vpop.f32.mrb[0].mxu0
      %2038 = vmatprep.mubr.f32.mxu0 0.0
      %2039 = vmatmul.mubr.f32.gmra.mrb[0].mxu0 %v1959
      %v2040 = vpop.f32.mrb[0].mxu0
      %v2041 = vadd.f32 0.0, %v2040
      %v2042 = vpop.f32.mrb[0].mxu0
      %2043 = vmatprep.mubr.f32.mxu0 0.0
      %2044 = vmatmul.mubr.f32.gmra.mrb[0].mxu0 %v1961
      %v2045 = vpop.f32.mrb[0].mxu0
      %v2046 = vadd.f32 0.0, %v2045
      %v2047 = vpop.f32.mrb[0].mxu0
      %2048 = vdwg.mxu0
      %v2049 = vmul.f32 %v2036, 0.35355338
      %v2050 = vmul.f32 %v2041, 0.35355338
      %v2051 = vmul.f32 %v2046, 0.35355338
      %v2052 = vadd.f32 %v2049, %v1237
      %v2053 = vadd.f32 %v2050, %v1238
      %v2054 = vadd.f32 %v2051, %v1239
      %v2055 = vsel %vm1547, %v2052, -inf
      %2056 = vmax.xlane.f32.xlu0 %v2055
      %v2057 = vpop.xlane.xlu0 %2056
      %v2058 = vsel %vm1547, %v2053, -inf
      %2059 = vmax.xlane.f32.xlu0 %v2058
      %v2060 = vpop.xlane.xlu0 %2059
      %v2061 = vsel %vm1554, %v2054, -inf
      %2062 = vmax.xlane.f32.xlu0 %v2061
      %v2063 = vpop.xlane.xlu0 %2062
      %v2064 = vsub.f32 %v2052, %v2057
      %v2065 = vsub.f32 %v2053, %v2060
      %v2066 = vsub.f32 %v2054, %v2063
      %v2067 = vmul.f32 %v2064, 1.442695
      %v2068 = vpow.pop %v2067
      %v2069 = vmul.f32 %v2065, 1.442695
      %v2070 = vpow.pop %v2069
      %v2071 = vmul.f32 %v2066, 1.442695
      %v2072 = vpow.pop %v2071
      %v2073 = vsel %vm1547, %v2068, 0.0
      %2074 = vadd.xlane.f32.xlu0 %v2073
      %v2075 = vpop.xlane.xlu0 %2074
      %v2076 = vsel %vm1547, %v2070, 0.0
      %2077 = vadd.xlane.f32.xlu0 %v2076
      %v2078 = vpop.xlane.xlu0 %2077
      %v2079 = vsel %vm1554, %v2072, 0.0
      %2080 = vadd.xlane.f32.xlu0 %v2079
      %v2081 = vpop.xlane.xlu0 %2080
      %v2082 = vrcp.pop %v2075
      %v2083 = vrcp.pop %v2078
      %v2084 = vrcp.pop %v2081
      %v2085 = vmul.f32 %v2068, %v2082
      %v2086 = vmul.f32 %v2070, %v2083
      %v2087 = vmul.f32 %v2072, %v2084
      %2088 = vrot.lane.b32.xlu0 %v1426, 48
      %v2089 = vpop.permute.xlu0 %2088
      %2090 = vrot.lane.b32.xlu0 %v1429, 48
      %v2091 = vpop.permute.xlu0 %2090
      %2092 = vrot.lane.b32.xlu0 %v1434, 48
      %v2093 = vpop.permute.xlu0 %2092
      %v2097 = vsel %vm1547, %v2085, 0
      %v2100 = vsel %vm1547, %v2086, 0
      %v2103 = vsel %vm1547, %v2087, 0
      %v2105 = vsel %vm1599, %v2093, 0
      %2107 = vmatprep.subr.mxu0 0.0
      %2108 = vmatpush1.msra.mxu0 %v2089
      %2109 = vmatprep.subr.mxu0 0.0
      %2110 = vmatpush1.msra.mxu0 %v2091
      %2111 = vmatprep.subr.mxu0 0.0
      %2112 = vmatpush1.msra.mxu0 %v2105
      %2113 = vmatprep.subr.mxu0 0.0
      %2114 = vmatpush1.msra.mxu0 0.0
      %2115 = vmatprep.subr.mxu0 0.0
      %2116 = vmatpush1.msra.mxu0 0.0
      %2117 = vmatprep.subr.mxu0 0.0
      %2118 = vmatpush1.msra.mxu0 0.0
      %2119 = vmatprep.subr.mxu0 0.0
      %2120 = vmatpush1.msra.mxu0 0.0
      %2121 = vmatprep.subr.mxu0 0.0
      %2122 = vmatpush1.msra.mxu0 0.0
      %2123 = vmatprep.subr.mxu0 0.0
      %2124 = vmatpush1.msra.mxu0 0.0
      %2125 = vmatprep.subr.mxu0 0.0
      %2126 = vmatpush1.msra.mxu0 0.0
      %2127 = vmatprep.subr.mxu0 0.0
      %2128 = vmatpush1.msra.mxu0 0.0
      %2129 = vmatprep.subr.mxu0 0.0
      %2130 = vmatpush1.msra.mxu0 0.0
      %2131 = vmatprep.subr.mxu0 0.0
      %2132 = vmatpush1.msra.mxu0 0.0
      %2133 = vmatprep.subr.mxu0 0.0
      %2134 = vmatpush1.msra.mxu0 0.0
      %2135 = vmatprep.subr.mxu0 0.0
      %2136 = vmatpush1.msra.mxu0 0.0
      %2137 = vmatprep.subr.mxu0 0.0
      %2138 = vmatpush1.msra.mxu0 0.0
      %2139 = vmatprep.subr.mxu0 0.0
      %2140 = vmatpush1.msra.mxu0 0.0
      %2141 = vmatprep.subr.mxu0 0.0
      %2142 = vmatpush1.msra.mxu0 0.0
      %2143 = vmatprep.subr.mxu0 0.0
      %2144 = vmatpush1.msra.mxu0 0.0
      %2145 = vmatprep.subr.mxu0 0.0
      %2146 = vmatpush1.msra.mxu0 0.0
      %2147 = vmatprep.subr.mxu0 0.0
      %2148 = vmatpush1.msra.mxu0 0.0
      %2149 = vmatprep.subr.mxu0 0.0
      %2150 = vmatpush1.msra.mxu0 0.0
      %2151 = vmatprep.subr.mxu0 0.0
      %2152 = vmatpush1.msra.mxu0 0.0
      %2153 = vmatprep.subr.mxu0 0.0
      %2154 = vmatpush1.msra.mxu0 0.0
      %2155 = vmatprep.subr.mxu0 0.0
      %2156 = vmatpush1.msra.mxu0 0.0
      %2157 = vmatprep.subr.mxu0 0.0
      %2158 = vmatpush1.msra.mxu0 0.0
      %2159 = vmatprep.subr.mxu0 0.0
      %2160 = vmatpush1.msra.mxu0 0.0
      %2161 = vmatprep.subr.mxu0 0.0
      %2162 = vmatpush1.msra.mxu0 0.0
      %2163 = vmatprep.subr.mxu0 0.0
      %2164 = vmatpush1.msra.mxu0 0.0
      %2165 = vmatprep.subr.mxu0 0.0
      %2166 = vmatpush1.msra.mxu0 0.0
      %2167 = vmatprep.subr.mxu0 0.0
      %2168 = vmatpush1.msra.mxu0 0.0
      %2169 = vmatprep.subr.mxu0 0.0
      %2170 = vmatpush1.msra.mxu0 0.0
      %2171 = vmatprep.mubr.f32.mxu0 0.0
      %2172 = vmatmul.mubr.f32.gmra.mrb[0].mxu0 %v2097
      %v2173 = vpop.f32.mrb[0].mxu0
      %v2174 = vadd.f32 0.0, %v2173
      %v2175 = vpop.f32.mrb[0].mxu0
      %2176 = vmatprep.mubr.f32.mxu0 0.0
      %2177 = vmatmul.mubr.f32.gmra.mrb[0].mxu0 %v2100
      %v2178 = vpop.f32.mrb[0].mxu0
      %v2179 = vadd.f32 0.0, %v2178
      %v2180 = vpop.f32.mrb[0].mxu0
      %2181 = vmatprep.mubr.f32.mxu0 0.0
      %2182 = vmatmul.mubr.f32.gmra.mrb[0].mxu0 %v2103
      %v2183 = vpop.f32.mrb[0].mxu0
      %v2184 = vadd.f32 0.0, %v2183
      %v2185 = vpop.f32.mrb[0].mxu0
      %2186 = vdwg.mxu0
      %2190 = vrot.lane.b32.xlu0 %v2174, 16
      %v2191 = vpop.permute.xlu0 %2190
      %2192 = vrot.lane.b32.xlu0 %v2179, 16
      %v2193 = vpop.permute.xlu0 %2192
      %2194 = vrot.lane.b32.xlu0 %v2184, 16
      %v2195 = vpop.permute.xlu0 %2194
      %vm2199 = vcmask 195712
      %2200 = vst.msk [vmem:[#allocation3] sm:$0xff] %vm2199, %v2191
      %2201 = vst.msk [vmem:[#allocation3 + $0x8] sm:$0xff] %vm2199, %v2193
      %vm2202 = vcmask 191616
      %2203 = vst.msk [vmem:[#allocation3 + $0x10] sm:$0xf] %vm2202, %v2195
      %2204 = vrot.lane.b32.xlu0 %v1426, 104
      %v2205 = vpop.permute.xlu0 %2204
      %2206 = vrot.lane.b32.xlu0 %v1429, 104
      %v2207 = vpop.permute.xlu0 %2206
      %2208 = vrot.lane.b32.xlu0 %v1434, 104
      %v2209 = vpop.permute.xlu0 %2208
      %2210 = vrot.lane.b32.xlu0 %v1426, 72
      %v2211 = vpop.permute.xlu0 %2210
      %2212 = vrot.lane.b32.xlu0 %v1429, 72
      %v2213 = vpop.permute.xlu0 %2212
      %2214 = vrot.lane.b32.xlu0 %v1434, 72
      %v2215 = vpop.permute.xlu0 %2214
      %v2216 = vsel %vm1448, %v2205, 0
      %v2218 = vsel %vm1448, %v2207, 0
      %v2220 = vsel %vm1448, %v2209, 0
      %v2222 = vsel %vm1448, %v2211, 0
      %v2224 = vsel %vm1448, %v2213, 0
      %v2226 = vsel %vm1448, %v2215, 0
      %2228 = vmatprep.subr.mxu0 0.0
      %2229 = vmatpush1.xpose.msra.mxu0 %v2222
      %2230 = vmatprep.subr.mxu0 0.0
      %2231 = vmatpush1.xpose.msra.mxu0 %v2224
      %2232 = vmatprep.subr.mxu0 0.0
      %2233 = vmatpush1.xpose.msra.mxu0 %v2226
      %2234 = vmatprep.subr.mxu0 0.0
      %2235 = vmatpush1.xpose.msra.mxu0 0.0
      %2236 = vmatprep.subr.mxu0 0.0
      %2237 = vmatpush1.xpose.msra.mxu0 0.0
      %2238 = vmatprep.subr.mxu0 0.0
      %2239 = vmatpush1.xpose.msra.mxu0 0.0
      %2240 = vmatprep.subr.mxu0 0.0
      %2241 = vmatpush1.xpose.msra.mxu0 0.0
      %2242 = vmatprep.subr.mxu0 0.0
      %2243 = vmatpush1.xpose.msra.mxu0 0.0
      %2244 = vmatprep.subr.mxu0 0.0
      %2245 = vmatpush1.xpose.msra.mxu0 0.0
      %2246 = vmatprep.subr.mxu0 0.0
      %2247 = vmatpush1.xpose.msra.mxu0 0.0
      %2248 = vmatprep.subr.mxu0 0.0
      %2249 = vmatpush1.xpose.msra.mxu0 0.0
      %2250 = vmatprep.subr.mxu0 0.0
      %2251 = vmatpush1.xpose.msra.mxu0 0.0
      %2252 = vmatprep.subr.mxu0 0.0
      %2253 = vmatpush1.xpose.msra.mxu0 0.0
      %2254 = vmatprep.subr.mxu0 0.0
      %2255 = vmatpush1.xpose.msra.mxu0 0.0
      %2256 = vmatprep.subr.mxu0 0.0
      %2257 = vmatpush1.xpose.msra.mxu0 0.0
      %2258 = vmatprep.subr.mxu0 0.0
      %2259 = vmatpush1.xpose.msra.mxu0 0.0
      %2260 = vmatprep.subr.mxu0 0.0
      %2261 = vmatpush1.xpose.msra.mxu0 0.0
      %2262 = vmatprep.subr.mxu0 0.0
      %2263 = vmatpush1.xpose.msra.mxu0 0.0
      %2264 = vmatprep.subr.mxu0 0.0
      %2265 = vmatpush1.xpose.msra.mxu0 0.0
      %2266 = vmatprep.subr.mxu0 0.0
      %2267 = vmatpush1.xpose.msra.mxu0 0.0
      %2268 = vmatprep.subr.mxu0 0.0
      %2269 = vmatpush1.xpose.msra.mxu0 0.0
      %2270 = vmatprep.subr.mxu0 0.0
      %2271 = vmatpush1.xpose.msra.mxu0 0.0
      %2272 = vmatprep.subr.mxu0 0.0
      %2273 = vmatpush1.xpose.msra.mxu0 0.0
      %2274 = vmatprep.subr.mxu0 0.0
      %2275 = vmatpush1.xpose.msra.mxu0 0.0
      %2276 = vmatprep.subr.mxu0 0.0
      %2277 = vmatpush1.xpose.msra.mxu0 0.0
      %2278 = vmatprep.subr.mxu0 0.0
      %2279 = vmatpush1.xpose.msra.mxu0 0.0
      %2280 = vmatprep.subr.mxu0 0.0
      %2281 = vmatpush1.xpose.msra.mxu0 0.0
      %2282 = vmatprep.subr.mxu0 0.0
      %2283 = vmatpush1.xpose.msra.mxu0 0.0
      %2284 = vmatprep.subr.mxu0 0.0
      %2285 = vmatpush1.xpose.msra.mxu0 0.0
      %2286 = vmatprep.subr.mxu0 0.0
      %2287 = vmatpush1.xpose.msra.mxu0 0.0
      %2288 = vmatprep.subr.mxu0 0.0
      %2289 = vmatpush1.xpose.msra.mxu0 0.0
      %2290 = vmatprep.subr.mxu0 0.0
      %2291 = vmatpush1.xpose.msra.mxu0 0.0
      %2292 = vmatprep.mubr.f32.mxu0 0.0
      %2293 = vmatmul.mubr.f32.gmra.mrb[0].mxu0 %v2216
      %v2294 = vpop.f32.mrb[0].mxu0
      %v2295 = vadd.f32 0.0, %v2294
      %v2296 = vpop.f32.mrb[0].mxu0
      %2297 = vmatprep.mubr.f32.mxu0 0.0
      %2298 = vmatmul.mubr.f32.gmra.mrb[0].mxu0 %v2218
      %v2299 = vpop.f32.mrb[0].mxu0
      %v2300 = vadd.f32 0.0, %v2299
      %v2301 = vpop.f32.mrb[0].mxu0
      %2302 = vmatprep.mubr.f32.mxu0 0.0
      %2303 = vmatmul.mubr.f32.gmra.mrb[0].mxu0 %v2220
      %v2304 = vpop.f32.mrb[0].mxu0
      %v2305 = vadd.f32 0.0, %v2304
      %v2306 = vpop.f32.mrb[0].mxu0
      %2307 = vdwg.mxu0
      %v2308 = vmul.f32 %v2295, 0.35355338
      %v2309 = vmul.f32 %v2300, 0.35355338
      %v2310 = vmul.f32 %v2305, 0.35355338
      %v2311 = vadd.f32 %v2308, %v1237
      %v2312 = vadd.f32 %v2309, %v1238
      %v2313 = vadd.f32 %v2310, %v1239
      %v2314 = vsel %vm1547, %v2311, -inf
      %2315 = vmax.xlane.f32.xlu0 %v2314
      %v2316 = vpop.xlane.xlu0 %2315
      %v2317 = vsel %vm1547, %v2312, -inf
      %2318 = vmax.xlane.f32.xlu0 %v2317
      %v2319 = vpop.xlane.xlu0 %2318
      %v2320 = vsel %vm1554, %v2313, -inf
      %2321 = vmax.xlane.f32.xlu0 %v2320
      %v2322 = vpop.xlane.xlu0 %2321
      %v2323 = vsub.f32 %v2311, %v2316
      %v2324 = vsub.f32 %v2312, %v2319
      %v2325 = vsub.f32 %v2313, %v2322
      %v2326 = vmul.f32 %v2323, 1.442695
      %v2327 = vpow.pop %v2326
      %v2328 = vmul.f32 %v2324, 1.442695
      %v2329 = vpow.pop %v2328
      %v2330 = vmul.f32 %v2325, 1.442695
      %v2331 = vpow.pop %v2330
      %v2332 = vsel %vm1547, %v2327, 0.0
      %2333 = vadd.xlane.f32.xlu0 %v2332
      %v2334 = vpop.xlane.xlu0 %2333
      %v2335 = vsel %vm1547, %v2329, 0.0
      %2336 = vadd.xlane.f32.xlu0 %v2335
      %v2337 = vpop.xlane.xlu0 %2336
      %v2338 = vsel %vm1554, %v2331, 0.0
      %2339 = vadd.xlane.f32.xlu0 %v2338
      %v2340 = vpop.xlane.xlu0 %2339
      %v2341 = vrcp.pop %v2334
      %v2342 = vrcp.pop %v2337
      %v2343 = vrcp.pop %v2340
      %v2344 = vmul.f32 %v2327, %v2341
      %v2345 = vmul.f32 %v2329, %v2342
      %v2346 = vmul.f32 %v2331, %v2343
      %2347 = vrot.lane.b32.xlu0 %v1426, 40
      %v2348 = vpop.permute.xlu0 %2347
      %2349 = vrot.lane.b32.xlu0 %v1429, 40
      %v2350 = vpop.permute.xlu0 %2349
      %2351 = vrot.lane.b32.xlu0 %v1434, 40
      %v2352 = vpop.permute.xlu0 %2351
      %v2356 = vsel %vm1547, %v2344, 0
      %v2359 = vsel %vm1547, %v2345, 0
      %v2362 = vsel %vm1547, %v2346, 0
      %v2364 = vsel %vm1599, %v2352, 0
      %2366 = vmatprep.subr.mxu0 0.0
      %2367 = vmatpush1.msra.mxu0 %v2348
      %2368 = vmatprep.subr.mxu0 0.0
      %2369 = vmatpush1.msra.mxu0 %v2350
      %2370 = vmatprep.subr.mxu0 0.0
      %2371 = vmatpush1.msra.mxu0 %v2364
      %2372 = vmatprep.subr.mxu0 0.0
      %2373 = vmatpush1.msra.mxu0 0.0
      %2374 = vmatprep.subr.mxu0 0.0
      %2375 = vmatpush1.msra.mxu0 0.0
      %2376 = vmatprep.subr.mxu0 0.0
      %2377 = vmatpush1.msra.mxu0 0.0
      %2378 = vmatprep.subr.mxu0 0.0
      %2379 = vmatpush1.msra.mxu0 0.0
      %2380 = vmatprep.subr.mxu0 0.0
      %2381 = vmatpush1.msra.mxu0 0.0
      %2382 = vmatprep.subr.mxu0 0.0
      %2383 = vmatpush1.msra.mxu0 0.0
      %2384 = vmatprep.subr.mxu0 0.0
      %2385 = vmatpush1.msra.mxu0 0.0
      %2386 = vmatprep.subr.mxu0 0.0
      %2387 = vmatpush1.msra.mxu0 0.0
      %2388 = vmatprep.subr.mxu0 0.0
      %2389 = vmatpush1.msra.mxu0 0.0
      %2390 = vmatprep.subr.mxu0 0.0
      %2391 = vmatpush1.msra.mxu0 0.0
      %2392 = vmatprep.subr.mxu0 0.0
      %2393 = vmatpush1.msra.mxu0 0.0
      %2394 = vmatprep.subr.mxu0 0.0
      %2395 = vmatpush1.msra.mxu0 0.0
      %2396 = vmatprep.subr.mxu0 0.0
      %2397 = vmatpush1.msra.mxu0 0.0
      %2398 = vmatprep.subr.mxu0 0.0
      %2399 = vmatpush1.msra.mxu0 0.0
      %2400 = vmatprep.subr.mxu0 0.0
      %2401 = vmatpush1.msra.mxu0 0.0
      %2402 = vmatprep.subr.mxu0 0.0
      %2403 = vmatpush1.msra.mxu0 0.0
      %2404 = vmatprep.subr.mxu0 0.0
      %2405 = vmatpush1.msra.mxu0 0.0
      %2406 = vmatprep.subr.mxu0 0.0
      %2407 = vmatpush1.msra.mxu0 0.0
      %2408 = vmatprep.subr.mxu0 0.0
      %2409 = vmatpush1.msra.mxu0 0.0
      %2410 = vmatprep.subr.mxu0 0.0
      %2411 = vmatpush1.msra.mxu0 0.0
      %2412 = vmatprep.subr.mxu0 0.0
      %2413 = vmatpush1.msra.mxu0 0.0
      %2414 = vmatprep.subr.mxu0 0.0
      %2415 = vmatpush1.msra.mxu0 0.0
      %2416 = vmatprep.subr.mxu0 0.0
      %2417 = vmatpush1.msra.mxu0 0.0
      %2418 = vmatprep.subr.mxu0 0.0
      %2419 = vmatpush1.msra.mxu0 0.0
      %2420 = vmatprep.subr.mxu0 0.0
      %2421 = vmatpush1.msra.mxu0 0.0
      %2422 = vmatprep.subr.mxu0 0.0
      %2423 = vmatpush1.msra.mxu0 0.0
      %2424 = vmatprep.subr.mxu0 0.0
      %2425 = vmatpush1.msra.mxu0 0.0
      %2426 = vmatprep.subr.mxu0 0.0
      %2427 = vmatpush1.msra.mxu0 0.0
      %2428 = vmatprep.subr.mxu0 0.0
      %2429 = vmatpush1.msra.mxu0 0.0
      %2430 = vmatprep.mubr.f32.mxu0 0.0
      %2431 = vmatmul.mubr.f32.gmra.mrb[0].mxu0 %v2356
      %v2432 = vpop.f32.mrb[0].mxu0
      %v2433 = vadd.f32 0.0, %v2432
      %v2434 = vpop.f32.mrb[0].mxu0
      %2435 = vmatprep.mubr.f32.mxu0 0.0
      %2436 = vmatmul.mubr.f32.gmra.mrb[0].mxu0 %v2359
      %v2437 = vpop.f32.mrb[0].mxu0
      %v2438 = vadd.f32 0.0, %v2437
      %v2439 = vpop.f32.mrb[0].mxu0
      %2440 = vmatprep.mubr.f32.mxu0 0.0
      %2441 = vmatmul.mubr.f32.gmra.mrb[0].mxu0 %v2362
      %v2442 = vpop.f32.mrb[0].mxu0
      %v2443 = vadd.f32 0.0, %v2442
      %v2444 = vpop.f32.mrb[0].mxu0
      %2445 = vdwg.mxu0
      %2449 = vrot.lane.b32.xlu0 %v2433, 24
      %v2450 = vpop.permute.xlu0 %2449
      %2451 = vrot.lane.b32.xlu0 %v2438, 24
      %v2452 = vpop.permute.xlu0 %2451
      %2453 = vrot.lane.b32.xlu0 %v2443, 24
      %v2454 = vpop.permute.xlu0 %2453
      %vm2458 = vcmask 261312
      %2459 = vst.msk [vmem:[#allocation3] sm:$0xff] %vm2458, %v2450
      %2460 = vst.msk [vmem:[#allocation3 + $0x8] sm:$0xff] %vm2458, %v2452
      %vm2461 = vcmask 257216
      %2462 = vst.msk [vmem:[#allocation3 + $0x10] sm:$0xf] %vm2461, %v2454
      %v2463 = vld [vmem:[#allocation3] sm:$0xff]
      %v2464 = vld [vmem:[#allocation3 + $0x8] sm:$0xff]
      %v2465 = vld [vmem:[#allocation3 + $0x10] sm:$0xf]
      %v2466 = vpack.c.bf16 %v2464, %v2463
      %v2467 = vpack.c.bf16 %v2465, %v2465
      %v2469 = vlaneseq
      %v2470 = vshrl.u32 %v2469, 7
      %v2471 = vsub.s32 0, %v2470
      %v2472 = vrot.slane %v1250, %v2471
      %v2478 = vunpack.c.l.b16 %v1246
      %v2479 = vunpack.c.l.b16 %v1247
      %v2480 = vunpack.c.l.b16 %v1248
      %v2481 = vunpack.c.l.b16 %v1249
      %v2482 = vpack.c.b16 %v2479, %v2478
      %v2483 = vpack.c.b16 %v2481, %v2480
      %v2487 = vsel %vm1309, %v2466, 0
      %v2490 = vsel %vm1309, %v2467, 0
      %2492 = vmatprep.subr.bf16.mxu0 0
      %2493 = vmatpush1.bf16.msra.mxu0 %v2482
      %2494 = vmatprep.subr.bf16.mxu0 0
      %2495 = vmatpush1.bf16.msra.mxu0 %v2483
      %2496 = vmatprep.subr.bf16.mxu0 0
      %2497 = vmatpush1.bf16.msra.mxu0 0
      %2498 = vmatprep.subr.bf16.mxu0 0
      %2499 = vmatpush1.bf16.msra.mxu0 0
      %2500 = vmatprep.subr.bf16.mxu0 0
      %2501 = vmatpush1.bf16.msra.mxu0 0
      %2502 = vmatprep.subr.bf16.mxu0 0
      %2503 = vmatpush1.bf16.msra.mxu0 0
      %2504 = vmatprep.subr.bf16.mxu0 0
      %2505 = vmatpush1.bf16.msra.mxu0 0
      %2506 = vmatprep.subr.bf16.mxu0 0
      %2507 = vmatpush1.bf16.msra.mxu0 0
      %2508 = vmatprep.subr.bf16.mxu0 0
      %2509 = vmatpush1.bf16.msra.mxu0 0
      %2510 = vmatprep.subr.bf16.mxu0 0
      %2511 = vmatpush1.bf16.msra.mxu0 0
      %2512 = vmatprep.subr.bf16.mxu0 0
      %2513 = vmatpush1.bf16.msra.mxu0 0
      %2514 = vmatprep.subr.bf16.mxu0 0
      %2515 = vmatpush1.bf16.msra.mxu0 0
      %2516 = vmatprep.subr.bf16.mxu0 0
      %2517 = vmatpush1.bf16.msra.mxu0 0
      %2518 = vmatprep.subr.bf16.mxu0 0
      %2519 = vmatpush1.bf16.msra.mxu0 0
      %2520 = vmatprep.subr.bf16.mxu0 0
      %2521 = vmatpush1.bf16.msra.mxu0 0
      %2522 = vmatprep.subr.bf16.mxu0 0
      %2523 = vmatpush1.bf16.msra.mxu0 0
      %2524 = vmatprep.mubr.bf16.mxu0 0
      %2525 = vmatmul.mubr.bf16.gmra.mrb[0].mxu0 %v2487
      %v2526 = vpop.f32.mrb[0].mxu0
      %v2527 = vadd.f32 %v2472, %v2526
      %v2528 = vpop.f32.mrb[0].mxu0
      %v2529 = vpop.f32.mrb[0].mxu0
      %v2530 = vadd.f32 %v2472, %v2529
      %v2531 = vpop.f32.mrb[0].mxu0
      %2532 = vmatprep.mubr.bf16.mxu0 0
      %2533 = vmatmul.mubr.bf16.gmra.mrb[0].mxu0 %v2490
      %v2534 = vpop.f32.mrb[0].mxu0
      %v2535 = vadd.f32 %v2472, %v2534
      %v2536 = vpop.f32.mrb[0].mxu0
      %v2537 = vpop.f32.mrb[0].mxu0
      %v2538 = vpop.f32.mrb[0].mxu0
      %2539 = vdwg.mxu0
      %v2540 = vadd.f32 %v1306, %v2527
      %v2541 = vadd.f32 %v1307, %v2530
      %v2542 = vadd.f32 %v1308, %v2535
      %v2543 = vsel %vm1309, %v2540, 0.0
      %2544 = vadd.xlane.f32.xlu0 %v2543
      %v2545 = vpop.xlane.xlu0 %2544
      %v2546 = vsel %vm1309, %v2541, 0.0
      %2547 = vadd.xlane.f32.xlu0 %v2546
      %v2548 = vpop.xlane.xlu0 %2547
      %v2549 = vsel %vm1316, %v2542, 0.0
      %2550 = vadd.xlane.f32.xlu0 %v2549
      %v2551 = vpop.xlane.xlu0 %2550
      %v2552 = vmul.f32 %v2545, %v1320
      %v2553 = vmul.f32 %v2548, %v1320
      %v2554 = vmul.f32 %v2551, %v1320
      %v2555 = vsub.f32 %v2540, %v2552
      %v2556 = vsub.f32 %v2541, %v2553
      %v2557 = vsub.f32 %v2542, %v2554
      %v2558 = vmul.f32 %v2555, %v2555
      %v2559 = vmul.f32 %v2556, %v2556
      %v2560 = vmul.f32 %v2557, %v2557
      %v2561 = vsel %vm1309, %v2558, 0.0
      %2562 = vadd.xlane.f32.xlu0 %v2561
      %v2563 = vpop.xlane.xlu0 %2562
      %v2564 = vsel %vm1309, %v2559, 0.0
      %2565 = vadd.xlane.f32.xlu0 %v2564
      %v2566 = vpop.xlane.xlu0 %2565
      %v2567 = vsel %vm1316, %v2560, 0.0
      %2568 = vadd.xlane.f32.xlu0 %v2567
      %v2569 = vpop.xlane.xlu0 %2568
      %v2570 = vmul.f32 %v2563, %v1320
      %v2571 = vmul.f32 %v2566, %v1320
      %v2572 = vmul.f32 %v2569, %v1320
      %v2573 = vadd.f32 %v2570, 1e-05
      %v2574 = vadd.f32 %v2571, 1e-05
      %v2575 = vadd.f32 %v2572, 1e-05
      %v2576 = vrsqrt.pop %v2573
      %v2577 = vrsqrt.pop %v2574
      %v2578 = vrsqrt.pop %v2575
      %v2579 = vmul.f32 %v2555, %v2576
      %v2580 = vmul.f32 %v2556, %v2577
      %v2581 = vmul.f32 %v2557, %v2578
      %v2582 = vlaneseq
      %v2583 = vshrl.u32 %v2582, 7
      %v2584 = vsub.s32 2, %v2583
      %v2585 = vrot.slane %v1240, %v2584
      %v2586 = vmul.f32 %v2579, %v2585
      %v2587 = vmul.f32 %v2580, %v2585
      %v2588 = vmul.f32 %v2581, %v2585
      %v2589 = vlaneseq
      %v2590 = vshrl.u32 %v2589, 7
      %v2591 = vsub.s32 3, %v2590
      %v2592 = vrot.slane %v1240, %v2591
      %v2593 = vadd.f32 %v2586, %v2592
      %v2594 = vadd.f32 %v2587, %v2592
      %v2595 = vadd.f32 %v2588, %v2592
      %v2596 = vpack.c.bf16 %v2594, %v2593
      %v2597 = vpack.c.bf16 %v2595, %v2595
      %v2599 = vlaneseq
      %v2600 = vshrl.u32 %v2599, 7
      %v2601 = vsub.s32 0, %v2600
      %v2602 = vrot.slane %v1255, %v2601
      %v2608 = vunpack.c.l.b16 %v1251
      %v2609 = vunpack.c.l.b16 %v1252
      %v2610 = vunpack.c.l.b16 %v1253
      %v2611 = vunpack.c.l.b16 %v1254
      %v2612 = vpack.c.b16 %v2609, %v2608
      %v2613 = vpack.c.b16 %v2611, %v2610
      %v2617 = vsel %vm1309, %v2596, 0
      %v2620 = vsel %vm1309, %v2597, 0
      %2622 = vmatprep.subr.bf16.mxu0 0
      %2623 = vmatpush1.bf16.msra.mxu0 %v2612
      %2624 = vmatprep.subr.bf16.mxu0 0
      %2625 = vmatpush1.bf16.msra.mxu0 %v2613
      %2626 = vmatprep.subr.bf16.mxu0 0
      %2627 = vmatpush1.bf16.msra.mxu0 0
      %2628 = vmatprep.subr.bf16.mxu0 0
      %2629 = vmatpush1.bf16.msra.mxu0 0
      %2630 = vmatprep.subr.bf16.mxu0 0
      %2631 = vmatpush1.bf16.msra.mxu0 0
      %2632 = vmatprep.subr.bf16.mxu0 0
      %2633 = vmatpush1.bf16.msra.mxu0 0
      %2634 = vmatprep.subr.bf16.mxu0 0
      %2635 = vmatpush1.bf16.msra.mxu0 0
      %2636 = vmatprep.subr.bf16.mxu0 0
      %2637 = vmatpush1.bf16.msra.mxu0 0
      %2638 = vmatprep.subr.bf16.mxu0 0
      %2639 = vmatpush1.bf16.msra.mxu0 0
      %2640 = vmatprep.subr.bf16.mxu0 0
      %2641 = vmatpush1.bf16.msra.mxu0 0
      %2642 = vmatprep.subr.bf16.mxu0 0
      %2643 = vmatpush1.bf16.msra.mxu0 0
      %2644 = vmatprep.subr.bf16.mxu0 0
      %2645 = vmatpush1.bf16.msra.mxu0 0
      %2646 = vmatprep.subr.bf16.mxu0 0
      %2647 = vmatpush1.bf16.msra.mxu0 0
      %2648 = vmatprep.subr.bf16.mxu0 0
      %2649 = vmatpush1.bf16.msra.mxu0 0
      %2650 = vmatprep.subr.bf16.mxu0 0
      %2651 = vmatpush1.bf16.msra.mxu0 0
      %2652 = vmatprep.subr.bf16.mxu0 0
      %2653 = vmatpush1.bf16.msra.mxu0 0
      %2654 = vmatprep.mubr.bf16.mxu0 0
      %2655 = vmatmul.mubr.bf16.gmra.mrb[0].mxu0 %v2617
      %v2656 = vpop.f32.mrb[0].mxu0
      %v2657 = vadd.f32 %v2602, %v2656
      %v2658 = vpop.f32.mrb[0].mxu0
      %v2659 = vpop.f32.mrb[0].mxu0
      %v2660 = vadd.f32 %v2602, %v2659
      %v2661 = vpop.f32.mrb[0].mxu0
      %2662 = vmatprep.mubr.bf16.mxu0 0
      %2663 = vmatmul.mubr.bf16.gmra.mrb[0].mxu0 %v2620
      %v2664 = vpop.f32.mrb[0].mxu0
      %v2665 = vadd.f32 %v2602, %v2664
      %v2666 = vpop.f32.mrb[0].mxu0
      %v2667 = vpop.f32.mrb[0].mxu0
      %v2668 = vpop.f32.mrb[0].mxu0
      %2669 = vdwg.mxu0
      %v2670 = vmul.f32 %v2657, %v2657
      %v2671 = vmul.f32 %v2660, %v2660
      %v2672 = vmul.f32 %v2665, %v2665
      %v2673 = vmul.f32 %v2657, %v2670
      %v2674 = vmul.f32 %v2660, %v2671
      %v2675 = vmul.f32 %v2665, %v2672
      %v2676 = vmul.f32 %v2673, 0.044715
      %v2677 = vmul.f32 %v2674, 0.044715
      %v2678 = vmul.f32 %v2675, 0.044715
      %v2679 = vadd.f32 %v2657, %v2676
      %v2680 = vadd.f32 %v2660, %v2677
      %v2681 = vadd.f32 %v2665, %v2678
      %v2682 = vmul.f32 %v2679, 0.7978846
      %v2683 = vmul.f32 %v2680, 0.7978846
      %v2684 = vmul.f32 %v2681, 0.7978846
      %v2685 = vtanh.pop %v2682
      %v2686 = vtanh.pop %v2683
      %v2687 = vtanh.pop %v2684
      %v2688 = vadd.f32 %v2685, 1.0
      %v2689 = vadd.f32 %v2686, 1.0
      %v2690 = vadd.f32 %v2687, 1.0
      %v2691 = vmul.f32 %v2688, 0.5
      %v2692 = vmul.f32 %v2689, 0.5
      %v2693 = vmul.f32 %v2690, 0.5
      %v2694 = vmul.f32 %v2657, %v2691
      %v2695 = vmul.f32 %v2660, %v2692
      %v2696 = vmul.f32 %v2665, %v2693
      %v2697 = vpack.c.bf16 %v2695, %v2694
      %v2698 = vpack.c.bf16 %v2696, %v2696
      %v2715 = vunpack.c.l.b16 %v1256
      %v2716 = vunpack.c.l.b16 %v1257
      %v2717 = vunpack.c.l.b16 %v1258
      %v2718 = vunpack.c.l.b16 %v1259
      %v2719 = vunpack.c.l.b16 %v1260
      %v2720 = vunpack.c.l.b16 %v1261
      %v2721 = vunpack.c.l.b16 %v1262
      %v2722 = vunpack.c.l.b16 %v1263
      %v2723 = vunpack.c.l.b16 %v1264
      %v2724 = vunpack.c.l.b16 %v1265
      %v2725 = vunpack.c.l.b16 %v1266
      %v2726 = vunpack.c.l.b16 %v1267
      %v2727 = vunpack.c.l.b16 %v1268
      %v2728 = vunpack.c.l.b16 %v1269
      %v2729 = vunpack.c.l.b16 %v1270
      %v2730 = vunpack.c.l.b16 %v1271
      %v2731 = vpack.c.b16 %v2716, %v2715
      %v2732 = vpack.c.b16 %v2718, %v2717
      %v2733 = vpack.c.b16 %v2720, %v2719
      %v2734 = vpack.c.b16 %v2722, %v2721
      %v2735 = vpack.c.b16 %v2724, %v2723
      %v2736 = vpack.c.b16 %v2726, %v2725
      %v2737 = vpack.c.b16 %v2728, %v2727
      %v2738 = vpack.c.b16 %v2730, %v2729
      %2747 = vmatprep.subr.bf16.mxu0 0
      %2748 = vmatpush1.bf16.msra.mxu0 %v2731
      %2749 = vmatprep.subr.bf16.mxu0 0
      %2750 = vmatpush1.bf16.msra.mxu0 %v2732
      %2751 = vmatprep.subr.bf16.mxu0 0
      %2752 = vmatpush1.bf16.msra.mxu0 %v2733
      %2753 = vmatprep.subr.bf16.mxu0 0
      %2754 = vmatpush1.bf16.msra.mxu0 %v2734
      %2755 = vmatprep.subr.bf16.mxu0 0
      %2756 = vmatpush1.bf16.msra.mxu0 %v2735
      %2757 = vmatprep.subr.bf16.mxu0 0
      %2758 = vmatpush1.bf16.msra.mxu0 %v2736
      %2759 = vmatprep.subr.bf16.mxu0 0
      %2760 = vmatpush1.bf16.msra.mxu0 %v2737
      %2761 = vmatprep.subr.bf16.mxu0 0
      %2762 = vmatpush1.bf16.msra.mxu0 %v2738
      %2763 = vmatprep.subr.bf16.mxu0 0
      %2764 = vmatpush1.bf16.msra.mxu0 0
      %2765 = vmatprep.subr.bf16.mxu0 0
      %2766 = vmatpush1.bf16.msra.mxu0 0
      %2767 = vmatprep.subr.bf16.mxu0 0
      %2768 = vmatpush1.bf16.msra.mxu0 0
      %2769 = vmatprep.subr.bf16.mxu0 0
      %2770 = vmatpush1.bf16.msra.mxu0 0
      %2771 = vmatprep.subr.bf16.mxu0 0
      %2772 = vmatpush1.bf16.msra.mxu0 0
      %2773 = vmatprep.subr.bf16.mxu0 0
      %2774 = vmatpush1.bf16.msra.mxu0 0
      %2775 = vmatprep.subr.bf16.mxu0 0
      %2776 = vmatpush1.bf16.msra.mxu0 0
      %2777 = vmatprep.subr.bf16.mxu0 0
      %2778 = vmatpush1.bf16.msra.mxu0 0
      %2779 = vmatprep.mubr.bf16.mxu0 0
      %2780 = vmatmul.mubr.bf16.gmra.mrb[0].mxu0 %v2697
      %v2781 = vpop.f32.mrb[0].mxu0
      %v2782 = vadd.f32 0.0, %v2781
      %v2783 = vpop.f32.mrb[0].mxu0
      %v2784 = vpop.f32.mrb[0].mxu0
      %v2785 = vadd.f32 0.0, %v2784
      %v2786 = vpop.f32.mrb[0].mxu0
      %2787 = vmatprep.mubr.bf16.mxu0 0
      %2788 = vmatmul.mubr.bf16.gmra.mrb[0].mxu0 %v2698
      %v2789 = vpop.f32.mrb[0].mxu0
      %v2790 = vadd.f32 0.0, %v2789
      %v2791 = vpop.f32.mrb[0].mxu0
      %v2792 = vpop.f32.mrb[0].mxu0
      %v2793 = vpop.f32.mrb[0].mxu0
      %2794 = vdwg.mxu0
      %v2795 = vadd.f32 %v2540, %v2782
      %v2796 = vadd.f32 %v2541, %v2785
      %v2797 = vadd.f32 %v2542, %v2790
      %v2799 = vlaneseq
      %v2800 = vshrl.u32 %v2799, 7
      %v2801 = vsub.s32 0, %v2800
      %v2802 = vrot.slane %v1272, %v2801
      %v2804 = vadd.f32 %v2795, %v2802
      %v2805 = vadd.f32 %v2796, %v2802
      %v2806 = vadd.f32 %v2797, %v2802
      %vm2807 = vcmask 261122
      %v2808 = vsel %vm2807, %v2805, 0.0
      %2809 = vadd.xlane.f32.xlu0 %v2808
      %v2810 = vpop.xlane.xlu0 %2809
      %v2811 = vsel %vm1316, %v2806, 0.0
      %2812 = vadd.xlane.f32.xlu0 %v2811
      %v2813 = vpop.xlane.xlu0 %2812
      %v2814 = vmul.f32 %v2810, %v1320
      %v2815 = vmul.f32 %v2813, %v1320
      %v2816 = vsub.f32 %v2805, %v2814
      %v2817 = vsub.f32 %v2806, %v2815
      %v2818 = vmul.f32 %v2816, %v2816
      %v2819 = vmul.f32 %v2817, %v2817
      %v2820 = vsel %vm2807, %v2818, 0.0
      %2821 = vadd.xlane.f32.xlu0 %v2820
      %v2822 = vpop.xlane.xlu0 %2821
      %v2823 = vsel %vm1316, %v2819, 0.0
      %2824 = vadd.xlane.f32.xlu0 %v2823
      %v2825 = vpop.xlane.xlu0 %2824
      %v2826 = vmul.f32 %v2822, %v1320
      %v2827 = vmul.f32 %v2825, %v1320
      %v2828 = vadd.f32 %v2826, 1e-05
      %v2829 = vadd.f32 %v2827, 1e-05
      %v2830 = vrsqrt.pop %v2828
      %v2831 = vrsqrt.pop %v2829
      %v2832 = vmul.f32 %v2816, %v2830
      %v2833 = vmul.f32 %v2817, %v2831
      %v2834 = vlaneseq
      %v2835 = vshrl.u32 %v2834, 7
      %v2836 = vsub.s32 0, %v2835
      %v2837 = vrot.slane %v1273, %v2836
      %v2838 = vmul.f32 %v2832, %v2837
      %v2839 = vmul.f32 %v2833, %v2837
      %v2840 = vlaneseq
      %v2841 = vshrl.u32 %v2840, 7
      %v2842 = vsub.s32 1, %v2841
      %v2843 = vrot.slane %v1273, %v2842
      %v2844 = vadd.f32 %v2838, %v2843
      %v2845 = vadd.f32 %v2839, %v2843
      %v2846 = vpack.c.bf16 %v2845, %v2844
      %v2848 = vlaneseq
      %v2849 = vshrl.u32 %v2848, 7
      %v2850 = vsub.s32 0, %v2849
      %v2851 = vrot.slane %v1278, %v2850
      %v2854 = vrot.slane %v2846, 1
      %v2859 = vunpack.c.l.b16 %v1274
      %v2860 = vunpack.c.l.b16 %v1275
      %v2861 = vunpack.c.l.b16 %v1276
      %v2862 = vunpack.c.l.b16 %v1277
      %v2863 = vpack.c.b16 %v2860, %v2859
      %v2864 = vpack.c.b16 %v2862, %v2861
      %v2868 = vsel %vm1309, %v2854, 0
      %2870 = vmatprep.subr.bf16.mxu0 0
      %2871 = vmatpush1.bf16.msra.mxu0 %v2863
      %2872 = vmatprep.subr.bf16.mxu0 0
      %2873 = vmatpush1.bf16.msra.mxu0 %v2864
      %2874 = vmatprep.subr.bf16.mxu0 0
      %2875 = vmatpush1.bf16.msra.mxu0 0
      %2876 = vmatprep.subr.bf16.mxu0 0
      %2877 = vmatpush1.bf16.msra.mxu0 0
      %2878 = vmatprep.subr.bf16.mxu0 0
      %2879 = vmatpush1.bf16.msra.mxu0 0
      %2880 = vmatprep.subr.bf16.mxu0 0
      %2881 = vmatpush1.bf16.msra.mxu0 0
      %2882 = vmatprep.subr.bf16.mxu0 0
      %2883 = vmatpush1.bf16.msra.mxu0 0
      %2884 = vmatprep.subr.bf16.mxu0 0
      %2885 = vmatpush1.bf16.msra.mxu0 0
      %2886 = vmatprep.subr.bf16.mxu0 0
      %2887 = vmatpush1.bf16.msra.mxu0 0
      %2888 = vmatprep.subr.bf16.mxu0 0
      %2889 = vmatpush1.bf16.msra.mxu0 0
      %2890 = vmatprep.subr.bf16.mxu0 0
      %2891 = vmatpush1.bf16.msra.mxu0 0
      %2892 = vmatprep.subr.bf16.mxu0 0
      %2893 = vmatpush1.bf16.msra.mxu0 0
      %2894 = vmatprep.subr.bf16.mxu0 0
      %2895 = vmatpush1.bf16.msra.mxu0 0
      %2896 = vmatprep.subr.bf16.mxu0 0
      %2897 = vmatpush1.bf16.msra.mxu0 0
      %2898 = vmatprep.subr.bf16.mxu0 0
      %2899 = vmatpush1.bf16.msra.mxu0 0
      %2900 = vmatprep.subr.bf16.mxu0 0
      %2901 = vmatpush1.bf16.msra.mxu0 0
      %2902 = vmatprep.mubr.bf16.mxu0 0
      %2903 = vmatmul.mubr.bf16.gmra.mrb[0].mxu0 %v2868
      %v2904 = vpop.f32.mrb[0].mxu0
      %v2905 = vadd.f32 %v2851, %v2904
      %v2906 = vpop.f32.mrb[0].mxu0
      %v2907 = vpop.f32.mrb[0].mxu0
      %v2908 = vadd.f32 %v2851, %v2907
      %v2909 = vpop.f32.mrb[0].mxu0
      %2910 = vdwg.mxu0
      %2913 = vrot.lane.b32.xlu0 %v2905, 96
      %v2914 = vpop.permute.xlu0 %2913
      %2915 = vrot.lane.b32.xlu0 %v2908, 96
      %v2916 = vpop.permute.xlu0 %2915
      %v2917 = vsel %vm1448, %v2905, 0
      %v2919 = vsel %vm1448, %v2908, 0
      %v2921 = vsel %vm1448, %v2914, 0
      %v2923 = vsel %vm1448, %v2916, 0
      %2925 = vmatprep.subr.mxu0 0.0
      %2926 = vmatpush1.xpose.msra.mxu0 %v2921
      %2927 = vmatprep.subr.mxu0 0.0
      %2928 = vmatpush1.xpose.msra.mxu0 %v2923
      %2929 = vmatprep.subr.mxu0 0.0
      %2930 = vmatpush1.xpose.msra.mxu0 0.0
      %2931 = vmatprep.subr.mxu0 0.0
      %2932 = vmatpush1.xpose.msra.mxu0 0.0
      %2933 = vmatprep.subr.mxu0 0.0
      %2934 = vmatpush1.xpose.msra.mxu0 0.0
      %2935 = vmatprep.subr.mxu0 0.0
      %2936 = vmatpush1.xpose.msra.mxu0 0.0
      %2937 = vmatprep.subr.mxu0 0.0
      %2938 = vmatpush1.xpose.msra.mxu0 0.0
      %2939 = vmatprep.subr.mxu0 0.0
      %2940 = vmatpush1.xpose.msra.mxu0 0.0
      %2941 = vmatprep.subr.mxu0 0.0
      %2942 = vmatpush1.xpose.msra.mxu0 0.0
      %2943 = vmatprep.subr.mxu0 0.0
      %2944 = vmatpush1.xpose.msra.mxu0 0.0
      %2945 = vmatprep.subr.mxu0 0.0
      %2946 = vmatpush1.xpose.msra.mxu0 0.0
      %2947 = vmatprep.subr.mxu0 0.0
      %2948 = vmatpush1.xpose.msra.mxu0 0.0
      %2949 = vmatprep.subr.mxu0 0.0
      %2950 = vmatpush1.xpose.msra.mxu0 0.0
      %2951 = vmatprep.subr.mxu0 0.0
      %2952 = vmatpush1.xpose.msra.mxu0 0.0
      %2953 = vmatprep.subr.mxu0 0.0
      %2954 = vmatpush1.xpose.msra.mxu0 0.0
      %2955 = vmatprep.subr.mxu0 0.0
      %2956 = vmatpush1.xpose.msra.mxu0 0.0
      %2957 = vmatprep.subr.mxu0 0.0
      %2958 = vmatpush1.xpose.msra.mxu0 0.0
      %2959 = vmatprep.subr.mxu0 0.0
      %2960 = vmatpush1.xpose.msra.mxu0 0.0
      %2961 = vmatprep.subr.mxu0 0.0
      %2962 = vmatpush1.xpose.msra.mxu0 0.0
      %2963 = vmatprep.subr.mxu0 0.0
      %2964 = vmatpush1.xpose.msra.mxu0 0.0
      %2965 = vmatprep.subr.mxu0 0.0
      %2966 = vmatpush1.xpose.msra.mxu0 0.0
      %2967 = vmatprep.subr.mxu0 0.0
      %2968 = vmatpush1.xpose.msra.mxu0 0.0
      %2969 = vmatprep.subr.mxu0 0.0
      %2970 = vmatpush1.xpose.msra.mxu0 0.0
      %2971 = vmatprep.subr.mxu0 0.0
      %2972 = vmatpush1.xpose.msra.mxu0 0.0
      %2973 = vmatprep.subr.mxu0 0.0
      %2974 = vmatpush1.xpose.msra.mxu0 0.0
      %2975 = vmatprep.subr.mxu0 0.0
      %2976 = vmatpush1.xpose.msra.mxu0 0.0
      %2977 = vmatprep.subr.mxu0 0.0
      %2978 = vmatpush1.xpose.msra.mxu0 0.0
      %2979 = vmatprep.subr.mxu0 0.0
      %2980 = vmatpush1.xpose.msra.mxu0 0.0
      %2981 = vmatprep.subr.mxu0 0.0
      %2982 = vmatpush1.xpose.msra.mxu0 0.0
      %2983 = vmatprep.subr.mxu0 0.0
      %2984 = vmatpush1.xpose.msra.mxu0 0.0
      %2985 = vmatprep.subr.mxu0 0.0
      %2986 = vmatpush1.xpose.msra.mxu0 0.0
      %2987 = vmatprep.subr.mxu0 0.0
      %2988 = vmatpush1.xpose.msra.mxu0 0.0
      %2989 = vmatprep.mubr.f32.mxu0 0.0
      %2990 = vmatmul.mubr.f32.gmra.mrb[0].mxu0 %v2917
      %v2991 = vpop.f32.mrb[0].mxu0
      %v2992 = vadd.f32 0.0, %v2991
      %v2993 = vpop.f32.mrb[0].mxu0
      %2994 = vmatprep.mubr.f32.mxu0 0.0
      %2995 = vmatmul.mubr.f32.gmra.mrb[0].mxu0 %v2919
      %v2996 = vpop.f32.mrb[0].mxu0
      %v2997 = vadd.f32 0.0, %v2996
      %v2998 = vpop.f32.mrb[0].mxu0
      %2999 = vdwg.mxu0
      %v3000 = vmul.f32 %v2992, 0.35355338
      %v3001 = vmul.f32 %v2997, 0.35355338
      %v3002 = vadd.f32 %v3000, %v1237
      %v3003 = vadd.f32 %v3001, %v1238
      %vm3004 = vcmask 80896
      %v3005 = vsel %vm3004, %v3002, -inf
      %3006 = vmax.xlane.f32.xlu0 %v3005
      %v3007 = vpop.xlane.xlu0 %3006
      %vm3008 = vcmask 74752
      %v3009 = vsel %vm3008, %v3003, -inf
      %3010 = vmax.xlane.f32.xlu0 %v3009
      %v3011 = vpop.xlane.xlu0 %3010
      %v3012 = vsub.f32 %v3002, %v3007
      %v3013 = vsub.f32 %v3003, %v3011
      %v3014 = vmul.f32 %v3012, 1.442695
      %v3015 = vpow.pop %v3014
      %v3016 = vmul.f32 %v3013, 1.442695
      %v3017 = vpow.pop %v3016
      %v3018 = vsel %vm3004, %v3015, 0.0
      %3019 = vadd.xlane.f32.xlu0 %v3018
      %v3020 = vpop.xlane.xlu0 %3019
      %v3021 = vsel %vm3008, %v3017, 0.0
      %3022 = vadd.xlane.f32.xlu0 %v3021
      %v3023 = vpop.xlane.xlu0 %3022
      %v3024 = vrcp.pop %v3020
      %v3025 = vrcp.pop %v3023
      %v3026 = vmul.f32 %v3015, %v3024
      %v3027 = vmul.f32 %v3017, %v3025
      %3028 = vrot.lane.b32.xlu0 %v2905, 64
      %v3029 = vpop.permute.xlu0 %3028
      %3030 = vrot.lane.b32.xlu0 %v2908, 64
      %v3031 = vpop.permute.xlu0 %3030
      %v3034 = vsel %vm3004, %v3026, 0
      %v3037 = vsel %vm3004, %v3027, 0
      %vm3039 = vcmask 1041408
      %v3040 = vsel %vm3039, %v3031, 0
      %3042 = vmatprep.subr.mxu0 0.0
      %3043 = vmatpush1.msra.mxu0 %v3029
      %3044 = vmatprep.subr.mxu0 0.0
      %3045 = vmatpush1.msra.mxu0 %v3040
      %3046 = vmatprep.subr.mxu0 0.0
      %3047 = vmatpush1.msra.mxu0 0.0
      %3048 = vmatprep.subr.mxu0 0.0
      %3049 = vmatpush1.msra.mxu0 0.0
      %3050 = vmatprep.subr.mxu0 0.0
      %3051 = vmatpush1.msra.mxu0 0.0
      %3052 = vmatprep.subr.mxu0 0.0
      %3053 = vmatpush1.msra.mxu0 0.0
      %3054 = vmatprep.subr.mxu0 0.0
      %3055 = vmatpush1.msra.mxu0 0.0
      %3056 = vmatprep.subr.mxu0 0.0
      %3057 = vmatpush1.msra.mxu0 0.0
      %3058 = vmatprep.subr.mxu0 0.0
      %3059 = vmatpush1.msra.mxu0 0.0
      %3060 = vmatprep.subr.mxu0 0.0
      %3061 = vmatpush1.msra.mxu0 0.0
      %3062 = vmatprep.subr.mxu0 0.0
      %3063 = vmatpush1.msra.mxu0 0.0
      %3064 = vmatprep.subr.mxu0 0.0
      %3065 = vmatpush1.msra.mxu0 0.0
      %3066 = vmatprep.subr.mxu0 0.0
      %3067 = vmatpush1.msra.mxu0 0.0
      %3068 = vmatprep.subr.mxu0 0.0
      %3069 = vmatpush1.msra.mxu0 0.0
      %3070 = vmatprep.subr.mxu0 0.0
      %3071 = vmatpush1.msra.mxu0 0.0
      %3072 = vmatprep.subr.mxu0 0.0
      %3073 = vmatpush1.msra.mxu0 0.0
      %3074 = vmatprep.subr.mxu0 0.0
      %3075 = vmatpush1.msra.mxu0 0.0
      %3076 = vmatprep.subr.mxu0 0.0
      %3077 = vmatpush1.msra.mxu0 0.0
      %3078 = vmatprep.subr.mxu0 0.0
      %3079 = vmatpush1.msra.mxu0 0.0
      %3080 = vmatprep.subr.mxu0 0.0
      %3081 = vmatpush1.msra.mxu0 0.0
      %3082 = vmatprep.subr.mxu0 0.0
      %3083 = vmatpush1.msra.mxu0 0.0
      %3084 = vmatprep.subr.mxu0 0.0
      %3085 = vmatpush1.msra.mxu0 0.0
      %3086 = vmatprep.subr.mxu0 0.0
      %3087 = vmatpush1.msra.mxu0 0.0
      %3088 = vmatprep.subr.mxu0 0.0
      %3089 = vmatpush1.msra.mxu0 0.0
      %3090 = vmatprep.subr.mxu0 0.0
      %3091 = vmatpush1.msra.mxu0 0.0
      %3092 = vmatprep.subr.mxu0 0.0
      %3093 = vmatpush1.msra.mxu0 0.0
      %3094 = vmatprep.subr.mxu0 0.0
      %3095 = vmatpush1.msra.mxu0 0.0
      %3096 = vmatprep.subr.mxu0 0.0
      %3097 = vmatpush1.msra.mxu0 0.0
      %3098 = vmatprep.subr.mxu0 0.0
      %3099 = vmatpush1.msra.mxu0 0.0
      %3100 = vmatprep.subr.mxu0 0.0
      %3101 = vmatpush1.msra.mxu0 0.0
      %3102 = vmatprep.subr.mxu0 0.0
      %3103 = vmatpush1.msra.mxu0 0.0
      %3104 = vmatprep.subr.mxu0 0.0
      %3105 = vmatpush1.msra.mxu0 0.0
      %3106 = vmatprep.mubr.f32.mxu0 0.0
      %3107 = vmatmul.mubr.f32.gmra.mrb[0].mxu0 %v3034
      %v3108 = vpop.f32.mrb[0].mxu0
      %v3109 = vadd.f32 0.0, %v3108
      %v3110 = vpop.f32.mrb[0].mxu0
      %3111 = vmatprep.mubr.f32.mxu0 0.0
      %3112 = vmatmul.mubr.f32.gmra.mrb[0].mxu0 %v3037
      %v3113 = vpop.f32.mrb[0].mxu0
      %v3114 = vadd.f32 0.0, %v3113
      %v3115 = vpop.f32.mrb[0].mxu0
      %3116 = vdwg.mxu0
      %3117 = vst.msk [vmem:[#allocation3] sm:$0xff] %vm1448, %v3109
      %vm3118 = vcmask 58368
      %3119 = vst.msk [vmem:[#allocation3 + $0x8] sm:$0x3] %vm3118, %v3114
      %3120 = vrot.lane.b32.xlu0 %v2905, 120
      %v3121 = vpop.permute.xlu0 %3120
      %3122 = vrot.lane.b32.xlu0 %v2908, 120
      %v3123 = vpop.permute.xlu0 %3122
      %3124 = vrot.lane.b32.xlu0 %v2905, 88
      %v3125 = vpop.permute.xlu0 %3124
      %3126 = vrot.lane.b32.xlu0 %v2908, 88
      %v3127 = vpop.permute.xlu0 %3126
      %v3128 = vsel %vm1448, %v3121, 0
      %v3130 = vsel %vm1448, %v3123, 0
      %v3132 = vsel %vm1448, %v3125, 0
      %v3134 = vsel %vm1448, %v3127, 0
      %3136 = vmatprep.subr.mxu0 0.0
      %3137 = vmatpush1.xpose.msra.mxu0 %v3132
      %3138 = vmatprep.subr.mxu0 0.0
      %3139 = vmatpush1.xpose.msra.mxu0 %v3134
      %3140 = vmatprep.subr.mxu0 0.0
      %3141 = vmatpush1.xpose.msra.mxu0 0.0
      %3142 = vmatprep.subr.mxu0 0.0
      %3143 = vmatpush1.xpose.msra.mxu0 0.0
      %3144 = vmatprep.subr.mxu0 0.0
      %3145 = vmatpush1.xpose.msra.mxu0 0.0
      %3146 = vmatprep.subr.mxu0 0.0
      %3147 = vmatpush1.xpose.msra.mxu0 0.0
      %3148 = vmatprep.subr.mxu0 0.0
      %3149 = vmatpush1.xpose.msra.mxu0 0.0
      %3150 = vmatprep.subr.mxu0 0.0
      %3151 = vmatpush1.xpose.msra.mxu0 0.0
      %3152 = vmatprep.subr.mxu0 0.0
      %3153 = vmatpush1.xpose.msra.mxu0 0.0
      %3154 = vmatprep.subr.mxu0 0.0
      %3155 = vmatpush1.xpose.msra.mxu0 0.0
      %3156 = vmatprep.subr.mxu0 0.0
      %3157 = vmatpush1.xpose.msra.mxu0 0.0
      %3158 = vmatprep.subr.mxu0 0.0
      %3159 = vmatpush1.xpose.msra.mxu0 0.0
      %3160 = vmatprep.subr.mxu0 0.0
      %3161 = vmatpush1.xpose.msra.mxu0 0.0
      %3162 = vmatprep.subr.mxu0 0.0
      %3163 = vmatpush1.xpose.msra.mxu0 0.0
      %3164 = vmatprep.subr.mxu0 0.0
      %3165 = vmatpush1.xpose.msra.mxu0 0.0
      %3166 = vmatprep.subr.mxu0 0.0
      %3167 = vmatpush1.xpose.msra.mxu0 0.0
      %3168 = vmatprep.subr.mxu0 0.0
      %3169 = vmatpush1.xpose.msra.mxu0 0.0
      %3170 = vmatprep.subr.mxu0 0.0
      %3171 = vmatpush1.xpose.msra.mxu0 0.0
      %3172 = vmatprep.subr.mxu0 0.0
      %3173 = vmatpush1.xpose.msra.mxu0 0.0
      %3174 = vmatprep.subr.mxu0 0.0
      %3175 = vmatpush1.xpose.msra.mxu0 0.0
      %3176 = vmatprep.subr.mxu0 0.0
      %3177 = vmatpush1.xpose.msra.mxu0 0.0
      %3178 = vmatprep.subr.mxu0 0.0
      %3179 = vmatpush1.xpose.msra.mxu0 0.0
      %3180 = vmatprep.subr.mxu0 0.0
      %3181 = vmatpush1.xpose.msra.mxu0 0.0
      %3182 = vmatprep.subr.mxu0 0.0
      %3183 = vmatpush1.xpose.msra.mxu0 0.0
      %3184 = vmatprep.subr.mxu0 0.0
      %3185 = vmatpush1.xpose.msra.mxu0 0.0
      %3186 = vmatprep.subr.mxu0 0.0
      %3187 = vmatpush1.xpose.msra.mxu0 0.0
      %3188 = vmatprep.subr.mxu0 0.0
      %3189 = vmatpush1.xpose.msra.mxu0 0.0
      %3190 = vmatprep.subr.mxu0 0.0
      %3191 = vmatpush1.xpose.msra.mxu0 0.0
      %3192 = vmatprep.subr.mxu0 0.0
      %3193 = vmatpush1.xpose.msra.mxu0 0.0
      %3194 = vmatprep.subr.mxu0 0.0
      %3195 = vmatpush1.xpose.msra.mxu0 0.0
      %3196 = vmatprep.subr.mxu0 0.0
      %3197 = vmatpush1.xpose.msra.mxu0 0.0
      %3198 = vmatprep.subr.mxu0 0.0
      %3199 = vmatpush1.xpose.msra.mxu0 0.0
      %3200 = vmatprep.mubr.f32.mxu0 0.0
      %3201 = vmatmul.mubr.f32.gmra.mrb[0].mxu0 %v3128
      %v3202 = vpop.f32.mrb[0].mxu0
      %v3203 = vadd.f32 0.0, %v3202
      %v3204 = vpop.f32.mrb[0].mxu0
      %3205 = vmatprep.mubr.f32.mxu0 0.0
      %3206 = vmatmul.mubr.f32.gmra.mrb[0].mxu0 %v3130
      %v3207 = vpop.f32.mrb[0].mxu0
      %v3208 = vadd.f32 0.0, %v3207
      %v3209 = vpop.f32.mrb[0].mxu0
      %3210 = vdwg.mxu0
      %v3211 = vmul.f32 %v3203, 0.35355338
      %v3212 = vmul.f32 %v3208, 0.35355338
      %v3213 = vadd.f32 %v3211, %v1237
      %v3214 = vadd.f32 %v3212, %v1238
      %v3215 = vsel %vm3004, %v3213, -inf
      %3216 = vmax.xlane.f32.xlu0 %v3215
      %v3217 = vpop.xlane.xlu0 %3216
      %v3218 = vsel %vm3008, %v3214, -inf
      %3219 = vmax.xlane.f32.xlu0 %v3218
      %v3220 = vpop.xlane.xlu0 %3219
      %v3221 = vsub.f32 %v3213, %v3217
      %v3222 = vsub.f32 %v3214, %v3220
      %v3223 = vmul.f32 %v3221, 1.442695
      %v3224 = vpow.pop %v3223
      %v3225 = vmul.f32 %v3222, 1.442695
      %v3226 = vpow.pop %v3225
      %v3227 = vsel %vm3004, %v3224, 0.0
      %3228 = vadd.xlane.f32.xlu0 %v3227
      %v3229 = vpop.xlane.xlu0 %3228
      %v3230 = vsel %vm3008, %v3226, 0.0
      %3231 = vadd.xlane.f32.xlu0 %v3230
      %v3232 = vpop.xlane.xlu0 %3231
      %v3233 = vrcp.pop %v3229
      %v3234 = vrcp.pop %v3232
      %v3235 = vmul.f32 %v3224, %v3233
      %v3236 = vmul.f32 %v3226, %v3234
      %3237 = vrot.lane.b32.xlu0 %v2905, 56
      %v3238 = vpop.permute.xlu0 %3237
      %3239 = vrot.lane.b32.xlu0 %v2908, 56
      %v3240 = vpop.permute.xlu0 %3239
      %v3243 = vsel %vm3004, %v3235, 0
      %v3246 = vsel %vm3004, %v3236, 0
      %v3248 = vsel %vm3039, %v3240, 0
      %3250 = vmatprep.subr.mxu0 0.0
      %3251 = vmatpush1.msra.mxu0 %v3238
      %3252 = vmatprep.subr.mxu0 0.0
      %3253 = vmatpush1.msra.mxu0 %v3248
      %3254 = vmatprep.subr.mxu0 0.0
      %3255 = vmatpush1.msra.mxu0 0.0
      %3256 = vmatprep.subr.mxu0 0.0
      %3257 = vmatpush1.msra.mxu0 0.0
      %3258 = vmatprep.subr.mxu0 0.0
      %3259 = vmatpush1.msra.mxu0 0.0
      %3260 = vmatprep.subr.mxu0 0.0
      %3261 = vmatpush1.msra.mxu0 0.0
      %3262 = vmatprep.subr.mxu0 0.0
      %3263 = vmatpush1.msra.mxu0 0.0
      %3264 = vmatprep.subr.mxu0 0.0
      %3265 = vmatpush1.msra.mxu0 0.0
      %3266 = vmatprep.subr.mxu0 0.0
      %3267 = vmatpush1.msra.mxu0 0.0
      %3268 = vmatprep.subr.mxu0 0.0
      %3269 = vmatpush1.msra.mxu0 0.0
      %3270 = vmatprep.subr.mxu0 0.0
      %3271 = vmatpush1.msra.mxu0 0.0
      %3272 = vmatprep.subr.mxu0 0.0
      %3273 = vmatpush1.msra.mxu0 0.0
      %3274 = vmatprep.subr.mxu0 0.0
      %3275 = vmatpush1.msra.mxu0 0.0
      %3276 = vmatprep.subr.mxu0 0.0
      %3277 = vmatpush1.msra.mxu0 0.0
      %3278 = vmatprep.subr.mxu0 0.0
      %3279 = vmatpush1.msra.mxu0 0.0
      %3280 = vmatprep.subr.mxu0 0.0
      %3281 = vmatpush1.msra.mxu0 0.0
      %3282 = vmatprep.subr.mxu0 0.0
      %3283 = vmatpush1.msra.mxu0 0.0
      %3284 = vmatprep.subr.mxu0 0.0
      %3285 = vmatpush1.msra.mxu0 0.0
      %3286 = vmatprep.subr.mxu0 0.0
      %3287 = vmatpush1.msra.mxu0 0.0
      %3288 = vmatprep.subr.mxu0 0.0
      %3289 = vmatpush1.msra.mxu0 0.0
      %3290 = vmatprep.subr.mxu0 0.0
      %3291 = vmatpush1.msra.mxu0 0.0
      %3292 = vmatprep.subr.mxu0 0.0
      %3293 = vmatpush1.msra.mxu0 0.0
      %3294 = vmatprep.subr.mxu0 0.0
      %3295 = vmatpush1.msra.mxu0 0.0
      %3296 = vmatprep.subr.mxu0 0.0
      %3297 = vmatpush1.msra.mxu0 0.0
      %3298 = vmatprep.subr.mxu0 0.0
      %3299 = vmatpush1.msra.mxu0 0.0
      %3300 = vmatprep.subr.mxu0 0.0
      %3301 = vmatpush1.msra.mxu0 0.0
      %3302 = vmatprep.subr.mxu0 0.0
      %3303 = vmatpush1.msra.mxu0 0.0
      %3304 = vmatprep.subr.mxu0 0.0
      %3305 = vmatpush1.msra.mxu0 0.0
      %3306 = vmatprep.subr.mxu0 0.0
      %3307 = vmatpush1.msra.mxu0 0.0
      %3308 = vmatprep.subr.mxu0 0.0
      %3309 = vmatpush1.msra.mxu0 0.0
      %3310 = vmatprep.subr.mxu0 0.0
      %3311 = vmatpush1.msra.mxu0 0.0
      %3312 = vmatprep.subr.mxu0 0.0
      %3313 = vmatpush1.msra.mxu0 0.0
      %3314 = vmatprep.mubr.f32.mxu0 0.0
      %3315 = vmatmul.mubr.f32.gmra.mrb[0].mxu0 %v3243
      %v3316 = vpop.f32.mrb[0].mxu0
      %v3317 = vadd.f32 0.0, %v3316
      %v3318 = vpop.f32.mrb[0].mxu0
      %3319 = vmatprep.mubr.f32.mxu0 0.0
      %3320 = vmatmul.mubr.f32.gmra.mrb[0].mxu0 %v3246
      %v3321 = vpop.f32.mrb[0].mxu0
      %v3322 = vadd.f32 0.0, %v3321
      %v3323 = vpop.f32.mrb[0].mxu0
      %3324 = vdwg.mxu0
      %3327 = vrot.lane.b32.xlu0 %v3317, 8
      %v3328 = vpop.permute.xlu0 %3327
      %3329 = vrot.lane.b32.xlu0 %v3322, 8
      %v3330 = vpop.permute.xlu0 %3329
      %3333 = vst.msk [vmem:[#allocation3] sm:$0xff] %vm1940, %v3328
      %vm3334 = vcmask 123968
      %3335 = vst.msk [vmem:[#allocation3 + $0x8] sm:$0x3] %vm3334, %v3330
      %3336 = vrot.lane.b32.xlu0 %v2905, 112
      %v3337 = vpop.permute.xlu0 %3336
      %3338 = vrot.lane.b32.xlu0 %v2908, 112
      %v3339 = vpop.permute.xlu0 %3338
      %3340 = vrot.lane.b32.xlu0 %v2905, 80
      %v3341 = vpop.permute.xlu0 %3340
      %3342 = vrot.lane.b32.xlu0 %v2908, 80
      %v3343 = vpop.permute.xlu0 %3342
      %v3344 = vsel %vm1448, %v3337, 0
      %v3346 = vsel %vm1448, %v3339, 0
      %v3348 = vsel %vm1448, %v3341, 0
      %v3350 = vsel %vm1448, %v3343, 0
      %3352 = vmatprep.subr.mxu0 0.0
      %3353 = vmatpush1.xpose.msra.mxu0 %v3348
      %3354 = vmatprep.subr.mxu0 0.0
      %3355 = vmatpush1.xpose.msra.mxu0 %v3350
      %3356 = vmatprep.subr.mxu0 0.0
      %3357 = vmatpush1.xpose.msra.mxu0 0.0
      %3358 = vmatprep.subr.mxu0 0.0
      %3359 = vmatpush1.xpose.msra.mxu0 0.0
      %3360 = vmatprep.subr.mxu0 0.0
      %3361 = vmatpush1.xpose.msra.mxu0 0.0
      %3362 = vmatprep.subr.mxu0 0.0
      %3363 = vmatpush1.xpose.msra.mxu0 0.0
      %3364 = vmatprep.subr.mxu0 0.0
      %3365 = vmatpush1.xpose.msra.mxu0 0.0
      %3366 = vmatprep.subr.mxu0 0.0
      %3367 = vmatpush1.xpose.msra.mxu0 0.0
      %3368 = vmatprep.subr.mxu0 0.0
      %3369 = vmatpush1.xpose.msra.mxu0 0.0
      %3370 = vmatprep.subr.mxu0 0.0
      %3371 = vmatpush1.xpose.msra.mxu0 0.0
      %3372 = vmatprep.subr.mxu0 0.0
      %3373 = vmatpush1.xpose.msra.mxu0 0.0
      %3374 = vmatprep.subr.mxu0 0.0
      %3375 = vmatpush1.xpose.msra.mxu0 0.0
      %3376 = vmatprep.subr.mxu0 0.0
      %3377 = vmatpush1.xpose.msra.mxu0 0.0
      %3378 = vmatprep.subr.mxu0 0.0
      %3379 = vmatpush1.xpose.msra.mxu0 0.0
      %3380 = vmatprep.subr.mxu0 0.0
      %3381 = vmatpush1.xpose.msra.mxu0 0.0
      %3382 = vmatprep.subr.mxu0 0.0
      %3383 = vmatpush1.xpose.msra.mxu0 0.0
      %3384 = vmatprep.subr.mxu0 0.0
      %3385 = vmatpush1.xpose.msra.mxu0 0.0
      %3386 = vmatprep.subr.mxu0 0.0
      %3387 = vmatpush1.xpose.msra.mxu0 0.0
      %3388 = vmatprep.subr.mxu0 0.0
      %3389 = vmatpush1.xpose.msra.mxu0 0.0
      %3390 = vmatprep.subr.mxu0 0.0
      %3391 = vmatpush1.xpose.msra.mxu0 0.0
      %3392 = vmatprep.subr.mxu0 0.0
      %3393 = vmatpush1.xpose.msra.mxu0 0.0
      %3394 = vmatprep.subr.mxu0 0.0
      %3395 = vmatpush1.xpose.msra.mxu0 0.0
      %3396 = vmatprep.subr.mxu0 0.0
      %3397 = vmatpush1.xpose.msra.mxu0 0.0
      %3398 = vmatprep.subr.mxu0 0.0
      %3399 = vmatpush1.xpose.msra.mxu0 0.0
      %3400 = vmatprep.subr.mxu0 0.0
      %3401 = vmatpush1.xpose.msra.mxu0 0.0
      %3402 = vmatprep.subr.mxu0 0.0
      %3403 = vmatpush1.xpose.msra.mxu0 0.0
      %3404 = vmatprep.subr.mxu0 0.0
      %3405 = vmatpush1.xpose.msra.mxu0 0.0
      %3406 = vmatprep.subr.mxu0 0.0
      %3407 = vmatpush1.xpose.msra.mxu0 0.0
      %3408 = vmatprep.subr.mxu0 0.0
      %3409 = vmatpush1.xpose.msra.mxu0 0.0
      %3410 = vmatprep.subr.mxu0 0.0
      %3411 = vmatpush1.xpose.msra.mxu0 0.0
      %3412 = vmatprep.subr.mxu0 0.0
      %3413 = vmatpush1.xpose.msra.mxu0 0.0
      %3414 = vmatprep.subr.mxu0 0.0
      %3415 = vmatpush1.xpose.msra.mxu0 0.0
      %3416 = vmatprep.mubr.f32.mxu0 0.0
      %3417 = vmatmul.mubr.f32.gmra.mrb[0].mxu0 %v3344
      %v3418 = vpop.f32.mrb[0].mxu0
      %v3419 = vadd.f32 0.0, %v3418
      %v3420 = vpop.f32.mrb[0].mxu0
      %3421 = vmatprep.mubr.f32.mxu0 0.0
      %3422 = vmatmul.mubr.f32.gmra.mrb[0].mxu0 %v3346
      %v3423 = vpop.f32.mrb[0].mxu0
      %v3424 = vadd.f32 0.0, %v3423
      %v3425 = vpop.f32.mrb[0].mxu0
      %3426 = vdwg.mxu0
      %v3427 = vmul.f32 %v3419, 0.35355338
      %v3428 = vmul.f32 %v3424, 0.35355338
      %v3429 = vadd.f32 %v3427, %v1237
      %v3430 = vadd.f32 %v3428, %v1238
      %v3431 = vsel %vm3004, %v3429, -inf
      %3432 = vmax.xlane.f32.xlu0 %v3431
      %v3433 = vpop.xlane.xlu0 %3432
      %v3434 = vsel %vm3008, %v3430, -inf
      %3435 = vmax.xlane.f32.xlu0 %v3434
      %v3436 = vpop.xlane.xlu0 %3435
      %v3437 = vsub.f32 %v3429, %v3433
      %v3438 = vsub.f32 %v3430, %v3436
      %v3439 = vmul.f32 %v3437, 1.442695
      %v3440 = vpow.pop %v3439
      %v3441 = vmul.f32 %v3438, 1.442695
      %v3442 = vpow.pop %v3441
      %v3443 = vsel %vm3004, %v3440, 0.0
      %3444 = vadd.xlane.f32.xlu0 %v3443
      %v3445 = vpop.xlane.xlu0 %3444
      %v3446 = vsel %vm3008, %v3442, 0.0
      %3447 = vadd.xlane.f32.xlu0 %v3446
      %v3448 = vpop.xlane.xlu0 %3447
      %v3449 = vrcp.pop %v3445
      %v3450 = vrcp.pop %v3448
      %v3451 = vmul.f32 %v3440, %v3449
      %v3452 = vmul.f32 %v3442, %v3450
      %3453 = vrot.lane.b32.xlu0 %v2905, 48
      %v3454 = vpop.permute.xlu0 %3453
      %3455 = vrot.lane.b32.xlu0 %v2908, 48
      %v3456 = vpop.permute.xlu0 %3455
      %v3459 = vsel %vm3004, %v3451, 0
      %v3462 = vsel %vm3004, %v3452, 0
      %v3464 = vsel %vm3039, %v3456, 0
      %3466 = vmatprep.subr.mxu0 0.0
      %3467 = vmatpush1.msra.mxu0 %v3454
      %3468 = vmatprep.subr.mxu0 0.0
      %3469 = vmatpush1.msra.mxu0 %v3464
      %3470 = vmatprep.subr.mxu0 0.0
      %3471 = vmatpush1.msra.mxu0 0.0
      %3472 = vmatprep.subr.mxu0 0.0
      %3473 = vmatpush1.msra.mxu0 0.0
      %3474 = vmatprep.subr.mxu0 0.0
      %3475 = vmatpush1.msra.mxu0 0.0
      %3476 = vmatprep.subr.mxu0 0.0
      %3477 = vmatpush1.msra.mxu0 0.0
      %3478 = vmatprep.subr.mxu0 0.0
      %3479 = vmatpush1.msra.mxu0 0.0
      %3480 = vmatprep.subr.mxu0 0.0
      %3481 = vmatpush1.msra.mxu0 0.0
      %3482 = vmatprep.subr.mxu0 0.0
      %3483 = vmatpush1.msra.mxu0 0.0
      %3484 = vmatprep.subr.mxu0 0.0
      %3485 = vmatpush1.msra.mxu0 0.0
      %3486 = vmatprep.subr.mxu0 0.0
      %3487 = vmatpush1.msra.mxu0 0.0
      %3488 = vmatprep.subr.mxu0 0.0
      %3489 = vmatpush1.msra.mxu0 0.0
      %3490 = vmatprep.subr.mxu0 0.0
      %3491 = vmatpush1.msra.mxu0 0.0
      %3492 = vmatprep.subr.mxu0 0.0
      %3493 = vmatpush1.msra.mxu0 0.0
      %3494 = vmatprep.subr.mxu0 0.0
      %3495 = vmatpush1.msra.mxu0 0.0
      %3496 = vmatprep.subr.mxu0 0.0
      %3497 = vmatpush1.msra.mxu0 0.0
      %3498 = vmatprep.subr.mxu0 0.0
      %3499 = vmatpush1.msra.mxu0 0.0
      %3500 = vmatprep.subr.mxu0 0.0
      %3501 = vmatpush1.msra.mxu0 0.0
      %3502 = vmatprep.subr.mxu0 0.0
      %3503 = vmatpush1.msra.mxu0 0.0
      %3504 = vmatprep.subr.mxu0 0.0
      %3505 = vmatpush1.msra.mxu0 0.0
      %3506 = vmatprep.subr.mxu0 0.0
      %3507 = vmatpush1.msra.mxu0 0.0
      %3508 = vmatprep.subr.mxu0 0.0
      %3509 = vmatpush1.msra.mxu0 0.0
      %3510 = vmatprep.subr.mxu0 0.0
      %3511 = vmatpush1.msra.mxu0 0.0
      %3512 = vmatprep.subr.mxu0 0.0
      %3513 = vmatpush1.msra.mxu0 0.0
      %3514 = vmatprep.subr.mxu0 0.0
      %3515 = vmatpush1.msra.mxu0 0.0
      %3516 = vmatprep.subr.mxu0 0.0
      %3517 = vmatpush1.msra.mxu0 0.0
      %3518 = vmatprep.subr.mxu0 0.0
      %3519 = vmatpush1.msra.mxu0 0.0
      %3520 = vmatprep.subr.mxu0 0.0
      %3521 = vmatpush1.msra.mxu0 0.0
      %3522 = vmatprep.subr.mxu0 0.0
      %3523 = vmatpush1.msra.mxu0 0.0
      %3524 = vmatprep.subr.mxu0 0.0
      %3525 = vmatpush1.msra.mxu0 0.0
      %3526 = vmatprep.subr.mxu0 0.0
      %3527 = vmatpush1.msra.mxu0 0.0
      %3528 = vmatprep.subr.mxu0 0.0
      %3529 = vmatpush1.msra.mxu0 0.0
      %3530 = vmatprep.mubr.f32.mxu0 0.0
      %3531 = vmatmul.mubr.f32.gmra.mrb[0].mxu0 %v3459
      %v3532 = vpop.f32.mrb[0].mxu0
      %v3533 = vadd.f32 0.0, %v3532
      %v3534 = vpop.f32.mrb[0].mxu0
      %3535 = vmatprep.mubr.f32.mxu0 0.0
      %3536 = vmatmul.mubr.f32.gmra.mrb[0].mxu0 %v3462
      %v3537 = vpop.f32.mrb[0].mxu0
      %v3538 = vadd.f32 0.0, %v3537
      %v3539 = vpop.f32.mrb[0].mxu0
      %3540 = vdwg.mxu0
      %3543 = vrot.lane.b32.xlu0 %v3533, 16
      %v3544 = vpop.permute.xlu0 %3543
      %3545 = vrot.lane.b32.xlu0 %v3538, 16
      %v3546 = vpop.permute.xlu0 %3545
      %3549 = vst.msk [vmem:[#allocation3] sm:$0xff] %vm2199, %v3544
      %vm3550 = vcmask 189568
      %3551 = vst.msk [vmem:[#allocation3 + $0x8] sm:$0x3] %vm3550, %v3546
      %3552 = vrot.lane.b32.xlu0 %v2905, 104
      %v3553 = vpop.permute.xlu0 %3552
      %3554 = vrot.lane.b32.xlu0 %v2908, 104
      %v3555 = vpop.permute.xlu0 %3554
      %3556 = vrot.lane.b32.xlu0 %v2905, 72
      %v3557 = vpop.permute.xlu0 %3556
      %3558 = vrot.lane.b32.xlu0 %v2908, 72
      %v3559 = vpop.permute.xlu0 %3558
      %v3560 = vsel %vm1448, %v3553, 0
      %v3562 = vsel %vm1448, %v3555, 0
      %v3564 = vsel %vm1448, %v3557, 0
      %v3566 = vsel %vm1448, %v3559, 0
      %3568 = vmatprep.subr.mxu0 0.0
      %3569 = vmatpush1.xpose.msra.mxu0 %v3564
      %3570 = vmatprep.subr.mxu0 0.0
      %3571 = vmatpush1.xpose.msra.mxu0 %v3566
      %3572 = vmatprep.subr.mxu0 0.0
      %3573 = vmatpush1.xpose.msra.mxu0 0.0
      %3574 = vmatprep.subr.mxu0 0.0
      %3575 = vmatpush1.xpose.msra.mxu0 0.0
      %3576 = vmatprep.subr.mxu0 0.0
      %3577 = vmatpush1.xpose.msra.mxu0 0.0
      %3578 = vmatprep.subr.mxu0 0.0
      %3579 = vmatpush1.xpose.msra.mxu0 0.0
      %3580 = vmatprep.subr.mxu0 0.0
      %3581 = vmatpush1.xpose.msra.mxu0 0.0
      %3582 = vmatprep.subr.mxu0 0.0
      %3583 = vmatpush1.xpose.msra.mxu0 0.0
      %3584 = vmatprep.subr.mxu0 0.0
      %3585 = vmatpush1.xpose.msra.mxu0 0.0
      %3586 = vmatprep.subr.mxu0 0.0
      %3587 = vmatpush1.xpose.msra.mxu0 0.0
      %3588 = vmatprep.subr.mxu0 0.0
      %3589 = vmatpush1.xpose.msra.mxu0 0.0
      %3590 = vmatprep.subr.mxu0 0.0
      %3591 = vmatpush1.xpose.msra.mxu0 0.0
      %3592 = vmatprep.subr.mxu0 0.0
      %3593 = vmatpush1.xpose.msra.mxu0 0.0
      %3594 = vmatprep.subr.mxu0 0.0
      %3595 = vmatpush1.xpose.msra.mxu0 0.0
      %3596 = vmatprep.subr.mxu0 0.0
      %3597 = vmatpush1.xpose.msra.mxu0 0.0
      %3598 = vmatprep.subr.mxu0 0.0
      %3599 = vmatpush1.xpose.msra.mxu0 0.0
      %3600 = vmatprep.subr.mxu0 0.0
      %3601 = vmatpush1.xpose.msra.mxu0 0.0
      %3602 = vmatprep.subr.mxu0 0.0
      %3603 = vmatpush1.xpose.msra.mxu0 0.0
      %3604 = vmatprep.subr.mxu0 0.0
      %3605 = vmatpush1.xpose.msra.mxu0 0.0
      %3606 = vmatprep.subr.mxu0 0.0
      %3607 = vmatpush1.xpose.msra.mxu0 0.0
      %3608 = vmatprep.subr.mxu0 0.0
      %3609 = vmatpush1.xpose.msra.mxu0 0.0
      %3610 = vmatprep.subr.mxu0 0.0
      %3611 = vmatpush1.xpose.msra.mxu0 0.0
      %3612 = vmatprep.subr.mxu0 0.0
      %3613 = vmatpush1.xpose.msra.mxu0 0.0
      %3614 = vmatprep.subr.mxu0 0.0
      %3615 = vmatpush1.xpose.msra.mxu0 0.0
      %3616 = vmatprep.subr.mxu0 0.0
      %3617 = vmatpush1.xpose.msra.mxu0 0.0
      %3618 = vmatprep.subr.mxu0 0.0
      %3619 = vmatpush1.xpose.msra.mxu0 0.0
      %3620 = vmatprep.subr.mxu0 0.0
      %3621 = vmatpush1.xpose.msra.mxu0 0.0
      %3622 = vmatprep.subr.mxu0 0.0
      %3623 = vmatpush1.xpose.msra.mxu0 0.0
      %3624 = vmatprep.subr.mxu0 0.0
      %3625 = vmatpush1.xpose.msra.mxu0 0.0
      %3626 = vmatprep.subr.mxu0 0.0
      %3627 = vmatpush1.xpose.msra.mxu0 0.0
      %3628 = vmatprep.subr.mxu0 0.0
      %3629 = vmatpush1.xpose.msra.mxu0 0.0
      %3630 = vmatprep.subr.mxu0 0.0
      %3631 = vmatpush1.xpose.msra.mxu0 0.0
      %3632 = vmatprep.mubr.f32.mxu0 0.0
      %3633 = vmatmul.mubr.f32.gmra.mrb[0].mxu0 %v3560
      %v3634 = vpop.f32.mrb[0].mxu0
      %v3635 = vadd.f32 0.0, %v3634
      %v3636 = vpop.f32.mrb[0].mxu0
      %3637 = vmatprep.mubr.f32.mxu0 0.0
      %3638 = vmatmul.mubr.f32.gmra.mrb[0].mxu0 %v3562
      %v3639 = vpop.f32.mrb[0].mxu0
      %v3640 = vadd.f32 0.0, %v3639
      %v3641 = vpop.f32.mrb[0].mxu0
      %3642 = vdwg.mxu0
      %v3643 = vmul.f32 %v3635, 0.35355338
      %v3644 = vmul.f32 %v3640, 0.35355338
      %v3645 = vadd.f32 %v3643, %v1237
      %v3646 = vadd.f32 %v3644, %v1238
      %v3647 = vsel %vm3004, %v3645, -inf
      %3648 = vmax.xlane.f32.xlu0 %v3647
      %v3649 = vpop.xlane.xlu0 %3648
      %v3650 = vsel %vm3008, %v3646, -inf
      %3651 = vmax.xlane.f32.xlu0 %v3650
      %v3652 = vpop.xlane.xlu0 %3651
      %v3653 = vsub.f32 %v3645, %v3649
      %v3654 = vsub.f32 %v3646, %v3652
      %v3655 = vmul.f32 %v3653, 1.442695
      %v3656 = vpow.pop %v3655
      %v3657 = vmul.f32 %v3654, 1.442695
      %v3658 = vpow.pop %v3657
      %v3659 = vsel %vm3004, %v3656, 0.0
      %3660 = vadd.xlane.f32.xlu0 %v3659
      %v3661 = vpop.xlane.xlu0 %3660
      %v3662 = vsel %vm3008, %v3658, 0.0
      %3663 = vadd.xlane.f32.xlu0 %v3662
      %v3664 = vpop.xlane.xlu0 %3663
      %v3665 = vrcp.pop %v3661
      %v3666 = vrcp.pop %v3664
      %v3667 = vmul.f32 %v3656, %v3665
      %v3668 = vmul.f32 %v3658, %v3666
      %3669 = vrot.lane.b32.xlu0 %v2905, 40
      %v3670 = vpop.permute.xlu0 %3669
      %3671 = vrot.lane.b32.xlu0 %v2908, 40
      %v3672 = vpop.permute.xlu0 %3671
      %v3675 = vsel %vm3004, %v3667, 0
      %v3678 = vsel %vm3004, %v3668, 0
      %v3680 = vsel %vm3039, %v3672, 0
      %3682 = vmatprep.subr.mxu0 0.0
      %3683 = vmatpush1.msra.mxu0 %v3670
      %3684 = vmatprep.subr.mxu0 0.0
      %3685 = vmatpush1.msra.mxu0 %v3680
      %3686 = vmatprep.subr.mxu0 0.0
      %3687 = vmatpush1.msra.mxu0 0.0
      %3688 = vmatprep.subr.mxu0 0.0
      %3689 = vmatpush1.msra.mxu0 0.0
      %3690 = vmatprep.subr.mxu0 0.0
      %3691 = vmatpush1.msra.mxu0 0.0
      %3692 = vmatprep.subr.mxu0 0.0
      %3693 = vmatpush1.msra.mxu0 0.0
      %3694 = vmatprep.subr.mxu0 0.0
      %3695 = vmatpush1.msra.mxu0 0.0
      %3696 = vmatprep.subr.mxu0 0.0
      %3697 = vmatpush1.msra.mxu0 0.0
      %3698 = vmatprep.subr.mxu0 0.0
      %3699 = vmatpush1.msra.mxu0 0.0
      %3700 = vmatprep.subr.mxu0 0.0
      %3701 = vmatpush1.msra.mxu0 0.0
      %3702 = vmatprep.subr.mxu0 0.0
      %3703 = vmatpush1.msra.mxu0 0.0
      %3704 = vmatprep.subr.mxu0 0.0
      %3705 = vmatpush1.msra.mxu0 0.0
      %3706 = vmatprep.subr.mxu0 0.0
      %3707 = vmatpush1.msra.mxu0 0.0
      %3708 = vmatprep.subr.mxu0 0.0
      %3709 = vmatpush1.msra.mxu0 0.0
      %3710 = vmatprep.subr.mxu0 0.0
      %3711 = vmatpush1.msra.mxu0 0.0
      %3712 = vmatprep.subr.mxu0 0.0
      %3713 = vmatpush1.msra.mxu0 0.0
      %3714 = vmatprep.subr.mxu0 0.0
      %3715 = vmatpush1.msra.mxu0 0.0
      %3716 = vmatprep.subr.mxu0 0.0
      %3717 = vmatpush1.msra.mxu0 0.0
      %3718 = vmatprep.subr.mxu0 0.0
      %3719 = vmatpush1.msra.mxu0 0.0
      %3720 = vmatprep.subr.mxu0 0.0
      %3721 = vmatpush1.msra.mxu0 0.0
      %3722 = vmatprep.subr.mxu0 0.0
      %3723 = vmatpush1.msra.mxu0 0.0
      %3724 = vmatprep.subr.mxu0 0.0
      %3725 = vmatpush1.msra.mxu0 0.0
      %3726 = vmatprep.subr.mxu0 0.0
      %3727 = vmatpush1.msra.mxu0 0.0
      %3728 = vmatprep.subr.mxu0 0.0
      %3729 = vmatpush1.msra.mxu0 0.0
      %3730 = vmatprep.subr.mxu0 0.0
      %3731 = vmatpush1.msra.mxu0 0.0
      %3732 = vmatprep.subr.mxu0 0.0
      %3733 = vmatpush1.msra.mxu0 0.0
      %3734 = vmatprep.subr.mxu0 0.0
      %3735 = vmatpush1.msra.mxu0 0.0
      %3736 = vmatprep.subr.mxu0 0.0
      %3737 = vmatpush1.msra.mxu0 0.0
      %3738 = vmatprep.subr.mxu0 0.0
      %3739 = vmatpush1.msra.mxu0 0.0
      %3740 = vmatprep.subr.mxu0 0.0
      %3741 = vmatpush1.msra.mxu0 0.0
      %3742 = vmatprep.subr.mxu0 0.0
      %3743 = vmatpush1.msra.mxu0 0.0
      %3744 = vmatprep.subr.mxu0 0.0
      %3745 = vmatpush1.msra.mxu0 0.0
      %3746 = vmatprep.mubr.f32.mxu0 0.0
      %3747 = vmatmul.mubr.f32.gmra.mrb[0].mxu0 %v3675
      %v3748 = vpop.f32.mrb[0].mxu0
      %v3749 = vadd.f32 0.0, %v3748
      %v3750 = vpop.f32.mrb[0].mxu0
      %3751 = vmatprep.mubr.f32.mxu0 0.0
      %3752 = vmatmul.mubr.f32.gmra.mrb[0].mxu0 %v3678
      %v3753 = vpop.f32.mrb[0].mxu0
      %v3754 = vadd.f32 0.0, %v3753
      %v3755 = vpop.f32.mrb[0].mxu0
      %3756 = vdwg.mxu0
      %3759 = vrot.lane.b32.xlu0 %v3749, 24
      %v3760 = vpop.permute.xlu0 %3759
      %3761 = vrot.lane.b32.xlu0 %v3754, 24
      %v3762 = vpop.permute.xlu0 %3761
      %3765 = vst.msk [vmem:[#allocation3] sm:$0xff] %vm2458, %v3760
      %vm3766 = vcmask 255168
      %3767 = vst.msk [vmem:[#allocation3 + $0x8] sm:$0x3] %vm3766, %v3762
      %v3768 = vld [vmem:[#allocation3] sm:$0xff]
      %v3769 = vld [vmem:[#allocation3 + $0x8] sm:$0x3]
      %v3770 = vpack.c.bf16 %v3769, %v3768
      %v3772 = vlaneseq
      %v3773 = vshrl.u32 %v3772, 7
      %v3774 = vsub.s32 0, %v3773
      %v3775 = vrot.slane %v1283, %v3774
      %v3781 = vunpack.c.l.b16 %v1279
      %v3782 = vunpack.c.l.b16 %v1280
      %v3783 = vunpack.c.l.b16 %v1281
      %v3784 = vunpack.c.l.b16 %v1282
      %v3785 = vpack.c.b16 %v3782, %v3781
      %v3786 = vpack.c.b16 %v3784, %v3783
      %v3790 = vsel %vm1309, %v3770, 0
      %3792 = vmatprep.subr.bf16.mxu0 0
      %3793 = vmatpush1.bf16.msra.mxu0 %v3785
      %3794 = vmatprep.subr.bf16.mxu0 0
      %3795 = vmatpush1.bf16.msra.mxu0 %v3786
      %3796 = vmatprep.subr.bf16.mxu0 0
      %3797 = vmatpush1.bf16.msra.mxu0 0
      %3798 = vmatprep.subr.bf16.mxu0 0
      %3799 = vmatpush1.bf16.msra.mxu0 0
      %3800 = vmatprep.subr.bf16.mxu0 0
      %3801 = vmatpush1.bf16.msra.mxu0 0
      %3802 = vmatprep.subr.bf16.mxu0 0
      %3803 = vmatpush1.bf16.msra.mxu0 0
      %3804 = vmatprep.subr.bf16.mxu0 0
      %3805 = vmatpush1.bf16.msra.mxu0 0
      %3806 = vmatprep.subr.bf16.mxu0 0
      %3807 = vmatpush1.bf16.msra.mxu0 0
      %3808 = vmatprep.subr.bf16.mxu0 0
      %3809 = vmatpush1.bf16.msra.mxu0 0
      %3810 = vmatprep.subr.bf16.mxu0 0
      %3811 = vmatpush1.bf16.msra.mxu0 0
      %3812 = vmatprep.subr.bf16.mxu0 0
      %3813 = vmatpush1.bf16.msra.mxu0 0
      %3814 = vmatprep.subr.bf16.mxu0 0
      %3815 = vmatpush1.bf16.msra.mxu0 0
      %3816 = vmatprep.subr.bf16.mxu0 0
      %3817 = vmatpush1.bf16.msra.mxu0 0
      %3818 = vmatprep.subr.bf16.mxu0 0
      %3819 = vmatpush1.bf16.msra.mxu0 0
      %3820 = vmatprep.subr.bf16.mxu0 0
      %3821 = vmatpush1.bf16.msra.mxu0 0
      %3822 = vmatprep.subr.bf16.mxu0 0
      %3823 = vmatpush1.bf16.msra.mxu0 0
      %3824 = vmatprep.mubr.bf16.mxu0 0
      %3825 = vmatmul.mubr.bf16.gmra.mrb[0].mxu0 %v3790
      %v3826 = vpop.f32.mrb[0].mxu0
      %v3827 = vadd.f32 %v3775, %v3826
      %v3828 = vpop.f32.mrb[0].mxu0
      %v3829 = vpop.f32.mrb[0].mxu0
      %v3830 = vadd.f32 %v3775, %v3829
      %v3831 = vpop.f32.mrb[0].mxu0
      %3832 = vdwg.mxu0
      %v3835 = vrot.slane %v3827, 6
      %v3836 = vrot.slane %v3830, 6
      %v3837 = vsel %vm3039, %v3835, %v3836
      %v3840 = vadd.f32 %v2805, %v3835
      %v3841 = vadd.f32 %v2806, %v3837
      %v3842 = vsel %vm2807, %v3840, 0.0
      %3843 = vadd.xlane.f32.xlu0 %v3842
      %v3844 = vpop.xlane.xlu0 %3843
      %v3845 = vsel %vm1316, %v3841, 0.0
      %3846 = vadd.xlane.f32.xlu0 %v3845
      %v3847 = vpop.xlane.xlu0 %3846
      %v3848 = vmul.f32 %v3844, %v1320
      %v3849 = vmul.f32 %v3847, %v1320
      %v3850 = vsub.f32 %v3840, %v3848
      %v3851 = vsub.f32 %v3841, %v3849
      %v3852 = vmul.f32 %v3850, %v3850
      %v3853 = vmul.f32 %v3851, %v3851
      %v3854 = vsel %vm2807, %v3852, 0.0
      %3855 = vadd.xlane.f32.xlu0 %v3854
      %v3856 = vpop.xlane.xlu0 %3855
      %v3857 = vsel %vm1316, %v3853, 0.0
      %3858 = vadd.xlane.f32.xlu0 %v3857
      %v3859 = vpop.xlane.xlu0 %3858
      %v3860 = vmul.f32 %v3856, %v1320
      %v3861 = vmul.f32 %v3859, %v1320
      %v3862 = vadd.f32 %v3860, 1e-05
      %v3863 = vadd.f32 %v3861, 1e-05
      %v3864 = vrsqrt.pop %v3862
      %v3865 = vrsqrt.pop %v3863
      %v3866 = vmul.f32 %v3850, %v3864
      %v3867 = vmul.f32 %v3851, %v3865
      %v3868 = vlaneseq
      %v3869 = vshrl.u32 %v3868, 7
      %v3870 = vsub.s32 2, %v3869
      %v3871 = vrot.slane %v1273, %v3870
      %v3872 = vmul.f32 %v3866, %v3871
      %v3873 = vmul.f32 %v3867, %v3871
      %v3874 = vlaneseq
      %v3875 = vshrl.u32 %v3874, 7
      %v3876 = vsub.s32 3, %v3875
      %v3877 = vrot.slane %v1273, %v3876
      %v3878 = vadd.f32 %v3872, %v3877
      %v3879 = vadd.f32 %v3873, %v3877
      %v3880 = vpack.c.bf16 %v3879, %v3878
      %v3882 = vlaneseq
      %v3883 = vshrl.u32 %v3882, 7
      %v3884 = vsub.s32 0, %v3883
      %v3885 = vrot.slane %v1288, %v3884
      %v3888 = vrot.slane %v3880, 1
      %v3893 = vunpack.c.l.b16 %v1284
      %v3894 = vunpack.c.l.b16 %v1285
      %v3895 = vunpack.c.l.b16 %v1286
      %v3896 = vunpack.c.l.b16 %v1287
      %v3897 = vpack.c.b16 %v3894, %v3893
      %v3898 = vpack.c.b16 %v3896, %v3895
      %v3902 = vsel %vm1309, %v3888, 0
      %3904 = vmatprep.subr.bf16.mxu0 0
      %3905 = vmatpush1.bf16.msra.mxu0 %v3897
      %3906 = vmatprep.subr.bf16.mxu0 0
      %3907 = vmatpush1.bf16.msra.mxu0 %v3898
      %3908 = vmatprep.subr.bf16.mxu0 0
      %3909 = vmatpush1.bf16.msra.mxu0 0
      %3910 = vmatprep.subr.bf16.mxu0 0
      %3911 = vmatpush1.bf16.msra.mxu0 0
      %3912 = vmatprep.subr.bf16.mxu0 0
      %3913 = vmatpush1.bf16.msra.mxu0 0
      %3914 = vmatprep.subr.bf16.mxu0 0
      %3915 = vmatpush1.bf16.msra.mxu0 0
      %3916 = vmatprep.subr.bf16.mxu0 0
      %3917 = vmatpush1.bf16.msra.mxu0 0
      %3918 = vmatprep.subr.bf16.mxu0 0
      %3919 = vmatpush1.bf16.msra.mxu0 0
      %3920 = vmatprep.subr.bf16.mxu0 0
      %3921 = vmatpush1.bf16.msra.mxu0 0
      %3922 = vmatprep.subr.bf16.mxu0 0
      %3923 = vmatpush1.bf16.msra.mxu0 0
      %3924 = vmatprep.subr.bf16.mxu0 0
      %3925 = vmatpush1.bf16.msra.mxu0 0
      %3926 = vmatprep.subr.bf16.mxu0 0
      %3927 = vmatpush1.bf16.msra.mxu0 0
      %3928 = vmatprep.subr.bf16.mxu0 0
      %3929 = vmatpush1.bf16.msra.mxu0 0
      %3930 = vmatprep.subr.bf16.mxu0 0
      %3931 = vmatpush1.bf16.msra.mxu0 0
      %3932 = vmatprep.subr.bf16.mxu0 0
      %3933 = vmatpush1.bf16.msra.mxu0 0
      %3934 = vmatprep.subr.bf16.mxu0 0
      %3935 = vmatpush1.bf16.msra.mxu0 0
      %3936 = vmatprep.mubr.bf16.mxu0 0
      %3937 = vmatmul.mubr.bf16.gmra.mrb[0].mxu0 %v3902
      %v3938 = vpop.f32.mrb[0].mxu0
      %v3939 = vadd.f32 %v3885, %v3938
      %v3940 = vpop.f32.mrb[0].mxu0
      %v3941 = vpop.f32.mrb[0].mxu0
      %v3942 = vadd.f32 %v3885, %v3941
      %v3943 = vpop.f32.mrb[0].mxu0
      %3944 = vdwg.mxu0
      %v3945 = vmul.f32 %v3939, %v3939
      %v3946 = vmul.f32 %v3942, %v3942
      %v3947 = vmul.f32 %v3939, %v3945
      %v3948 = vmul.f32 %v3942, %v3946
      %v3949 = vmul.f32 %v3947, 0.044715
      %v3950 = vmul.f32 %v3948, 0.044715
      %v3951 = vadd.f32 %v3939, %v3949
      %v3952 = vadd.f32 %v3942, %v3950
      %v3953 = vmul.f32 %v3951, 0.7978846
      %v3954 = vmul.f32 %v3952, 0.7978846
      %v3955 = vtanh.pop %v3953
      %v3956 = vtanh.pop %v3954
      %v3957 = vadd.f32 %v3955, 1.0
      %v3958 = vadd.f32 %v3956, 1.0
      %v3959 = vmul.f32 %v3957, 0.5
      %v3960 = vmul.f32 %v3958, 0.5
      %v3961 = vmul.f32 %v3939, %v3959
      %v3962 = vmul.f32 %v3942, %v3960
      %v3963 = vpack.c.bf16 %v3962, %v3961
      %v3980 = vunpack.c.l.b16 %v1289
      %v3981 = vunpack.c.l.b16 %v1290
      %v3982 = vunpack.c.l.b16 %v1291
      %v3983 = vunpack.c.l.b16 %v1292
      %v3984 = vunpack.c.l.b16 %v1293
      %v3985 = vunpack.c.l.b16 %v1294
      %v3986 = vunpack.c.l.b16 %v1295
      %v3987 = vunpack.c.l.b16 %v1296
      %v3988 = vunpack.c.l.b16 %v1297
      %v3989 = vunpack.c.l.b16 %v1298
      %v3990 = vunpack.c.l.b16 %v1299
      %v3991 = vunpack.c.l.b16 %v1300
      %v3992 = vunpack.c.l.b16 %v1301
      %v3993 = vunpack.c.l.b16 %v1302
      %v3994 = vunpack.c.l.b16 %v1303
      %v3995 = vunpack.c.l.b16 %v1304
      %v3996 = vpack.c.b16 %v3981, %v3980
      %v3997 = vpack.c.b16 %v3983, %v3982
      %v3998 = vpack.c.b16 %v3985, %v3984
      %v3999 = vpack.c.b16 %v3987, %v3986
      %v4000 = vpack.c.b16 %v3989, %v3988
      %v4001 = vpack.c.b16 %v3991, %v3990
      %v4002 = vpack.c.b16 %v3993, %v3992
      %v4003 = vpack.c.b16 %v3995, %v3994
      %4012 = vmatprep.subr.bf16.mxu0 0
      %4013 = vmatpush1.bf16.msra.mxu0 %v3996
      %4014 = vmatprep.subr.bf16.mxu0 0
      %4015 = vmatpush1.bf16.msra.mxu0 %v3997
      %4016 = vmatprep.subr.bf16.mxu0 0
      %4017 = vmatpush1.bf16.msra.mxu0 %v3998
      %4018 = vmatprep.subr.bf16.mxu0 0
      %4019 = vmatpush1.bf16.msra.mxu0 %v3999
      %4020 = vmatprep.subr.bf16.mxu0 0
      %4021 = vmatpush1.bf16.msra.mxu0 %v4000
      %4022 = vmatprep.subr.bf16.mxu0 0
      %4023 = vmatpush1.bf16.msra.mxu0 %v4001
      %4024 = vmatprep.subr.bf16.mxu0 0
      %4025 = vmatpush1.bf16.msra.mxu0 %v4002
      %4026 = vmatprep.subr.bf16.mxu0 0
      %4027 = vmatpush1.bf16.msra.mxu0 %v4003
      %4028 = vmatprep.subr.bf16.mxu0 0
      %4029 = vmatpush1.bf16.msra.mxu0 0
      %4030 = vmatprep.subr.bf16.mxu0 0
      %4031 = vmatpush1.bf16.msra.mxu0 0
      %4032 = vmatprep.subr.bf16.mxu0 0
      %4033 = vmatpush1.bf16.msra.mxu0 0
      %4034 = vmatprep.subr.bf16.mxu0 0
      %4035 = vmatpush1.bf16.msra.mxu0 0
      %4036 = vmatprep.subr.bf16.mxu0 0
      %4037 = vmatpush1.bf16.msra.mxu0 0
      %4038 = vmatprep.subr.bf16.mxu0 0
      %4039 = vmatpush1.bf16.msra.mxu0 0
      %4040 = vmatprep.subr.bf16.mxu0 0
      %4041 = vmatpush1.bf16.msra.mxu0 0
      %4042 = vmatprep.subr.bf16.mxu0 0
      %4043 = vmatpush1.bf16.msra.mxu0 0
      %4044 = vmatprep.mubr.bf16.mxu0 0
      %4045 = vmatmul.mubr.bf16.gmra.mrb[0].mxu0 %v3963
      %v4046 = vpop.f32.mrb[0].mxu0
      %v4047 = vadd.f32 0.0, %v4046
      %v4048 = vpop.f32.mrb[0].mxu0
      %v4049 = vpop.f32.mrb[0].mxu0
      %v4050 = vadd.f32 0.0, %v4049
      %v4051 = vpop.f32.mrb[0].mxu0
      %4052 = vdwg.mxu0
      %v4055 = vrot.slane %v4047, 6
      %v4056 = vrot.slane %v4050, 6
      %v4057 = vsel %vm3039, %v4055, %v4056
      %v4060 = vadd.f32 %v3840, %v4055
      %v4061 = vadd.f32 %v3841, %v4057
      %v4063 = vlaneseq
      %v4064 = vshrl.u32 %v4063, 7
      %v4065 = vsub.s32 0, %v4064
      %v4066 = vrot.slane %v1305, %v4065
      %v4068 = vadd.f32 %v4060, %v4066
      %v4069 = vadd.f32 %v4061, %v4066
      %vm4072 = vcmask 1045504
      %v4073 = vrot.slane %v4068, 2
      %v4074 = vrot.slane %v4069, 2
      %v4075 = vsel %vm4072, %v4073, %v4074
      %v4078 = vadd.f32 %v2804, %v4075
      %v4079 = vadd.f32 %v2805, %v4074
      %4080 = vst.msk [vmem:[#allocation2] sm:$0xff] %vm1309, %v4078
      %vm4081 = vcmask 254976
      %4082 = vst.msk [vmem:[#allocation2 + $0x8] sm:$0x3] %vm4081, %v4079
      %4083 = vst.msk [vmem:[#allocation2 + $0x8] sm:$0xfc] %vm2807, %v2805
      %4084 = vst.msk [vmem:[#allocation2 + $0x10] sm:$0xf] %vm1316, %v2806
      %p4085 = scmp.eq.s32.totalorder %s36, 1
      // Predicated region
      $region125: #{daclip_forward.2} parent=119 // pred_check
        %p4086 = pneg %p4085
      $region126: #{daclip_forward.2} parent=119 // pred_check_branch
        %4088 = sbr.rel (%p4086) target = $region128
      $region127: #{daclip_forward.2} parent=119 // pred_region
        %v4089 = vld [vmem:[#allocation2] sm:$0x1]
        %vm4090 = vcmask 253952
        %4091 = vst.msk [vmem:[#allocation3] sm:$0x1] %vm4090, %v4089
        %v4092 = vld [vmem:[#allocation2 + $0x5] sm:$0x1]
        %4093 = vst.msk [vmem:[#allocation3 + $0x1] sm:$0x1] %vm4090, %v4092
        %v4094 = vld [vmem:[#allocation2 + $0xa] sm:$0x1]
        %4095 = vst.msk [vmem:[#allocation3 + $0x2] sm:$0x1] %vm4090, %v4094
        %v4096 = vld [vmem:[#allocation2 + $0xf] sm:$0x1]
        %4097 = vst.msk [vmem:[#allocation3 + $0x3] sm:$0x1] %vm4090, %v4096
        %v4098 = vld [vmem:[#allocation3] sm:$0xf]
        %v4099 = vld [vmem:[%s23] sm:$0x3]
        %v4100 = vld [vmem:[%s24] sm:$0xf]
        %v4101 = vld [vmem:[%s24 + $0x4] sm:$0xf]
        %v4102 = vld [vmem:[%s24 + $0x8] sm:$0xf]
        %v4103 = vld [vmem:[%s24 + $0xc] sm:$0xf]
        %v4104 = vsel %vm1316, %v4098, 0.0
        %4105 = vadd.xlane.f32.xlu0 %v4104
        %v4106 = vpop.xlane.xlu0 %4105
        %v4107 = vmul.f32 %v4106, %v1320
        %v4108 = vsub.f32 %v4098, %v4107
        %v4109 = vmul.f32 %v4108, %v4108
        %v4110 = vsel %vm1316, %v4109, 0.0
        %4111 = vadd.xlane.f32.xlu0 %v4110
        %v4112 = vpop.xlane.xlu0 %4111
        %v4113 = vmul.f32 %v4112, %v1320
        %v4114 = vadd.f32 %v4113, 1e-05
        %v4115 = vrsqrt.pop %v4114
        %v4116 = vmul.f32 %v4108, %v4115
        %v4117 = vlaneseq
        %v4118 = vshrl.u32 %v4117, 7
        %v4119 = vsub.s32 0, %v4118
        %v4120 = vrot.slane %v4099, %v4119
        %v4121 = vmul.f32 %v4116, %v4120
        %v4122 = vlaneseq
        %v4123 = vshrl.u32 %v4122, 7
        %v4124 = vsub.s32 1, %v4123
        %v4125 = vrot.slane %v4099, %v4124
        %v4126 = vadd.f32 %v4121, %v4125
        %v4127 = vpack.c.bf16 %v4126, %v4126
        %v4132 = vunpack.c.l.b16 %v4100
        %v4133 = vunpack.c.l.b16 %v4101
        %v4134 = vunpack.c.l.b16 %v4102
        %v4135 = vunpack.c.l.b16 %v4103
        %v4136 = vpack.c.b16 %v4133, %v4132
        %v4137 = vpack.c.b16 %v4135, %v4134
        %v4141 = vsel %vm1309, %v4127, 0
        %4143 = vmatprep.subr.bf16.mxu0 0
        %4144 = vmatpush1.bf16.msra.mxu0 %v4136
        %4145 = vmatprep.subr.bf16.mxu0 0
        %4146 = vmatpush1.bf16.msra.mxu0 %v4137
        %4147 = vmatprep.subr.bf16.mxu0 0
        %4148 = vmatpush1.bf16.msra.mxu0 0
        %4149 = vmatprep.subr.bf16.mxu0 0
        %4150 = vmatpush1.bf16.msra.mxu0 0
        %4151 = vmatprep.subr.bf16.mxu0 0
        %4152 = vmatpush1.bf16.msra.mxu0 0
        %4153 = vmatprep.subr.bf16.mxu0 0
        %4154 = vmatpush1.bf16.msra.mxu0 0
        %4155 = vmatprep.subr.bf16.mxu0 0
        %4156 = vmatpush1.bf16.msra.mxu0 0
        %4157 = vmatprep.subr.bf16.mxu0 0
        %4158 = vmatpush1.bf16.msra.mxu0 0
        %4159 = vmatprep.subr.bf16.mxu0 0
        %4160 = vmatpush1.bf16.msra.mxu0 0
        %4161 = vmatprep.subr.bf16.mxu0 0
        %4162 = vmatpush1.bf16.msra.mxu0 0
        %4163 = vmatprep.subr.bf16.mxu0 0
        %4164 = vmatpush1.bf16.msra.mxu0 0
        %4165 = vmatprep.subr.bf16.mxu0 0
        %4166 = vmatpush1.bf16.msra.mxu0 0
        %4167 = vmatprep.subr.bf16.mxu0 0
        %4168 = vmatpush1.bf16.msra.mxu0 0
        %4169 = vmatprep.subr.bf16.mxu0 0
        %4170 = vmatpush1.bf16.msra.mxu0 0
        %4171 = vmatprep.subr.bf16.mxu0 0
        %4172 = vmatpush1.bf16.msra.mxu0 0
        %4173 = vmatprep.subr.bf16.mxu0 0
        %4174 = vmatpush1.bf16.msra.mxu0 0
        %4175 = vmatprep.mubr.bf16.mxu0 0
        %4176 = vmatmul.mubr.bf16.gmra.mrb[0].mxu0 %v4141
        %v4177 = vpop.f32.mrb[0].mxu0
        %v4178 = vadd.f32 0.0, %v4177
        %v4179 = vpop.f32.mrb[0].mxu0
        %v4180 = vpop.f32.mrb[0].mxu0
        %v4181 = vpop.f32.mrb[0].mxu0
        %4182 = vdwg.mxu0
        %v4183 = vmul.f32 %v4178, %v4178
        %v4184 = vsel %vm1316, %v4183, 0.0
        %4185 = vadd.xlane.f32.xlu0 %v4184
        %v4186 = vpop.xlane.xlu0 %4185
        %v4187 = vmax.f32 %v4186, 1e-24
        %v4188 = vrsqrt.pop %v4187
        %v4189 = vmul.f32 %v4178, %v4188
        %4190 = vst.msk [vmem:[%s25] sm:$0xf] %vm1316, %v4189
      $region128: #{daclip_forward.2} parent=119 // pred_fallthru
        _
      // Predicated region
      $region129: #{daclip_forward.2} parent=119 // pred_check
        %p4191 = pneg %p664
      $region130: #{daclip_forward.2} parent=119 // pred_check_branch
        %4193 = sbr.rel (%p4191) target = $region132
      $region131: #{daclip_forward.2} parent=119 // pred_region
        _
      $region132: #{daclip_forward.2} parent=119 // pred_fallthru
        _
      // Predicated region
      $region133: #{daclip_forward.2} parent=119 // pred_check
        %p4194 = pneg %p664
      $region134: #{daclip_forward.2} parent=119 // pred_check_branch
        %4196 = sbr.rel (%p4194) target = $region136
      $region135: #{daclip_forward.2} parent=119 // pred_region
        _
      $region136: #{daclip_forward.2} parent=119 // pred_fallthru
        _
    $region120: #{daclip_forward.2} parent=5 // pred_fallthru
      _
    %p4197 = scmp.le.s32.totalorder 2, %s31
    // Predicated region
    $region137: #{daclip_forward.2} parent=5 // pred_check
      %p4198 = pneg %p4197
    $region138: #{daclip_forward.2} parent=5 // pred_check_branch
      %4200 = sbr.rel (%p4198) target = $region140
    $region139: #{daclip_forward.2} parent=5 // pred_region
      %s4201 = ssub.s32 %s31, 2
    $region140: #{daclip_forward.2} parent=5 // pred_fallthru
      _
  $region6: #{daclip_forward.2} parent=0 // loop_footer
    %s35 = sadd.s32 1, %s31
  $region7: #{daclip_forward.2} parent=0 // loop_footer_branch
    %30 = sbr.rel target = $region3
  $region8: #{daclip_forward.2} parent=0 // loop_exit
    _

</llo_original>
